<compile_context>
chip_gen: v7x
topology: tpu7x:2x2x1
jax: 0.10.0
libtpu: 0.0.40
codegen_flags: <defaults>
</compile_context>

<pallas_src>
import functools

import jax
import jax.numpy as jnp
from jax.experimental import pallas as pl
from jax.experimental.pallas import tpu as pltpu

EPS = 1e-5  # nn.InstanceNorm2d default (affine=False, biased variance)


# ----------------------------------------------------------------------------
# Fused Pallas kernel (one image per grid step)
# ----------------------------------------------------------------------------
def _resblock_kernel(xp_ref, w1_ref, w2_ref, o_ref, h1p_ref, *, H, W, Wr, Cp):
    """Fused ResidualBlock forward for one image in padded-row layout.

    xp_ref : ((H+2)*Wr, Cp) bf16  reflection-padded input; row pitch Wr >= W+2,
                                  columns [W+2, Wr) are zero filler.
    w*_ref : (9, Cp, Cp)    bf16  per-tap (C_in, C_out) weight matrices.
    o_ref  : (H*Wr, Cp)     f32   x + IN(conv2(relu(IN(conv1(x))))), same
                                  padded-row layout (valid cols 1..W).
    h1p_ref: ((H+2)*Wr, Cp) bf16  VMEM scratch: reflection-padded stage-1 act.
    """
    HWr = H * Wr
    inv_hw = 1.0 / float(H * W)

    # Column id of every flattened row; (HWr, 1) broadcasts over the lane dim.
    col = jax.lax.broadcasted_iota(jnp.int32, (HWr, 1), 0) % Wr
    m_int = jnp.logical_and(col >= 1, col <= W).astype(jnp.float32)

    def roll_rows(v, s):                       # sublane rotation (XLU slot)
        return pltpu.roll(v, shift=s % HWr, axis=0)

    def conv3x3(src_ref, w_ref):
        # 9 (HWr, Cp) x (Cp, Cp) bf16 MXU matmuls on contiguous, tile-aligned
        # row views of the padded source; the dx shift is folded into 2 rolls
        # of the per-dx group sums (junk only reaches discarded pad columns).
        acc = None
        for dx in range(3):
            grp = None
            for dy in range(3):
                patch = src_ref[dy * Wr:dy * Wr + HWr, :]      # no-copy view
                t = jnp.dot(patch, w_ref[dy * 3 + dx],
                            preferred_element_type=jnp.float32)
                grp = t if grp is None else grp + t
            if dx != 1:
                grp = roll_rows(grp, 1 - dx)
            acc = grp if acc is None else acc + grp
        return acc                                             # (HWr, Cp) f32

    def instance_norm(y):
        # Two-pass, interior-masked per-channel stats in f32; pad columns -> 0.
        mean = jnp.sum(y * m_int, axis=0, keepdims=True) * inv_hw
        d = (y - mean) * m_int
        var = jnp.sum(d * d, axis=0, keepdims=True) * inv_hw
        return d * jax.lax.rsqrt(var + EPS)

    # ---- stage 1: conv -> InstanceNorm -> ReLU ------------------------------
    h1 = jnp.maximum(instance_norm(conv3x3(xp_ref, w1_ref)), 0.0)

    # ---- reflection-pad stage-1 output directly into the VMEM scratch -------
    left = roll_rows(h1, -2)     # col 0   <- interior col 1
    right = roll_rows(h1, 2)     # col W+1 <- interior col W-2
    h1pad = jnp.where(col == 0, left, jnp.where(col == W + 1, right, h1))
    h1p_ref[Wr:Wr + HWr, :] = h1pad.astype(jnp.bfloat16)
    # Top/bottom reflection rows (corners come along via the already-reflected
    # columns of the copied rows).
    h1p_ref[0:Wr, :] = h1p_ref[2 * Wr:3 * Wr, :]
    h1p_ref[(H + 1) * Wr:(H + 2) * Wr, :] = h1p_ref[(H - 1) * Wr:H * Wr, :]

    # ---- stage 2: conv -> InstanceNorm -> residual add ----------------------
    y2n = instance_norm(conv3x3(h1p_ref, w2_ref))
    o_ref[...] = xp_ref[Wr:Wr + HWr, :].astype(jnp.float32) + y2n


# ----------------------------------------------------------------------------
# Wrapper: layout plumbing (transpose / pad / flatten / weight prep) in XLA
# ----------------------------------------------------------------------------
def _round_up(v, m):
    return -(-v // m) * m


@jax.jit
def residual_block_pallas(x_nchw, w1, b1, w2, b2):
    # b1/b2 are accepted for parity with the PyTorch module but are exact
    # no-ops: each conv feeds an affine-free InstanceNorm whose per-channel
    # mean subtraction cancels the bias.
    del b1, b2
    n, c, h, w = x_nchw.shape
    cp = _round_up(max(c, 128), 128)       # lane-dense channel width
    wr = _round_up(w + 2, 16)              # row pitch: bf16 sublane tile (16)
    rows_pad = (h + 2) * wr
    rows_out = h * wr

    # NCHW -> NHWC, spatial reflection pad, zero-pad cols to Wr / chans to Cp,
    # flatten rows to the 2-D padded-row layout, cast to bf16.
    x_nhwc = jnp.transpose(x_nchw, (0, 2, 3, 1))
    xp = jnp.pad(x_nhwc, ((0, 0), (1, 1), (1, 1), (0, 0)), mode="reflect")
    xp = jnp.pad(xp, ((0, 0), (0, 0), (0, wr - (w + 2)), (0, cp - c)))
    xp = xp.astype(jnp.bfloat16).reshape(n, rows_pad, cp)

    def prep_w(wt):
        # (C_out, C_in, 3, 3) -> (9, C_in, C_out), zero-padded to (9, Cp, Cp).
        t = jnp.transpose(wt, (2, 3, 1, 0)).reshape(9, c, c)
        return jnp.pad(t, ((0, 0), (0, cp - c), (0, cp - c))).astype(jnp.bfloat16)

    w1t, w2t = prep_w(w1), prep_w(w2)

    # Scoped-VMEM budget from the real working set (double-buffered in/out
    # blocks + weights + scratch + f32 temporaries) with 2x headroom.
    blk_in = rows_pad * cp * 2
    blk_out = rows_out * cp * 4
    blk_w = 9 * cp * cp * 2
    est = 2 * blk_in + 2 * blk_out + 4 * blk_w + blk_in + 8 * rows_out * cp * 4
    vmem_limit = int(min(100 * 2**20, max(2 * est, 32 * 2**20)))

    kernel = functools.partial(_resblock_kernel, H=h, W=w, Wr=wr, Cp=cp)

    out = pl.pallas_call(
        kernel,
        out_shape=jax.ShapeDtypeStruct((n, rows_out, cp), jnp.float32),
        grid=(n,),
        in_specs=[
            pl.BlockSpec((None, rows_pad, cp), lambda i: (i, 0, 0)),  # padded x
            pl.BlockSpec((9, cp, cp), lambda i: (0, 0, 0)),           # w1 (resident)
            pl.BlockSpec((9, cp, cp), lambda i: (0, 0, 0)),           # w2 (resident)
        ],
        out_specs=pl.BlockSpec((None, rows_out, cp), lambda i: (i, 0, 0)),
        scratch_shapes=[pltpu.VMEM((rows_pad, cp), jnp.bfloat16)],
        compiler_params=pltpu.CompilerParams(
            dimension_semantics=("parallel",),
            vmem_limit_bytes=vmem_limit),
    )(xp, w1t, w2t)

    # Slice interior columns / channels; NHWC -> NCHW.
    out = out.reshape(n, h, wr, cp)[:, :, 1:w + 1, :c]
    return jnp.transpose(out, (0, 3, 1, 2))


# ----------------------------------------------------------------------------
# Pure-JAX reference (correctness sanity check, f32 / HIGHEST precision)
# ----------------------------------------------------------------------------
def _ref_forward(x, w1, b1, w2, b2):
    def conv_in(x_, w_, b_):
        xp = jnp.pad(x_, ((0, 0), (0, 0), (1, 1), (1, 1)), mode="reflect")
        y = jax.lax.conv_general_dilated(
            xp, w_, (1, 1), "VALID",
            dimension_numbers=("NCHW", "OIHW", "NCHW"),
            precision=jax.lax.Precision.HIGHEST,
        ) + b_[None, :, None, None]
        mean = jnp.mean(y, axis=(2, 3), keepdims=True)
        var = jnp.mean(jnp.square(y - mean), axis=(2, 3), keepdims=True)
        return (y - mean) * jax.lax.rsqrt(var + EPS)

    h = jnp.maximum(conv_in(x, w1, b1), 0.0)
    return x + conv_in(h, w2, b2)


# ----------------------------------------------------------------------------
if __name__ == "__main__":
    N, C, H, W = 2, 4, 16, 16

    key = jax.random.PRNGKey(0)
    kx, kw1, kb1, kw2, kb2 = jax.random.split(key, 5)

    x = jax.random.normal(kx, (N, C, H, W), dtype=jnp.float32)

    # Conv2d weights: normal(0, 0.02) as in the module's `conv()` helper.
    w1 = 0.02 * jax.random.normal(kw1, (C, C, 3, 3), dtype=jnp.float32)
    w2 = 0.02 * jax.random.normal(kw2, (C, C, 3, 3), dtype=jnp.float32)
    # Conv2d biases: uniform(-1/sqrt(fan_in), 1/sqrt(fan_in)) like PyTorch.
    bound = 1.0 / jnp.sqrt(jnp.float32(C * 3 * 3))
    b1 = jax.random.uniform(kb1, (C,), jnp.float32, -bound, bound)
    b2 = jax.random.uniform(kb2, (C,), jnp.float32, -bound, bound)

    out = jax.block_until_ready(residual_block_pallas(x, w1, b1, w2, b2))
    ref = jax.block_until_ready(_ref_forward(x, w1, b1, w2, b2))

    assert out.shape == (N, C, H, W)
    # bf16 conv operands/storage -> compare against the f32 HIGHEST-precision
    # reference at bf16-level tolerances; the aggregate check stays tight.
    err = jnp.abs(out - ref)
    assert float(jnp.mean(err)) < 1e-2, float(jnp.mean(err))
    assert bool(jnp.allclose(out, ref, atol=5e-2, rtol=5e-2)), float(jnp.max(err))

    print("KERNEL_OK")
</pallas_src>

<mosaic_0001>
module attributes {stable_mosaic.version = 11 : i64} {
  func.func @_resblock_kernel(%arg0: i32, %arg1: memref<1x576x128xbf16, #tpu.memory_space<vmem>>, %arg2: memref<9x128x128xbf16, #tpu.memory_space<vmem>>, %arg3: memref<9x128x128xbf16, #tpu.memory_space<vmem>>, %arg4: memref<1x512x128xf32, #tpu.memory_space<vmem>>, %arg5: memref<576x128xbf16, #tpu.memory_space<vmem>>) attributes {dimension_semantics = [#tpu.dimension_semantics<parallel>], iteration_bounds = array<i64: 2>, scalar_prefetch = 0 : i64, scratch_operands = 1 : i64, tpu.core_type = #tpu.core_type<tc>, window_params = [{transform_indices = @transform_0, window_bounds = array<i64: 1, 576, 128>}, {pipeline_mode = #tpu.pipeline_mode<synchronous>, transform_indices = @transform_1, window_bounds = array<i64: 9, 128, 128>}, {pipeline_mode = #tpu.pipeline_mode<synchronous>, transform_indices = @transform_2, window_bounds = array<i64: 9, 128, 128>}, {transform_indices = @transform_3, window_bounds = array<i64: 1, 512, 128>}]} {
    %0 = tpu.iota {dimensions = array<i32: 0>} : vector<512x1xi32>
    %c32_i32 = arith.constant 32 : i32
    %c0_i32 = arith.constant 0 : i32
    %1 = arith.cmpi eq, %c32_i32, %c0_i32 : i32
    %c1_i32 = arith.constant 1 : i32
    %2 = arith.select %1, %c1_i32, %c32_i32 : i32
    %3 = vector.broadcast %2 : i32 to vector<512x1xi32>
    %4 = arith.remsi %0, %3 : vector<512x1xi32>
    %c0_i32_0 = arith.constant 0 : i32
    %5 = vector.broadcast %c0_i32_0 : i32 to vector<512x1xi32>
    %6 = arith.cmpi ne, %4, %5 : vector<512x1xi32>
    %c0_i32_1 = arith.constant 0 : i32
    %7 = vector.broadcast %c0_i32_1 : i32 to vector<512x1xi32>
    %8 = arith.cmpi slt, %4, %7 : vector<512x1xi32>
    %c0_i32_2 = arith.constant 0 : i32
    %9 = arith.cmpi slt, %2, %c0_i32_2 : i32
    %10 = vector.broadcast %9 : i1 to vector<512x1xi1>
    %11 = vector.broadcast %10 : vector<512x1xi1> to vector<512x1xi1>
    %12 = arith.xori %8, %11 : vector<512x1xi1>
    %13 = arith.andi %12, %6 : vector<512x1xi1>
    %14 = vector.broadcast %2 : i32 to vector<512x1xi32>
    %15 = arith.addi %4, %14 : vector<512x1xi32>
    %16 = arith.select %13, %15, %4 : vector<512x1xi1>, vector<512x1xi32>
    %c1_i32_3 = arith.constant 1 : i32
    %17 = vector.broadcast %c1_i32_3 : i32 to vector<512x1xi32>
    %18 = arith.cmpi sge, %16, %17 : vector<512x1xi32>
    %c16_i32 = arith.constant 16 : i32
    %19 = vector.broadcast %c16_i32 : i32 to vector<512x1xi32>
    %20 = arith.cmpi sle, %16, %19 : vector<512x1xi32>
    %21 = arith.andi %18, %20 : vector<512x1xi1>
    %22 = arith.extui %21 : vector<512x1xi1> to vector<512x1xi32>
    %23 = arith.sitofp %22 : vector<512x1xi32> to vector<512x1xf32>
    %c0 = arith.constant 0 : index
    %c0_4 = arith.constant 0 : index
    %c0_5 = arith.constant 0 : index
    %24 = vector.load %arg1[%c0, %c0_4, %c0_5] : memref<1x576x128xbf16, #tpu.memory_space<vmem>>, vector<1x512x128xbf16>
    %25 = vector.shape_cast %24 : vector<1x512x128xbf16> to vector<512x128xbf16>
    %c0_6 = arith.constant 0 : index
    %c0_7 = arith.constant 0 : index
    %c0_8 = arith.constant 0 : index
    %26 = vector.load %arg2[%c0_6, %c0_7, %c0_8] : memref<9x128x128xbf16, #tpu.memory_space<vmem>>, vector<1x128x128xbf16>
    %27 = vector.shape_cast %26 : vector<1x128x128xbf16> to vector<128x128xbf16>
    %cst = arith.constant dense<0.000000e+00> : vector<512x128xf32>
    %28 = tpu.matmul %25, %27, %cst {dimension_numbers = #tpu.dot_dimension_numbers<[1], [0], [0], [1], [0, 0, 1, 1], [], []>} : vector<512x128xbf16>, vector<128x128xbf16>, vector<512x128xf32> -> vector<512x128xf32>
    %c0_9 = arith.constant 0 : index
    %c32 = arith.constant 32 : index
    %c0_10 = arith.constant 0 : index
    %29 = vector.load %arg1[%c0_9, %c32, %c0_10] : memref<1x576x128xbf16, #tpu.memory_space<vmem>>, vector<1x512x128xbf16>
    %30 = vector.shape_cast %29 : vector<1x512x128xbf16> to vector<512x128xbf16>
    %c3 = arith.constant 3 : index
    %c0_11 = arith.constant 0 : index
    %c0_12 = arith.constant 0 : index
    %31 = vector.load %arg2[%c3, %c0_11, %c0_12] : memref<9x128x128xbf16, #tpu.memory_space<vmem>>, vector<1x128x128xbf16>
    %32 = vector.shape_cast %31 : vector<1x128x128xbf16> to vector<128x128xbf16>
    %cst_13 = arith.constant dense<0.000000e+00> : vector<512x128xf32>
    %33 = tpu.matmul %30, %32, %cst_13 {dimension_numbers = #tpu.dot_dimension_numbers<[1], [0], [0], [1], [0, 0, 1, 1], [], []>} : vector<512x128xbf16>, vector<128x128xbf16>, vector<512x128xf32> -> vector<512x128xf32>
    %34 = arith.addf %28, %33 : vector<512x128xf32>
    %c0_14 = arith.constant 0 : index
    %c64 = arith.constant 64 : index
    %c0_15 = arith.constant 0 : index
    %35 = vector.load %arg1[%c0_14, %c64, %c0_15] : memref<1x576x128xbf16, #tpu.memory_space<vmem>>, vector<1x512x128xbf16>
    %36 = vector.shape_cast %35 : vector<1x512x128xbf16> to vector<512x128xbf16>
    %c6 = arith.constant 6 : index
    %c0_16 = arith.constant 0 : index
    %c0_17 = arith.constant 0 : index
    %37 = vector.load %arg2[%c6, %c0_16, %c0_17] : memref<9x128x128xbf16, #tpu.memory_space<vmem>>, vector<1x128x128xbf16>
    %38 = vector.shape_cast %37 : vector<1x128x128xbf16> to vector<128x128xbf16>
    %cst_18 = arith.constant dense<0.000000e+00> : vector<512x128xf32>
    %39 = tpu.matmul %36, %38, %cst_18 {dimension_numbers = #tpu.dot_dimension_numbers<[1], [0], [0], [1], [0, 0, 1, 1], [], []>} : vector<512x128xbf16>, vector<128x128xbf16>, vector<512x128xf32> -> vector<512x128xf32>
    %40 = arith.addf %34, %39 : vector<512x128xf32>
    %c1_i32_19 = arith.constant 1 : i32
    %41 = tpu.dynamic_rotate %40 by %c1_i32_19 dim 0 : vector<512x128xf32>, i32 -> vector<512x128xf32>
    %c0_20 = arith.constant 0 : index
    %c0_21 = arith.constant 0 : index
    %c0_22 = arith.constant 0 : index
    %42 = vector.load %arg1[%c0_20, %c0_21, %c0_22] : memref<1x576x128xbf16, #tpu.memory_space<vmem>>, vector<1x512x128xbf16>
    %43 = vector.shape_cast %42 : vector<1x512x128xbf16> to vector<512x128xbf16>
    %c1 = arith.constant 1 : index
    %c0_23 = arith.constant 0 : index
    %c0_24 = arith.constant 0 : index
    %44 = vector.load %arg2[%c1, %c0_23, %c0_24] : memref<9x128x128xbf16, #tpu.memory_space<vmem>>, vector<1x128x128xbf16>
    %45 = vector.shape_cast %44 : vector<1x128x128xbf16> to vector<128x128xbf16>
    %cst_25 = arith.constant dense<0.000000e+00> : vector<512x128xf32>
    %46 = tpu.matmul %43, %45, %cst_25 {dimension_numbers = #tpu.dot_dimension_numbers<[1], [0], [0], [1], [0, 0, 1, 1], [], []>} : vector<512x128xbf16>, vector<128x128xbf16>, vector<512x128xf32> -> vector<512x128xf32>
    %c0_26 = arith.constant 0 : index
    %c32_27 = arith.constant 32 : index
    %c0_28 = arith.constant 0 : index
    %47 = vector.load %arg1[%c0_26, %c32_27, %c0_28] : memref<1x576x128xbf16, #tpu.memory_space<vmem>>, vector<1x512x128xbf16>
    %48 = vector.shape_cast %47 : vector<1x512x128xbf16> to vector<512x128xbf16>
    %c4 = arith.constant 4 : index
    %c0_29 = arith.constant 0 : index
    %c0_30 = arith.constant 0 : index
    %49 = vector.load %arg2[%c4, %c0_29, %c0_30] : memref<9x128x128xbf16, #tpu.memory_space<vmem>>, vector<1x128x128xbf16>
    %50 = vector.shape_cast %49 : vector<1x128x128xbf16> to vector<128x128xbf16>
    %cst_31 = arith.constant dense<0.000000e+00> : vector<512x128xf32>
    %51 = tpu.matmul %48, %50, %cst_31 {dimension_numbers = #tpu.dot_dimension_numbers<[1], [0], [0], [1], [0, 0, 1, 1], [], []>} : vector<512x128xbf16>, vector<128x128xbf16>, vector<512x128xf32> -> vector<512x128xf32>
    %52 = arith.addf %46, %51 : vector<512x128xf32>
    %c0_32 = arith.constant 0 : index
    %c64_33 = arith.constant 64 : index
    %c0_34 = arith.constant 0 : index
    %53 = vector.load %arg1[%c0_32, %c64_33, %c0_34] : memref<1x576x128xbf16, #tpu.memory_space<vmem>>, vector<1x512x128xbf16>
    %54 = vector.shape_cast %53 : vector<1x512x128xbf16> to vector<512x128xbf16>
    %c7 = arith.constant 7 : index
    %c0_35 = arith.constant 0 : index
    %c0_36 = arith.constant 0 : index
    %55 = vector.load %arg2[%c7, %c0_35, %c0_36] : memref<9x128x128xbf16, #tpu.memory_space<vmem>>, vector<1x128x128xbf16>
    %56 = vector.shape_cast %55 : vector<1x128x128xbf16> to vector<128x128xbf16>
    %cst_37 = arith.constant dense<0.000000e+00> : vector<512x128xf32>
    %57 = tpu.matmul %54, %56, %cst_37 {dimension_numbers = #tpu.dot_dimension_numbers<[1], [0], [0], [1], [0, 0, 1, 1], [], []>} : vector<512x128xbf16>, vector<128x128xbf16>, vector<512x128xf32> -> vector<512x128xf32>
    %58 = arith.addf %52, %57 : vector<512x128xf32>
    %59 = arith.addf %41, %58 : vector<512x128xf32>
    %c0_38 = arith.constant 0 : index
    %c0_39 = arith.constant 0 : index
    %c0_40 = arith.constant 0 : index
    %60 = vector.load %arg1[%c0_38, %c0_39, %c0_40] : memref<1x576x128xbf16, #tpu.memory_space<vmem>>, vector<1x512x128xbf16>
    %61 = vector.shape_cast %60 : vector<1x512x128xbf16> to vector<512x128xbf16>
    %c2 = arith.constant 2 : index
    %c0_41 = arith.constant 0 : index
    %c0_42 = arith.constant 0 : index
    %62 = vector.load %arg2[%c2, %c0_41, %c0_42] : memref<9x128x128xbf16, #tpu.memory_space<vmem>>, vector<1x128x128xbf16>
    %63 = vector.shape_cast %62 : vector<1x128x128xbf16> to vector<128x128xbf16>
    %cst_43 = arith.constant dense<0.000000e+00> : vector<512x128xf32>
    %64 = tpu.matmul %61, %63, %cst_43 {dimension_numbers = #tpu.dot_dimension_numbers<[1], [0], [0], [1], [0, 0, 1, 1], [], []>} : vector<512x128xbf16>, vector<128x128xbf16>, vector<512x128xf32> -> vector<512x128xf32>
    %c0_44 = arith.constant 0 : index
    %c32_45 = arith.constant 32 : index
    %c0_46 = arith.constant 0 : index
    %65 = vector.load %arg1[%c0_44, %c32_45, %c0_46] : memref<1x576x128xbf16, #tpu.memory_space<vmem>>, vector<1x512x128xbf16>
    %66 = vector.shape_cast %65 : vector<1x512x128xbf16> to vector<512x128xbf16>
    %c5 = arith.constant 5 : index
    %c0_47 = arith.constant 0 : index
    %c0_48 = arith.constant 0 : index
    %67 = vector.load %arg2[%c5, %c0_47, %c0_48] : memref<9x128x128xbf16, #tpu.memory_space<vmem>>, vector<1x128x128xbf16>
    %68 = vector.shape_cast %67 : vector<1x128x128xbf16> to vector<128x128xbf16>
    %cst_49 = arith.constant dense<0.000000e+00> : vector<512x128xf32>
    %69 = tpu.matmul %66, %68, %cst_49 {dimension_numbers = #tpu.dot_dimension_numbers<[1], [0], [0], [1], [0, 0, 1, 1], [], []>} : vector<512x128xbf16>, vector<128x128xbf16>, vector<512x128xf32> -> vector<512x128xf32>
    %70 = arith.addf %64, %69 : vector<512x128xf32>
    %c0_50 = arith.constant 0 : index
    %c64_51 = arith.constant 64 : index
    %c0_52 = arith.constant 0 : index
    %71 = vector.load %arg1[%c0_50, %c64_51, %c0_52] : memref<1x576x128xbf16, #tpu.memory_space<vmem>>, vector<1x512x128xbf16>
    %72 = vector.shape_cast %71 : vector<1x512x128xbf16> to vector<512x128xbf16>
    %c8 = arith.constant 8 : index
    %c0_53 = arith.constant 0 : index
    %c0_54 = arith.constant 0 : index
    %73 = vector.load %arg2[%c8, %c0_53, %c0_54] : memref<9x128x128xbf16, #tpu.memory_space<vmem>>, vector<1x128x128xbf16>
    %74 = vector.shape_cast %73 : vector<1x128x128xbf16> to vector<128x128xbf16>
    %cst_55 = arith.constant dense<0.000000e+00> : vector<512x128xf32>
    %75 = tpu.matmul %72, %74, %cst_55 {dimension_numbers = #tpu.dot_dimension_numbers<[1], [0], [0], [1], [0, 0, 1, 1], [], []>} : vector<512x128xbf16>, vector<128x128xbf16>, vector<512x128xf32> -> vector<512x128xf32>
    %76 = arith.addf %70, %75 : vector<512x128xf32>
    %c511_i32 = arith.constant 511 : i32
    %77 = tpu.dynamic_rotate %76 by %c511_i32 dim 0 : vector<512x128xf32>, i32 -> vector<512x128xf32>
    %78 = arith.addf %59, %77 : vector<512x128xf32>
    %79 = vector.broadcast %23 : vector<512x1xf32> to vector<512x128xf32>
    %80 = arith.mulf %78, %79 : vector<512x128xf32>
    %cst_56 = arith.constant dense<0.000000e+00> : vector<128xf32>
    %81 = vector.multi_reduction <add>, %80, %cst_56 [0] : vector<512x128xf32> to vector<128xf32>
    %82 = vector.shape_cast %81 : vector<128xf32> to vector<1x128xf32>
    %cst_57 = arith.constant 3.906250e-03 : f32
    %83 = vector.broadcast %cst_57 : f32 to vector<1x128xf32>
    %84 = arith.mulf %82, %83 : vector<1x128xf32>
    %85 = vector.broadcast %84 : vector<1x128xf32> to vector<512x128xf32>
    %86 = arith.subf %78, %85 : vector<512x128xf32>
    %87 = vector.broadcast %23 : vector<512x1xf32> to vector<512x128xf32>
    %88 = arith.mulf %86, %87 : vector<512x128xf32>
    %89 = arith.mulf %88, %88 : vector<512x128xf32>
    %cst_58 = arith.constant dense<0.000000e+00> : vector<128xf32>
    %90 = vector.multi_reduction <add>, %89, %cst_58 [0] : vector<512x128xf32> to vector<128xf32>
    %91 = vector.shape_cast %90 : vector<128xf32> to vector<1x128xf32>
    %cst_59 = arith.constant 3.906250e-03 : f32
    %92 = vector.broadcast %cst_59 : f32 to vector<1x128xf32>
    %93 = arith.mulf %91, %92 : vector<1x128xf32>
    %cst_60 = arith.constant 9.99999974E-6 : f32
    %94 = vector.broadcast %cst_60 : f32 to vector<1x128xf32>
    %95 = arith.addf %93, %94 : vector<1x128xf32>
    %96 = math.rsqrt %95 : vector<1x128xf32>
    %97 = vector.broadcast %96 : vector<1x128xf32> to vector<512x128xf32>
    %98 = arith.mulf %88, %97 : vector<512x128xf32>
    %cst_61 = arith.constant 0.000000e+00 : f32
    %99 = vector.broadcast %cst_61 : f32 to vector<512x128xf32>
    %100 = arith.maximumf %98, %99 : vector<512x128xf32>
    %c510_i32 = arith.constant 510 : i32
    %101 = tpu.dynamic_rotate %100 by %c510_i32 dim 0 : vector<512x128xf32>, i32 -> vector<512x128xf32>
    %c2_i32 = arith.constant 2 : i32
    %102 = tpu.dynamic_rotate %100 by %c2_i32 dim 0 : vector<512x128xf32>, i32 -> vector<512x128xf32>
    %c0_i32_62 = arith.constant 0 : i32
    %103 = vector.broadcast %c0_i32_62 : i32 to vector<512x1xi32>
    %104 = arith.cmpi eq, %16, %103 : vector<512x1xi32>
    %c17_i32 = arith.constant 17 : i32
    %105 = vector.broadcast %c17_i32 : i32 to vector<512x1xi32>
    %106 = arith.cmpi eq, %16, %105 : vector<512x1xi32>
    %107 = vector.shape_cast %106 : vector<512x1xi1> to vector<512x1xi1>
    %108 = vector.broadcast %107 : vector<512x1xi1> to vector<512x128xi1>
    %109 = arith.select %108, %102, %100 : vector<512x128xi1>, vector<512x128xf32>
    %110 = vector.shape_cast %104 : vector<512x1xi1> to vector<512x1xi1>
    %111 = vector.broadcast %110 : vector<512x1xi1> to vector<512x128xi1>
    %112 = arith.select %111, %101, %109 : vector<512x128xi1>, vector<512x128xf32>
    %113 = arith.truncf %112 : vector<512x128xf32> to vector<512x128xbf16>
    %c32_63 = arith.constant 32 : index
    %c0_64 = arith.constant 0 : index
    %114 = vector.load %arg5[%c32_63, %c0_64] : memref<576x128xbf16, #tpu.memory_space<vmem>>, vector<512x128xbf16>
    tpu.vector_store %arg5[%c32_63, %c0_64], %113 {strides = array<i32>} : memref<576x128xbf16, #tpu.memory_space<vmem>>, vector<512x128xbf16>,
    %c64_65 = arith.constant 64 : index
    %c0_66 = arith.constant 0 : index
    %115 = vector.load %arg5[%c64_65, %c0_66] : memref<576x128xbf16, #tpu.memory_space<vmem>>, vector<32x128xbf16>
    %c0_67 = arith.constant 0 : index
    %c0_68 = arith.constant 0 : index
    %116 = vector.load %arg5[%c0_67, %c0_68] : memref<576x128xbf16, #tpu.memory_space<vmem>>, vector<32x128xbf16>
    tpu.vector_store %arg5[%c0_67, %c0_68], %115 {strides = array<i32>} : memref<576x128xbf16, #tpu.memory_space<vmem>>, vector<32x128xbf16>,
    %c480 = arith.constant 480 : index
    %c0_69 = arith.constant 0 : index
    %117 = vector.load %arg5[%c480, %c0_69] : memref<576x128xbf16, #tpu.memory_space<vmem>>, vector<32x128xbf16>
    %c544 = arith.constant 544 : index
    %c0_70 = arith.constant 0 : index
    %118 = vector.load %arg5[%c544, %c0_70] : memref<576x128xbf16, #tpu.memory_space<vmem>>, vector<32x128xbf16>
    tpu.vector_store %arg5[%c544, %c0_70], %117 {strides = array<i32>} : memref<576x128xbf16, #tpu.memory_space<vmem>>, vector<32x128xbf16>,
    %c0_71 = arith.constant 0 : index
    %c0_72 = arith.constant 0 : index
    %119 = vector.load %arg5[%c0_71, %c0_72] : memref<576x128xbf16, #tpu.memory_space<vmem>>, vector<512x128xbf16>
    %c0_73 = arith.constant 0 : index
    %c0_74 = arith.constant 0 : index
    %c0_75 = arith.constant 0 : index
    %120 = vector.load %arg3[%c0_73, %c0_74, %c0_75] : memref<9x128x128xbf16, #tpu.memory_space<vmem>>, vector<1x128x128xbf16>
    %121 = vector.shape_cast %120 : vector<1x128x128xbf16> to vector<128x128xbf16>
    %cst_76 = arith.constant dense<0.000000e+00> : vector<512x128xf32>
    %122 = tpu.matmul %119, %121, %cst_76 {dimension_numbers = #tpu.dot_dimension_numbers<[1], [0], [0], [1], [0, 0, 1, 1], [], []>} : vector<512x128xbf16>, vector<128x128xbf16>, vector<512x128xf32> -> vector<512x128xf32>
    %c32_77 = arith.constant 32 : index
    %c0_78 = arith.constant 0 : index
    %123 = vector.load %arg5[%c32_77, %c0_78] : memref<576x128xbf16, #tpu.memory_space<vmem>>, vector<512x128xbf16>
    %c3_79 = arith.constant 3 : index
    %c0_80 = arith.constant 0 : index
    %c0_81 = arith.constant 0 : index
    %124 = vector.load %arg3[%c3_79, %c0_80, %c0_81] : memref<9x128x128xbf16, #tpu.memory_space<vmem>>, vector<1x128x128xbf16>
    %125 = vector.shape_cast %124 : vector<1x128x128xbf16> to vector<128x128xbf16>
    %cst_82 = arith.constant dense<0.000000e+00> : vector<512x128xf32>
    %126 = tpu.matmul %123, %125, %cst_82 {dimension_numbers = #tpu.dot_dimension_numbers<[1], [0], [0], [1], [0, 0, 1, 1], [], []>} : vector<512x128xbf16>, vector<128x128xbf16>, vector<512x128xf32> -> vector<512x128xf32>
    %127 = arith.addf %122, %126 : vector<512x128xf32>
    %c64_83 = arith.constant 64 : index
    %c0_84 = arith.constant 0 : index
    %128 = vector.load %arg5[%c64_83, %c0_84] : memref<576x128xbf16, #tpu.memory_space<vmem>>, vector<512x128xbf16>
    %c6_85 = arith.constant 6 : index
    %c0_86 = arith.constant 0 : index
    %c0_87 = arith.constant 0 : index
    %129 = vector.load %arg3[%c6_85, %c0_86, %c0_87] : memref<9x128x128xbf16, #tpu.memory_space<vmem>>, vector<1x128x128xbf16>
    %130 = vector.shape_cast %129 : vector<1x128x128xbf16> to vector<128x128xbf16>
    %cst_88 = arith.constant dense<0.000000e+00> : vector<512x128xf32>
    %131 = tpu.matmul %128, %130, %cst_88 {dimension_numbers = #tpu.dot_dimension_numbers<[1], [0], [0], [1], [0, 0, 1, 1], [], []>} : vector<512x128xbf16>, vector<128x128xbf16>, vector<512x128xf32> -> vector<512x128xf32>
    %132 = arith.addf %127, %131 : vector<512x128xf32>
    %c1_i32_89 = arith.constant 1 : i32
    %133 = tpu.dynamic_rotate %132 by %c1_i32_89 dim 0 : vector<512x128xf32>, i32 -> vector<512x128xf32>
    %c0_90 = arith.constant 0 : index
    %c0_91 = arith.constant 0 : index
    %134 = vector.load %arg5[%c0_90, %c0_91] : memref<576x128xbf16, #tpu.memory_space<vmem>>, vector<512x128xbf16>
    %c1_92 = arith.constant 1 : index
    %c0_93 = arith.constant 0 : index
    %c0_94 = arith.constant 0 : index
    %135 = vector.load %arg3[%c1_92, %c0_93, %c0_94] : memref<9x128x128xbf16, #tpu.memory_space<vmem>>, vector<1x128x128xbf16>
    %136 = vector.shape_cast %135 : vector<1x128x128xbf16> to vector<128x128xbf16>
    %cst_95 = arith.constant dense<0.000000e+00> : vector<512x128xf32>
    %137 = tpu.matmul %134, %136, %cst_95 {dimension_numbers = #tpu.dot_dimension_numbers<[1], [0], [0], [1], [0, 0, 1, 1], [], []>} : vector<512x128xbf16>, vector<128x128xbf16>, vector<512x128xf32> -> vector<512x128xf32>
    %c32_96 = arith.constant 32 : index
    %c0_97 = arith.constant 0 : index
    %138 = vector.load %arg5[%c32_96, %c0_97] : memref<576x128xbf16, #tpu.memory_space<vmem>>, vector<512x128xbf16>
    %c4_98 = arith.constant 4 : index
    %c0_99 = arith.constant 0 : index
    %c0_100 = arith.constant 0 : index
    %139 = vector.load %arg3[%c4_98, %c0_99, %c0_100] : memref<9x128x128xbf16, #tpu.memory_space<vmem>>, vector<1x128x128xbf16>
    %140 = vector.shape_cast %139 : vector<1x128x128xbf16> to vector<128x128xbf16>
    %cst_101 = arith.constant dense<0.000000e+00> : vector<512x128xf32>
    %141 = tpu.matmul %138, %140, %cst_101 {dimension_numbers = #tpu.dot_dimension_numbers<[1], [0], [0], [1], [0, 0, 1, 1], [], []>} : vector<512x128xbf16>, vector<128x128xbf16>, vector<512x128xf32> -> vector<512x128xf32>
    %142 = arith.addf %137, %141 : vector<512x128xf32>
    %c64_102 = arith.constant 64 : index
    %c0_103 = arith.constant 0 : index
    %143 = vector.load %arg5[%c64_102, %c0_103] : memref<576x128xbf16, #tpu.memory_space<vmem>>, vector<512x128xbf16>
    %c7_104 = arith.constant 7 : index
    %c0_105 = arith.constant 0 : index
    %c0_106 = arith.constant 0 : index
    %144 = vector.load %arg3[%c7_104, %c0_105, %c0_106] : memref<9x128x128xbf16, #tpu.memory_space<vmem>>, vector<1x128x128xbf16>
    %145 = vector.shape_cast %144 : vector<1x128x128xbf16> to vector<128x128xbf16>
    %cst_107 = arith.constant dense<0.000000e+00> : vector<512x128xf32>
    %146 = tpu.matmul %143, %145, %cst_107 {dimension_numbers = #tpu.dot_dimension_numbers<[1], [0], [0], [1], [0, 0, 1, 1], [], []>} : vector<512x128xbf16>, vector<128x128xbf16>, vector<512x128xf32> -> vector<512x128xf32>
    %147 = arith.addf %142, %146 : vector<512x128xf32>
    %148 = arith.addf %133, %147 : vector<512x128xf32>
    %c0_108 = arith.constant 0 : index
    %c0_109 = arith.constant 0 : index
    %149 = vector.load %arg5[%c0_108, %c0_109] : memref<576x128xbf16, #tpu.memory_space<vmem>>, vector<512x128xbf16>
    %c2_110 = arith.constant 2 : index
    %c0_111 = arith.constant 0 : index
    %c0_112 = arith.constant 0 : index
    %150 = vector.load %arg3[%c2_110, %c0_111, %c0_112] : memref<9x128x128xbf16, #tpu.memory_space<vmem>>, vector<1x128x128xbf16>
    %151 = vector.shape_cast %150 : vector<1x128x128xbf16> to vector<128x128xbf16>
    %cst_113 = arith.constant dense<0.000000e+00> : vector<512x128xf32>
    %152 = tpu.matmul %149, %151, %cst_113 {dimension_numbers = #tpu.dot_dimension_numbers<[1], [0], [0], [1], [0, 0, 1, 1], [], []>} : vector<512x128xbf16>, vector<128x128xbf16>, vector<512x128xf32> -> vector<512x128xf32>
    %c32_114 = arith.constant 32 : index
    %c0_115 = arith.constant 0 : index
    %153 = vector.load %arg5[%c32_114, %c0_115] : memref<576x128xbf16, #tpu.memory_space<vmem>>, vector<512x128xbf16>
    %c5_116 = arith.constant 5 : index
    %c0_117 = arith.constant 0 : index
    %c0_118 = arith.constant 0 : index
    %154 = vector.load %arg3[%c5_116, %c0_117, %c0_118] : memref<9x128x128xbf16, #tpu.memory_space<vmem>>, vector<1x128x128xbf16>
    %155 = vector.shape_cast %154 : vector<1x128x128xbf16> to vector<128x128xbf16>
    %cst_119 = arith.constant dense<0.000000e+00> : vector<512x128xf32>
    %156 = tpu.matmul %153, %155, %cst_119 {dimension_numbers = #tpu.dot_dimension_numbers<[1], [0], [0], [1], [0, 0, 1, 1], [], []>} : vector<512x128xbf16>, vector<128x128xbf16>, vector<512x128xf32> -> vector<512x128xf32>
    %157 = arith.addf %152, %156 : vector<512x128xf32>
    %c64_120 = arith.constant 64 : index
    %c0_121 = arith.constant 0 : index
    %158 = vector.load %arg5[%c64_120, %c0_121] : memref<576x128xbf16, #tpu.memory_space<vmem>>, vector<512x128xbf16>
    %c8_122 = arith.constant 8 : index
    %c0_123 = arith.constant 0 : index
    %c0_124 = arith.constant 0 : index
    %159 = vector.load %arg3[%c8_122, %c0_123, %c0_124] : memref<9x128x128xbf16, #tpu.memory_space<vmem>>, vector<1x128x128xbf16>
    %160 = vector.shape_cast %159 : vector<1x128x128xbf16> to vector<128x128xbf16>
    %cst_125 = arith.constant dense<0.000000e+00> : vector<512x128xf32>
    %161 = tpu.matmul %158, %160, %cst_125 {dimension_numbers = #tpu.dot_dimension_numbers<[1], [0], [0], [1], [0, 0, 1, 1], [], []>} : vector<512x128xbf16>, vector<128x128xbf16>, vector<512x128xf32> -> vector<512x128xf32>
    %162 = arith.addf %157, %161 : vector<512x128xf32>
    %c511_i32_126 = arith.constant 511 : i32
    %163 = tpu.dynamic_rotate %162 by %c511_i32_126 dim 0 : vector<512x128xf32>, i32 -> vector<512x128xf32>
    %164 = arith.addf %148, %163 : vector<512x128xf32>
    %165 = vector.broadcast %23 : vector<512x1xf32> to vector<512x128xf32>
    %166 = arith.mulf %164, %165 : vector<512x128xf32>
    %cst_127 = arith.constant dense<0.000000e+00> : vector<128xf32>
    %167 = vector.multi_reduction <add>, %166, %cst_127 [0] : vector<512x128xf32> to vector<128xf32>
    %168 = vector.shape_cast %167 : vector<128xf32> to vector<1x128xf32>
    %cst_128 = arith.constant 3.906250e-03 : f32
    %169 = vector.broadcast %cst_128 : f32 to vector<1x128xf32>
    %170 = arith.mulf %168, %169 : vector<1x128xf32>
    %171 = vector.broadcast %170 : vector<1x128xf32> to vector<512x128xf32>
    %172 = arith.subf %164, %171 : vector<512x128xf32>
    %173 = vector.broadcast %23 : vector<512x1xf32> to vector<512x128xf32>
    %174 = arith.mulf %172, %173 : vector<512x128xf32>
    %175 = arith.mulf %174, %174 : vector<512x128xf32>
    %cst_129 = arith.constant dense<0.000000e+00> : vector<128xf32>
    %176 = vector.multi_reduction <add>, %175, %cst_129 [0] : vector<512x128xf32> to vector<128xf32>
    %177 = vector.shape_cast %176 : vector<128xf32> to vector<1x128xf32>
    %cst_130 = arith.constant 3.906250e-03 : f32
    %178 = vector.broadcast %cst_130 : f32 to vector<1x128xf32>
    %179 = arith.mulf %177, %178 : vector<1x128xf32>
    %cst_131 = arith.constant 9.99999974E-6 : f32
    %180 = vector.broadcast %cst_131 : f32 to vector<1x128xf32>
    %181 = arith.addf %179, %180 : vector<1x128xf32>
    %182 = math.rsqrt %181 : vector<1x128xf32>
    %183 = vector.broadcast %182 : vector<1x128xf32> to vector<512x128xf32>
    %184 = arith.mulf %174, %183 : vector<512x128xf32>
    %c0_132 = arith.constant 0 : index
    %c32_133 = arith.constant 32 : index
    %c0_134 = arith.constant 0 : index
    %185 = vector.load %arg1[%c0_132, %c32_133, %c0_134] : memref<1x576x128xbf16, #tpu.memory_space<vmem>>, vector<1x512x128xbf16>
    %186 = vector.shape_cast %185 : vector<1x512x128xbf16> to vector<512x128xbf16>
    %187 = arith.extf %186 : vector<512x128xbf16> to vector<512x128xf32>
    %188 = arith.addf %187, %184 : vector<512x128xf32>
    %c0_135 = arith.constant 0 : index
    %c0_136 = arith.constant 0 : index
    %c0_137 = arith.constant 0 : index
    %189 = vector.load %arg4[%c0_135, %c0_136, %c0_137] : memref<1x512x128xf32, #tpu.memory_space<vmem>>, vector<1x512x128xf32>
    %190 = vector.shape_cast %189 : vector<1x512x128xf32> to vector<512x128xf32>
    %191 = vector.shape_cast %188 : vector<512x128xf32> to vector<1x512x128xf32>
    tpu.vector_store %arg4[%c0_135, %c0_136, %c0_137], %191 {strides = array<i32>} : memref<1x512x128xf32, #tpu.memory_space<vmem>>, vector<1x512x128xf32>,
    return
  }
  func.func @transform_0(%arg0: i32) -> (i32, i32, i32) {
    %c0_i32 = arith.constant 0 : i32
    %c0_i32_0 = arith.constant 0 : i32
    %c0_i32_1 = arith.constant 0 : i32
    return %arg0, %c0_i32, %c0_i32_0 : i32, i32, i32
  }
  func.func @transform_1(%arg0: i32) -> (i32, i32, i32) {
    %c0_i32 = arith.constant 0 : i32
    %c0_i32_0 = arith.constant 0 : i32
    %c0_i32_1 = arith.constant 0 : i32
    %c0_i32_2 = arith.constant 0 : i32
    return %c0_i32, %c0_i32_0, %c0_i32_1 : i32, i32, i32
  }
  func.func @transform_2(%arg0: i32) -> (i32, i32, i32) {
    %c0_i32 = arith.constant 0 : i32
    %c0_i32_0 = arith.constant 0 : i32
    %c0_i32_1 = arith.constant 0 : i32
    %c0_i32_2 = arith.constant 0 : i32
    return %c0_i32, %c0_i32_0, %c0_i32_1 : i32, i32, i32
  }
  func.func @transform_3(%arg0: i32) -> (i32, i32, i32) {
    %c0_i32 = arith.constant 0 : i32
    %c0_i32_0 = arith.constant 0 : i32
    %c0_i32_1 = arith.constant 0 : i32
    return %arg0, %c0_i32, %c0_i32_0 : i32, i32, i32
  }
}

</mosaic_0001>

<llo_original>
// kernel: residual_block_pallas.1
$region0: #{residual_block_pallas.1}
  #allocation0 [shape = 'u32[]', space=smem, size = 0x4, offset = 0x4, fixed_abs, tag = 'smem constant byte address 0x4 - core index']
  #allocation1 [shape = 'u32[144,128]{1,0:T(1,128)}', space=vmem, size = 0x12000, scoped, tag = 'internal scratch']
  #allocation2 [shape = 'bf16[576,128]{1,0:T(16,128)(2,1)}', space=vmem, size = 0x24000, scoped, tag = 'scratch operand']
  %s0 = inlined_call_operand.vmem [shape: bf16[2,576,128], index: 0, kind: input, shape index: {}]
  %s1 = inlined_call_operand.vmem [shape: bf16[9,128,128], index: 1, kind: input, shape index: {}]
  %s2 = inlined_call_operand.vmem [shape: bf16[9,128,128], index: 2, kind: input, shape index: {}]
  %s3 = inlined_call_operand.vmem [shape: f32[2,512,128], index: 3, kind: output, shape index: {}]
  %s4 = sld [smem:[#allocation0]]
  $region45: #{residual_block_pallas.1} parent=0
    _
  %s6 = ssub.s32 1, %s4
  %s7 = scalar_select 0, %s6, %s4
  loop: start=0, step=1, limit=4
  $region2: #{residual_block_pallas.1} parent=0 // loop_pre_header
    _
  $region3: #{residual_block_pallas.1} parent=0 // loop_header
    %s9 = sphi 0, %s13
    %p10 = scmp.ge.s32.totalorder %s9, 4
    %s19 = sphi 0, %s21
    %s22 = sphi 0, %s19
    %s23 = sphi 0, %s22
    %s39 = sphi 0, %s23
    %s43 = sphi 0, %s43
    %s45 = sphi 0, %s43
    %s46 = sphi 0, %s45
    %s60 = sphi 0, %s46
    %s64 = sphi 0, %s64
    %s66 = sphi 0, %s64
    %s67 = sphi 0, %s66
    %s81 = sphi 0, %s67
    %s87 = sphi 0, %s89
    %s90 = sphi 0, %s87
    %s91 = sphi 0, %s90
    %s107 = sphi 0, %s91
  $region4: #{residual_block_pallas.1} parent=0 // loop_header_branch
    %12 = sbr.rel (%p10) target = $region8
  $region5: #{residual_block_pallas.1} parent=0 // loop_body
    %s14 = ssub.s32 %s9, 1
    %s15 = ssub.s32 %s9, 2
    %s16 = sadd.s32 %s9, 1
    %s17 = ssub.s32 %s9, %s16
    %p18 = scmp.eq.s32.totalorder %s17, 0
    %s20 = sadd.s32 %s19, 1
    %s21 = scalar_select %p18, %s19, %s20
    %p24 = pneg %p18
    %p25 = scmp.eq.s32.totalorder %s9, 1
    %p26 = por %p24, %p25
    %p27 = scmp.ne.s32.totalorder %s19, %s22
    %p28 = scmp.eq.s32.totalorder %s9, 0
    %p29 = por %p27, %p28
    %p30 = scmp.ne.s32.totalorder %s19, %s22
    %p31 = scmp.eq.s32.totalorder %s14, 1
    %p32 = por %p30, %p31
    %p33 = scmp.ne.s32.totalorder %s22, %s23
    %p34 = scmp.eq.s32.totalorder %s14, 0
    %p35 = por %p33, %p34
    %p36 = scmp.ne.s32.totalorder %s22, %s23
    %p37 = scmp.eq.s32.totalorder %s15, 1
    %p38 = por %p36, %p37
    %p40 = scmp.ne.s32.totalorder %s23, %s39
    %p41 = scmp.eq.s32.totalorder %s15, 0
    %p42 = por %p40, %p41
    %s44 = sadd.s32 %s43, 1
    %p47 = scmp.eq.s32.totalorder %s9, 1
    %p48 = scmp.ne.s32.totalorder %s43, %s45
    %p49 = scmp.eq.s32.totalorder %s9, 0
    %p50 = por %p48, %p49
    %p51 = scmp.ne.s32.totalorder %s43, %s45
    %p52 = scmp.eq.s32.totalorder %s14, 1
    %p53 = por %p51, %p52
    %p54 = scmp.ne.s32.totalorder %s45, %s46
    %p55 = scmp.eq.s32.totalorder %s14, 0
    %p56 = por %p54, %p55
    %p57 = scmp.ne.s32.totalorder %s45, %s46
    %p58 = scmp.eq.s32.totalorder %s15, 1
    %p59 = por %p57, %p58
    %p61 = scmp.ne.s32.totalorder %s46, %s60
    %p62 = scmp.eq.s32.totalorder %s15, 0
    %p63 = por %p61, %p62
    %s65 = sadd.s32 %s64, 1
    %p68 = scmp.eq.s32.totalorder %s9, 1
    %p69 = scmp.ne.s32.totalorder %s64, %s66
    %p70 = scmp.eq.s32.totalorder %s9, 0
    %p71 = por %p69, %p70
    %p72 = scmp.ne.s32.totalorder %s64, %s66
    %p73 = scmp.eq.s32.totalorder %s14, 1
    %p74 = por %p72, %p73
    %p75 = scmp.ne.s32.totalorder %s66, %s67
    %p76 = scmp.eq.s32.totalorder %s14, 0
    %p77 = por %p75, %p76
    %p78 = scmp.ne.s32.totalorder %s66, %s67
    %p79 = scmp.eq.s32.totalorder %s15, 1
    %p80 = por %p78, %p79
    %p82 = scmp.ne.s32.totalorder %s67, %s81
    %p83 = scmp.eq.s32.totalorder %s15, 0
    %p84 = por %p82, %p83
    %s85 = ssub.s32 %s9, %s16
    %p86 = scmp.eq.s32.totalorder %s85, 0
    %s88 = sadd.s32 %s87, 1
    %s89 = scalar_select %p86, %s87, %s88
    %p92 = pneg %p86
    %p93 = scmp.eq.s32.totalorder %s9, 1
    %p94 = por %p92, %p93
    %p95 = scmp.ne.s32.totalorder %s87, %s90
    %p96 = scmp.eq.s32.totalorder %s9, 0
    %p97 = por %p95, %p96
    %p98 = scmp.ne.s32.totalorder %s87, %s90
    %p99 = scmp.eq.s32.totalorder %s14, 1
    %p100 = por %p98, %p99
    %p101 = scmp.ne.s32.totalorder %s90, %s91
    %p102 = scmp.eq.s32.totalorder %s14, 0
    %p103 = por %p101, %p102
    %p104 = scmp.ne.s32.totalorder %s90, %s91
    %p105 = scmp.eq.s32.totalorder %s15, 1
    %p106 = por %p104, %p105
    %p108 = scmp.ne.s32.totalorder %s91, %s107
    %p109 = scmp.eq.s32.totalorder %s15, 0
    %p110 = por %p108, %p109
    %p111 = scmp.le.s32.totalorder 1, %s9
    %p112 = scmp.lt.s32.totalorder %s9, 3
    %p113 = pnand %p111, %p112
    %p114 = pneg %p113
    // Predicated region
    $region9: #{residual_block_pallas.1} parent=5 // pred_check
      _
    $region10: #{residual_block_pallas.1} parent=5 // pred_check_branch
      %116 = sbr.rel (%p113) target = $region12
    $region11: #{residual_block_pallas.1} parent=5 // pred_region
      %s117 = ssub.s32 %s9, 1
      // Predicated region
      $region13: #{residual_block_pallas.1} parent=11 // pred_check
        %p118 = pneg %p56
      $region14: #{residual_block_pallas.1} parent=11 // pred_check_branch
        %120 = sbr.rel (%p118) target = $region16
      $region15: #{residual_block_pallas.1} parent=11 // pred_region
        _
      $region16: #{residual_block_pallas.1} parent=11 // pred_fallthru
        _
      // Predicated region
      $region17: #{residual_block_pallas.1} parent=11 // pred_check
        %p121 = pneg %p77
      $region18: #{residual_block_pallas.1} parent=11 // pred_check_branch
        %123 = sbr.rel (%p121) target = $region20
      $region19: #{residual_block_pallas.1} parent=11 // pred_region
        _
      $region20: #{residual_block_pallas.1} parent=11 // pred_fallthru
        _
    $region12: #{residual_block_pallas.1} parent=5 // pred_fallthru
      _
    %p124 = scmp.lt.s32.totalorder %s9, 2
    // Predicated region
    $region21: #{residual_block_pallas.1} parent=5 // pred_check
      %p125 = pneg %p124
    $region22: #{residual_block_pallas.1} parent=5 // pred_check_branch
      %127 = sbr.rel (%p125) target = $region24
    $region23: #{residual_block_pallas.1} parent=5 // pred_region
      // Predicated region
      $region25: #{residual_block_pallas.1} parent=23 // pred_check
        %p128 = pneg %p29
      $region26: #{residual_block_pallas.1} parent=23 // pred_check_branch
        %130 = sbr.rel (%p128) target = $region28
      $region27: #{residual_block_pallas.1} parent=23 // pred_region
        %p131 = scmp.lt.s32.totalorder %s9, 1
        %s132 = scalar_select %p131, %s9, 1
        %s133 = smul.addr %s132, 72
        %s134 = smul.addr %s133, 4
        %s135 = scalar_lea.vmem %s0, %s134
      $region28: #{residual_block_pallas.1} parent=23 // pred_fallthru
        _
    $region24: #{residual_block_pallas.1} parent=5 // pred_fallthru
      _
    %p136 = scmp.le.s32.totalorder 1, %s9
    %p137 = scmp.lt.s32.totalorder %s9, 3
    %p138 = pnand %p136, %p137
    %p139 = pneg %p138
    // Predicated region
    $region29: #{residual_block_pallas.1} parent=5 // pred_check
      _
    $region30: #{residual_block_pallas.1} parent=5 // pred_check_branch
      %141 = sbr.rel (%p138) target = $region32
    $region31: #{residual_block_pallas.1} parent=5 // pred_region
      %s142 = ssub.s32 %s9, 1
      %p143 = scmp.lt.s32.totalorder %s14, 1
      %s144 = scalar_select %p143, %s14, 1
      %s145 = smul.addr %s144, 72
      %s146 = smul.addr %s145, 4
      %s147 = scalar_lea.vmem %s0, %s146
      %p148 = pneg %p35
      %p149 = pneg %p32
      %p150 = pneg %p56
      %p151 = pneg %p53
      %p152 = pneg %p77
      %p153 = pneg %p74
      %p154 = pneg %p103
      %p155 = pneg %p100
      %p156 = scmp.lt.s32.totalorder %s14, 1
      %s157 = scalar_select %p156, %s14, 1
      %s158 = smul.addr %s157, 64
      %s159 = smul.addr %s158, 8
      %s160 = scalar_lea.vmem %s3, %s159
      %p161 = scmp.lt.s32.totalorder %s14, 1
      %s162 = scalar_select %p161, %s14, 1
      %s163 = smul.addr %s162, 72
      %s164 = smul.addr %s163, 4
      %s165 = scalar_lea.vmem %s0, %s164
      %p166 = scmp.lt.s32.totalorder %s14, 1
      %s167 = scalar_select %p166, %s14, 1
      %s168 = smul.addr %s167, 64
      %s169 = smul.addr %s168, 8
      %s170 = scalar_lea.vmem %s3, %s169
      %v172 = vlaneseq
      %v173 = vshrl.u32 %v172, 7
      %v174 = vadd.s32 %v173, 8
      %v175 = vadd.s32 %v173, 16
      %v176 = vadd.s32 %v173, 24
      %v177 = vadd.s32 %v173, 32
      %v178 = vadd.s32 %v173, 40
      %v179 = vadd.s32 %v173, 48
      %v180 = vadd.s32 %v173, 56
      %v181 = vadd.s32 %v173, 64
      %v182 = vadd.s32 %v173, 72
      %v183 = vadd.s32 %v173, 80
      %v184 = vadd.s32 %v173, 88
      %v185 = vadd.s32 %v173, 96
      %v186 = vadd.s32 %v173, 104
      %v187 = vadd.s32 %v173, 112
      %v188 = vadd.s32 %v173, 120
      %v189 = vadd.s32 %v173, 128
      %v190 = vadd.s32 %v173, 136
      %v191 = vadd.s32 %v173, 144
      %v192 = vadd.s32 %v173, 152
      %v193 = vadd.s32 %v173, 160
      %v194 = vadd.s32 %v173, 168
      %v195 = vadd.s32 %v173, 176
      %v196 = vadd.s32 %v173, 184
      %v197 = vadd.s32 %v173, 192
      %v198 = vadd.s32 %v173, 200
      %v199 = vadd.s32 %v173, 208
      %v200 = vadd.s32 %v173, 216
      %v201 = vadd.s32 %v173, 224
      %v202 = vadd.s32 %v173, 232
      %v203 = vadd.s32 %v173, 240
      %v204 = vadd.s32 %v173, 248
      %v205 = vadd.s32 %v173, 256
      %v206 = vadd.s32 %v173, 264
      %v207 = vadd.s32 %v173, 272
      %v208 = vadd.s32 %v173, 280
      %v209 = vadd.s32 %v173, 288
      %v210 = vadd.s32 %v173, 296
      %v211 = vadd.s32 %v173, 304
      %v212 = vadd.s32 %v173, 312
      %v213 = vadd.s32 %v173, 320
      %v214 = vadd.s32 %v173, 328
      %v215 = vadd.s32 %v173, 336
      %v216 = vadd.s32 %v173, 344
      %v217 = vadd.s32 %v173, 352
      %v218 = vadd.s32 %v173, 360
      %v219 = vadd.s32 %v173, 368
      %v220 = vadd.s32 %v173, 376
      %v221 = vadd.s32 %v173, 384
      %v222 = vadd.s32 %v173, 392
      %v223 = vadd.s32 %v173, 400
      %v224 = vadd.s32 %v173, 408
      %v225 = vadd.s32 %v173, 416
      %v226 = vadd.s32 %v173, 424
      %v227 = vadd.s32 %v173, 432
      %v228 = vadd.s32 %v173, 440
      %v229 = vadd.s32 %v173, 448
      %v230 = vadd.s32 %v173, 456
      %v231 = vadd.s32 %v173, 464
      %v232 = vadd.s32 %v173, 472
      %v233 = vadd.s32 %v173, 480
      %v234 = vadd.s32 %v173, 488
      %v235 = vadd.s32 %v173, 496
      %v236 = vadd.s32 %v173, 504
      %vm237 = vcmp.lt.s32.totalorder %v173, 0
      %v238 = vsub.s32 0, %v173
      %v239 = vsel %vm237, %v238, %v173
      %v240 = vshrl.u32 %v239, 5
      %v241 = vand.u32 %v239, 31
      %v242 = vsub.s32 0, %v241
      %v243 = vsel %vm237, %v242, %v241
      %vm244 = vcmp.lt.s32.totalorder %v174, 0
      %v245 = vsub.s32 0, %v174
      %v246 = vsel %vm244, %v245, %v174
      %v247 = vshrl.u32 %v246, 5
      %v248 = vand.u32 %v246, 31
      %v249 = vsub.s32 0, %v248
      %v250 = vsel %vm244, %v249, %v248
      %vm251 = vcmp.lt.s32.totalorder %v175, 0
      %v252 = vsub.s32 0, %v175
      %v253 = vsel %vm251, %v252, %v175
      %v254 = vshrl.u32 %v253, 5
      %v255 = vand.u32 %v253, 31
      %v256 = vsub.s32 0, %v255
      %v257 = vsel %vm251, %v256, %v255
      %vm258 = vcmp.lt.s32.totalorder %v176, 0
      %v259 = vsub.s32 0, %v176
      %v260 = vsel %vm258, %v259, %v176
      %v261 = vshrl.u32 %v260, 5
      %v262 = vand.u32 %v260, 31
      %v263 = vsub.s32 0, %v262
      %v264 = vsel %vm258, %v263, %v262
      %vm265 = vcmp.lt.s32.totalorder %v177, 0
      %v266 = vsub.s32 0, %v177
      %v267 = vsel %vm265, %v266, %v177
      %v268 = vshrl.u32 %v267, 5
      %v269 = vand.u32 %v267, 31
      %v270 = vsub.s32 0, %v269
      %v271 = vsel %vm265, %v270, %v269
      %vm272 = vcmp.lt.s32.totalorder %v178, 0
      %v273 = vsub.s32 0, %v178
      %v274 = vsel %vm272, %v273, %v178
      %v275 = vshrl.u32 %v274, 5
      %v276 = vand.u32 %v274, 31
      %v277 = vsub.s32 0, %v276
      %v278 = vsel %vm272, %v277, %v276
      %vm279 = vcmp.lt.s32.totalorder %v179, 0
      %v280 = vsub.s32 0, %v179
      %v281 = vsel %vm279, %v280, %v179
      %v282 = vshrl.u32 %v281, 5
      %v283 = vand.u32 %v281, 31
      %v284 = vsub.s32 0, %v283
      %v285 = vsel %vm279, %v284, %v283
      %vm286 = vcmp.lt.s32.totalorder %v180, 0
      %v287 = vsub.s32 0, %v180
      %v288 = vsel %vm286, %v287, %v180
      %v289 = vshrl.u32 %v288, 5
      %v290 = vand.u32 %v288, 31
      %v291 = vsub.s32 0, %v290
      %v292 = vsel %vm286, %v291, %v290
      %vm293 = vcmp.lt.s32.totalorder %v181, 0
      %v294 = vsub.s32 0, %v181
      %v295 = vsel %vm293, %v294, %v181
      %v296 = vshrl.u32 %v295, 5
      %v297 = vand.u32 %v295, 31
      %v298 = vsub.s32 0, %v297
      %v299 = vsel %vm293, %v298, %v297
      %vm300 = vcmp.lt.s32.totalorder %v182, 0
      %v301 = vsub.s32 0, %v182
      %v302 = vsel %vm300, %v301, %v182
      %v303 = vshrl.u32 %v302, 5
      %v304 = vand.u32 %v302, 31
      %v305 = vsub.s32 0, %v304
      %v306 = vsel %vm300, %v305, %v304
      %vm307 = vcmp.lt.s32.totalorder %v183, 0
      %v308 = vsub.s32 0, %v183
      %v309 = vsel %vm307, %v308, %v183
      %v310 = vshrl.u32 %v309, 5
      %v311 = vand.u32 %v309, 31
      %v312 = vsub.s32 0, %v311
      %v313 = vsel %vm307, %v312, %v311
      %vm314 = vcmp.lt.s32.totalorder %v184, 0
      %v315 = vsub.s32 0, %v184
      %v316 = vsel %vm314, %v315, %v184
      %v317 = vshrl.u32 %v316, 5
      %v318 = vand.u32 %v316, 31
      %v319 = vsub.s32 0, %v318
      %v320 = vsel %vm314, %v319, %v318
      %vm321 = vcmp.lt.s32.totalorder %v185, 0
      %v322 = vsub.s32 0, %v185
      %v323 = vsel %vm321, %v322, %v185
      %v324 = vshrl.u32 %v323, 5
      %v325 = vand.u32 %v323, 31
      %v326 = vsub.s32 0, %v325
      %v327 = vsel %vm321, %v326, %v325
      %vm328 = vcmp.lt.s32.totalorder %v186, 0
      %v329 = vsub.s32 0, %v186
      %v330 = vsel %vm328, %v329, %v186
      %v331 = vshrl.u32 %v330, 5
      %v332 = vand.u32 %v330, 31
      %v333 = vsub.s32 0, %v332
      %v334 = vsel %vm328, %v333, %v332
      %vm335 = vcmp.lt.s32.totalorder %v187, 0
      %v336 = vsub.s32 0, %v187
      %v337 = vsel %vm335, %v336, %v187
      %v338 = vshrl.u32 %v337, 5
      %v339 = vand.u32 %v337, 31
      %v340 = vsub.s32 0, %v339
      %v341 = vsel %vm335, %v340, %v339
      %vm342 = vcmp.lt.s32.totalorder %v188, 0
      %v343 = vsub.s32 0, %v188
      %v344 = vsel %vm342, %v343, %v188
      %v345 = vshrl.u32 %v344, 5
      %v346 = vand.u32 %v344, 31
      %v347 = vsub.s32 0, %v346
      %v348 = vsel %vm342, %v347, %v346
      %vm349 = vcmp.lt.s32.totalorder %v189, 0
      %v350 = vsub.s32 0, %v189
      %v351 = vsel %vm349, %v350, %v189
      %v352 = vshrl.u32 %v351, 5
      %v353 = vand.u32 %v351, 31
      %v354 = vsub.s32 0, %v353
      %v355 = vsel %vm349, %v354, %v353
      %vm356 = vcmp.lt.s32.totalorder %v190, 0
      %v357 = vsub.s32 0, %v190
      %v358 = vsel %vm356, %v357, %v190
      %v359 = vshrl.u32 %v358, 5
      %v360 = vand.u32 %v358, 31
      %v361 = vsub.s32 0, %v360
      %v362 = vsel %vm356, %v361, %v360
      %vm363 = vcmp.lt.s32.totalorder %v191, 0
      %v364 = vsub.s32 0, %v191
      %v365 = vsel %vm363, %v364, %v191
      %v366 = vshrl.u32 %v365, 5
      %v367 = vand.u32 %v365, 31
      %v368 = vsub.s32 0, %v367
      %v369 = vsel %vm363, %v368, %v367
      %vm370 = vcmp.lt.s32.totalorder %v192, 0
      %v371 = vsub.s32 0, %v192
      %v372 = vsel %vm370, %v371, %v192
      %v373 = vshrl.u32 %v372, 5
      %v374 = vand.u32 %v372, 31
      %v375 = vsub.s32 0, %v374
      %v376 = vsel %vm370, %v375, %v374
      %vm377 = vcmp.lt.s32.totalorder %v193, 0
      %v378 = vsub.s32 0, %v193
      %v379 = vsel %vm377, %v378, %v193
      %v380 = vshrl.u32 %v379, 5
      %v381 = vand.u32 %v379, 31
      %v382 = vsub.s32 0, %v381
      %v383 = vsel %vm377, %v382, %v381
      %vm384 = vcmp.lt.s32.totalorder %v194, 0
      %v385 = vsub.s32 0, %v194
      %v386 = vsel %vm384, %v385, %v194
      %v387 = vshrl.u32 %v386, 5
      %v388 = vand.u32 %v386, 31
      %v389 = vsub.s32 0, %v388
      %v390 = vsel %vm384, %v389, %v388
      %vm391 = vcmp.lt.s32.totalorder %v195, 0
      %v392 = vsub.s32 0, %v195
      %v393 = vsel %vm391, %v392, %v195
      %v394 = vshrl.u32 %v393, 5
      %v395 = vand.u32 %v393, 31
      %v396 = vsub.s32 0, %v395
      %v397 = vsel %vm391, %v396, %v395
      %vm398 = vcmp.lt.s32.totalorder %v196, 0
      %v399 = vsub.s32 0, %v196
      %v400 = vsel %vm398, %v399, %v196
      %v401 = vshrl.u32 %v400, 5
      %v402 = vand.u32 %v400, 31
      %v403 = vsub.s32 0, %v402
      %v404 = vsel %vm398, %v403, %v402
      %vm405 = vcmp.lt.s32.totalorder %v197, 0
      %v406 = vsub.s32 0, %v197
      %v407 = vsel %vm405, %v406, %v197
      %v408 = vshrl.u32 %v407, 5
      %v409 = vand.u32 %v407, 31
      %v410 = vsub.s32 0, %v409
      %v411 = vsel %vm405, %v410, %v409
      %vm412 = vcmp.lt.s32.totalorder %v198, 0
      %v413 = vsub.s32 0, %v198
      %v414 = vsel %vm412, %v413, %v198
      %v415 = vshrl.u32 %v414, 5
      %v416 = vand.u32 %v414, 31
      %v417 = vsub.s32 0, %v416
      %v418 = vsel %vm412, %v417, %v416
      %vm419 = vcmp.lt.s32.totalorder %v199, 0
      %v420 = vsub.s32 0, %v199
      %v421 = vsel %vm419, %v420, %v199
      %v422 = vshrl.u32 %v421, 5
      %v423 = vand.u32 %v421, 31
      %v424 = vsub.s32 0, %v423
      %v425 = vsel %vm419, %v424, %v423
      %vm426 = vcmp.lt.s32.totalorder %v200, 0
      %v427 = vsub.s32 0, %v200
      %v428 = vsel %vm426, %v427, %v200
      %v429 = vshrl.u32 %v428, 5
      %v430 = vand.u32 %v428, 31
      %v431 = vsub.s32 0, %v430
      %v432 = vsel %vm426, %v431, %v430
      %vm433 = vcmp.lt.s32.totalorder %v201, 0
      %v434 = vsub.s32 0, %v201
      %v435 = vsel %vm433, %v434, %v201
      %v436 = vshrl.u32 %v435, 5
      %v437 = vand.u32 %v435, 31
      %v438 = vsub.s32 0, %v437
      %v439 = vsel %vm433, %v438, %v437
      %vm440 = vcmp.lt.s32.totalorder %v202, 0
      %v441 = vsub.s32 0, %v202
      %v442 = vsel %vm440, %v441, %v202
      %v443 = vshrl.u32 %v442, 5
      %v444 = vand.u32 %v442, 31
      %v445 = vsub.s32 0, %v444
      %v446 = vsel %vm440, %v445, %v444
      %vm447 = vcmp.lt.s32.totalorder %v203, 0
      %v448 = vsub.s32 0, %v203
      %v449 = vsel %vm447, %v448, %v203
      %v450 = vshrl.u32 %v449, 5
      %v451 = vand.u32 %v449, 31
      %v452 = vsub.s32 0, %v451
      %v453 = vsel %vm447, %v452, %v451
      %vm454 = vcmp.lt.s32.totalorder %v204, 0
      %v455 = vsub.s32 0, %v204
      %v456 = vsel %vm454, %v455, %v204
      %v457 = vshrl.u32 %v456, 5
      %v458 = vand.u32 %v456, 31
      %v459 = vsub.s32 0, %v458
      %v460 = vsel %vm454, %v459, %v458
      %vm461 = vcmp.lt.s32.totalorder %v205, 0
      %v462 = vsub.s32 0, %v205
      %v463 = vsel %vm461, %v462, %v205
      %v464 = vshrl.u32 %v463, 5
      %v465 = vand.u32 %v463, 31
      %v466 = vsub.s32 0, %v465
      %v467 = vsel %vm461, %v466, %v465
      %vm468 = vcmp.lt.s32.totalorder %v206, 0
      %v469 = vsub.s32 0, %v206
      %v470 = vsel %vm468, %v469, %v206
      %v471 = vshrl.u32 %v470, 5
      %v472 = vand.u32 %v470, 31
      %v473 = vsub.s32 0, %v472
      %v474 = vsel %vm468, %v473, %v472
      %vm475 = vcmp.lt.s32.totalorder %v207, 0
      %v476 = vsub.s32 0, %v207
      %v477 = vsel %vm475, %v476, %v207
      %v478 = vshrl.u32 %v477, 5
      %v479 = vand.u32 %v477, 31
      %v480 = vsub.s32 0, %v479
      %v481 = vsel %vm475, %v480, %v479
      %vm482 = vcmp.lt.s32.totalorder %v208, 0
      %v483 = vsub.s32 0, %v208
      %v484 = vsel %vm482, %v483, %v208
      %v485 = vshrl.u32 %v484, 5
      %v486 = vand.u32 %v484, 31
      %v487 = vsub.s32 0, %v486
      %v488 = vsel %vm482, %v487, %v486
      %vm489 = vcmp.lt.s32.totalorder %v209, 0
      %v490 = vsub.s32 0, %v209
      %v491 = vsel %vm489, %v490, %v209
      %v492 = vshrl.u32 %v491, 5
      %v493 = vand.u32 %v491, 31
      %v494 = vsub.s32 0, %v493
      %v495 = vsel %vm489, %v494, %v493
      %vm496 = vcmp.lt.s32.totalorder %v210, 0
      %v497 = vsub.s32 0, %v210
      %v498 = vsel %vm496, %v497, %v210
      %v499 = vshrl.u32 %v498, 5
      %v500 = vand.u32 %v498, 31
      %v501 = vsub.s32 0, %v500
      %v502 = vsel %vm496, %v501, %v500
      %vm503 = vcmp.lt.s32.totalorder %v211, 0
      %v504 = vsub.s32 0, %v211
      %v505 = vsel %vm503, %v504, %v211
      %v506 = vshrl.u32 %v505, 5
      %v507 = vand.u32 %v505, 31
      %v508 = vsub.s32 0, %v507
      %v509 = vsel %vm503, %v508, %v507
      %vm510 = vcmp.lt.s32.totalorder %v212, 0
      %v511 = vsub.s32 0, %v212
      %v512 = vsel %vm510, %v511, %v212
      %v513 = vshrl.u32 %v512, 5
      %v514 = vand.u32 %v512, 31
      %v515 = vsub.s32 0, %v514
      %v516 = vsel %vm510, %v515, %v514
      %vm517 = vcmp.lt.s32.totalorder %v213, 0
      %v518 = vsub.s32 0, %v213
      %v519 = vsel %vm517, %v518, %v213
      %v520 = vshrl.u32 %v519, 5
      %v521 = vand.u32 %v519, 31
      %v522 = vsub.s32 0, %v521
      %v523 = vsel %vm517, %v522, %v521
      %vm524 = vcmp.lt.s32.totalorder %v214, 0
      %v525 = vsub.s32 0, %v214
      %v526 = vsel %vm524, %v525, %v214
      %v527 = vshrl.u32 %v526, 5
      %v528 = vand.u32 %v526, 31
      %v529 = vsub.s32 0, %v528
      %v530 = vsel %vm524, %v529, %v528
      %vm531 = vcmp.lt.s32.totalorder %v215, 0
      %v532 = vsub.s32 0, %v215
      %v533 = vsel %vm531, %v532, %v215
      %v534 = vshrl.u32 %v533, 5
      %v535 = vand.u32 %v533, 31
      %v536 = vsub.s32 0, %v535
      %v537 = vsel %vm531, %v536, %v535
      %vm538 = vcmp.lt.s32.totalorder %v216, 0
      %v539 = vsub.s32 0, %v216
      %v540 = vsel %vm538, %v539, %v216
      %v541 = vshrl.u32 %v540, 5
      %v542 = vand.u32 %v540, 31
      %v543 = vsub.s32 0, %v542
      %v544 = vsel %vm538, %v543, %v542
      %vm545 = vcmp.lt.s32.totalorder %v217, 0
      %v546 = vsub.s32 0, %v217
      %v547 = vsel %vm545, %v546, %v217
      %v548 = vshrl.u32 %v547, 5
      %v549 = vand.u32 %v547, 31
      %v550 = vsub.s32 0, %v549
      %v551 = vsel %vm545, %v550, %v549
      %vm552 = vcmp.lt.s32.totalorder %v218, 0
      %v553 = vsub.s32 0, %v218
      %v554 = vsel %vm552, %v553, %v218
      %v555 = vshrl.u32 %v554, 5
      %v556 = vand.u32 %v554, 31
      %v557 = vsub.s32 0, %v556
      %v558 = vsel %vm552, %v557, %v556
      %vm559 = vcmp.lt.s32.totalorder %v219, 0
      %v560 = vsub.s32 0, %v219
      %v561 = vsel %vm559, %v560, %v219
      %v562 = vshrl.u32 %v561, 5
      %v563 = vand.u32 %v561, 31
      %v564 = vsub.s32 0, %v563
      %v565 = vsel %vm559, %v564, %v563
      %vm566 = vcmp.lt.s32.totalorder %v220, 0
      %v567 = vsub.s32 0, %v220
      %v568 = vsel %vm566, %v567, %v220
      %v569 = vshrl.u32 %v568, 5
      %v570 = vand.u32 %v568, 31
      %v571 = vsub.s32 0, %v570
      %v572 = vsel %vm566, %v571, %v570
      %vm573 = vcmp.lt.s32.totalorder %v221, 0
      %v574 = vsub.s32 0, %v221
      %v575 = vsel %vm573, %v574, %v221
      %v576 = vshrl.u32 %v575, 5
      %v577 = vand.u32 %v575, 31
      %v578 = vsub.s32 0, %v577
      %v579 = vsel %vm573, %v578, %v577
      %vm580 = vcmp.lt.s32.totalorder %v222, 0
      %v581 = vsub.s32 0, %v222
      %v582 = vsel %vm580, %v581, %v222
      %v583 = vshrl.u32 %v582, 5
      %v584 = vand.u32 %v582, 31
      %v585 = vsub.s32 0, %v584
      %v586 = vsel %vm580, %v585, %v584
      %vm587 = vcmp.lt.s32.totalorder %v223, 0
      %v588 = vsub.s32 0, %v223
      %v589 = vsel %vm587, %v588, %v223
      %v590 = vshrl.u32 %v589, 5
      %v591 = vand.u32 %v589, 31
      %v592 = vsub.s32 0, %v591
      %v593 = vsel %vm587, %v592, %v591
      %vm594 = vcmp.lt.s32.totalorder %v224, 0
      %v595 = vsub.s32 0, %v224
      %v596 = vsel %vm594, %v595, %v224
      %v597 = vshrl.u32 %v596, 5
      %v598 = vand.u32 %v596, 31
      %v599 = vsub.s32 0, %v598
      %v600 = vsel %vm594, %v599, %v598
      %vm601 = vcmp.lt.s32.totalorder %v225, 0
      %v602 = vsub.s32 0, %v225
      %v603 = vsel %vm601, %v602, %v225
      %v604 = vshrl.u32 %v603, 5
      %v605 = vand.u32 %v603, 31
      %v606 = vsub.s32 0, %v605
      %v607 = vsel %vm601, %v606, %v605
      %vm608 = vcmp.lt.s32.totalorder %v226, 0
      %v609 = vsub.s32 0, %v226
      %v610 = vsel %vm608, %v609, %v226
      %v611 = vshrl.u32 %v610, 5
      %v612 = vand.u32 %v610, 31
      %v613 = vsub.s32 0, %v612
      %v614 = vsel %vm608, %v613, %v612
      %vm615 = vcmp.lt.s32.totalorder %v227, 0
      %v616 = vsub.s32 0, %v227
      %v617 = vsel %vm615, %v616, %v227
      %v618 = vshrl.u32 %v617, 5
      %v619 = vand.u32 %v617, 31
      %v620 = vsub.s32 0, %v619
      %v621 = vsel %vm615, %v620, %v619
      %vm622 = vcmp.lt.s32.totalorder %v228, 0
      %v623 = vsub.s32 0, %v228
      %v624 = vsel %vm622, %v623, %v228
      %v625 = vshrl.u32 %v624, 5
      %v626 = vand.u32 %v624, 31
      %v627 = vsub.s32 0, %v626
      %v628 = vsel %vm622, %v627, %v626
      %vm629 = vcmp.lt.s32.totalorder %v229, 0
      %v630 = vsub.s32 0, %v229
      %v631 = vsel %vm629, %v630, %v229
      %v632 = vshrl.u32 %v631, 5
      %v633 = vand.u32 %v631, 31
      %v634 = vsub.s32 0, %v633
      %v635 = vsel %vm629, %v634, %v633
      %vm636 = vcmp.lt.s32.totalorder %v230, 0
      %v637 = vsub.s32 0, %v230
      %v638 = vsel %vm636, %v637, %v230
      %v639 = vshrl.u32 %v638, 5
      %v640 = vand.u32 %v638, 31
      %v641 = vsub.s32 0, %v640
      %v642 = vsel %vm636, %v641, %v640
      %vm643 = vcmp.lt.s32.totalorder %v231, 0
      %v644 = vsub.s32 0, %v231
      %v645 = vsel %vm643, %v644, %v231
      %v646 = vshrl.u32 %v645, 5
      %v647 = vand.u32 %v645, 31
      %v648 = vsub.s32 0, %v647
      %v649 = vsel %vm643, %v648, %v647
      %vm650 = vcmp.lt.s32.totalorder %v232, 0
      %v651 = vsub.s32 0, %v232
      %v652 = vsel %vm650, %v651, %v232
      %v653 = vshrl.u32 %v652, 5
      %v654 = vand.u32 %v652, 31
      %v655 = vsub.s32 0, %v654
      %v656 = vsel %vm650, %v655, %v654
      %vm657 = vcmp.lt.s32.totalorder %v233, 0
      %v658 = vsub.s32 0, %v233
      %v659 = vsel %vm657, %v658, %v233
      %v660 = vshrl.u32 %v659, 5
      %v661 = vand.u32 %v659, 31
      %v662 = vsub.s32 0, %v661
      %v663 = vsel %vm657, %v662, %v661
      %vm664 = vcmp.lt.s32.totalorder %v234, 0
      %v665 = vsub.s32 0, %v234
      %v666 = vsel %vm664, %v665, %v234
      %v667 = vshrl.u32 %v666, 5
      %v668 = vand.u32 %v666, 31
      %v669 = vsub.s32 0, %v668
      %v670 = vsel %vm664, %v669, %v668
      %vm671 = vcmp.lt.s32.totalorder %v235, 0
      %v672 = vsub.s32 0, %v235
      %v673 = vsel %vm671, %v672, %v235
      %v674 = vshrl.u32 %v673, 5
      %v675 = vand.u32 %v673, 31
      %v676 = vsub.s32 0, %v675
      %v677 = vsel %vm671, %v676, %v675
      %vm678 = vcmp.lt.s32.totalorder %v236, 0
      %v679 = vsub.s32 0, %v236
      %v680 = vsel %vm678, %v679, %v236
      %v681 = vshrl.u32 %v680, 5
      %v682 = vand.u32 %v680, 31
      %v683 = vsub.s32 0, %v682
      %v684 = vsel %vm678, %v683, %v682
      %vm685 = vcmp.ne.s32.totalorder %v243, 0
      %vm686 = vcmp.ne.s32.totalorder %v250, 0
      %vm687 = vcmp.ne.s32.totalorder %v257, 0
      %vm688 = vcmp.ne.s32.totalorder %v264, 0
      %vm689 = vcmp.ne.s32.totalorder %v271, 0
      %vm690 = vcmp.ne.s32.totalorder %v278, 0
      %vm691 = vcmp.ne.s32.totalorder %v285, 0
      %vm692 = vcmp.ne.s32.totalorder %v292, 0
      %vm693 = vcmp.ne.s32.totalorder %v299, 0
      %vm694 = vcmp.ne.s32.totalorder %v306, 0
      %vm695 = vcmp.ne.s32.totalorder %v313, 0
      %vm696 = vcmp.ne.s32.totalorder %v320, 0
      %vm697 = vcmp.ne.s32.totalorder %v327, 0
      %vm698 = vcmp.ne.s32.totalorder %v334, 0
      %vm699 = vcmp.ne.s32.totalorder %v341, 0
      %vm700 = vcmp.ne.s32.totalorder %v348, 0
      %vm701 = vcmp.ne.s32.totalorder %v355, 0
      %vm702 = vcmp.ne.s32.totalorder %v362, 0
      %vm703 = vcmp.ne.s32.totalorder %v369, 0
      %vm704 = vcmp.ne.s32.totalorder %v376, 0
      %vm705 = vcmp.ne.s32.totalorder %v383, 0
      %vm706 = vcmp.ne.s32.totalorder %v390, 0
      %vm707 = vcmp.ne.s32.totalorder %v397, 0
      %vm708 = vcmp.ne.s32.totalorder %v404, 0
      %vm709 = vcmp.ne.s32.totalorder %v411, 0
      %vm710 = vcmp.ne.s32.totalorder %v418, 0
      %vm711 = vcmp.ne.s32.totalorder %v425, 0
      %vm712 = vcmp.ne.s32.totalorder %v432, 0
      %vm713 = vcmp.ne.s32.totalorder %v439, 0
      %vm714 = vcmp.ne.s32.totalorder %v446, 0
      %vm715 = vcmp.ne.s32.totalorder %v453, 0
      %vm716 = vcmp.ne.s32.totalorder %v460, 0
      %vm717 = vcmp.ne.s32.totalorder %v467, 0
      %vm718 = vcmp.ne.s32.totalorder %v474, 0
      %vm719 = vcmp.ne.s32.totalorder %v481, 0
      %vm720 = vcmp.ne.s32.totalorder %v488, 0
      %vm721 = vcmp.ne.s32.totalorder %v495, 0
      %vm722 = vcmp.ne.s32.totalorder %v502, 0
      %vm723 = vcmp.ne.s32.totalorder %v509, 0
      %vm724 = vcmp.ne.s32.totalorder %v516, 0
      %vm725 = vcmp.ne.s32.totalorder %v523, 0
      %vm726 = vcmp.ne.s32.totalorder %v530, 0
      %vm727 = vcmp.ne.s32.totalorder %v537, 0
      %vm728 = vcmp.ne.s32.totalorder %v544, 0
      %vm729 = vcmp.ne.s32.totalorder %v551, 0
      %vm730 = vcmp.ne.s32.totalorder %v558, 0
      %vm731 = vcmp.ne.s32.totalorder %v565, 0
      %vm732 = vcmp.ne.s32.totalorder %v572, 0
      %vm733 = vcmp.ne.s32.totalorder %v579, 0
      %vm734 = vcmp.ne.s32.totalorder %v586, 0
      %vm735 = vcmp.ne.s32.totalorder %v593, 0
      %vm736 = vcmp.ne.s32.totalorder %v600, 0
      %vm737 = vcmp.ne.s32.totalorder %v607, 0
      %vm738 = vcmp.ne.s32.totalorder %v614, 0
      %vm739 = vcmp.ne.s32.totalorder %v621, 0
      %vm740 = vcmp.ne.s32.totalorder %v628, 0
      %vm741 = vcmp.ne.s32.totalorder %v635, 0
      %vm742 = vcmp.ne.s32.totalorder %v642, 0
      %vm743 = vcmp.ne.s32.totalorder %v649, 0
      %vm744 = vcmp.ne.s32.totalorder %v656, 0
      %vm745 = vcmp.ne.s32.totalorder %v663, 0
      %vm746 = vcmp.ne.s32.totalorder %v670, 0
      %vm747 = vcmp.ne.s32.totalorder %v677, 0
      %vm748 = vcmp.ne.s32.totalorder %v684, 0
      %vm749 = vcmp.lt.s32.totalorder %v243, 0
      %vm750 = vcmp.lt.s32.totalorder %v250, 0
      %vm751 = vcmp.lt.s32.totalorder %v257, 0
      %vm752 = vcmp.lt.s32.totalorder %v264, 0
      %vm753 = vcmp.lt.s32.totalorder %v271, 0
      %vm754 = vcmp.lt.s32.totalorder %v278, 0
      %vm755 = vcmp.lt.s32.totalorder %v285, 0
      %vm756 = vcmp.lt.s32.totalorder %v292, 0
      %vm757 = vcmp.lt.s32.totalorder %v299, 0
      %vm758 = vcmp.lt.s32.totalorder %v306, 0
      %vm759 = vcmp.lt.s32.totalorder %v313, 0
      %vm760 = vcmp.lt.s32.totalorder %v320, 0
      %vm761 = vcmp.lt.s32.totalorder %v327, 0
      %vm762 = vcmp.lt.s32.totalorder %v334, 0
      %vm763 = vcmp.lt.s32.totalorder %v341, 0
      %vm764 = vcmp.lt.s32.totalorder %v348, 0
      %vm765 = vcmp.lt.s32.totalorder %v355, 0
      %vm766 = vcmp.lt.s32.totalorder %v362, 0
      %vm767 = vcmp.lt.s32.totalorder %v369, 0
      %vm768 = vcmp.lt.s32.totalorder %v376, 0
      %vm769 = vcmp.lt.s32.totalorder %v383, 0
      %vm770 = vcmp.lt.s32.totalorder %v390, 0
      %vm771 = vcmp.lt.s32.totalorder %v397, 0
      %vm772 = vcmp.lt.s32.totalorder %v404, 0
      %vm773 = vcmp.lt.s32.totalorder %v411, 0
      %vm774 = vcmp.lt.s32.totalorder %v418, 0
      %vm775 = vcmp.lt.s32.totalorder %v425, 0
      %vm776 = vcmp.lt.s32.totalorder %v432, 0
      %vm777 = vcmp.lt.s32.totalorder %v439, 0
      %vm778 = vcmp.lt.s32.totalorder %v446, 0
      %vm779 = vcmp.lt.s32.totalorder %v453, 0
      %vm780 = vcmp.lt.s32.totalorder %v460, 0
      %vm781 = vcmp.lt.s32.totalorder %v467, 0
      %vm782 = vcmp.lt.s32.totalorder %v474, 0
      %vm783 = vcmp.lt.s32.totalorder %v481, 0
      %vm784 = vcmp.lt.s32.totalorder %v488, 0
      %vm785 = vcmp.lt.s32.totalorder %v495, 0
      %vm786 = vcmp.lt.s32.totalorder %v502, 0
      %vm787 = vcmp.lt.s32.totalorder %v509, 0
      %vm788 = vcmp.lt.s32.totalorder %v516, 0
      %vm789 = vcmp.lt.s32.totalorder %v523, 0
      %vm790 = vcmp.lt.s32.totalorder %v530, 0
      %vm791 = vcmp.lt.s32.totalorder %v537, 0
      %vm792 = vcmp.lt.s32.totalorder %v544, 0
      %vm793 = vcmp.lt.s32.totalorder %v551, 0
      %vm794 = vcmp.lt.s32.totalorder %v558, 0
      %vm795 = vcmp.lt.s32.totalorder %v565, 0
      %vm796 = vcmp.lt.s32.totalorder %v572, 0
      %vm797 = vcmp.lt.s32.totalorder %v579, 0
      %vm798 = vcmp.lt.s32.totalorder %v586, 0
      %vm799 = vcmp.lt.s32.totalorder %v593, 0
      %vm800 = vcmp.lt.s32.totalorder %v600, 0
      %vm801 = vcmp.lt.s32.totalorder %v607, 0
      %vm802 = vcmp.lt.s32.totalorder %v614, 0
      %vm803 = vcmp.lt.s32.totalorder %v621, 0
      %vm804 = vcmp.lt.s32.totalorder %v628, 0
      %vm805 = vcmp.lt.s32.totalorder %v635, 0
      %vm806 = vcmp.lt.s32.totalorder %v642, 0
      %vm807 = vcmp.lt.s32.totalorder %v649, 0
      %vm808 = vcmp.lt.s32.totalorder %v656, 0
      %vm809 = vcmp.lt.s32.totalorder %v663, 0
      %vm810 = vcmp.lt.s32.totalorder %v670, 0
      %vm811 = vcmp.lt.s32.totalorder %v677, 0
      %vm812 = vcmp.lt.s32.totalorder %v684, 0
      %vm813 = vmand %vm749, %vm685
      %vm814 = vmand %vm750, %vm686
      %vm815 = vmand %vm751, %vm687
      %vm816 = vmand %vm752, %vm688
      %vm817 = vmand %vm753, %vm689
      %vm818 = vmand %vm754, %vm690
      %vm819 = vmand %vm755, %vm691
      %vm820 = vmand %vm756, %vm692
      %vm821 = vmand %vm757, %vm693
      %vm822 = vmand %vm758, %vm694
      %vm823 = vmand %vm759, %vm695
      %vm824 = vmand %vm760, %vm696
      %vm825 = vmand %vm761, %vm697
      %vm826 = vmand %vm762, %vm698
      %vm827 = vmand %vm763, %vm699
      %vm828 = vmand %vm764, %vm700
      %vm829 = vmand %vm765, %vm701
      %vm830 = vmand %vm766, %vm702
      %vm831 = vmand %vm767, %vm703
      %vm832 = vmand %vm768, %vm704
      %vm833 = vmand %vm769, %vm705
      %vm834 = vmand %vm770, %vm706
      %vm835 = vmand %vm771, %vm707
      %vm836 = vmand %vm772, %vm708
      %vm837 = vmand %vm773, %vm709
      %vm838 = vmand %vm774, %vm710
      %vm839 = vmand %vm775, %vm711
      %vm840 = vmand %vm776, %vm712
      %vm841 = vmand %vm777, %vm713
      %vm842 = vmand %vm778, %vm714
      %vm843 = vmand %vm779, %vm715
      %vm844 = vmand %vm780, %vm716
      %vm845 = vmand %vm781, %vm717
      %vm846 = vmand %vm782, %vm718
      %vm847 = vmand %vm783, %vm719
      %vm848 = vmand %vm784, %vm720
      %vm849 = vmand %vm785, %vm721
      %vm850 = vmand %vm786, %vm722
      %vm851 = vmand %vm787, %vm723
      %vm852 = vmand %vm788, %vm724
      %vm853 = vmand %vm789, %vm725
      %vm854 = vmand %vm790, %vm726
      %vm855 = vmand %vm791, %vm727
      %vm856 = vmand %vm792, %vm728
      %vm857 = vmand %vm793, %vm729
      %vm858 = vmand %vm794, %vm730
      %vm859 = vmand %vm795, %vm731
      %vm860 = vmand %vm796, %vm732
      %vm861 = vmand %vm797, %vm733
      %vm862 = vmand %vm798, %vm734
      %vm863 = vmand %vm799, %vm735
      %vm864 = vmand %vm800, %vm736
      %vm865 = vmand %vm801, %vm737
      %vm866 = vmand %vm802, %vm738
      %vm867 = vmand %vm803, %vm739
      %vm868 = vmand %vm804, %vm740
      %vm869 = vmand %vm805, %vm741
      %vm870 = vmand %vm806, %vm742
      %vm871 = vmand %vm807, %vm743
      %vm872 = vmand %vm808, %vm744
      %vm873 = vmand %vm809, %vm745
      %vm874 = vmand %vm810, %vm746
      %vm875 = vmand %vm811, %vm747
      %vm876 = vmand %vm812, %vm748
      %v877 = vadd.s32 %v243, 32
      %v878 = vadd.s32 %v250, 32
      %v879 = vadd.s32 %v257, 32
      %v880 = vadd.s32 %v264, 32
      %v881 = vadd.s32 %v271, 32
      %v882 = vadd.s32 %v278, 32
      %v883 = vadd.s32 %v285, 32
      %v884 = vadd.s32 %v292, 32
      %v885 = vadd.s32 %v299, 32
      %v886 = vadd.s32 %v306, 32
      %v887 = vadd.s32 %v313, 32
      %v888 = vadd.s32 %v320, 32
      %v889 = vadd.s32 %v327, 32
      %v890 = vadd.s32 %v334, 32
      %v891 = vadd.s32 %v341, 32
      %v892 = vadd.s32 %v348, 32
      %v893 = vadd.s32 %v355, 32
      %v894 = vadd.s32 %v362, 32
      %v895 = vadd.s32 %v369, 32
      %v896 = vadd.s32 %v376, 32
      %v897 = vadd.s32 %v383, 32
      %v898 = vadd.s32 %v390, 32
      %v899 = vadd.s32 %v397, 32
      %v900 = vadd.s32 %v404, 32
      %v901 = vadd.s32 %v411, 32
      %v902 = vadd.s32 %v418, 32
      %v903 = vadd.s32 %v425, 32
      %v904 = vadd.s32 %v432, 32
      %v905 = vadd.s32 %v439, 32
      %v906 = vadd.s32 %v446, 32
      %v907 = vadd.s32 %v453, 32
      %v908 = vadd.s32 %v460, 32
      %v909 = vadd.s32 %v467, 32
      %v910 = vadd.s32 %v474, 32
      %v911 = vadd.s32 %v481, 32
      %v912 = vadd.s32 %v488, 32
      %v913 = vadd.s32 %v495, 32
      %v914 = vadd.s32 %v502, 32
      %v915 = vadd.s32 %v509, 32
      %v916 = vadd.s32 %v516, 32
      %v917 = vadd.s32 %v523, 32
      %v918 = vadd.s32 %v530, 32
      %v919 = vadd.s32 %v537, 32
      %v920 = vadd.s32 %v544, 32
      %v921 = vadd.s32 %v551, 32
      %v922 = vadd.s32 %v558, 32
      %v923 = vadd.s32 %v565, 32
      %v924 = vadd.s32 %v572, 32
      %v925 = vadd.s32 %v579, 32
      %v926 = vadd.s32 %v586, 32
      %v927 = vadd.s32 %v593, 32
      %v928 = vadd.s32 %v600, 32
      %v929 = vadd.s32 %v607, 32
      %v930 = vadd.s32 %v614, 32
      %v931 = vadd.s32 %v621, 32
      %v932 = vadd.s32 %v628, 32
      %v933 = vadd.s32 %v635, 32
      %v934 = vadd.s32 %v642, 32
      %v935 = vadd.s32 %v649, 32
      %v936 = vadd.s32 %v656, 32
      %v937 = vadd.s32 %v663, 32
      %v938 = vadd.s32 %v670, 32
      %v939 = vadd.s32 %v677, 32
      %v940 = vadd.s32 %v684, 32
      %v941 = vsel %vm813, %v877, %v243
      %v942 = vsel %vm814, %v878, %v250
      %v943 = vsel %vm815, %v879, %v257
      %v944 = vsel %vm816, %v880, %v264
      %v945 = vsel %vm817, %v881, %v271
      %v946 = vsel %vm818, %v882, %v278
      %v947 = vsel %vm819, %v883, %v285
      %v948 = vsel %vm820, %v884, %v292
      %v949 = vsel %vm821, %v885, %v299
      %v950 = vsel %vm822, %v886, %v306
      %v951 = vsel %vm823, %v887, %v313
      %v952 = vsel %vm824, %v888, %v320
      %v953 = vsel %vm825, %v889, %v327
      %v954 = vsel %vm826, %v890, %v334
      %v955 = vsel %vm827, %v891, %v341
      %v956 = vsel %vm828, %v892, %v348
      %v957 = vsel %vm829, %v893, %v355
      %v958 = vsel %vm830, %v894, %v362
      %v959 = vsel %vm831, %v895, %v369
      %v960 = vsel %vm832, %v896, %v376
      %v961 = vsel %vm833, %v897, %v383
      %v962 = vsel %vm834, %v898, %v390
      %v963 = vsel %vm835, %v899, %v397
      %v964 = vsel %vm836, %v900, %v404
      %v965 = vsel %vm837, %v901, %v411
      %v966 = vsel %vm838, %v902, %v418
      %v967 = vsel %vm839, %v903, %v425
      %v968 = vsel %vm840, %v904, %v432
      %v969 = vsel %vm841, %v905, %v439
      %v970 = vsel %vm842, %v906, %v446
      %v971 = vsel %vm843, %v907, %v453
      %v972 = vsel %vm844, %v908, %v460
      %v973 = vsel %vm845, %v909, %v467
      %v974 = vsel %vm846, %v910, %v474
      %v975 = vsel %vm847, %v911, %v481
      %v976 = vsel %vm848, %v912, %v488
      %v977 = vsel %vm849, %v913, %v495
      %v978 = vsel %vm850, %v914, %v502
      %v979 = vsel %vm851, %v915, %v509
      %v980 = vsel %vm852, %v916, %v516
      %v981 = vsel %vm853, %v917, %v523
      %v982 = vsel %vm854, %v918, %v530
      %v983 = vsel %vm855, %v919, %v537
      %v984 = vsel %vm856, %v920, %v544
      %v985 = vsel %vm857, %v921, %v551
      %v986 = vsel %vm858, %v922, %v558
      %v987 = vsel %vm859, %v923, %v565
      %v988 = vsel %vm860, %v924, %v572
      %v989 = vsel %vm861, %v925, %v579
      %v990 = vsel %vm862, %v926, %v586
      %v991 = vsel %vm863, %v927, %v593
      %v992 = vsel %vm864, %v928, %v600
      %v993 = vsel %vm865, %v929, %v607
      %v994 = vsel %vm866, %v930, %v614
      %v995 = vsel %vm867, %v931, %v621
      %v996 = vsel %vm868, %v932, %v628
      %v997 = vsel %vm869, %v933, %v635
      %v998 = vsel %vm870, %v934, %v642
      %v999 = vsel %vm871, %v935, %v649
      %v1000 = vsel %vm872, %v936, %v656
      %v1001 = vsel %vm873, %v937, %v663
      %v1002 = vsel %vm874, %v938, %v670
      %v1003 = vsel %vm875, %v939, %v677
      %v1004 = vsel %vm876, %v940, %v684
      %vm1005 = vcmp.ge.s32.totalorder %v941, 1
      %vm1006 = vcmp.ge.s32.totalorder %v942, 1
      %vm1007 = vcmp.ge.s32.totalorder %v943, 1
      %vm1008 = vcmp.ge.s32.totalorder %v944, 1
      %vm1009 = vcmp.ge.s32.totalorder %v945, 1
      %vm1010 = vcmp.ge.s32.totalorder %v946, 1
      %vm1011 = vcmp.ge.s32.totalorder %v947, 1
      %vm1012 = vcmp.ge.s32.totalorder %v948, 1
      %vm1013 = vcmp.ge.s32.totalorder %v949, 1
      %vm1014 = vcmp.ge.s32.totalorder %v950, 1
      %vm1015 = vcmp.ge.s32.totalorder %v951, 1
      %vm1016 = vcmp.ge.s32.totalorder %v952, 1
      %vm1017 = vcmp.ge.s32.totalorder %v953, 1
      %vm1018 = vcmp.ge.s32.totalorder %v954, 1
      %vm1019 = vcmp.ge.s32.totalorder %v955, 1
      %vm1020 = vcmp.ge.s32.totalorder %v956, 1
      %vm1021 = vcmp.ge.s32.totalorder %v957, 1
      %vm1022 = vcmp.ge.s32.totalorder %v958, 1
      %vm1023 = vcmp.ge.s32.totalorder %v959, 1
      %vm1024 = vcmp.ge.s32.totalorder %v960, 1
      %vm1025 = vcmp.ge.s32.totalorder %v961, 1
      %vm1026 = vcmp.ge.s32.totalorder %v962, 1
      %vm1027 = vcmp.ge.s32.totalorder %v963, 1
      %vm1028 = vcmp.ge.s32.totalorder %v964, 1
      %vm1029 = vcmp.ge.s32.totalorder %v965, 1
      %vm1030 = vcmp.ge.s32.totalorder %v966, 1
      %vm1031 = vcmp.ge.s32.totalorder %v967, 1
      %vm1032 = vcmp.ge.s32.totalorder %v968, 1
      %vm1033 = vcmp.ge.s32.totalorder %v969, 1
      %vm1034 = vcmp.ge.s32.totalorder %v970, 1
      %vm1035 = vcmp.ge.s32.totalorder %v971, 1
      %vm1036 = vcmp.ge.s32.totalorder %v972, 1
      %vm1037 = vcmp.ge.s32.totalorder %v973, 1
      %vm1038 = vcmp.ge.s32.totalorder %v974, 1
      %vm1039 = vcmp.ge.s32.totalorder %v975, 1
      %vm1040 = vcmp.ge.s32.totalorder %v976, 1
      %vm1041 = vcmp.ge.s32.totalorder %v977, 1
      %vm1042 = vcmp.ge.s32.totalorder %v978, 1
      %vm1043 = vcmp.ge.s32.totalorder %v979, 1
      %vm1044 = vcmp.ge.s32.totalorder %v980, 1
      %vm1045 = vcmp.ge.s32.totalorder %v981, 1
      %vm1046 = vcmp.ge.s32.totalorder %v982, 1
      %vm1047 = vcmp.ge.s32.totalorder %v983, 1
      %vm1048 = vcmp.ge.s32.totalorder %v984, 1
      %vm1049 = vcmp.ge.s32.totalorder %v985, 1
      %vm1050 = vcmp.ge.s32.totalorder %v986, 1
      %vm1051 = vcmp.ge.s32.totalorder %v987, 1
      %vm1052 = vcmp.ge.s32.totalorder %v988, 1
      %vm1053 = vcmp.ge.s32.totalorder %v989, 1
      %vm1054 = vcmp.ge.s32.totalorder %v990, 1
      %vm1055 = vcmp.ge.s32.totalorder %v991, 1
      %vm1056 = vcmp.ge.s32.totalorder %v992, 1
      %vm1057 = vcmp.ge.s32.totalorder %v993, 1
      %vm1058 = vcmp.ge.s32.totalorder %v994, 1
      %vm1059 = vcmp.ge.s32.totalorder %v995, 1
      %vm1060 = vcmp.ge.s32.totalorder %v996, 1
      %vm1061 = vcmp.ge.s32.totalorder %v997, 1
      %vm1062 = vcmp.ge.s32.totalorder %v998, 1
      %vm1063 = vcmp.ge.s32.totalorder %v999, 1
      %vm1064 = vcmp.ge.s32.totalorder %v1000, 1
      %vm1065 = vcmp.ge.s32.totalorder %v1001, 1
      %vm1066 = vcmp.ge.s32.totalorder %v1002, 1
      %vm1067 = vcmp.ge.s32.totalorder %v1003, 1
      %vm1068 = vcmp.ge.s32.totalorder %v1004, 1
      %vm1069 = vcmp.le.s32.totalorder %v941, 16
      %vm1070 = vcmp.le.s32.totalorder %v942, 16
      %vm1071 = vcmp.le.s32.totalorder %v943, 16
      %vm1072 = vcmp.le.s32.totalorder %v944, 16
      %vm1073 = vcmp.le.s32.totalorder %v945, 16
      %vm1074 = vcmp.le.s32.totalorder %v946, 16
      %vm1075 = vcmp.le.s32.totalorder %v947, 16
      %vm1076 = vcmp.le.s32.totalorder %v948, 16
      %vm1077 = vcmp.le.s32.totalorder %v949, 16
      %vm1078 = vcmp.le.s32.totalorder %v950, 16
      %vm1079 = vcmp.le.s32.totalorder %v951, 16
      %vm1080 = vcmp.le.s32.totalorder %v952, 16
      %vm1081 = vcmp.le.s32.totalorder %v953, 16
      %vm1082 = vcmp.le.s32.totalorder %v954, 16
      %vm1083 = vcmp.le.s32.totalorder %v955, 16
      %vm1084 = vcmp.le.s32.totalorder %v956, 16
      %vm1085 = vcmp.le.s32.totalorder %v957, 16
      %vm1086 = vcmp.le.s32.totalorder %v958, 16
      %vm1087 = vcmp.le.s32.totalorder %v959, 16
      %vm1088 = vcmp.le.s32.totalorder %v960, 16
      %vm1089 = vcmp.le.s32.totalorder %v961, 16
      %vm1090 = vcmp.le.s32.totalorder %v962, 16
      %vm1091 = vcmp.le.s32.totalorder %v963, 16
      %vm1092 = vcmp.le.s32.totalorder %v964, 16
      %vm1093 = vcmp.le.s32.totalorder %v965, 16
      %vm1094 = vcmp.le.s32.totalorder %v966, 16
      %vm1095 = vcmp.le.s32.totalorder %v967, 16
      %vm1096 = vcmp.le.s32.totalorder %v968, 16
      %vm1097 = vcmp.le.s32.totalorder %v969, 16
      %vm1098 = vcmp.le.s32.totalorder %v970, 16
      %vm1099 = vcmp.le.s32.totalorder %v971, 16
      %vm1100 = vcmp.le.s32.totalorder %v972, 16
      %vm1101 = vcmp.le.s32.totalorder %v973, 16
      %vm1102 = vcmp.le.s32.totalorder %v974, 16
      %vm1103 = vcmp.le.s32.totalorder %v975, 16
      %vm1104 = vcmp.le.s32.totalorder %v976, 16
      %vm1105 = vcmp.le.s32.totalorder %v977, 16
      %vm1106 = vcmp.le.s32.totalorder %v978, 16
      %vm1107 = vcmp.le.s32.totalorder %v979, 16
      %vm1108 = vcmp.le.s32.totalorder %v980, 16
      %vm1109 = vcmp.le.s32.totalorder %v981, 16
      %vm1110 = vcmp.le.s32.totalorder %v982, 16
      %vm1111 = vcmp.le.s32.totalorder %v983, 16
      %vm1112 = vcmp.le.s32.totalorder %v984, 16
      %vm1113 = vcmp.le.s32.totalorder %v985, 16
      %vm1114 = vcmp.le.s32.totalorder %v986, 16
      %vm1115 = vcmp.le.s32.totalorder %v987, 16
      %vm1116 = vcmp.le.s32.totalorder %v988, 16
      %vm1117 = vcmp.le.s32.totalorder %v989, 16
      %vm1118 = vcmp.le.s32.totalorder %v990, 16
      %vm1119 = vcmp.le.s32.totalorder %v991, 16
      %vm1120 = vcmp.le.s32.totalorder %v992, 16
      %vm1121 = vcmp.le.s32.totalorder %v993, 16
      %vm1122 = vcmp.le.s32.totalorder %v994, 16
      %vm1123 = vcmp.le.s32.totalorder %v995, 16
      %vm1124 = vcmp.le.s32.totalorder %v996, 16
      %vm1125 = vcmp.le.s32.totalorder %v997, 16
      %vm1126 = vcmp.le.s32.totalorder %v998, 16
      %vm1127 = vcmp.le.s32.totalorder %v999, 16
      %vm1128 = vcmp.le.s32.totalorder %v1000, 16
      %vm1129 = vcmp.le.s32.totalorder %v1001, 16
      %vm1130 = vcmp.le.s32.totalorder %v1002, 16
      %vm1131 = vcmp.le.s32.totalorder %v1003, 16
      %vm1132 = vcmp.le.s32.totalorder %v1004, 16
      %vm1133 = vmand %vm1005, %vm1069
      %vm1134 = vmand %vm1006, %vm1070
      %vm1135 = vmand %vm1007, %vm1071
      %vm1136 = vmand %vm1008, %vm1072
      %vm1137 = vmand %vm1009, %vm1073
      %vm1138 = vmand %vm1010, %vm1074
      %vm1139 = vmand %vm1011, %vm1075
      %vm1140 = vmand %vm1012, %vm1076
      %vm1141 = vmand %vm1013, %vm1077
      %vm1142 = vmand %vm1014, %vm1078
      %vm1143 = vmand %vm1015, %vm1079
      %vm1144 = vmand %vm1016, %vm1080
      %vm1145 = vmand %vm1017, %vm1081
      %vm1146 = vmand %vm1018, %vm1082
      %vm1147 = vmand %vm1019, %vm1083
      %vm1148 = vmand %vm1020, %vm1084
      %vm1149 = vmand %vm1021, %vm1085
      %vm1150 = vmand %vm1022, %vm1086
      %vm1151 = vmand %vm1023, %vm1087
      %vm1152 = vmand %vm1024, %vm1088
      %vm1153 = vmand %vm1025, %vm1089
      %vm1154 = vmand %vm1026, %vm1090
      %vm1155 = vmand %vm1027, %vm1091
      %vm1156 = vmand %vm1028, %vm1092
      %vm1157 = vmand %vm1029, %vm1093
      %vm1158 = vmand %vm1030, %vm1094
      %vm1159 = vmand %vm1031, %vm1095
      %vm1160 = vmand %vm1032, %vm1096
      %vm1161 = vmand %vm1033, %vm1097
      %vm1162 = vmand %vm1034, %vm1098
      %vm1163 = vmand %vm1035, %vm1099
      %vm1164 = vmand %vm1036, %vm1100
      %vm1165 = vmand %vm1037, %vm1101
      %vm1166 = vmand %vm1038, %vm1102
      %vm1167 = vmand %vm1039, %vm1103
      %vm1168 = vmand %vm1040, %vm1104
      %vm1169 = vmand %vm1041, %vm1105
      %vm1170 = vmand %vm1042, %vm1106
      %vm1171 = vmand %vm1043, %vm1107
      %vm1172 = vmand %vm1044, %vm1108
      %vm1173 = vmand %vm1045, %vm1109
      %vm1174 = vmand %vm1046, %vm1110
      %vm1175 = vmand %vm1047, %vm1111
      %vm1176 = vmand %vm1048, %vm1112
      %vm1177 = vmand %vm1049, %vm1113
      %vm1178 = vmand %vm1050, %vm1114
      %vm1179 = vmand %vm1051, %vm1115
      %vm1180 = vmand %vm1052, %vm1116
      %vm1181 = vmand %vm1053, %vm1117
      %vm1182 = vmand %vm1054, %vm1118
      %vm1183 = vmand %vm1055, %vm1119
      %vm1184 = vmand %vm1056, %vm1120
      %vm1185 = vmand %vm1057, %vm1121
      %vm1186 = vmand %vm1058, %vm1122
      %vm1187 = vmand %vm1059, %vm1123
      %vm1188 = vmand %vm1060, %vm1124
      %vm1189 = vmand %vm1061, %vm1125
      %vm1190 = vmand %vm1062, %vm1126
      %vm1191 = vmand %vm1063, %vm1127
      %vm1192 = vmand %vm1064, %vm1128
      %vm1193 = vmand %vm1065, %vm1129
      %vm1194 = vmand %vm1066, %vm1130
      %vm1195 = vmand %vm1067, %vm1131
      %vm1196 = vmand %vm1068, %vm1132
      %v1197 = vsel %vm1133, 1, 0
      %v1198 = vsel %vm1134, 1, 0
      %v1199 = vsel %vm1135, 1, 0
      %v1200 = vsel %vm1136, 1, 0
      %v1201 = vsel %vm1137, 1, 0
      %v1202 = vsel %vm1138, 1, 0
      %v1203 = vsel %vm1139, 1, 0
      %v1204 = vsel %vm1140, 1, 0
      %v1205 = vsel %vm1141, 1, 0
      %v1206 = vsel %vm1142, 1, 0
      %v1207 = vsel %vm1143, 1, 0
      %v1208 = vsel %vm1144, 1, 0
      %v1209 = vsel %vm1145, 1, 0
      %v1210 = vsel %vm1146, 1, 0
      %v1211 = vsel %vm1147, 1, 0
      %v1212 = vsel %vm1148, 1, 0
      %v1213 = vsel %vm1149, 1, 0
      %v1214 = vsel %vm1150, 1, 0
      %v1215 = vsel %vm1151, 1, 0
      %v1216 = vsel %vm1152, 1, 0
      %v1217 = vsel %vm1153, 1, 0
      %v1218 = vsel %vm1154, 1, 0
      %v1219 = vsel %vm1155, 1, 0
      %v1220 = vsel %vm1156, 1, 0
      %v1221 = vsel %vm1157, 1, 0
      %v1222 = vsel %vm1158, 1, 0
      %v1223 = vsel %vm1159, 1, 0
      %v1224 = vsel %vm1160, 1, 0
      %v1225 = vsel %vm1161, 1, 0
      %v1226 = vsel %vm1162, 1, 0
      %v1227 = vsel %vm1163, 1, 0
      %v1228 = vsel %vm1164, 1, 0
      %v1229 = vsel %vm1165, 1, 0
      %v1230 = vsel %vm1166, 1, 0
      %v1231 = vsel %vm1167, 1, 0
      %v1232 = vsel %vm1168, 1, 0
      %v1233 = vsel %vm1169, 1, 0
      %v1234 = vsel %vm1170, 1, 0
      %v1235 = vsel %vm1171, 1, 0
      %v1236 = vsel %vm1172, 1, 0
      %v1237 = vsel %vm1173, 1, 0
      %v1238 = vsel %vm1174, 1, 0
      %v1239 = vsel %vm1175, 1, 0
      %v1240 = vsel %vm1176, 1, 0
      %v1241 = vsel %vm1177, 1, 0
      %v1242 = vsel %vm1178, 1, 0
      %v1243 = vsel %vm1179, 1, 0
      %v1244 = vsel %vm1180, 1, 0
      %v1245 = vsel %vm1181, 1, 0
      %v1246 = vsel %vm1182, 1, 0
      %v1247 = vsel %vm1183, 1, 0
      %v1248 = vsel %vm1184, 1, 0
      %v1249 = vsel %vm1185, 1, 0
      %v1250 = vsel %vm1186, 1, 0
      %v1251 = vsel %vm1187, 1, 0
      %v1252 = vsel %vm1188, 1, 0
      %v1253 = vsel %vm1189, 1, 0
      %v1254 = vsel %vm1190, 1, 0
      %v1255 = vsel %vm1191, 1, 0
      %v1256 = vsel %vm1192, 1, 0
      %v1257 = vsel %vm1193, 1, 0
      %v1258 = vsel %vm1194, 1, 0
      %v1259 = vsel %vm1195, 1, 0
      %v1260 = vsel %vm1196, 1, 0
      %v1261 = vcvt.s32.f32 %v1197
      %v1262 = vcvt.s32.f32 %v1198
      %v1263 = vcvt.s32.f32 %v1199
      %v1264 = vcvt.s32.f32 %v1200
      %v1265 = vcvt.s32.f32 %v1201
      %v1266 = vcvt.s32.f32 %v1202
      %v1267 = vcvt.s32.f32 %v1203
      %v1268 = vcvt.s32.f32 %v1204
      %v1269 = vcvt.s32.f32 %v1205
      %v1270 = vcvt.s32.f32 %v1206
      %v1271 = vcvt.s32.f32 %v1207
      %v1272 = vcvt.s32.f32 %v1208
      %v1273 = vcvt.s32.f32 %v1209
      %v1274 = vcvt.s32.f32 %v1210
      %v1275 = vcvt.s32.f32 %v1211
      %v1276 = vcvt.s32.f32 %v1212
      %v1277 = vcvt.s32.f32 %v1213
      %v1278 = vcvt.s32.f32 %v1214
      %v1279 = vcvt.s32.f32 %v1215
      %v1280 = vcvt.s32.f32 %v1216
      %v1281 = vcvt.s32.f32 %v1217
      %v1282 = vcvt.s32.f32 %v1218
      %v1283 = vcvt.s32.f32 %v1219
      %v1284 = vcvt.s32.f32 %v1220
      %v1285 = vcvt.s32.f32 %v1221
      %v1286 = vcvt.s32.f32 %v1222
      %v1287 = vcvt.s32.f32 %v1223
      %v1288 = vcvt.s32.f32 %v1224
      %v1289 = vcvt.s32.f32 %v1225
      %v1290 = vcvt.s32.f32 %v1226
      %v1291 = vcvt.s32.f32 %v1227
      %v1292 = vcvt.s32.f32 %v1228
      %v1293 = vcvt.s32.f32 %v1229
      %v1294 = vcvt.s32.f32 %v1230
      %v1295 = vcvt.s32.f32 %v1231
      %v1296 = vcvt.s32.f32 %v1232
      %v1297 = vcvt.s32.f32 %v1233
      %v1298 = vcvt.s32.f32 %v1234
      %v1299 = vcvt.s32.f32 %v1235
      %v1300 = vcvt.s32.f32 %v1236
      %v1301 = vcvt.s32.f32 %v1237
      %v1302 = vcvt.s32.f32 %v1238
      %v1303 = vcvt.s32.f32 %v1239
      %v1304 = vcvt.s32.f32 %v1240
      %v1305 = vcvt.s32.f32 %v1241
      %v1306 = vcvt.s32.f32 %v1242
      %v1307 = vcvt.s32.f32 %v1243
      %v1308 = vcvt.s32.f32 %v1244
      %v1309 = vcvt.s32.f32 %v1245
      %v1310 = vcvt.s32.f32 %v1246
      %v1311 = vcvt.s32.f32 %v1247
      %v1312 = vcvt.s32.f32 %v1248
      %v1313 = vcvt.s32.f32 %v1249
      %v1314 = vcvt.s32.f32 %v1250
      %v1315 = vcvt.s32.f32 %v1251
      %v1316 = vcvt.s32.f32 %v1252
      %v1317 = vcvt.s32.f32 %v1253
      %v1318 = vcvt.s32.f32 %v1254
      %v1319 = vcvt.s32.f32 %v1255
      %v1320 = vcvt.s32.f32 %v1256
      %v1321 = vcvt.s32.f32 %v1257
      %v1322 = vcvt.s32.f32 %v1258
      %v1323 = vcvt.s32.f32 %v1259
      %v1324 = vcvt.s32.f32 %v1260
      %v1325 = vld [vmem:[%s165] sm:$0xf]
      %v1326 = vld [vmem:[%s165 + $0x4] sm:$0xf]
      %v1327 = vld [vmem:[%s165 + $0x8] sm:$0xf]
      %v1328 = vld [vmem:[%s165 + $0xc] sm:$0xf]
      %v1329 = vld [vmem:[%s165 + $0x10] sm:$0xf]
      %v1330 = vld [vmem:[%s165 + $0x14] sm:$0xf]
      %v1331 = vld [vmem:[%s165 + $0x18] sm:$0xf]
      %v1332 = vld [vmem:[%s165 + $0x1c] sm:$0xf]
      %v1333 = vld [vmem:[%s165 + $0x20] sm:$0xf]
      %v1334 = vld [vmem:[%s165 + $0x24] sm:$0xf]
      %v1335 = vld [vmem:[%s165 + $0x28] sm:$0xf]
      %v1336 = vld [vmem:[%s165 + $0x2c] sm:$0xf]
      %v1337 = vld [vmem:[%s165 + $0x30] sm:$0xf]
      %v1338 = vld [vmem:[%s165 + $0x34] sm:$0xf]
      %v1339 = vld [vmem:[%s165 + $0x38] sm:$0xf]
      %v1340 = vld [vmem:[%s165 + $0x3c] sm:$0xf]
      %v1341 = vld [vmem:[%s165 + $0x40] sm:$0xf]
      %v1342 = vld [vmem:[%s165 + $0x44] sm:$0xf]
      %v1343 = vld [vmem:[%s165 + $0x48] sm:$0xf]
      %v1344 = vld [vmem:[%s165 + $0x4c] sm:$0xf]
      %v1345 = vld [vmem:[%s165 + $0x50] sm:$0xf]
      %v1346 = vld [vmem:[%s165 + $0x54] sm:$0xf]
      %v1347 = vld [vmem:[%s165 + $0x58] sm:$0xf]
      %v1348 = vld [vmem:[%s165 + $0x5c] sm:$0xf]
      %v1349 = vld [vmem:[%s165 + $0x60] sm:$0xf]
      %v1350 = vld [vmem:[%s165 + $0x64] sm:$0xf]
      %v1351 = vld [vmem:[%s165 + $0x68] sm:$0xf]
      %v1352 = vld [vmem:[%s165 + $0x6c] sm:$0xf]
      %v1353 = vld [vmem:[%s165 + $0x70] sm:$0xf]
      %v1354 = vld [vmem:[%s165 + $0x74] sm:$0xf]
      %v1355 = vld [vmem:[%s165 + $0x78] sm:$0xf]
      %v1356 = vld [vmem:[%s165 + $0x7c] sm:$0xf]
      %v1357 = vld [vmem:[%s165 + $0x80] sm:$0xf]
      %v1358 = vld [vmem:[%s165 + $0x84] sm:$0xf]
      %v1359 = vld [vmem:[%s165 + $0x88] sm:$0xf]
      %v1360 = vld [vmem:[%s165 + $0x8c] sm:$0xf]
      %v1361 = vld [vmem:[%s165 + $0x90] sm:$0xf]
      %v1362 = vld [vmem:[%s165 + $0x94] sm:$0xf]
      %v1363 = vld [vmem:[%s165 + $0x98] sm:$0xf]
      %v1364 = vld [vmem:[%s165 + $0x9c] sm:$0xf]
      %v1365 = vld [vmem:[%s165 + $0xa0] sm:$0xf]
      %v1366 = vld [vmem:[%s165 + $0xa4] sm:$0xf]
      %v1367 = vld [vmem:[%s165 + $0xa8] sm:$0xf]
      %v1368 = vld [vmem:[%s165 + $0xac] sm:$0xf]
      %v1369 = vld [vmem:[%s165 + $0xb0] sm:$0xf]
      %v1370 = vld [vmem:[%s165 + $0xb4] sm:$0xf]
      %v1371 = vld [vmem:[%s165 + $0xb8] sm:$0xf]
      %v1372 = vld [vmem:[%s165 + $0xbc] sm:$0xf]
      %v1373 = vld [vmem:[%s165 + $0xc0] sm:$0xf]
      %v1374 = vld [vmem:[%s165 + $0xc4] sm:$0xf]
      %v1375 = vld [vmem:[%s165 + $0xc8] sm:$0xf]
      %v1376 = vld [vmem:[%s165 + $0xcc] sm:$0xf]
      %v1377 = vld [vmem:[%s165 + $0xd0] sm:$0xf]
      %v1378 = vld [vmem:[%s165 + $0xd4] sm:$0xf]
      %v1379 = vld [vmem:[%s165 + $0xd8] sm:$0xf]
      %v1380 = vld [vmem:[%s165 + $0xdc] sm:$0xf]
      %v1381 = vld [vmem:[%s165 + $0xe0] sm:$0xf]
      %v1382 = vld [vmem:[%s165 + $0xe4] sm:$0xf]
      %v1383 = vld [vmem:[%s165 + $0xe8] sm:$0xf]
      %v1384 = vld [vmem:[%s165 + $0xec] sm:$0xf]
      %v1385 = vld [vmem:[%s165 + $0xf0] sm:$0xf]
      %v1386 = vld [vmem:[%s165 + $0xf4] sm:$0xf]
      %v1387 = vld [vmem:[%s165 + $0xf8] sm:$0xf]
      %v1388 = vld [vmem:[%s165 + $0xfc] sm:$0xf]
      %v1389 = vld [vmem:[%s1] sm:$0xf]
      %v1390 = vld [vmem:[%s1 + $0x4] sm:$0xf]
      %v1391 = vld [vmem:[%s1 + $0x8] sm:$0xf]
      %v1392 = vld [vmem:[%s1 + $0xc] sm:$0xf]
      %v1393 = vld [vmem:[%s1 + $0x10] sm:$0xf]
      %v1394 = vld [vmem:[%s1 + $0x14] sm:$0xf]
      %v1395 = vld [vmem:[%s1 + $0x18] sm:$0xf]
      %v1396 = vld [vmem:[%s1 + $0x1c] sm:$0xf]
      %v1397 = vld [vmem:[%s1 + $0x20] sm:$0xf]
      %v1398 = vld [vmem:[%s1 + $0x24] sm:$0xf]
      %v1399 = vld [vmem:[%s1 + $0x28] sm:$0xf]
      %v1400 = vld [vmem:[%s1 + $0x2c] sm:$0xf]
      %v1401 = vld [vmem:[%s1 + $0x30] sm:$0xf]
      %v1402 = vld [vmem:[%s1 + $0x34] sm:$0xf]
      %v1403 = vld [vmem:[%s1 + $0x38] sm:$0xf]
      %v1404 = vld [vmem:[%s1 + $0x3c] sm:$0xf]
      %v1405 = vld [vmem:[%s165 + $0x100] sm:$0xf]
      %v1406 = vld [vmem:[%s165 + $0x104] sm:$0xf]
      %v1407 = vld [vmem:[%s165 + $0x108] sm:$0xf]
      %v1408 = vld [vmem:[%s165 + $0x10c] sm:$0xf]
      %s1409 = scalar_lea.vmem %s1, 192
      %v1410 = vld [vmem:[%s1409] sm:$0xf]
      %v1411 = vld [vmem:[%s1409 + $0x4] sm:$0xf]
      %v1412 = vld [vmem:[%s1409 + $0x8] sm:$0xf]
      %v1413 = vld [vmem:[%s1409 + $0xc] sm:$0xf]
      %v1414 = vld [vmem:[%s1409 + $0x10] sm:$0xf]
      %v1415 = vld [vmem:[%s1409 + $0x14] sm:$0xf]
      %v1416 = vld [vmem:[%s1409 + $0x18] sm:$0xf]
      %v1417 = vld [vmem:[%s1409 + $0x1c] sm:$0xf]
      %v1418 = vld [vmem:[%s1409 + $0x20] sm:$0xf]
      %v1419 = vld [vmem:[%s1409 + $0x24] sm:$0xf]
      %v1420 = vld [vmem:[%s1409 + $0x28] sm:$0xf]
      %v1421 = vld [vmem:[%s1409 + $0x2c] sm:$0xf]
      %v1422 = vld [vmem:[%s1409 + $0x30] sm:$0xf]
      %v1423 = vld [vmem:[%s1409 + $0x34] sm:$0xf]
      %v1424 = vld [vmem:[%s1409 + $0x38] sm:$0xf]
      %v1425 = vld [vmem:[%s1409 + $0x3c] sm:$0xf]
      %v1490 = vunpack.c.l.b16 %v1329
      %v1491 = vunpack.c.l.b16 %v1330
      %v1492 = vunpack.c.l.b16 %v1331
      %v1493 = vunpack.c.l.b16 %v1332
      %v1494 = vunpack.c.l.b16 %v1333
      %v1495 = vunpack.c.l.b16 %v1334
      %v1496 = vunpack.c.l.b16 %v1335
      %v1497 = vunpack.c.l.b16 %v1336
      %v1498 = vunpack.c.l.b16 %v1337
      %v1499 = vunpack.c.l.b16 %v1338
      %v1500 = vunpack.c.l.b16 %v1339
      %v1501 = vunpack.c.l.b16 %v1340
      %v1502 = vunpack.c.l.b16 %v1341
      %v1503 = vunpack.c.l.b16 %v1342
      %v1504 = vunpack.c.l.b16 %v1343
      %v1505 = vunpack.c.l.b16 %v1344
      %v1506 = vunpack.c.l.b16 %v1345
      %v1507 = vunpack.c.l.b16 %v1346
      %v1508 = vunpack.c.l.b16 %v1347
      %v1509 = vunpack.c.l.b16 %v1348
      %v1510 = vunpack.c.l.b16 %v1349
      %v1511 = vunpack.c.l.b16 %v1350
      %v1512 = vunpack.c.l.b16 %v1351
      %v1513 = vunpack.c.l.b16 %v1352
      %v1514 = vunpack.c.l.b16 %v1353
      %v1515 = vunpack.c.l.b16 %v1354
      %v1516 = vunpack.c.l.b16 %v1355
      %v1517 = vunpack.c.l.b16 %v1356
      %v1518 = vunpack.c.l.b16 %v1357
      %v1519 = vunpack.c.l.b16 %v1358
      %v1520 = vunpack.c.l.b16 %v1359
      %v1521 = vunpack.c.l.b16 %v1360
      %v1522 = vunpack.c.l.b16 %v1361
      %v1523 = vunpack.c.l.b16 %v1362
      %v1524 = vunpack.c.l.b16 %v1363
      %v1525 = vunpack.c.l.b16 %v1364
      %v1526 = vunpack.c.l.b16 %v1365
      %v1527 = vunpack.c.l.b16 %v1366
      %v1528 = vunpack.c.l.b16 %v1367
      %v1529 = vunpack.c.l.b16 %v1368
      %v1530 = vunpack.c.l.b16 %v1369
      %v1531 = vunpack.c.l.b16 %v1370
      %v1532 = vunpack.c.l.b16 %v1371
      %v1533 = vunpack.c.l.b16 %v1372
      %v1534 = vunpack.c.l.b16 %v1373
      %v1535 = vunpack.c.l.b16 %v1374
      %v1536 = vunpack.c.l.b16 %v1375
      %v1537 = vunpack.c.l.b16 %v1376
      %v1538 = vunpack.c.l.b16 %v1377
      %v1539 = vunpack.c.l.b16 %v1378
      %v1540 = vunpack.c.l.b16 %v1379
      %v1541 = vunpack.c.l.b16 %v1380
      %v1542 = vunpack.c.l.b16 %v1381
      %v1543 = vunpack.c.l.b16 %v1382
      %v1544 = vunpack.c.l.b16 %v1383
      %v1545 = vunpack.c.l.b16 %v1384
      %v1546 = vunpack.c.l.b16 %v1385
      %v1547 = vunpack.c.l.b16 %v1386
      %v1548 = vunpack.c.l.b16 %v1387
      %v1549 = vunpack.c.l.b16 %v1388
      %v1550 = vunpack.c.l.b16 %v1405
      %v1551 = vunpack.c.l.b16 %v1406
      %v1552 = vunpack.c.l.b16 %v1407
      %v1553 = vunpack.c.l.b16 %v1408
      %v1554 = vpack.c.b16 %v1491, %v1490
      %v1555 = vpack.c.b16 %v1493, %v1492
      %v1556 = vpack.c.b16 %v1495, %v1494
      %v1557 = vpack.c.b16 %v1497, %v1496
      %v1558 = vpack.c.b16 %v1499, %v1498
      %v1559 = vpack.c.b16 %v1501, %v1500
      %v1560 = vpack.c.b16 %v1503, %v1502
      %v1561 = vpack.c.b16 %v1505, %v1504
      %v1562 = vpack.c.b16 %v1507, %v1506
      %v1563 = vpack.c.b16 %v1509, %v1508
      %v1564 = vpack.c.b16 %v1511, %v1510
      %v1565 = vpack.c.b16 %v1513, %v1512
      %v1566 = vpack.c.b16 %v1515, %v1514
      %v1567 = vpack.c.b16 %v1517, %v1516
      %v1568 = vpack.c.b16 %v1519, %v1518
      %v1569 = vpack.c.b16 %v1521, %v1520
      %v1570 = vpack.c.b16 %v1523, %v1522
      %v1571 = vpack.c.b16 %v1525, %v1524
      %v1572 = vpack.c.b16 %v1527, %v1526
      %v1573 = vpack.c.b16 %v1529, %v1528
      %v1574 = vpack.c.b16 %v1531, %v1530
      %v1575 = vpack.c.b16 %v1533, %v1532
      %v1576 = vpack.c.b16 %v1535, %v1534
      %v1577 = vpack.c.b16 %v1537, %v1536
      %v1578 = vpack.c.b16 %v1539, %v1538
      %v1579 = vpack.c.b16 %v1541, %v1540
      %v1580 = vpack.c.b16 %v1543, %v1542
      %v1581 = vpack.c.b16 %v1545, %v1544
      %v1582 = vpack.c.b16 %v1547, %v1546
      %v1583 = vpack.c.b16 %v1549, %v1548
      %v1584 = vpack.c.b16 %v1551, %v1550
      %v1585 = vpack.c.b16 %v1553, %v1552
      %v1634 = vunpack.c.l.b16 %v1410
      %v1635 = vunpack.c.l.b16 %v1411
      %v1636 = vunpack.c.l.b16 %v1412
      %v1637 = vunpack.c.l.b16 %v1413
      %v1638 = vunpack.c.l.b16 %v1414
      %v1639 = vunpack.c.l.b16 %v1415
      %v1640 = vunpack.c.l.b16 %v1416
      %v1641 = vunpack.c.l.b16 %v1417
      %v1642 = vunpack.c.l.b16 %v1418
      %v1643 = vunpack.c.l.b16 %v1419
      %v1644 = vunpack.c.l.b16 %v1420
      %v1645 = vunpack.c.l.b16 %v1421
      %v1646 = vunpack.c.l.b16 %v1422
      %v1647 = vunpack.c.l.b16 %v1423
      %v1648 = vunpack.c.l.b16 %v1424
      %v1649 = vunpack.c.l.b16 %v1425
      %v1650 = vpack.c.b16 %v1635, %v1634
      %v1651 = vpack.c.b16 %v1637, %v1636
      %v1652 = vpack.c.b16 %v1639, %v1638
      %v1653 = vpack.c.b16 %v1641, %v1640
      %v1654 = vpack.c.b16 %v1643, %v1642
      %v1655 = vpack.c.b16 %v1645, %v1644
      %v1656 = vpack.c.b16 %v1647, %v1646
      %v1657 = vpack.c.b16 %v1649, %v1648
      %1666 = vmatprep.subr.bf16.mxu0 0
      %1667 = vmatpush1.bf16.msra.mxu0 %v1650
      %1668 = vmatprep.subr.bf16.mxu0 0
      %1669 = vmatpush1.bf16.msra.mxu0 %v1651
      %1670 = vmatprep.subr.bf16.mxu0 0
      %1671 = vmatpush1.bf16.msra.mxu0 %v1652
      %1672 = vmatprep.subr.bf16.mxu0 0
      %1673 = vmatpush1.bf16.msra.mxu0 %v1653
      %1674 = vmatprep.subr.bf16.mxu0 0
      %1675 = vmatpush1.bf16.msra.mxu0 %v1654
      %1676 = vmatprep.subr.bf16.mxu0 0
      %1677 = vmatpush1.bf16.msra.mxu0 %v1655
      %1678 = vmatprep.subr.bf16.mxu0 0
      %1679 = vmatpush1.bf16.msra.mxu0 %v1656
      %1680 = vmatprep.subr.bf16.mxu0 0
      %1681 = vmatpush1.bf16.msra.mxu0 %v1657
      %1682 = vmatprep.subr.bf16.mxu0 0
      %1683 = vmatpush1.bf16.msra.mxu0 0
      %1684 = vmatprep.subr.bf16.mxu0 0
      %1685 = vmatpush1.bf16.msra.mxu0 0
      %1686 = vmatprep.subr.bf16.mxu0 0
      %1687 = vmatpush1.bf16.msra.mxu0 0
      %1688 = vmatprep.subr.bf16.mxu0 0
      %1689 = vmatpush1.bf16.msra.mxu0 0
      %1690 = vmatprep.subr.bf16.mxu0 0
      %1691 = vmatpush1.bf16.msra.mxu0 0
      %1692 = vmatprep.subr.bf16.mxu0 0
      %1693 = vmatpush1.bf16.msra.mxu0 0
      %1694 = vmatprep.subr.bf16.mxu0 0
      %1695 = vmatpush1.bf16.msra.mxu0 0
      %1696 = vmatprep.subr.bf16.mxu0 0
      %1697 = vmatpush1.bf16.msra.mxu0 0
      %1698 = vmatprep.mubr.bf16.mxu0 0
      %1699 = vmatmul.mubr.bf16.gmra.mrb[0].mxu0 %v1554
      %v1700 = vpop.f32.mrb[0].mxu0
      %v1701 = vadd.f32 0.0, %v1700
      %v1702 = vpop.f32.mrb[0].mxu0
      %v1703 = vpop.f32.mrb[0].mxu0
      %v1704 = vadd.f32 0.0, %v1703
      %v1705 = vpop.f32.mrb[0].mxu0
      %1706 = vmatprep.mubr.bf16.mxu0 0
      %1707 = vmatmul.mubr.bf16.gmra.mrb[0].mxu0 %v1555
      %v1708 = vpop.f32.mrb[0].mxu0
      %v1709 = vadd.f32 0.0, %v1708
      %v1710 = vpop.f32.mrb[0].mxu0
      %v1711 = vpop.f32.mrb[0].mxu0
      %v1712 = vadd.f32 0.0, %v1711
      %v1713 = vpop.f32.mrb[0].mxu0
      %1714 = vmatprep.mubr.bf16.mxu0 0
      %1715 = vmatmul.mubr.bf16.gmra.mrb[0].mxu0 %v1556
      %v1716 = vpop.f32.mrb[0].mxu0
      %v1717 = vadd.f32 0.0, %v1716
      %v1718 = vpop.f32.mrb[0].mxu0
      %v1719 = vpop.f32.mrb[0].mxu0
      %v1720 = vadd.f32 0.0, %v1719
      %v1721 = vpop.f32.mrb[0].mxu0
      %1722 = vmatprep.mubr.bf16.mxu0 0
      %1723 = vmatmul.mubr.bf16.gmra.mrb[0].mxu0 %v1557
      %v1724 = vpop.f32.mrb[0].mxu0
      %v1725 = vadd.f32 0.0, %v1724
      %v1726 = vpop.f32.mrb[0].mxu0
      %v1727 = vpop.f32.mrb[0].mxu0
      %v1728 = vadd.f32 0.0, %v1727
      %v1729 = vpop.f32.mrb[0].mxu0
      %1730 = vmatprep.mubr.bf16.mxu0 0
      %1731 = vmatmul.mubr.bf16.gmra.mrb[0].mxu0 %v1558
      %v1732 = vpop.f32.mrb[0].mxu0
      %v1733 = vadd.f32 0.0, %v1732
      %v1734 = vpop.f32.mrb[0].mxu0
      %v1735 = vpop.f32.mrb[0].mxu0
      %v1736 = vadd.f32 0.0, %v1735
      %v1737 = vpop.f32.mrb[0].mxu0
      %1738 = vmatprep.mubr.bf16.mxu0 0
      %1739 = vmatmul.mubr.bf16.gmra.mrb[0].mxu0 %v1559
      %v1740 = vpop.f32.mrb[0].mxu0
      %v1741 = vadd.f32 0.0, %v1740
      %v1742 = vpop.f32.mrb[0].mxu0
      %v1743 = vpop.f32.mrb[0].mxu0
      %v1744 = vadd.f32 0.0, %v1743
      %v1745 = vpop.f32.mrb[0].mxu0
      %1746 = vmatprep.mubr.bf16.mxu0 0
      %1747 = vmatmul.mubr.bf16.gmra.mrb[0].mxu0 %v1560
      %v1748 = vpop.f32.mrb[0].mxu0
      %v1749 = vadd.f32 0.0, %v1748
      %v1750 = vpop.f32.mrb[0].mxu0
      %v1751 = vpop.f32.mrb[0].mxu0
      %v1752 = vadd.f32 0.0, %v1751
      %v1753 = vpop.f32.mrb[0].mxu0
      %1754 = vmatprep.mubr.bf16.mxu0 0
      %1755 = vmatmul.mubr.bf16.gmra.mrb[0].mxu0 %v1561
      %v1756 = vpop.f32.mrb[0].mxu0
      %v1757 = vadd.f32 0.0, %v1756
      %v1758 = vpop.f32.mrb[0].mxu0
      %v1759 = vpop.f32.mrb[0].mxu0
      %v1760 = vadd.f32 0.0, %v1759
      %v1761 = vpop.f32.mrb[0].mxu0
      %1762 = vmatprep.mubr.bf16.mxu0 0
      %1763 = vmatmul.mubr.bf16.gmra.mrb[0].mxu0 %v1562
      %v1764 = vpop.f32.mrb[0].mxu0
      %v1765 = vadd.f32 0.0, %v1764
      %v1766 = vpop.f32.mrb[0].mxu0
      %v1767 = vpop.f32.mrb[0].mxu0
      %v1768 = vadd.f32 0.0, %v1767
      %v1769 = vpop.f32.mrb[0].mxu0
      %1770 = vmatprep.mubr.bf16.mxu0 0
      %1771 = vmatmul.mubr.bf16.gmra.mrb[0].mxu0 %v1563
      %v1772 = vpop.f32.mrb[0].mxu0
      %v1773 = vadd.f32 0.0, %v1772
      %v1774 = vpop.f32.mrb[0].mxu0
      %v1775 = vpop.f32.mrb[0].mxu0
      %v1776 = vadd.f32 0.0, %v1775
      %v1777 = vpop.f32.mrb[0].mxu0
      %1778 = vmatprep.mubr.bf16.mxu0 0
      %1779 = vmatmul.mubr.bf16.gmra.mrb[0].mxu0 %v1564
      %v1780 = vpop.f32.mrb[0].mxu0
      %v1781 = vadd.f32 0.0, %v1780
      %v1782 = vpop.f32.mrb[0].mxu0
      %v1783 = vpop.f32.mrb[0].mxu0
      %v1784 = vadd.f32 0.0, %v1783
      %v1785 = vpop.f32.mrb[0].mxu0
      %1786 = vmatprep.mubr.bf16.mxu0 0
      %1787 = vmatmul.mubr.bf16.gmra.mrb[0].mxu0 %v1565
      %v1788 = vpop.f32.mrb[0].mxu0
      %v1789 = vadd.f32 0.0, %v1788
      %v1790 = vpop.f32.mrb[0].mxu0
      %v1791 = vpop.f32.mrb[0].mxu0
      %v1792 = vadd.f32 0.0, %v1791
      %v1793 = vpop.f32.mrb[0].mxu0
      %1794 = vmatprep.mubr.bf16.mxu0 0
      %1795 = vmatmul.mubr.bf16.gmra.mrb[0].mxu0 %v1566
      %v1796 = vpop.f32.mrb[0].mxu0
      %v1797 = vadd.f32 0.0, %v1796
      %v1798 = vpop.f32.mrb[0].mxu0
      %v1799 = vpop.f32.mrb[0].mxu0
      %v1800 = vadd.f32 0.0, %v1799
      %v1801 = vpop.f32.mrb[0].mxu0
      %1802 = vmatprep.mubr.bf16.mxu0 0
      %1803 = vmatmul.mubr.bf16.gmra.mrb[0].mxu0 %v1567
      %v1804 = vpop.f32.mrb[0].mxu0
      %v1805 = vadd.f32 0.0, %v1804
      %v1806 = vpop.f32.mrb[0].mxu0
      %v1807 = vpop.f32.mrb[0].mxu0
      %v1808 = vadd.f32 0.0, %v1807
      %v1809 = vpop.f32.mrb[0].mxu0
      %1810 = vmatprep.mubr.bf16.mxu0 0
      %1811 = vmatmul.mubr.bf16.gmra.mrb[0].mxu0 %v1568
      %v1812 = vpop.f32.mrb[0].mxu0
      %v1813 = vadd.f32 0.0, %v1812
      %v1814 = vpop.f32.mrb[0].mxu0
      %v1815 = vpop.f32.mrb[0].mxu0
      %v1816 = vadd.f32 0.0, %v1815
      %v1817 = vpop.f32.mrb[0].mxu0
      %1818 = vmatprep.mubr.bf16.mxu0 0
      %1819 = vmatmul.mubr.bf16.gmra.mrb[0].mxu0 %v1569
      %v1820 = vpop.f32.mrb[0].mxu0
      %v1821 = vadd.f32 0.0, %v1820
      %v1822 = vpop.f32.mrb[0].mxu0
      %v1823 = vpop.f32.mrb[0].mxu0
      %v1824 = vadd.f32 0.0, %v1823
      %v1825 = vpop.f32.mrb[0].mxu0
      %1826 = vmatprep.mubr.bf16.mxu0 0
      %1827 = vmatmul.mubr.bf16.gmra.mrb[0].mxu0 %v1570
      %v1828 = vpop.f32.mrb[0].mxu0
      %v1829 = vadd.f32 0.0, %v1828
      %v1830 = vpop.f32.mrb[0].mxu0
      %v1831 = vpop.f32.mrb[0].mxu0
      %v1832 = vadd.f32 0.0, %v1831
      %v1833 = vpop.f32.mrb[0].mxu0
      %1834 = vmatprep.mubr.bf16.mxu0 0
      %1835 = vmatmul.mubr.bf16.gmra.mrb[0].mxu0 %v1571
      %v1836 = vpop.f32.mrb[0].mxu0
      %v1837 = vadd.f32 0.0, %v1836
      %v1838 = vpop.f32.mrb[0].mxu0
      %v1839 = vpop.f32.mrb[0].mxu0
      %v1840 = vadd.f32 0.0, %v1839
      %v1841 = vpop.f32.mrb[0].mxu0
      %1842 = vmatprep.mubr.bf16.mxu0 0
      %1843 = vmatmul.mubr.bf16.gmra.mrb[0].mxu0 %v1572
      %v1844 = vpop.f32.mrb[0].mxu0
      %v1845 = vadd.f32 0.0, %v1844
      %v1846 = vpop.f32.mrb[0].mxu0
      %v1847 = vpop.f32.mrb[0].mxu0
      %v1848 = vadd.f32 0.0, %v1847
      %v1849 = vpop.f32.mrb[0].mxu0
      %1850 = vmatprep.mubr.bf16.mxu0 0
      %1851 = vmatmul.mubr.bf16.gmra.mrb[0].mxu0 %v1573
      %v1852 = vpop.f32.mrb[0].mxu0
      %v1853 = vadd.f32 0.0, %v1852
      %v1854 = vpop.f32.mrb[0].mxu0
      %v1855 = vpop.f32.mrb[0].mxu0
      %v1856 = vadd.f32 0.0, %v1855
      %v1857 = vpop.f32.mrb[0].mxu0
      %1858 = vmatprep.mubr.bf16.mxu0 0
      %1859 = vmatmul.mubr.bf16.gmra.mrb[0].mxu0 %v1574
      %v1860 = vpop.f32.mrb[0].mxu0
      %v1861 = vadd.f32 0.0, %v1860
      %v1862 = vpop.f32.mrb[0].mxu0
      %v1863 = vpop.f32.mrb[0].mxu0
      %v1864 = vadd.f32 0.0, %v1863
      %v1865 = vpop.f32.mrb[0].mxu0
      %1866 = vmatprep.mubr.bf16.mxu0 0
      %1867 = vmatmul.mubr.bf16.gmra.mrb[0].mxu0 %v1575
      %v1868 = vpop.f32.mrb[0].mxu0
      %v1869 = vadd.f32 0.0, %v1868
      %v1870 = vpop.f32.mrb[0].mxu0
      %v1871 = vpop.f32.mrb[0].mxu0
      %v1872 = vadd.f32 0.0, %v1871
      %v1873 = vpop.f32.mrb[0].mxu0
      %1874 = vmatprep.mubr.bf16.mxu0 0
      %1875 = vmatmul.mubr.bf16.gmra.mrb[0].mxu0 %v1576
      %v1876 = vpop.f32.mrb[0].mxu0
      %v1877 = vadd.f32 0.0, %v1876
      %v1878 = vpop.f32.mrb[0].mxu0
      %v1879 = vpop.f32.mrb[0].mxu0
      %v1880 = vadd.f32 0.0, %v1879
      %v1881 = vpop.f32.mrb[0].mxu0
      %1882 = vmatprep.mubr.bf16.mxu0 0
      %1883 = vmatmul.mubr.bf16.gmra.mrb[0].mxu0 %v1577
      %v1884 = vpop.f32.mrb[0].mxu0
      %v1885 = vadd.f32 0.0, %v1884
      %v1886 = vpop.f32.mrb[0].mxu0
      %v1887 = vpop.f32.mrb[0].mxu0
      %v1888 = vadd.f32 0.0, %v1887
      %v1889 = vpop.f32.mrb[0].mxu0
      %1890 = vmatprep.mubr.bf16.mxu0 0
      %1891 = vmatmul.mubr.bf16.gmra.mrb[0].mxu0 %v1578
      %v1892 = vpop.f32.mrb[0].mxu0
      %v1893 = vadd.f32 0.0, %v1892
      %v1894 = vpop.f32.mrb[0].mxu0
      %v1895 = vpop.f32.mrb[0].mxu0
      %v1896 = vadd.f32 0.0, %v1895
      %v1897 = vpop.f32.mrb[0].mxu0
      %1898 = vmatprep.mubr.bf16.mxu0 0
      %1899 = vmatmul.mubr.bf16.gmra.mrb[0].mxu0 %v1579
      %v1900 = vpop.f32.mrb[0].mxu0
      %v1901 = vadd.f32 0.0, %v1900
      %v1902 = vpop.f32.mrb[0].mxu0
      %v1903 = vpop.f32.mrb[0].mxu0
      %v1904 = vadd.f32 0.0, %v1903
      %v1905 = vpop.f32.mrb[0].mxu0
      %1906 = vmatprep.mubr.bf16.mxu0 0
      %1907 = vmatmul.mubr.bf16.gmra.mrb[0].mxu0 %v1580
      %v1908 = vpop.f32.mrb[0].mxu0
      %v1909 = vadd.f32 0.0, %v1908
      %v1910 = vpop.f32.mrb[0].mxu0
      %v1911 = vpop.f32.mrb[0].mxu0
      %v1912 = vadd.f32 0.0, %v1911
      %v1913 = vpop.f32.mrb[0].mxu0
      %1914 = vmatprep.mubr.bf16.mxu0 0
      %1915 = vmatmul.mubr.bf16.gmra.mrb[0].mxu0 %v1581
      %v1916 = vpop.f32.mrb[0].mxu0
      %v1917 = vadd.f32 0.0, %v1916
      %v1918 = vpop.f32.mrb[0].mxu0
      %v1919 = vpop.f32.mrb[0].mxu0
      %v1920 = vadd.f32 0.0, %v1919
      %v1921 = vpop.f32.mrb[0].mxu0
      %1922 = vmatprep.mubr.bf16.mxu0 0
      %1923 = vmatmul.mubr.bf16.gmra.mrb[0].mxu0 %v1582
      %v1924 = vpop.f32.mrb[0].mxu0
      %v1925 = vadd.f32 0.0, %v1924
      %v1926 = vpop.f32.mrb[0].mxu0
      %v1927 = vpop.f32.mrb[0].mxu0
      %v1928 = vadd.f32 0.0, %v1927
      %v1929 = vpop.f32.mrb[0].mxu0
      %1930 = vmatprep.mubr.bf16.mxu0 0
      %1931 = vmatmul.mubr.bf16.gmra.mrb[0].mxu0 %v1583
      %v1932 = vpop.f32.mrb[0].mxu0
      %v1933 = vadd.f32 0.0, %v1932
      %v1934 = vpop.f32.mrb[0].mxu0
      %v1935 = vpop.f32.mrb[0].mxu0
      %v1936 = vadd.f32 0.0, %v1935
      %v1937 = vpop.f32.mrb[0].mxu0
      %1938 = vmatprep.mubr.bf16.mxu0 0
      %1939 = vmatmul.mubr.bf16.gmra.mrb[0].mxu0 %v1584
      %v1940 = vpop.f32.mrb[0].mxu0
      %v1941 = vadd.f32 0.0, %v1940
      %v1942 = vpop.f32.mrb[0].mxu0
      %v1943 = vpop.f32.mrb[0].mxu0
      %v1944 = vadd.f32 0.0, %v1943
      %v1945 = vpop.f32.mrb[0].mxu0
      %1946 = vmatprep.mubr.bf16.mxu0 0
      %1947 = vmatmul.mubr.bf16.gmra.mrb[0].mxu0 %v1585
      %v1948 = vpop.f32.mrb[0].mxu0
      %v1949 = vadd.f32 0.0, %v1948
      %v1950 = vpop.f32.mrb[0].mxu0
      %v1951 = vpop.f32.mrb[0].mxu0
      %v1952 = vadd.f32 0.0, %v1951
      %v1953 = vpop.f32.mrb[0].mxu0
      %1954 = vdwg.mxu0
      %v1959 = vunpack.c.l.b16 %v1325
      %v1960 = vunpack.c.l.b16 %v1326
      %v1961 = vunpack.c.l.b16 %v1327
      %v1962 = vunpack.c.l.b16 %v1328
      %v1963 = vpack.c.b16 %v1960, %v1959
      %v1964 = vpack.c.b16 %v1962, %v1961
      %v1983 = vunpack.c.l.b16 %v1389
      %v1984 = vunpack.c.l.b16 %v1390
      %v1985 = vunpack.c.l.b16 %v1391
      %v1986 = vunpack.c.l.b16 %v1392
      %v1987 = vunpack.c.l.b16 %v1393
      %v1988 = vunpack.c.l.b16 %v1394
      %v1989 = vunpack.c.l.b16 %v1395
      %v1990 = vunpack.c.l.b16 %v1396
      %v1991 = vunpack.c.l.b16 %v1397
      %v1992 = vunpack.c.l.b16 %v1398
      %v1993 = vunpack.c.l.b16 %v1399
      %v1994 = vunpack.c.l.b16 %v1400
      %v1995 = vunpack.c.l.b16 %v1401
      %v1996 = vunpack.c.l.b16 %v1402
      %v1997 = vunpack.c.l.b16 %v1403
      %v1998 = vunpack.c.l.b16 %v1404
      %v1999 = vpack.c.b16 %v1984, %v1983
      %v2000 = vpack.c.b16 %v1986, %v1985
      %v2001 = vpack.c.b16 %v1988, %v1987
      %v2002 = vpack.c.b16 %v1990, %v1989
      %v2003 = vpack.c.b16 %v1992, %v1991
      %v2004 = vpack.c.b16 %v1994, %v1993
      %v2005 = vpack.c.b16 %v1996, %v1995
      %v2006 = vpack.c.b16 %v1998, %v1997
      %2015 = vmatprep.subr.bf16.mxu0 0
      %2016 = vmatpush1.bf16.msra.mxu0 %v1999
      %2017 = vmatprep.subr.bf16.mxu0 0
      %2018 = vmatpush1.bf16.msra.mxu0 %v2000
      %2019 = vmatprep.subr.bf16.mxu0 0
      %2020 = vmatpush1.bf16.msra.mxu0 %v2001
      %2021 = vmatprep.subr.bf16.mxu0 0
      %2022 = vmatpush1.bf16.msra.mxu0 %v2002
      %2023 = vmatprep.subr.bf16.mxu0 0
      %2024 = vmatpush1.bf16.msra.mxu0 %v2003
      %2025 = vmatprep.subr.bf16.mxu0 0
      %2026 = vmatpush1.bf16.msra.mxu0 %v2004
      %2027 = vmatprep.subr.bf16.mxu0 0
      %2028 = vmatpush1.bf16.msra.mxu0 %v2005
      %2029 = vmatprep.subr.bf16.mxu0 0
      %2030 = vmatpush1.bf16.msra.mxu0 %v2006
      %2031 = vmatprep.subr.bf16.mxu0 0
      %2032 = vmatpush1.bf16.msra.mxu0 0
      %2033 = vmatprep.subr.bf16.mxu0 0
      %2034 = vmatpush1.bf16.msra.mxu0 0
      %2035 = vmatprep.subr.bf16.mxu0 0
      %2036 = vmatpush1.bf16.msra.mxu0 0
      %2037 = vmatprep.subr.bf16.mxu0 0
      %2038 = vmatpush1.bf16.msra.mxu0 0
      %2039 = vmatprep.subr.bf16.mxu0 0
      %2040 = vmatpush1.bf16.msra.mxu0 0
      %2041 = vmatprep.subr.bf16.mxu0 0
      %2042 = vmatpush1.bf16.msra.mxu0 0
      %2043 = vmatprep.subr.bf16.mxu0 0
      %2044 = vmatpush1.bf16.msra.mxu0 0
      %2045 = vmatprep.subr.bf16.mxu0 0
      %2046 = vmatpush1.bf16.msra.mxu0 0
      %2047 = vmatprep.mubr.bf16.mxu0 0
      %2048 = vmatmul.mubr.bf16.gmra.mrb[0].mxu0 %v1963
      %v2049 = vpop.f32.mrb[0].mxu0
      %v2050 = vadd.f32 %v1701, %v2049
      %v2051 = vpop.f32.mrb[0].mxu0
      %v2052 = vpop.f32.mrb[0].mxu0
      %v2053 = vadd.f32 %v1704, %v2052
      %v2054 = vpop.f32.mrb[0].mxu0
      %2055 = vmatprep.mubr.bf16.mxu0 0
      %2056 = vmatmul.mubr.bf16.gmra.mrb[0].mxu0 %v1964
      %v2057 = vpop.f32.mrb[0].mxu0
      %v2058 = vadd.f32 %v1709, %v2057
      %v2059 = vpop.f32.mrb[0].mxu0
      %v2060 = vpop.f32.mrb[0].mxu0
      %v2061 = vadd.f32 %v1712, %v2060
      %v2062 = vpop.f32.mrb[0].mxu0
      %2063 = vmatprep.mubr.bf16.mxu0 0
      %2064 = vmatmul.mubr.bf16.gmra.mrb[0].mxu0 %v1554
      %v2065 = vpop.f32.mrb[0].mxu0
      %v2066 = vadd.f32 %v1717, %v2065
      %v2067 = vpop.f32.mrb[0].mxu0
      %v2068 = vpop.f32.mrb[0].mxu0
      %v2069 = vadd.f32 %v1720, %v2068
      %v2070 = vpop.f32.mrb[0].mxu0
      %2071 = vmatprep.mubr.bf16.mxu0 0
      %2072 = vmatmul.mubr.bf16.gmra.mrb[0].mxu0 %v1555
      %v2073 = vpop.f32.mrb[0].mxu0
      %v2074 = vadd.f32 %v1725, %v2073
      %v2075 = vpop.f32.mrb[0].mxu0
      %v2076 = vpop.f32.mrb[0].mxu0
      %v2077 = vadd.f32 %v1728, %v2076
      %v2078 = vpop.f32.mrb[0].mxu0
      %2079 = vmatprep.mubr.bf16.mxu0 0
      %2080 = vmatmul.mubr.bf16.gmra.mrb[0].mxu0 %v1556
      %v2081 = vpop.f32.mrb[0].mxu0
      %v2082 = vadd.f32 %v1733, %v2081
      %v2083 = vpop.f32.mrb[0].mxu0
      %v2084 = vpop.f32.mrb[0].mxu0
      %v2085 = vadd.f32 %v1736, %v2084
      %v2086 = vpop.f32.mrb[0].mxu0
      %2087 = vmatprep.mubr.bf16.mxu0 0
      %2088 = vmatmul.mubr.bf16.gmra.mrb[0].mxu0 %v1557
      %v2089 = vpop.f32.mrb[0].mxu0
      %v2090 = vadd.f32 %v1741, %v2089
      %v2091 = vpop.f32.mrb[0].mxu0
      %v2092 = vpop.f32.mrb[0].mxu0
      %v2093 = vadd.f32 %v1744, %v2092
      %v2094 = vpop.f32.mrb[0].mxu0
      %2095 = vmatprep.mubr.bf16.mxu0 0
      %2096 = vmatmul.mubr.bf16.gmra.mrb[0].mxu0 %v1558
      %v2097 = vpop.f32.mrb[0].mxu0
      %v2098 = vadd.f32 %v1749, %v2097
      %v2099 = vpop.f32.mrb[0].mxu0
      %v2100 = vpop.f32.mrb[0].mxu0
      %v2101 = vadd.f32 %v1752, %v2100
      %v2102 = vpop.f32.mrb[0].mxu0
      %2103 = vmatprep.mubr.bf16.mxu0 0
      %2104 = vmatmul.mubr.bf16.gmra.mrb[0].mxu0 %v1559
      %v2105 = vpop.f32.mrb[0].mxu0
      %v2106 = vadd.f32 %v1757, %v2105
      %v2107 = vpop.f32.mrb[0].mxu0
      %v2108 = vpop.f32.mrb[0].mxu0
      %v2109 = vadd.f32 %v1760, %v2108
      %v2110 = vpop.f32.mrb[0].mxu0
      %2111 = vmatprep.mubr.bf16.mxu0 0
      %2112 = vmatmul.mubr.bf16.gmra.mrb[0].mxu0 %v1560
      %v2113 = vpop.f32.mrb[0].mxu0
      %v2114 = vadd.f32 %v1765, %v2113
      %v2115 = vpop.f32.mrb[0].mxu0
      %v2116 = vpop.f32.mrb[0].mxu0
      %v2117 = vadd.f32 %v1768, %v2116
      %v2118 = vpop.f32.mrb[0].mxu0
      %2119 = vmatprep.mubr.bf16.mxu0 0
      %2120 = vmatmul.mubr.bf16.gmra.mrb[0].mxu0 %v1561
      %v2121 = vpop.f32.mrb[0].mxu0
      %v2122 = vadd.f32 %v1773, %v2121
      %v2123 = vpop.f32.mrb[0].mxu0
      %v2124 = vpop.f32.mrb[0].mxu0
      %v2125 = vadd.f32 %v1776, %v2124
      %v2126 = vpop.f32.mrb[0].mxu0
      %2127 = vmatprep.mubr.bf16.mxu0 0
      %2128 = vmatmul.mubr.bf16.gmra.mrb[0].mxu0 %v1562
      %v2129 = vpop.f32.mrb[0].mxu0
      %v2130 = vadd.f32 %v1781, %v2129
      %v2131 = vpop.f32.mrb[0].mxu0
      %v2132 = vpop.f32.mrb[0].mxu0
      %v2133 = vadd.f32 %v1784, %v2132
      %v2134 = vpop.f32.mrb[0].mxu0
      %2135 = vmatprep.mubr.bf16.mxu0 0
      %2136 = vmatmul.mubr.bf16.gmra.mrb[0].mxu0 %v1563
      %v2137 = vpop.f32.mrb[0].mxu0
      %v2138 = vadd.f32 %v1789, %v2137
      %v2139 = vpop.f32.mrb[0].mxu0
      %v2140 = vpop.f32.mrb[0].mxu0
      %v2141 = vadd.f32 %v1792, %v2140
      %v2142 = vpop.f32.mrb[0].mxu0
      %2143 = vmatprep.mubr.bf16.mxu0 0
      %2144 = vmatmul.mubr.bf16.gmra.mrb[0].mxu0 %v1564
      %v2145 = vpop.f32.mrb[0].mxu0
      %v2146 = vadd.f32 %v1797, %v2145
      %v2147 = vpop.f32.mrb[0].mxu0
      %v2148 = vpop.f32.mrb[0].mxu0
      %v2149 = vadd.f32 %v1800, %v2148
      %v2150 = vpop.f32.mrb[0].mxu0
      %2151 = vmatprep.mubr.bf16.mxu0 0
      %2152 = vmatmul.mubr.bf16.gmra.mrb[0].mxu0 %v1565
      %v2153 = vpop.f32.mrb[0].mxu0
      %v2154 = vadd.f32 %v1805, %v2153
      %v2155 = vpop.f32.mrb[0].mxu0
      %v2156 = vpop.f32.mrb[0].mxu0
      %v2157 = vadd.f32 %v1808, %v2156
      %v2158 = vpop.f32.mrb[0].mxu0
      %2159 = vmatprep.mubr.bf16.mxu0 0
      %2160 = vmatmul.mubr.bf16.gmra.mrb[0].mxu0 %v1566
      %v2161 = vpop.f32.mrb[0].mxu0
      %v2162 = vadd.f32 %v1813, %v2161
      %v2163 = vpop.f32.mrb[0].mxu0
      %v2164 = vpop.f32.mrb[0].mxu0
      %v2165 = vadd.f32 %v1816, %v2164
      %v2166 = vpop.f32.mrb[0].mxu0
      %2167 = vmatprep.mubr.bf16.mxu0 0
      %2168 = vmatmul.mubr.bf16.gmra.mrb[0].mxu0 %v1567
      %v2169 = vpop.f32.mrb[0].mxu0
      %v2170 = vadd.f32 %v1821, %v2169
      %v2171 = vpop.f32.mrb[0].mxu0
      %v2172 = vpop.f32.mrb[0].mxu0
      %v2173 = vadd.f32 %v1824, %v2172
      %v2174 = vpop.f32.mrb[0].mxu0
      %2175 = vmatprep.mubr.bf16.mxu0 0
      %2176 = vmatmul.mubr.bf16.gmra.mrb[0].mxu0 %v1568
      %v2177 = vpop.f32.mrb[0].mxu0
      %v2178 = vadd.f32 %v1829, %v2177
      %v2179 = vpop.f32.mrb[0].mxu0
      %v2180 = vpop.f32.mrb[0].mxu0
      %v2181 = vadd.f32 %v1832, %v2180
      %v2182 = vpop.f32.mrb[0].mxu0
      %2183 = vmatprep.mubr.bf16.mxu0 0
      %2184 = vmatmul.mubr.bf16.gmra.mrb[0].mxu0 %v1569
      %v2185 = vpop.f32.mrb[0].mxu0
      %v2186 = vadd.f32 %v1837, %v2185
      %v2187 = vpop.f32.mrb[0].mxu0
      %v2188 = vpop.f32.mrb[0].mxu0
      %v2189 = vadd.f32 %v1840, %v2188
      %v2190 = vpop.f32.mrb[0].mxu0
      %2191 = vmatprep.mubr.bf16.mxu0 0
      %2192 = vmatmul.mubr.bf16.gmra.mrb[0].mxu0 %v1570
      %v2193 = vpop.f32.mrb[0].mxu0
      %v2194 = vadd.f32 %v1845, %v2193
      %v2195 = vpop.f32.mrb[0].mxu0
      %v2196 = vpop.f32.mrb[0].mxu0
      %v2197 = vadd.f32 %v1848, %v2196
      %v2198 = vpop.f32.mrb[0].mxu0
      %2199 = vmatprep.mubr.bf16.mxu0 0
      %2200 = vmatmul.mubr.bf16.gmra.mrb[0].mxu0 %v1571
      %v2201 = vpop.f32.mrb[0].mxu0
      %v2202 = vadd.f32 %v1853, %v2201
      %v2203 = vpop.f32.mrb[0].mxu0
      %v2204 = vpop.f32.mrb[0].mxu0
      %v2205 = vadd.f32 %v1856, %v2204
      %v2206 = vpop.f32.mrb[0].mxu0
      %2207 = vmatprep.mubr.bf16.mxu0 0
      %2208 = vmatmul.mubr.bf16.gmra.mrb[0].mxu0 %v1572
      %v2209 = vpop.f32.mrb[0].mxu0
      %v2210 = vadd.f32 %v1861, %v2209
      %v2211 = vpop.f32.mrb[0].mxu0
      %v2212 = vpop.f32.mrb[0].mxu0
      %v2213 = vadd.f32 %v1864, %v2212
      %v2214 = vpop.f32.mrb[0].mxu0
      %2215 = vmatprep.mubr.bf16.mxu0 0
      %2216 = vmatmul.mubr.bf16.gmra.mrb[0].mxu0 %v1573
      %v2217 = vpop.f32.mrb[0].mxu0
      %v2218 = vadd.f32 %v1869, %v2217
      %v2219 = vpop.f32.mrb[0].mxu0
      %v2220 = vpop.f32.mrb[0].mxu0
      %v2221 = vadd.f32 %v1872, %v2220
      %v2222 = vpop.f32.mrb[0].mxu0
      %2223 = vmatprep.mubr.bf16.mxu0 0
      %2224 = vmatmul.mubr.bf16.gmra.mrb[0].mxu0 %v1574
      %v2225 = vpop.f32.mrb[0].mxu0
      %v2226 = vadd.f32 %v1877, %v2225
      %v2227 = vpop.f32.mrb[0].mxu0
      %v2228 = vpop.f32.mrb[0].mxu0
      %v2229 = vadd.f32 %v1880, %v2228
      %v2230 = vpop.f32.mrb[0].mxu0
      %2231 = vmatprep.mubr.bf16.mxu0 0
      %2232 = vmatmul.mubr.bf16.gmra.mrb[0].mxu0 %v1575
      %v2233 = vpop.f32.mrb[0].mxu0
      %v2234 = vadd.f32 %v1885, %v2233
      %v2235 = vpop.f32.mrb[0].mxu0
      %v2236 = vpop.f32.mrb[0].mxu0
      %v2237 = vadd.f32 %v1888, %v2236
      %v2238 = vpop.f32.mrb[0].mxu0
      %2239 = vmatprep.mubr.bf16.mxu0 0
      %2240 = vmatmul.mubr.bf16.gmra.mrb[0].mxu0 %v1576
      %v2241 = vpop.f32.mrb[0].mxu0
      %v2242 = vadd.f32 %v1893, %v2241
      %v2243 = vpop.f32.mrb[0].mxu0
      %v2244 = vpop.f32.mrb[0].mxu0
      %v2245 = vadd.f32 %v1896, %v2244
      %v2246 = vpop.f32.mrb[0].mxu0
      %2247 = vmatprep.mubr.bf16.mxu0 0
      %2248 = vmatmul.mubr.bf16.gmra.mrb[0].mxu0 %v1577
      %v2249 = vpop.f32.mrb[0].mxu0
      %v2250 = vadd.f32 %v1901, %v2249
      %v2251 = vpop.f32.mrb[0].mxu0
      %v2252 = vpop.f32.mrb[0].mxu0
      %v2253 = vadd.f32 %v1904, %v2252
      %v2254 = vpop.f32.mrb[0].mxu0
      %2255 = vmatprep.mubr.bf16.mxu0 0
      %2256 = vmatmul.mubr.bf16.gmra.mrb[0].mxu0 %v1578
      %v2257 = vpop.f32.mrb[0].mxu0
      %v2258 = vadd.f32 %v1909, %v2257
      %v2259 = vpop.f32.mrb[0].mxu0
      %v2260 = vpop.f32.mrb[0].mxu0
      %v2261 = vadd.f32 %v1912, %v2260
      %v2262 = vpop.f32.mrb[0].mxu0
      %2263 = vmatprep.mubr.bf16.mxu0 0
      %2264 = vmatmul.mubr.bf16.gmra.mrb[0].mxu0 %v1579
      %v2265 = vpop.f32.mrb[0].mxu0
      %v2266 = vadd.f32 %v1917, %v2265
      %v2267 = vpop.f32.mrb[0].mxu0
      %v2268 = vpop.f32.mrb[0].mxu0
      %v2269 = vadd.f32 %v1920, %v2268
      %v2270 = vpop.f32.mrb[0].mxu0
      %2271 = vmatprep.mubr.bf16.mxu0 0
      %2272 = vmatmul.mubr.bf16.gmra.mrb[0].mxu0 %v1580
      %v2273 = vpop.f32.mrb[0].mxu0
      %v2274 = vadd.f32 %v1925, %v2273
      %v2275 = vpop.f32.mrb[0].mxu0
      %v2276 = vpop.f32.mrb[0].mxu0
      %v2277 = vadd.f32 %v1928, %v2276
      %v2278 = vpop.f32.mrb[0].mxu0
      %2279 = vmatprep.mubr.bf16.mxu0 0
      %2280 = vmatmul.mubr.bf16.gmra.mrb[0].mxu0 %v1581
      %v2281 = vpop.f32.mrb[0].mxu0
      %v2282 = vadd.f32 %v1933, %v2281
      %v2283 = vpop.f32.mrb[0].mxu0
      %v2284 = vpop.f32.mrb[0].mxu0
      %v2285 = vadd.f32 %v1936, %v2284
      %v2286 = vpop.f32.mrb[0].mxu0
      %2287 = vmatprep.mubr.bf16.mxu0 0
      %2288 = vmatmul.mubr.bf16.gmra.mrb[0].mxu0 %v1582
      %v2289 = vpop.f32.mrb[0].mxu0
      %v2290 = vadd.f32 %v1941, %v2289
      %v2291 = vpop.f32.mrb[0].mxu0
      %v2292 = vpop.f32.mrb[0].mxu0
      %v2293 = vadd.f32 %v1944, %v2292
      %v2294 = vpop.f32.mrb[0].mxu0
      %2295 = vmatprep.mubr.bf16.mxu0 0
      %2296 = vmatmul.mubr.bf16.gmra.mrb[0].mxu0 %v1583
      %v2297 = vpop.f32.mrb[0].mxu0
      %v2298 = vadd.f32 %v1949, %v2297
      %v2299 = vpop.f32.mrb[0].mxu0
      %v2300 = vpop.f32.mrb[0].mxu0
      %v2301 = vadd.f32 %v1952, %v2300
      %v2302 = vpop.f32.mrb[0].mxu0
      %2303 = vdwg.mxu0
      %v2304 = vld [vmem:[%s165 + $0x20] sm:$0xf]
      %v2305 = vld [vmem:[%s165 + $0x24] sm:$0xf]
      %v2306 = vld [vmem:[%s165 + $0x28] sm:$0xf]
      %v2307 = vld [vmem:[%s165 + $0x2c] sm:$0xf]
      %v2308 = vld [vmem:[%s165 + $0x30] sm:$0xf]
      %v2309 = vld [vmem:[%s165 + $0x34] sm:$0xf]
      %v2310 = vld [vmem:[%s165 + $0x38] sm:$0xf]
      %v2311 = vld [vmem:[%s165 + $0x3c] sm:$0xf]
      %v2312 = vld [vmem:[%s165 + $0x40] sm:$0xf]
      %v2313 = vld [vmem:[%s165 + $0x44] sm:$0xf]
      %v2314 = vld [vmem:[%s165 + $0x48] sm:$0xf]
      %v2315 = vld [vmem:[%s165 + $0x4c] sm:$0xf]
      %v2316 = vld [vmem:[%s165 + $0x50] sm:$0xf]
      %v2317 = vld [vmem:[%s165 + $0x54] sm:$0xf]
      %v2318 = vld [vmem:[%s165 + $0x58] sm:$0xf]
      %v2319 = vld [vmem:[%s165 + $0x5c] sm:$0xf]
      %v2320 = vld [vmem:[%s165 + $0x60] sm:$0xf]
      %v2321 = vld [vmem:[%s165 + $0x64] sm:$0xf]
      %v2322 = vld [vmem:[%s165 + $0x68] sm:$0xf]
      %v2323 = vld [vmem:[%s165 + $0x6c] sm:$0xf]
      %v2324 = vld [vmem:[%s165 + $0x70] sm:$0xf]
      %v2325 = vld [vmem:[%s165 + $0x74] sm:$0xf]
      %v2326 = vld [vmem:[%s165 + $0x78] sm:$0xf]
      %v2327 = vld [vmem:[%s165 + $0x7c] sm:$0xf]
      %v2328 = vld [vmem:[%s165 + $0x80] sm:$0xf]
      %v2329 = vld [vmem:[%s165 + $0x84] sm:$0xf]
      %v2330 = vld [vmem:[%s165 + $0x88] sm:$0xf]
      %v2331 = vld [vmem:[%s165 + $0x8c] sm:$0xf]
      %v2332 = vld [vmem:[%s165 + $0x90] sm:$0xf]
      %v2333 = vld [vmem:[%s165 + $0x94] sm:$0xf]
      %v2334 = vld [vmem:[%s165 + $0x98] sm:$0xf]
      %v2335 = vld [vmem:[%s165 + $0x9c] sm:$0xf]
      %v2336 = vld [vmem:[%s165 + $0xa0] sm:$0xf]
      %v2337 = vld [vmem:[%s165 + $0xa4] sm:$0xf]
      %v2338 = vld [vmem:[%s165 + $0xa8] sm:$0xf]
      %v2339 = vld [vmem:[%s165 + $0xac] sm:$0xf]
      %v2340 = vld [vmem:[%s165 + $0xb0] sm:$0xf]
      %v2341 = vld [vmem:[%s165 + $0xb4] sm:$0xf]
      %v2342 = vld [vmem:[%s165 + $0xb8] sm:$0xf]
      %v2343 = vld [vmem:[%s165 + $0xbc] sm:$0xf]
      %v2344 = vld [vmem:[%s165 + $0xc0] sm:$0xf]
      %v2345 = vld [vmem:[%s165 + $0xc4] sm:$0xf]
      %v2346 = vld [vmem:[%s165 + $0xc8] sm:$0xf]
      %v2347 = vld [vmem:[%s165 + $0xcc] sm:$0xf]
      %v2348 = vld [vmem:[%s165 + $0xd0] sm:$0xf]
      %v2349 = vld [vmem:[%s165 + $0xd4] sm:$0xf]
      %v2350 = vld [vmem:[%s165 + $0xd8] sm:$0xf]
      %v2351 = vld [vmem:[%s165 + $0xdc] sm:$0xf]
      %v2352 = vld [vmem:[%s165 + $0xe0] sm:$0xf]
      %v2353 = vld [vmem:[%s165 + $0xe4] sm:$0xf]
      %v2354 = vld [vmem:[%s165 + $0xe8] sm:$0xf]
      %v2355 = vld [vmem:[%s165 + $0xec] sm:$0xf]
      %v2356 = vld [vmem:[%s165 + $0xf0] sm:$0xf]
      %v2357 = vld [vmem:[%s165 + $0xf4] sm:$0xf]
      %v2358 = vld [vmem:[%s165 + $0xf8] sm:$0xf]
      %v2359 = vld [vmem:[%s165 + $0xfc] sm:$0xf]
      %v2360 = vld [vmem:[%s165 + $0x100] sm:$0xf]
      %v2361 = vld [vmem:[%s165 + $0x104] sm:$0xf]
      %v2362 = vld [vmem:[%s165 + $0x108] sm:$0xf]
      %v2363 = vld [vmem:[%s165 + $0x10c] sm:$0xf]
      %v2364 = vld [vmem:[%s165 + $0x110] sm:$0xf]
      %v2365 = vld [vmem:[%s165 + $0x114] sm:$0xf]
      %v2366 = vld [vmem:[%s165 + $0x118] sm:$0xf]
      %v2367 = vld [vmem:[%s165 + $0x11c] sm:$0xf]
      %s2368 = scalar_lea.vmem %s1, 384
      %v2369 = vld [vmem:[%s2368] sm:$0xf]
      %v2370 = vld [vmem:[%s2368 + $0x4] sm:$0xf]
      %v2371 = vld [vmem:[%s2368 + $0x8] sm:$0xf]
      %v2372 = vld [vmem:[%s2368 + $0xc] sm:$0xf]
      %v2373 = vld [vmem:[%s2368 + $0x10] sm:$0xf]
      %v2374 = vld [vmem:[%s2368 + $0x14] sm:$0xf]
      %v2375 = vld [vmem:[%s2368 + $0x18] sm:$0xf]
      %v2376 = vld [vmem:[%s2368 + $0x1c] sm:$0xf]
      %v2377 = vld [vmem:[%s2368 + $0x20] sm:$0xf]
      %v2378 = vld [vmem:[%s2368 + $0x24] sm:$0xf]
      %v2379 = vld [vmem:[%s2368 + $0x28] sm:$0xf]
      %v2380 = vld [vmem:[%s2368 + $0x2c] sm:$0xf]
      %v2381 = vld [vmem:[%s2368 + $0x30] sm:$0xf]
      %v2382 = vld [vmem:[%s2368 + $0x34] sm:$0xf]
      %v2383 = vld [vmem:[%s2368 + $0x38] sm:$0xf]
      %v2384 = vld [vmem:[%s2368 + $0x3c] sm:$0xf]
      %v2449 = vunpack.c.l.b16 %v2304
      %v2450 = vunpack.c.l.b16 %v2305
      %v2451 = vunpack.c.l.b16 %v2306
      %v2452 = vunpack.c.l.b16 %v2307
      %v2453 = vunpack.c.l.b16 %v2308
      %v2454 = vunpack.c.l.b16 %v2309
      %v2455 = vunpack.c.l.b16 %v2310
      %v2456 = vunpack.c.l.b16 %v2311
      %v2457 = vunpack.c.l.b16 %v2312
      %v2458 = vunpack.c.l.b16 %v2313
      %v2459 = vunpack.c.l.b16 %v2314
      %v2460 = vunpack.c.l.b16 %v2315
      %v2461 = vunpack.c.l.b16 %v2316
      %v2462 = vunpack.c.l.b16 %v2317
      %v2463 = vunpack.c.l.b16 %v2318
      %v2464 = vunpack.c.l.b16 %v2319
      %v2465 = vunpack.c.l.b16 %v2320
      %v2466 = vunpack.c.l.b16 %v2321
      %v2467 = vunpack.c.l.b16 %v2322
      %v2468 = vunpack.c.l.b16 %v2323
      %v2469 = vunpack.c.l.b16 %v2324
      %v2470 = vunpack.c.l.b16 %v2325
      %v2471 = vunpack.c.l.b16 %v2326
      %v2472 = vunpack.c.l.b16 %v2327
      %v2473 = vunpack.c.l.b16 %v2328
      %v2474 = vunpack.c.l.b16 %v2329
      %v2475 = vunpack.c.l.b16 %v2330
      %v2476 = vunpack.c.l.b16 %v2331
      %v2477 = vunpack.c.l.b16 %v2332
      %v2478 = vunpack.c.l.b16 %v2333
      %v2479 = vunpack.c.l.b16 %v2334
      %v2480 = vunpack.c.l.b16 %v2335
      %v2481 = vunpack.c.l.b16 %v2336
      %v2482 = vunpack.c.l.b16 %v2337
      %v2483 = vunpack.c.l.b16 %v2338
      %v2484 = vunpack.c.l.b16 %v2339
      %v2485 = vunpack.c.l.b16 %v2340
      %v2486 = vunpack.c.l.b16 %v2341
      %v2487 = vunpack.c.l.b16 %v2342
      %v2488 = vunpack.c.l.b16 %v2343
      %v2489 = vunpack.c.l.b16 %v2344
      %v2490 = vunpack.c.l.b16 %v2345
      %v2491 = vunpack.c.l.b16 %v2346
      %v2492 = vunpack.c.l.b16 %v2347
      %v2493 = vunpack.c.l.b16 %v2348
      %v2494 = vunpack.c.l.b16 %v2349
      %v2495 = vunpack.c.l.b16 %v2350
      %v2496 = vunpack.c.l.b16 %v2351
      %v2497 = vunpack.c.l.b16 %v2352
      %v2498 = vunpack.c.l.b16 %v2353
      %v2499 = vunpack.c.l.b16 %v2354
      %v2500 = vunpack.c.l.b16 %v2355
      %v2501 = vunpack.c.l.b16 %v2356
      %v2502 = vunpack.c.l.b16 %v2357
      %v2503 = vunpack.c.l.b16 %v2358
      %v2504 = vunpack.c.l.b16 %v2359
      %v2505 = vunpack.c.l.b16 %v2360
      %v2506 = vunpack.c.l.b16 %v2361
      %v2507 = vunpack.c.l.b16 %v2362
      %v2508 = vunpack.c.l.b16 %v2363
      %v2509 = vunpack.c.l.b16 %v2364
      %v2510 = vunpack.c.l.b16 %v2365
      %v2511 = vunpack.c.l.b16 %v2366
      %v2512 = vunpack.c.l.b16 %v2367
      %v2513 = vpack.c.b16 %v2450, %v2449
      %v2514 = vpack.c.b16 %v2452, %v2451
      %v2515 = vpack.c.b16 %v2454, %v2453
      %v2516 = vpack.c.b16 %v2456, %v2455
      %v2517 = vpack.c.b16 %v2458, %v2457
      %v2518 = vpack.c.b16 %v2460, %v2459
      %v2519 = vpack.c.b16 %v2462, %v2461
      %v2520 = vpack.c.b16 %v2464, %v2463
      %v2521 = vpack.c.b16 %v2466, %v2465
      %v2522 = vpack.c.b16 %v2468, %v2467
      %v2523 = vpack.c.b16 %v2470, %v2469
      %v2524 = vpack.c.b16 %v2472, %v2471
      %v2525 = vpack.c.b16 %v2474, %v2473
      %v2526 = vpack.c.b16 %v2476, %v2475
      %v2527 = vpack.c.b16 %v2478, %v2477
      %v2528 = vpack.c.b16 %v2480, %v2479
      %v2529 = vpack.c.b16 %v2482, %v2481
      %v2530 = vpack.c.b16 %v2484, %v2483
      %v2531 = vpack.c.b16 %v2486, %v2485
      %v2532 = vpack.c.b16 %v2488, %v2487
      %v2533 = vpack.c.b16 %v2490, %v2489
      %v2534 = vpack.c.b16 %v2492, %v2491
      %v2535 = vpack.c.b16 %v2494, %v2493
      %v2536 = vpack.c.b16 %v2496, %v2495
      %v2537 = vpack.c.b16 %v2498, %v2497
      %v2538 = vpack.c.b16 %v2500, %v2499
      %v2539 = vpack.c.b16 %v2502, %v2501
      %v2540 = vpack.c.b16 %v2504, %v2503
      %v2541 = vpack.c.b16 %v2506, %v2505
      %v2542 = vpack.c.b16 %v2508, %v2507
      %v2543 = vpack.c.b16 %v2510, %v2509
      %v2544 = vpack.c.b16 %v2512, %v2511
      %v2593 = vunpack.c.l.b16 %v2369
      %v2594 = vunpack.c.l.b16 %v2370
      %v2595 = vunpack.c.l.b16 %v2371
      %v2596 = vunpack.c.l.b16 %v2372
      %v2597 = vunpack.c.l.b16 %v2373
      %v2598 = vunpack.c.l.b16 %v2374
      %v2599 = vunpack.c.l.b16 %v2375
      %v2600 = vunpack.c.l.b16 %v2376
      %v2601 = vunpack.c.l.b16 %v2377
      %v2602 = vunpack.c.l.b16 %v2378
      %v2603 = vunpack.c.l.b16 %v2379
      %v2604 = vunpack.c.l.b16 %v2380
      %v2605 = vunpack.c.l.b16 %v2381
      %v2606 = vunpack.c.l.b16 %v2382
      %v2607 = vunpack.c.l.b16 %v2383
      %v2608 = vunpack.c.l.b16 %v2384
      %v2609 = vpack.c.b16 %v2594, %v2593
      %v2610 = vpack.c.b16 %v2596, %v2595
      %v2611 = vpack.c.b16 %v2598, %v2597
      %v2612 = vpack.c.b16 %v2600, %v2599
      %v2613 = vpack.c.b16 %v2602, %v2601
      %v2614 = vpack.c.b16 %v2604, %v2603
      %v2615 = vpack.c.b16 %v2606, %v2605
      %v2616 = vpack.c.b16 %v2608, %v2607
      %2625 = vmatprep.subr.bf16.mxu0 0
      %2626 = vmatpush1.bf16.msra.mxu0 %v2609
      %2627 = vmatprep.subr.bf16.mxu0 0
      %2628 = vmatpush1.bf16.msra.mxu0 %v2610
      %2629 = vmatprep.subr.bf16.mxu0 0
      %2630 = vmatpush1.bf16.msra.mxu0 %v2611
      %2631 = vmatprep.subr.bf16.mxu0 0
      %2632 = vmatpush1.bf16.msra.mxu0 %v2612
      %2633 = vmatprep.subr.bf16.mxu0 0
      %2634 = vmatpush1.bf16.msra.mxu0 %v2613
      %2635 = vmatprep.subr.bf16.mxu0 0
      %2636 = vmatpush1.bf16.msra.mxu0 %v2614
      %2637 = vmatprep.subr.bf16.mxu0 0
      %2638 = vmatpush1.bf16.msra.mxu0 %v2615
      %2639 = vmatprep.subr.bf16.mxu0 0
      %2640 = vmatpush1.bf16.msra.mxu0 %v2616
      %2641 = vmatprep.subr.bf16.mxu0 0
      %2642 = vmatpush1.bf16.msra.mxu0 0
      %2643 = vmatprep.subr.bf16.mxu0 0
      %2644 = vmatpush1.bf16.msra.mxu0 0
      %2645 = vmatprep.subr.bf16.mxu0 0
      %2646 = vmatpush1.bf16.msra.mxu0 0
      %2647 = vmatprep.subr.bf16.mxu0 0
      %2648 = vmatpush1.bf16.msra.mxu0 0
      %2649 = vmatprep.subr.bf16.mxu0 0
      %2650 = vmatpush1.bf16.msra.mxu0 0
      %2651 = vmatprep.subr.bf16.mxu0 0
      %2652 = vmatpush1.bf16.msra.mxu0 0
      %2653 = vmatprep.subr.bf16.mxu0 0
      %2654 = vmatpush1.bf16.msra.mxu0 0
      %2655 = vmatprep.subr.bf16.mxu0 0
      %2656 = vmatpush1.bf16.msra.mxu0 0
      %2657 = vmatprep.mubr.bf16.mxu0 0
      %2658 = vmatmul.mubr.bf16.gmra.mrb[0].mxu0 %v2513
      %v2659 = vpop.f32.mrb[0].mxu0
      %v2660 = vadd.f32 0.0, %v2659
      %v2661 = vpop.f32.mrb[0].mxu0
      %v2662 = vpop.f32.mrb[0].mxu0
      %v2663 = vadd.f32 0.0, %v2662
      %v2664 = vpop.f32.mrb[0].mxu0
      %2665 = vmatprep.mubr.bf16.mxu0 0
      %2666 = vmatmul.mubr.bf16.gmra.mrb[0].mxu0 %v2514
      %v2667 = vpop.f32.mrb[0].mxu0
      %v2668 = vadd.f32 0.0, %v2667
      %v2669 = vpop.f32.mrb[0].mxu0
      %v2670 = vpop.f32.mrb[0].mxu0
      %v2671 = vadd.f32 0.0, %v2670
      %v2672 = vpop.f32.mrb[0].mxu0
      %2673 = vmatprep.mubr.bf16.mxu0 0
      %2674 = vmatmul.mubr.bf16.gmra.mrb[0].mxu0 %v2515
      %v2675 = vpop.f32.mrb[0].mxu0
      %v2676 = vadd.f32 0.0, %v2675
      %v2677 = vpop.f32.mrb[0].mxu0
      %v2678 = vpop.f32.mrb[0].mxu0
      %v2679 = vadd.f32 0.0, %v2678
      %v2680 = vpop.f32.mrb[0].mxu0
      %2681 = vmatprep.mubr.bf16.mxu0 0
      %2682 = vmatmul.mubr.bf16.gmra.mrb[0].mxu0 %v2516
      %v2683 = vpop.f32.mrb[0].mxu0
      %v2684 = vadd.f32 0.0, %v2683
      %v2685 = vpop.f32.mrb[0].mxu0
      %v2686 = vpop.f32.mrb[0].mxu0
      %v2687 = vadd.f32 0.0, %v2686
      %v2688 = vpop.f32.mrb[0].mxu0
      %2689 = vmatprep.mubr.bf16.mxu0 0
      %2690 = vmatmul.mubr.bf16.gmra.mrb[0].mxu0 %v2517
      %v2691 = vpop.f32.mrb[0].mxu0
      %v2692 = vadd.f32 0.0, %v2691
      %v2693 = vpop.f32.mrb[0].mxu0
      %v2694 = vpop.f32.mrb[0].mxu0
      %v2695 = vadd.f32 0.0, %v2694
      %v2696 = vpop.f32.mrb[0].mxu0
      %2697 = vmatprep.mubr.bf16.mxu0 0
      %2698 = vmatmul.mubr.bf16.gmra.mrb[0].mxu0 %v2518
      %v2699 = vpop.f32.mrb[0].mxu0
      %v2700 = vadd.f32 0.0, %v2699
      %v2701 = vpop.f32.mrb[0].mxu0
      %v2702 = vpop.f32.mrb[0].mxu0
      %v2703 = vadd.f32 0.0, %v2702
      %v2704 = vpop.f32.mrb[0].mxu0
      %2705 = vmatprep.mubr.bf16.mxu0 0
      %2706 = vmatmul.mubr.bf16.gmra.mrb[0].mxu0 %v2519
      %v2707 = vpop.f32.mrb[0].mxu0
      %v2708 = vadd.f32 0.0, %v2707
      %v2709 = vpop.f32.mrb[0].mxu0
      %v2710 = vpop.f32.mrb[0].mxu0
      %v2711 = vadd.f32 0.0, %v2710
      %v2712 = vpop.f32.mrb[0].mxu0
      %2713 = vmatprep.mubr.bf16.mxu0 0
      %2714 = vmatmul.mubr.bf16.gmra.mrb[0].mxu0 %v2520
      %v2715 = vpop.f32.mrb[0].mxu0
      %v2716 = vadd.f32 0.0, %v2715
      %v2717 = vpop.f32.mrb[0].mxu0
      %v2718 = vpop.f32.mrb[0].mxu0
      %v2719 = vadd.f32 0.0, %v2718
      %v2720 = vpop.f32.mrb[0].mxu0
      %2721 = vmatprep.mubr.bf16.mxu0 0
      %2722 = vmatmul.mubr.bf16.gmra.mrb[0].mxu0 %v2521
      %v2723 = vpop.f32.mrb[0].mxu0
      %v2724 = vadd.f32 0.0, %v2723
      %v2725 = vpop.f32.mrb[0].mxu0
      %v2726 = vpop.f32.mrb[0].mxu0
      %v2727 = vadd.f32 0.0, %v2726
      %v2728 = vpop.f32.mrb[0].mxu0
      %2729 = vmatprep.mubr.bf16.mxu0 0
      %2730 = vmatmul.mubr.bf16.gmra.mrb[0].mxu0 %v2522
      %v2731 = vpop.f32.mrb[0].mxu0
      %v2732 = vadd.f32 0.0, %v2731
      %v2733 = vpop.f32.mrb[0].mxu0
      %v2734 = vpop.f32.mrb[0].mxu0
      %v2735 = vadd.f32 0.0, %v2734
      %v2736 = vpop.f32.mrb[0].mxu0
      %2737 = vmatprep.mubr.bf16.mxu0 0
      %2738 = vmatmul.mubr.bf16.gmra.mrb[0].mxu0 %v2523
      %v2739 = vpop.f32.mrb[0].mxu0
      %v2740 = vadd.f32 0.0, %v2739
      %v2741 = vpop.f32.mrb[0].mxu0
      %v2742 = vpop.f32.mrb[0].mxu0
      %v2743 = vadd.f32 0.0, %v2742
      %v2744 = vpop.f32.mrb[0].mxu0
      %2745 = vmatprep.mubr.bf16.mxu0 0
      %2746 = vmatmul.mubr.bf16.gmra.mrb[0].mxu0 %v2524
      %v2747 = vpop.f32.mrb[0].mxu0
      %v2748 = vadd.f32 0.0, %v2747
      %v2749 = vpop.f32.mrb[0].mxu0
      %v2750 = vpop.f32.mrb[0].mxu0
      %v2751 = vadd.f32 0.0, %v2750
      %v2752 = vpop.f32.mrb[0].mxu0
      %2753 = vmatprep.mubr.bf16.mxu0 0
      %2754 = vmatmul.mubr.bf16.gmra.mrb[0].mxu0 %v2525
      %v2755 = vpop.f32.mrb[0].mxu0
      %v2756 = vadd.f32 0.0, %v2755
      %v2757 = vpop.f32.mrb[0].mxu0
      %v2758 = vpop.f32.mrb[0].mxu0
      %v2759 = vadd.f32 0.0, %v2758
      %v2760 = vpop.f32.mrb[0].mxu0
      %2761 = vmatprep.mubr.bf16.mxu0 0
      %2762 = vmatmul.mubr.bf16.gmra.mrb[0].mxu0 %v2526
      %v2763 = vpop.f32.mrb[0].mxu0
      %v2764 = vadd.f32 0.0, %v2763
      %v2765 = vpop.f32.mrb[0].mxu0
      %v2766 = vpop.f32.mrb[0].mxu0
      %v2767 = vadd.f32 0.0, %v2766
      %v2768 = vpop.f32.mrb[0].mxu0
      %2769 = vmatprep.mubr.bf16.mxu0 0
      %2770 = vmatmul.mubr.bf16.gmra.mrb[0].mxu0 %v2527
      %v2771 = vpop.f32.mrb[0].mxu0
      %v2772 = vadd.f32 0.0, %v2771
      %v2773 = vpop.f32.mrb[0].mxu0
      %v2774 = vpop.f32.mrb[0].mxu0
      %v2775 = vadd.f32 0.0, %v2774
      %v2776 = vpop.f32.mrb[0].mxu0
      %2777 = vmatprep.mubr.bf16.mxu0 0
      %2778 = vmatmul.mubr.bf16.gmra.mrb[0].mxu0 %v2528
      %v2779 = vpop.f32.mrb[0].mxu0
      %v2780 = vadd.f32 0.0, %v2779
      %v2781 = vpop.f32.mrb[0].mxu0
      %v2782 = vpop.f32.mrb[0].mxu0
      %v2783 = vadd.f32 0.0, %v2782
      %v2784 = vpop.f32.mrb[0].mxu0
      %2785 = vmatprep.mubr.bf16.mxu0 0
      %2786 = vmatmul.mubr.bf16.gmra.mrb[0].mxu0 %v2529
      %v2787 = vpop.f32.mrb[0].mxu0
      %v2788 = vadd.f32 0.0, %v2787
      %v2789 = vpop.f32.mrb[0].mxu0
      %v2790 = vpop.f32.mrb[0].mxu0
      %v2791 = vadd.f32 0.0, %v2790
      %v2792 = vpop.f32.mrb[0].mxu0
      %2793 = vmatprep.mubr.bf16.mxu0 0
      %2794 = vmatmul.mubr.bf16.gmra.mrb[0].mxu0 %v2530
      %v2795 = vpop.f32.mrb[0].mxu0
      %v2796 = vadd.f32 0.0, %v2795
      %v2797 = vpop.f32.mrb[0].mxu0
      %v2798 = vpop.f32.mrb[0].mxu0
      %v2799 = vadd.f32 0.0, %v2798
      %v2800 = vpop.f32.mrb[0].mxu0
      %2801 = vmatprep.mubr.bf16.mxu0 0
      %2802 = vmatmul.mubr.bf16.gmra.mrb[0].mxu0 %v2531
      %v2803 = vpop.f32.mrb[0].mxu0
      %v2804 = vadd.f32 0.0, %v2803
      %v2805 = vpop.f32.mrb[0].mxu0
      %v2806 = vpop.f32.mrb[0].mxu0
      %v2807 = vadd.f32 0.0, %v2806
      %v2808 = vpop.f32.mrb[0].mxu0
      %2809 = vmatprep.mubr.bf16.mxu0 0
      %2810 = vmatmul.mubr.bf16.gmra.mrb[0].mxu0 %v2532
      %v2811 = vpop.f32.mrb[0].mxu0
      %v2812 = vadd.f32 0.0, %v2811
      %v2813 = vpop.f32.mrb[0].mxu0
      %v2814 = vpop.f32.mrb[0].mxu0
      %v2815 = vadd.f32 0.0, %v2814
      %v2816 = vpop.f32.mrb[0].mxu0
      %2817 = vmatprep.mubr.bf16.mxu0 0
      %2818 = vmatmul.mubr.bf16.gmra.mrb[0].mxu0 %v2533
      %v2819 = vpop.f32.mrb[0].mxu0
      %v2820 = vadd.f32 0.0, %v2819
      %v2821 = vpop.f32.mrb[0].mxu0
      %v2822 = vpop.f32.mrb[0].mxu0
      %v2823 = vadd.f32 0.0, %v2822
      %v2824 = vpop.f32.mrb[0].mxu0
      %2825 = vmatprep.mubr.bf16.mxu0 0
      %2826 = vmatmul.mubr.bf16.gmra.mrb[0].mxu0 %v2534
      %v2827 = vpop.f32.mrb[0].mxu0
      %v2828 = vadd.f32 0.0, %v2827
      %v2829 = vpop.f32.mrb[0].mxu0
      %v2830 = vpop.f32.mrb[0].mxu0
      %v2831 = vadd.f32 0.0, %v2830
      %v2832 = vpop.f32.mrb[0].mxu0
      %2833 = vmatprep.mubr.bf16.mxu0 0
      %2834 = vmatmul.mubr.bf16.gmra.mrb[0].mxu0 %v2535
      %v2835 = vpop.f32.mrb[0].mxu0
      %v2836 = vadd.f32 0.0, %v2835
      %v2837 = vpop.f32.mrb[0].mxu0
      %v2838 = vpop.f32.mrb[0].mxu0
      %v2839 = vadd.f32 0.0, %v2838
      %v2840 = vpop.f32.mrb[0].mxu0
      %2841 = vmatprep.mubr.bf16.mxu0 0
      %2842 = vmatmul.mubr.bf16.gmra.mrb[0].mxu0 %v2536
      %v2843 = vpop.f32.mrb[0].mxu0
      %v2844 = vadd.f32 0.0, %v2843
      %v2845 = vpop.f32.mrb[0].mxu0
      %v2846 = vpop.f32.mrb[0].mxu0
      %v2847 = vadd.f32 0.0, %v2846
      %v2848 = vpop.f32.mrb[0].mxu0
      %2849 = vmatprep.mubr.bf16.mxu0 0
      %2850 = vmatmul.mubr.bf16.gmra.mrb[0].mxu0 %v2537
      %v2851 = vpop.f32.mrb[0].mxu0
      %v2852 = vadd.f32 0.0, %v2851
      %v2853 = vpop.f32.mrb[0].mxu0
      %v2854 = vpop.f32.mrb[0].mxu0
      %v2855 = vadd.f32 0.0, %v2854
      %v2856 = vpop.f32.mrb[0].mxu0
      %2857 = vmatprep.mubr.bf16.mxu0 0
      %2858 = vmatmul.mubr.bf16.gmra.mrb[0].mxu0 %v2538
      %v2859 = vpop.f32.mrb[0].mxu0
      %v2860 = vadd.f32 0.0, %v2859
      %v2861 = vpop.f32.mrb[0].mxu0
      %v2862 = vpop.f32.mrb[0].mxu0
      %v2863 = vadd.f32 0.0, %v2862
      %v2864 = vpop.f32.mrb[0].mxu0
      %2865 = vmatprep.mubr.bf16.mxu0 0
      %2866 = vmatmul.mubr.bf16.gmra.mrb[0].mxu0 %v2539
      %v2867 = vpop.f32.mrb[0].mxu0
      %v2868 = vadd.f32 0.0, %v2867
      %v2869 = vpop.f32.mrb[0].mxu0
      %v2870 = vpop.f32.mrb[0].mxu0
      %v2871 = vadd.f32 0.0, %v2870
      %v2872 = vpop.f32.mrb[0].mxu0
      %2873 = vmatprep.mubr.bf16.mxu0 0
      %2874 = vmatmul.mubr.bf16.gmra.mrb[0].mxu0 %v2540
      %v2875 = vpop.f32.mrb[0].mxu0
      %v2876 = vadd.f32 0.0, %v2875
      %v2877 = vpop.f32.mrb[0].mxu0
      %v2878 = vpop.f32.mrb[0].mxu0
      %v2879 = vadd.f32 0.0, %v2878
      %v2880 = vpop.f32.mrb[0].mxu0
      %2881 = vmatprep.mubr.bf16.mxu0 0
      %2882 = vmatmul.mubr.bf16.gmra.mrb[0].mxu0 %v2541
      %v2883 = vpop.f32.mrb[0].mxu0
      %v2884 = vadd.f32 0.0, %v2883
      %v2885 = vpop.f32.mrb[0].mxu0
      %v2886 = vpop.f32.mrb[0].mxu0
      %v2887 = vadd.f32 0.0, %v2886
      %v2888 = vpop.f32.mrb[0].mxu0
      %2889 = vmatprep.mubr.bf16.mxu0 0
      %2890 = vmatmul.mubr.bf16.gmra.mrb[0].mxu0 %v2542
      %v2891 = vpop.f32.mrb[0].mxu0
      %v2892 = vadd.f32 0.0, %v2891
      %v2893 = vpop.f32.mrb[0].mxu0
      %v2894 = vpop.f32.mrb[0].mxu0
      %v2895 = vadd.f32 0.0, %v2894
      %v2896 = vpop.f32.mrb[0].mxu0
      %2897 = vmatprep.mubr.bf16.mxu0 0
      %2898 = vmatmul.mubr.bf16.gmra.mrb[0].mxu0 %v2543
      %v2899 = vpop.f32.mrb[0].mxu0
      %v2900 = vadd.f32 0.0, %v2899
      %v2901 = vpop.f32.mrb[0].mxu0
      %v2902 = vpop.f32.mrb[0].mxu0
      %v2903 = vadd.f32 0.0, %v2902
      %v2904 = vpop.f32.mrb[0].mxu0
      %2905 = vmatprep.mubr.bf16.mxu0 0
      %2906 = vmatmul.mubr.bf16.gmra.mrb[0].mxu0 %v2544
      %v2907 = vpop.f32.mrb[0].mxu0
      %v2908 = vadd.f32 0.0, %v2907
      %v2909 = vpop.f32.mrb[0].mxu0
      %v2910 = vpop.f32.mrb[0].mxu0
      %v2911 = vadd.f32 0.0, %v2910
      %v2912 = vpop.f32.mrb[0].mxu0
      %2913 = vdwg.mxu0
      %v2914 = vadd.f32 %v2050, %v2660
      %v2915 = vadd.f32 %v2053, %v2663
      %v2916 = vadd.f32 %v2058, %v2668
      %v2917 = vadd.f32 %v2061, %v2671
      %v2918 = vadd.f32 %v2066, %v2676
      %v2919 = vadd.f32 %v2069, %v2679
      %v2920 = vadd.f32 %v2074, %v2684
      %v2921 = vadd.f32 %v2077, %v2687
      %v2922 = vadd.f32 %v2082, %v2692
      %v2923 = vadd.f32 %v2085, %v2695
      %v2924 = vadd.f32 %v2090, %v2700
      %v2925 = vadd.f32 %v2093, %v2703
      %v2926 = vadd.f32 %v2098, %v2708
      %v2927 = vadd.f32 %v2101, %v2711
      %v2928 = vadd.f32 %v2106, %v2716
      %v2929 = vadd.f32 %v2109, %v2719
      %v2930 = vadd.f32 %v2114, %v2724
      %v2931 = vadd.f32 %v2117, %v2727
      %v2932 = vadd.f32 %v2122, %v2732
      %v2933 = vadd.f32 %v2125, %v2735
      %v2934 = vadd.f32 %v2130, %v2740
      %v2935 = vadd.f32 %v2133, %v2743
      %v2936 = vadd.f32 %v2138, %v2748
      %v2937 = vadd.f32 %v2141, %v2751
      %v2938 = vadd.f32 %v2146, %v2756
      %v2939 = vadd.f32 %v2149, %v2759
      %v2940 = vadd.f32 %v2154, %v2764
      %v2941 = vadd.f32 %v2157, %v2767
      %v2942 = vadd.f32 %v2162, %v2772
      %v2943 = vadd.f32 %v2165, %v2775
      %v2944 = vadd.f32 %v2170, %v2780
      %v2945 = vadd.f32 %v2173, %v2783
      %v2946 = vadd.f32 %v2178, %v2788
      %v2947 = vadd.f32 %v2181, %v2791
      %v2948 = vadd.f32 %v2186, %v2796
      %v2949 = vadd.f32 %v2189, %v2799
      %v2950 = vadd.f32 %v2194, %v2804
      %v2951 = vadd.f32 %v2197, %v2807
      %v2952 = vadd.f32 %v2202, %v2812
      %v2953 = vadd.f32 %v2205, %v2815
      %v2954 = vadd.f32 %v2210, %v2820
      %v2955 = vadd.f32 %v2213, %v2823
      %v2956 = vadd.f32 %v2218, %v2828
      %v2957 = vadd.f32 %v2221, %v2831
      %v2958 = vadd.f32 %v2226, %v2836
      %v2959 = vadd.f32 %v2229, %v2839
      %v2960 = vadd.f32 %v2234, %v2844
      %v2961 = vadd.f32 %v2237, %v2847
      %v2962 = vadd.f32 %v2242, %v2852
      %v2963 = vadd.f32 %v2245, %v2855
      %v2964 = vadd.f32 %v2250, %v2860
      %v2965 = vadd.f32 %v2253, %v2863
      %v2966 = vadd.f32 %v2258, %v2868
      %v2967 = vadd.f32 %v2261, %v2871
      %v2968 = vadd.f32 %v2266, %v2876
      %v2969 = vadd.f32 %v2269, %v2879
      %v2970 = vadd.f32 %v2274, %v2884
      %v2971 = vadd.f32 %v2277, %v2887
      %v2972 = vadd.f32 %v2282, %v2892
      %v2973 = vadd.f32 %v2285, %v2895
      %v2974 = vadd.f32 %v2290, %v2900
      %v2975 = vadd.f32 %v2293, %v2903
      %v2976 = vadd.f32 %v2298, %v2908
      %v2977 = vadd.f32 %v2301, %v2911
      %v2978 = vrot.slane %v2914, 7
      %v2979 = vrot.slane %v2915, 7
      %v2980 = vrot.slane %v2916, 7
      %v2981 = vrot.slane %v2917, 7
      %v2982 = vrot.slane %v2918, 7
      %v2983 = vrot.slane %v2919, 7
      %v2984 = vrot.slane %v2920, 7
      %v2985 = vrot.slane %v2921, 7
      %v2986 = vrot.slane %v2922, 7
      %v2987 = vrot.slane %v2923, 7
      %v2988 = vrot.slane %v2924, 7
      %v2989 = vrot.slane %v2925, 7
      %v2990 = vrot.slane %v2926, 7
      %v2991 = vrot.slane %v2927, 7
      %v2992 = vrot.slane %v2928, 7
      %v2993 = vrot.slane %v2929, 7
      %v2994 = vrot.slane %v2930, 7
      %v2995 = vrot.slane %v2931, 7
      %v2996 = vrot.slane %v2932, 7
      %v2997 = vrot.slane %v2933, 7
      %v2998 = vrot.slane %v2934, 7
      %v2999 = vrot.slane %v2935, 7
      %v3000 = vrot.slane %v2936, 7
      %v3001 = vrot.slane %v2937, 7
      %v3002 = vrot.slane %v2938, 7
      %v3003 = vrot.slane %v2939, 7
      %v3004 = vrot.slane %v2940, 7
      %v3005 = vrot.slane %v2941, 7
      %v3006 = vrot.slane %v2942, 7
      %v3007 = vrot.slane %v2943, 7
      %v3008 = vrot.slane %v2944, 7
      %v3009 = vrot.slane %v2945, 7
      %v3010 = vrot.slane %v2946, 7
      %v3011 = vrot.slane %v2947, 7
      %v3012 = vrot.slane %v2948, 7
      %v3013 = vrot.slane %v2949, 7
      %v3014 = vrot.slane %v2950, 7
      %v3015 = vrot.slane %v2951, 7
      %v3016 = vrot.slane %v2952, 7
      %v3017 = vrot.slane %v2953, 7
      %v3018 = vrot.slane %v2954, 7
      %v3019 = vrot.slane %v2955, 7
      %v3020 = vrot.slane %v2956, 7
      %v3021 = vrot.slane %v2957, 7
      %v3022 = vrot.slane %v2958, 7
      %v3023 = vrot.slane %v2959, 7
      %v3024 = vrot.slane %v2960, 7
      %v3025 = vrot.slane %v2961, 7
      %v3026 = vrot.slane %v2962, 7
      %v3027 = vrot.slane %v2963, 7
      %v3028 = vrot.slane %v2964, 7
      %v3029 = vrot.slane %v2965, 7
      %v3030 = vrot.slane %v2966, 7
      %v3031 = vrot.slane %v2967, 7
      %v3032 = vrot.slane %v2968, 7
      %v3033 = vrot.slane %v2969, 7
      %v3034 = vrot.slane %v2970, 7
      %v3035 = vrot.slane %v2971, 7
      %v3036 = vrot.slane %v2972, 7
      %v3037 = vrot.slane %v2973, 7
      %v3038 = vrot.slane %v2974, 7
      %v3039 = vrot.slane %v2975, 7
      %v3040 = vrot.slane %v2976, 7
      %v3041 = vrot.slane %v2977, 7
      %vm3042 = vcmp.lt.s32.totalorder %v173, 1
      %v3043 = vsel %vm3042, %v3040, %v3041
      %v3044 = vsel %vm3042, %v3039, %v3040
      %v3045 = vsel %vm3042, %v3038, %v3039
      %v3046 = vsel %vm3042, %v3037, %v3038
      %v3047 = vsel %vm3042, %v3036, %v3037
      %v3048 = vsel %vm3042, %v3035, %v3036
      %v3049 = vsel %vm3042, %v3034, %v3035
      %v3050 = vsel %vm3042, %v3033, %v3034
      %v3051 = vsel %vm3042, %v3032, %v3033
      %v3052 = vsel %vm3042, %v3031, %v3032
      %v3053 = vsel %vm3042, %v3030, %v3031
      %v3054 = vsel %vm3042, %v3029, %v3030
      %v3055 = vsel %vm3042, %v3028, %v3029
      %v3056 = vsel %vm3042, %v3027, %v3028
      %v3057 = vsel %vm3042, %v3026, %v3027
      %v3058 = vsel %vm3042, %v3025, %v3026
      %v3059 = vsel %vm3042, %v3024, %v3025
      %v3060 = vsel %vm3042, %v3023, %v3024
      %v3061 = vsel %vm3042, %v3022, %v3023
      %v3062 = vsel %vm3042, %v3021, %v3022
      %v3063 = vsel %vm3042, %v3020, %v3021
      %v3064 = vsel %vm3042, %v3019, %v3020
      %v3065 = vsel %vm3042, %v3018, %v3019
      %v3066 = vsel %vm3042, %v3017, %v3018
      %v3067 = vsel %vm3042, %v3016, %v3017
      %v3068 = vsel %vm3042, %v3015, %v3016
      %v3069 = vsel %vm3042, %v3014, %v3015
      %v3070 = vsel %vm3042, %v3013, %v3014
      %v3071 = vsel %vm3042, %v3012, %v3013
      %v3072 = vsel %vm3042, %v3011, %v3012
      %v3073 = vsel %vm3042, %v3010, %v3011
      %v3074 = vsel %vm3042, %v3009, %v3010
      %v3075 = vsel %vm3042, %v3008, %v3009
      %v3076 = vsel %vm3042, %v3007, %v3008
      %v3077 = vsel %vm3042, %v3006, %v3007
      %v3078 = vsel %vm3042, %v3005, %v3006
      %v3079 = vsel %vm3042, %v3004, %v3005
      %v3080 = vsel %vm3042, %v3003, %v3004
      %v3081 = vsel %vm3042, %v3002, %v3003
      %v3082 = vsel %vm3042, %v3001, %v3002
      %v3083 = vsel %vm3042, %v3000, %v3001
      %v3084 = vsel %vm3042, %v2999, %v3000
      %v3085 = vsel %vm3042, %v2998, %v2999
      %v3086 = vsel %vm3042, %v2997, %v2998
      %v3087 = vsel %vm3042, %v2996, %v2997
      %v3088 = vsel %vm3042, %v2995, %v2996
      %v3089 = vsel %vm3042, %v2994, %v2995
      %v3090 = vsel %vm3042, %v2993, %v2994
      %v3091 = vsel %vm3042, %v2992, %v2993
      %v3092 = vsel %vm3042, %v2991, %v2992
      %v3093 = vsel %vm3042, %v2990, %v2991
      %v3094 = vsel %vm3042, %v2989, %v2990
      %v3095 = vsel %vm3042, %v2988, %v2989
      %v3096 = vsel %vm3042, %v2987, %v2988
      %v3097 = vsel %vm3042, %v2986, %v2987
      %v3098 = vsel %vm3042, %v2985, %v2986
      %v3099 = vsel %vm3042, %v2984, %v2985
      %v3100 = vsel %vm3042, %v2983, %v2984
      %v3101 = vsel %vm3042, %v2982, %v2983
      %v3102 = vsel %vm3042, %v2981, %v2982
      %v3103 = vsel %vm3042, %v2980, %v2981
      %v3104 = vsel %vm3042, %v2979, %v2980
      %v3105 = vsel %vm3042, %v2978, %v2979
      %v3106 = vsel %vm3042, %v3041, %v2978
      %s3107 = scalar_lea.vmem %s1, 64
      %v3108 = vld [vmem:[%s3107] sm:$0xf]
      %v3109 = vld [vmem:[%s3107 + $0x4] sm:$0xf]
      %v3110 = vld [vmem:[%s3107 + $0x8] sm:$0xf]
      %v3111 = vld [vmem:[%s3107 + $0xc] sm:$0xf]
      %v3112 = vld [vmem:[%s3107 + $0x10] sm:$0xf]
      %v3113 = vld [vmem:[%s3107 + $0x14] sm:$0xf]
      %v3114 = vld [vmem:[%s3107 + $0x18] sm:$0xf]
      %v3115 = vld [vmem:[%s3107 + $0x1c] sm:$0xf]
      %v3116 = vld [vmem:[%s3107 + $0x20] sm:$0xf]
      %v3117 = vld [vmem:[%s3107 + $0x24] sm:$0xf]
      %v3118 = vld [vmem:[%s3107 + $0x28] sm:$0xf]
      %v3119 = vld [vmem:[%s3107 + $0x2c] sm:$0xf]
      %v3120 = vld [vmem:[%s3107 + $0x30] sm:$0xf]
      %v3121 = vld [vmem:[%s3107 + $0x34] sm:$0xf]
      %v3122 = vld [vmem:[%s3107 + $0x38] sm:$0xf]
      %v3123 = vld [vmem:[%s3107 + $0x3c] sm:$0xf]
      %s3124 = scalar_lea.vmem %s1, 256
      %v3125 = vld [vmem:[%s3124] sm:$0xf]
      %v3126 = vld [vmem:[%s3124 + $0x4] sm:$0xf]
      %v3127 = vld [vmem:[%s3124 + $0x8] sm:$0xf]
      %v3128 = vld [vmem:[%s3124 + $0xc] sm:$0xf]
      %v3129 = vld [vmem:[%s3124 + $0x10] sm:$0xf]
      %v3130 = vld [vmem:[%s3124 + $0x14] sm:$0xf]
      %v3131 = vld [vmem:[%s3124 + $0x18] sm:$0xf]
      %v3132 = vld [vmem:[%s3124 + $0x1c] sm:$0xf]
      %v3133 = vld [vmem:[%s3124 + $0x20] sm:$0xf]
      %v3134 = vld [vmem:[%s3124 + $0x24] sm:$0xf]
      %v3135 = vld [vmem:[%s3124 + $0x28] sm:$0xf]
      %v3136 = vld [vmem:[%s3124 + $0x2c] sm:$0xf]
      %v3137 = vld [vmem:[%s3124 + $0x30] sm:$0xf]
      %v3138 = vld [vmem:[%s3124 + $0x34] sm:$0xf]
      %v3139 = vld [vmem:[%s3124 + $0x38] sm:$0xf]
      %v3140 = vld [vmem:[%s3124 + $0x3c] sm:$0xf]
      %v3157 = vunpack.c.l.b16 %v3125
      %v3158 = vunpack.c.l.b16 %v3126
      %v3159 = vunpack.c.l.b16 %v3127
      %v3160 = vunpack.c.l.b16 %v3128
      %v3161 = vunpack.c.l.b16 %v3129
      %v3162 = vunpack.c.l.b16 %v3130
      %v3163 = vunpack.c.l.b16 %v3131
      %v3164 = vunpack.c.l.b16 %v3132
      %v3165 = vunpack.c.l.b16 %v3133
      %v3166 = vunpack.c.l.b16 %v3134
      %v3167 = vunpack.c.l.b16 %v3135
      %v3168 = vunpack.c.l.b16 %v3136
      %v3169 = vunpack.c.l.b16 %v3137
      %v3170 = vunpack.c.l.b16 %v3138
      %v3171 = vunpack.c.l.b16 %v3139
      %v3172 = vunpack.c.l.b16 %v3140
      %v3173 = vpack.c.b16 %v3158, %v3157
      %v3174 = vpack.c.b16 %v3160, %v3159
      %v3175 = vpack.c.b16 %v3162, %v3161
      %v3176 = vpack.c.b16 %v3164, %v3163
      %v3177 = vpack.c.b16 %v3166, %v3165
      %v3178 = vpack.c.b16 %v3168, %v3167
      %v3179 = vpack.c.b16 %v3170, %v3169
      %v3180 = vpack.c.b16 %v3172, %v3171
      %3189 = vmatprep.subr.bf16.mxu0 0
      %3190 = vmatpush1.bf16.msra.mxu0 %v3173
      %3191 = vmatprep.subr.bf16.mxu0 0
      %3192 = vmatpush1.bf16.msra.mxu0 %v3174
      %3193 = vmatprep.subr.bf16.mxu0 0
      %3194 = vmatpush1.bf16.msra.mxu0 %v3175
      %3195 = vmatprep.subr.bf16.mxu0 0
      %3196 = vmatpush1.bf16.msra.mxu0 %v3176
      %3197 = vmatprep.subr.bf16.mxu0 0
      %3198 = vmatpush1.bf16.msra.mxu0 %v3177
      %3199 = vmatprep.subr.bf16.mxu0 0
      %3200 = vmatpush1.bf16.msra.mxu0 %v3178
      %3201 = vmatprep.subr.bf16.mxu0 0
      %3202 = vmatpush1.bf16.msra.mxu0 %v3179
      %3203 = vmatprep.subr.bf16.mxu0 0
      %3204 = vmatpush1.bf16.msra.mxu0 %v3180
      %3205 = vmatprep.subr.bf16.mxu0 0
      %3206 = vmatpush1.bf16.msra.mxu0 0
      %3207 = vmatprep.subr.bf16.mxu0 0
      %3208 = vmatpush1.bf16.msra.mxu0 0
      %3209 = vmatprep.subr.bf16.mxu0 0
      %3210 = vmatpush1.bf16.msra.mxu0 0
      %3211 = vmatprep.subr.bf16.mxu0 0
      %3212 = vmatpush1.bf16.msra.mxu0 0
      %3213 = vmatprep.subr.bf16.mxu0 0
      %3214 = vmatpush1.bf16.msra.mxu0 0
      %3215 = vmatprep.subr.bf16.mxu0 0
      %3216 = vmatpush1.bf16.msra.mxu0 0
      %3217 = vmatprep.subr.bf16.mxu0 0
      %3218 = vmatpush1.bf16.msra.mxu0 0
      %3219 = vmatprep.subr.bf16.mxu0 0
      %3220 = vmatpush1.bf16.msra.mxu0 0
      %3221 = vmatprep.mubr.bf16.mxu0 0
      %3222 = vmatmul.mubr.bf16.gmra.mrb[0].mxu0 %v1554
      %v3223 = vpop.f32.mrb[0].mxu0
      %v3224 = vadd.f32 0.0, %v3223
      %v3225 = vpop.f32.mrb[0].mxu0
      %v3226 = vpop.f32.mrb[0].mxu0
      %v3227 = vadd.f32 0.0, %v3226
      %v3228 = vpop.f32.mrb[0].mxu0
      %3229 = vmatprep.mubr.bf16.mxu0 0
      %3230 = vmatmul.mubr.bf16.gmra.mrb[0].mxu0 %v1555
      %v3231 = vpop.f32.mrb[0].mxu0
      %v3232 = vadd.f32 0.0, %v3231
      %v3233 = vpop.f32.mrb[0].mxu0
      %v3234 = vpop.f32.mrb[0].mxu0
      %v3235 = vadd.f32 0.0, %v3234
      %v3236 = vpop.f32.mrb[0].mxu0
      %3237 = vmatprep.mubr.bf16.mxu0 0
      %3238 = vmatmul.mubr.bf16.gmra.mrb[0].mxu0 %v1556
      %v3239 = vpop.f32.mrb[0].mxu0
      %v3240 = vadd.f32 0.0, %v3239
      %v3241 = vpop.f32.mrb[0].mxu0
      %v3242 = vpop.f32.mrb[0].mxu0
      %v3243 = vadd.f32 0.0, %v3242
      %v3244 = vpop.f32.mrb[0].mxu0
      %3245 = vmatprep.mubr.bf16.mxu0 0
      %3246 = vmatmul.mubr.bf16.gmra.mrb[0].mxu0 %v1557
      %v3247 = vpop.f32.mrb[0].mxu0
      %v3248 = vadd.f32 0.0, %v3247
      %v3249 = vpop.f32.mrb[0].mxu0
      %v3250 = vpop.f32.mrb[0].mxu0
      %v3251 = vadd.f32 0.0, %v3250
      %v3252 = vpop.f32.mrb[0].mxu0
      %3253 = vmatprep.mubr.bf16.mxu0 0
      %3254 = vmatmul.mubr.bf16.gmra.mrb[0].mxu0 %v1558
      %v3255 = vpop.f32.mrb[0].mxu0
      %v3256 = vadd.f32 0.0, %v3255
      %v3257 = vpop.f32.mrb[0].mxu0
      %v3258 = vpop.f32.mrb[0].mxu0
      %v3259 = vadd.f32 0.0, %v3258
      %v3260 = vpop.f32.mrb[0].mxu0
      %3261 = vmatprep.mubr.bf16.mxu0 0
      %3262 = vmatmul.mubr.bf16.gmra.mrb[0].mxu0 %v1559
      %v3263 = vpop.f32.mrb[0].mxu0
      %v3264 = vadd.f32 0.0, %v3263
      %v3265 = vpop.f32.mrb[0].mxu0
      %v3266 = vpop.f32.mrb[0].mxu0
      %v3267 = vadd.f32 0.0, %v3266
      %v3268 = vpop.f32.mrb[0].mxu0
      %3269 = vmatprep.mubr.bf16.mxu0 0
      %3270 = vmatmul.mubr.bf16.gmra.mrb[0].mxu0 %v1560
      %v3271 = vpop.f32.mrb[0].mxu0
      %v3272 = vadd.f32 0.0, %v3271
      %v3273 = vpop.f32.mrb[0].mxu0
      %v3274 = vpop.f32.mrb[0].mxu0
      %v3275 = vadd.f32 0.0, %v3274
      %v3276 = vpop.f32.mrb[0].mxu0
      %3277 = vmatprep.mubr.bf16.mxu0 0
      %3278 = vmatmul.mubr.bf16.gmra.mrb[0].mxu0 %v1561
      %v3279 = vpop.f32.mrb[0].mxu0
      %v3280 = vadd.f32 0.0, %v3279
      %v3281 = vpop.f32.mrb[0].mxu0
      %v3282 = vpop.f32.mrb[0].mxu0
      %v3283 = vadd.f32 0.0, %v3282
      %v3284 = vpop.f32.mrb[0].mxu0
      %3285 = vmatprep.mubr.bf16.mxu0 0
      %3286 = vmatmul.mubr.bf16.gmra.mrb[0].mxu0 %v1562
      %v3287 = vpop.f32.mrb[0].mxu0
      %v3288 = vadd.f32 0.0, %v3287
      %v3289 = vpop.f32.mrb[0].mxu0
      %v3290 = vpop.f32.mrb[0].mxu0
      %v3291 = vadd.f32 0.0, %v3290
      %v3292 = vpop.f32.mrb[0].mxu0
      %3293 = vmatprep.mubr.bf16.mxu0 0
      %3294 = vmatmul.mubr.bf16.gmra.mrb[0].mxu0 %v1563
      %v3295 = vpop.f32.mrb[0].mxu0
      %v3296 = vadd.f32 0.0, %v3295
      %v3297 = vpop.f32.mrb[0].mxu0
      %v3298 = vpop.f32.mrb[0].mxu0
      %v3299 = vadd.f32 0.0, %v3298
      %v3300 = vpop.f32.mrb[0].mxu0
      %3301 = vmatprep.mubr.bf16.mxu0 0
      %3302 = vmatmul.mubr.bf16.gmra.mrb[0].mxu0 %v1564
      %v3303 = vpop.f32.mrb[0].mxu0
      %v3304 = vadd.f32 0.0, %v3303
      %v3305 = vpop.f32.mrb[0].mxu0
      %v3306 = vpop.f32.mrb[0].mxu0
      %v3307 = vadd.f32 0.0, %v3306
      %v3308 = vpop.f32.mrb[0].mxu0
      %3309 = vmatprep.mubr.bf16.mxu0 0
      %3310 = vmatmul.mubr.bf16.gmra.mrb[0].mxu0 %v1565
      %v3311 = vpop.f32.mrb[0].mxu0
      %v3312 = vadd.f32 0.0, %v3311
      %v3313 = vpop.f32.mrb[0].mxu0
      %v3314 = vpop.f32.mrb[0].mxu0
      %v3315 = vadd.f32 0.0, %v3314
      %v3316 = vpop.f32.mrb[0].mxu0
      %3317 = vmatprep.mubr.bf16.mxu0 0
      %3318 = vmatmul.mubr.bf16.gmra.mrb[0].mxu0 %v1566
      %v3319 = vpop.f32.mrb[0].mxu0
      %v3320 = vadd.f32 0.0, %v3319
      %v3321 = vpop.f32.mrb[0].mxu0
      %v3322 = vpop.f32.mrb[0].mxu0
      %v3323 = vadd.f32 0.0, %v3322
      %v3324 = vpop.f32.mrb[0].mxu0
      %3325 = vmatprep.mubr.bf16.mxu0 0
      %3326 = vmatmul.mubr.bf16.gmra.mrb[0].mxu0 %v1567
      %v3327 = vpop.f32.mrb[0].mxu0
      %v3328 = vadd.f32 0.0, %v3327
      %v3329 = vpop.f32.mrb[0].mxu0
      %v3330 = vpop.f32.mrb[0].mxu0
      %v3331 = vadd.f32 0.0, %v3330
      %v3332 = vpop.f32.mrb[0].mxu0
      %3333 = vmatprep.mubr.bf16.mxu0 0
      %3334 = vmatmul.mubr.bf16.gmra.mrb[0].mxu0 %v1568
      %v3335 = vpop.f32.mrb[0].mxu0
      %v3336 = vadd.f32 0.0, %v3335
      %v3337 = vpop.f32.mrb[0].mxu0
      %v3338 = vpop.f32.mrb[0].mxu0
      %v3339 = vadd.f32 0.0, %v3338
      %v3340 = vpop.f32.mrb[0].mxu0
      %3341 = vmatprep.mubr.bf16.mxu0 0
      %3342 = vmatmul.mubr.bf16.gmra.mrb[0].mxu0 %v1569
      %v3343 = vpop.f32.mrb[0].mxu0
      %v3344 = vadd.f32 0.0, %v3343
      %v3345 = vpop.f32.mrb[0].mxu0
      %v3346 = vpop.f32.mrb[0].mxu0
      %v3347 = vadd.f32 0.0, %v3346
      %v3348 = vpop.f32.mrb[0].mxu0
      %3349 = vmatprep.mubr.bf16.mxu0 0
      %3350 = vmatmul.mubr.bf16.gmra.mrb[0].mxu0 %v1570
      %v3351 = vpop.f32.mrb[0].mxu0
      %v3352 = vadd.f32 0.0, %v3351
      %v3353 = vpop.f32.mrb[0].mxu0
      %v3354 = vpop.f32.mrb[0].mxu0
      %v3355 = vadd.f32 0.0, %v3354
      %v3356 = vpop.f32.mrb[0].mxu0
      %3357 = vmatprep.mubr.bf16.mxu0 0
      %3358 = vmatmul.mubr.bf16.gmra.mrb[0].mxu0 %v1571
      %v3359 = vpop.f32.mrb[0].mxu0
      %v3360 = vadd.f32 0.0, %v3359
      %v3361 = vpop.f32.mrb[0].mxu0
      %v3362 = vpop.f32.mrb[0].mxu0
      %v3363 = vadd.f32 0.0, %v3362
      %v3364 = vpop.f32.mrb[0].mxu0
      %3365 = vmatprep.mubr.bf16.mxu0 0
      %3366 = vmatmul.mubr.bf16.gmra.mrb[0].mxu0 %v1572
      %v3367 = vpop.f32.mrb[0].mxu0
      %v3368 = vadd.f32 0.0, %v3367
      %v3369 = vpop.f32.mrb[0].mxu0
      %v3370 = vpop.f32.mrb[0].mxu0
      %v3371 = vadd.f32 0.0, %v3370
      %v3372 = vpop.f32.mrb[0].mxu0
      %3373 = vmatprep.mubr.bf16.mxu0 0
      %3374 = vmatmul.mubr.bf16.gmra.mrb[0].mxu0 %v1573
      %v3375 = vpop.f32.mrb[0].mxu0
      %v3376 = vadd.f32 0.0, %v3375
      %v3377 = vpop.f32.mrb[0].mxu0
      %v3378 = vpop.f32.mrb[0].mxu0
      %v3379 = vadd.f32 0.0, %v3378
      %v3380 = vpop.f32.mrb[0].mxu0
      %3381 = vmatprep.mubr.bf16.mxu0 0
      %3382 = vmatmul.mubr.bf16.gmra.mrb[0].mxu0 %v1574
      %v3383 = vpop.f32.mrb[0].mxu0
      %v3384 = vadd.f32 0.0, %v3383
      %v3385 = vpop.f32.mrb[0].mxu0
      %v3386 = vpop.f32.mrb[0].mxu0
      %v3387 = vadd.f32 0.0, %v3386
      %v3388 = vpop.f32.mrb[0].mxu0
      %3389 = vmatprep.mubr.bf16.mxu0 0
      %3390 = vmatmul.mubr.bf16.gmra.mrb[0].mxu0 %v1575
      %v3391 = vpop.f32.mrb[0].mxu0
      %v3392 = vadd.f32 0.0, %v3391
      %v3393 = vpop.f32.mrb[0].mxu0
      %v3394 = vpop.f32.mrb[0].mxu0
      %v3395 = vadd.f32 0.0, %v3394
      %v3396 = vpop.f32.mrb[0].mxu0
      %3397 = vmatprep.mubr.bf16.mxu0 0
      %3398 = vmatmul.mubr.bf16.gmra.mrb[0].mxu0 %v1576
      %v3399 = vpop.f32.mrb[0].mxu0
      %v3400 = vadd.f32 0.0, %v3399
      %v3401 = vpop.f32.mrb[0].mxu0
      %v3402 = vpop.f32.mrb[0].mxu0
      %v3403 = vadd.f32 0.0, %v3402
      %v3404 = vpop.f32.mrb[0].mxu0
      %3405 = vmatprep.mubr.bf16.mxu0 0
      %3406 = vmatmul.mubr.bf16.gmra.mrb[0].mxu0 %v1577
      %v3407 = vpop.f32.mrb[0].mxu0
      %v3408 = vadd.f32 0.0, %v3407
      %v3409 = vpop.f32.mrb[0].mxu0
      %v3410 = vpop.f32.mrb[0].mxu0
      %v3411 = vadd.f32 0.0, %v3410
      %v3412 = vpop.f32.mrb[0].mxu0
      %3413 = vmatprep.mubr.bf16.mxu0 0
      %3414 = vmatmul.mubr.bf16.gmra.mrb[0].mxu0 %v1578
      %v3415 = vpop.f32.mrb[0].mxu0
      %v3416 = vadd.f32 0.0, %v3415
      %v3417 = vpop.f32.mrb[0].mxu0
      %v3418 = vpop.f32.mrb[0].mxu0
      %v3419 = vadd.f32 0.0, %v3418
      %v3420 = vpop.f32.mrb[0].mxu0
      %3421 = vmatprep.mubr.bf16.mxu0 0
      %3422 = vmatmul.mubr.bf16.gmra.mrb[0].mxu0 %v1579
      %v3423 = vpop.f32.mrb[0].mxu0
      %v3424 = vadd.f32 0.0, %v3423
      %v3425 = vpop.f32.mrb[0].mxu0
      %v3426 = vpop.f32.mrb[0].mxu0
      %v3427 = vadd.f32 0.0, %v3426
      %v3428 = vpop.f32.mrb[0].mxu0
      %3429 = vmatprep.mubr.bf16.mxu0 0
      %3430 = vmatmul.mubr.bf16.gmra.mrb[0].mxu0 %v1580
      %v3431 = vpop.f32.mrb[0].mxu0
      %v3432 = vadd.f32 0.0, %v3431
      %v3433 = vpop.f32.mrb[0].mxu0
      %v3434 = vpop.f32.mrb[0].mxu0
      %v3435 = vadd.f32 0.0, %v3434
      %v3436 = vpop.f32.mrb[0].mxu0
      %3437 = vmatprep.mubr.bf16.mxu0 0
      %3438 = vmatmul.mubr.bf16.gmra.mrb[0].mxu0 %v1581
      %v3439 = vpop.f32.mrb[0].mxu0
      %v3440 = vadd.f32 0.0, %v3439
      %v3441 = vpop.f32.mrb[0].mxu0
      %v3442 = vpop.f32.mrb[0].mxu0
      %v3443 = vadd.f32 0.0, %v3442
      %v3444 = vpop.f32.mrb[0].mxu0
      %3445 = vmatprep.mubr.bf16.mxu0 0
      %3446 = vmatmul.mubr.bf16.gmra.mrb[0].mxu0 %v1582
      %v3447 = vpop.f32.mrb[0].mxu0
      %v3448 = vadd.f32 0.0, %v3447
      %v3449 = vpop.f32.mrb[0].mxu0
      %v3450 = vpop.f32.mrb[0].mxu0
      %v3451 = vadd.f32 0.0, %v3450
      %v3452 = vpop.f32.mrb[0].mxu0
      %3453 = vmatprep.mubr.bf16.mxu0 0
      %3454 = vmatmul.mubr.bf16.gmra.mrb[0].mxu0 %v1583
      %v3455 = vpop.f32.mrb[0].mxu0
      %v3456 = vadd.f32 0.0, %v3455
      %v3457 = vpop.f32.mrb[0].mxu0
      %v3458 = vpop.f32.mrb[0].mxu0
      %v3459 = vadd.f32 0.0, %v3458
      %v3460 = vpop.f32.mrb[0].mxu0
      %3461 = vmatprep.mubr.bf16.mxu0 0
      %3462 = vmatmul.mubr.bf16.gmra.mrb[0].mxu0 %v1584
      %v3463 = vpop.f32.mrb[0].mxu0
      %v3464 = vadd.f32 0.0, %v3463
      %v3465 = vpop.f32.mrb[0].mxu0
      %v3466 = vpop.f32.mrb[0].mxu0
      %v3467 = vadd.f32 0.0, %v3466
      %v3468 = vpop.f32.mrb[0].mxu0
      %3469 = vmatprep.mubr.bf16.mxu0 0
      %3470 = vmatmul.mubr.bf16.gmra.mrb[0].mxu0 %v1585
      %v3471 = vpop.f32.mrb[0].mxu0
      %v3472 = vadd.f32 0.0, %v3471
      %v3473 = vpop.f32.mrb[0].mxu0
      %v3474 = vpop.f32.mrb[0].mxu0
      %v3475 = vadd.f32 0.0, %v3474
      %v3476 = vpop.f32.mrb[0].mxu0
      %3477 = vdwg.mxu0
      %v3494 = vunpack.c.l.b16 %v3108
      %v3495 = vunpack.c.l.b16 %v3109
      %v3496 = vunpack.c.l.b16 %v3110
      %v3497 = vunpack.c.l.b16 %v3111
      %v3498 = vunpack.c.l.b16 %v3112
      %v3499 = vunpack.c.l.b16 %v3113
      %v3500 = vunpack.c.l.b16 %v3114
      %v3501 = vunpack.c.l.b16 %v3115
      %v3502 = vunpack.c.l.b16 %v3116
      %v3503 = vunpack.c.l.b16 %v3117
      %v3504 = vunpack.c.l.b16 %v3118
      %v3505 = vunpack.c.l.b16 %v3119
      %v3506 = vunpack.c.l.b16 %v3120
      %v3507 = vunpack.c.l.b16 %v3121
      %v3508 = vunpack.c.l.b16 %v3122
      %v3509 = vunpack.c.l.b16 %v3123
      %v3510 = vpack.c.b16 %v3495, %v3494
      %v3511 = vpack.c.b16 %v3497, %v3496
      %v3512 = vpack.c.b16 %v3499, %v3498
      %v3513 = vpack.c.b16 %v3501, %v3500
      %v3514 = vpack.c.b16 %v3503, %v3502
      %v3515 = vpack.c.b16 %v3505, %v3504
      %v3516 = vpack.c.b16 %v3507, %v3506
      %v3517 = vpack.c.b16 %v3509, %v3508
      %3526 = vmatprep.subr.bf16.mxu0 0
      %3527 = vmatpush1.bf16.msra.mxu0 %v3510
      %3528 = vmatprep.subr.bf16.mxu0 0
      %3529 = vmatpush1.bf16.msra.mxu0 %v3511
      %3530 = vmatprep.subr.bf16.mxu0 0
      %3531 = vmatpush1.bf16.msra.mxu0 %v3512
      %3532 = vmatprep.subr.bf16.mxu0 0
      %3533 = vmatpush1.bf16.msra.mxu0 %v3513
      %3534 = vmatprep.subr.bf16.mxu0 0
      %3535 = vmatpush1.bf16.msra.mxu0 %v3514
      %3536 = vmatprep.subr.bf16.mxu0 0
      %3537 = vmatpush1.bf16.msra.mxu0 %v3515
      %3538 = vmatprep.subr.bf16.mxu0 0
      %3539 = vmatpush1.bf16.msra.mxu0 %v3516
      %3540 = vmatprep.subr.bf16.mxu0 0
      %3541 = vmatpush1.bf16.msra.mxu0 %v3517
      %3542 = vmatprep.subr.bf16.mxu0 0
      %3543 = vmatpush1.bf16.msra.mxu0 0
      %3544 = vmatprep.subr.bf16.mxu0 0
      %3545 = vmatpush1.bf16.msra.mxu0 0
      %3546 = vmatprep.subr.bf16.mxu0 0
      %3547 = vmatpush1.bf16.msra.mxu0 0
      %3548 = vmatprep.subr.bf16.mxu0 0
      %3549 = vmatpush1.bf16.msra.mxu0 0
      %3550 = vmatprep.subr.bf16.mxu0 0
      %3551 = vmatpush1.bf16.msra.mxu0 0
      %3552 = vmatprep.subr.bf16.mxu0 0
      %3553 = vmatpush1.bf16.msra.mxu0 0
      %3554 = vmatprep.subr.bf16.mxu0 0
      %3555 = vmatpush1.bf16.msra.mxu0 0
      %3556 = vmatprep.subr.bf16.mxu0 0
      %3557 = vmatpush1.bf16.msra.mxu0 0
      %3558 = vmatprep.mubr.bf16.mxu0 0
      %3559 = vmatmul.mubr.bf16.gmra.mrb[0].mxu0 %v1963
      %v3560 = vpop.f32.mrb[0].mxu0
      %v3561 = vadd.f32 %v3224, %v3560
      %v3562 = vpop.f32.mrb[0].mxu0
      %v3563 = vpop.f32.mrb[0].mxu0
      %v3564 = vadd.f32 %v3227, %v3563
      %v3565 = vpop.f32.mrb[0].mxu0
      %3566 = vmatprep.mubr.bf16.mxu0 0
      %3567 = vmatmul.mubr.bf16.gmra.mrb[0].mxu0 %v1964
      %v3568 = vpop.f32.mrb[0].mxu0
      %v3569 = vadd.f32 %v3232, %v3568
      %v3570 = vpop.f32.mrb[0].mxu0
      %v3571 = vpop.f32.mrb[0].mxu0
      %v3572 = vadd.f32 %v3235, %v3571
      %v3573 = vpop.f32.mrb[0].mxu0
      %3574 = vmatprep.mubr.bf16.mxu0 0
      %3575 = vmatmul.mubr.bf16.gmra.mrb[0].mxu0 %v1554
      %v3576 = vpop.f32.mrb[0].mxu0
      %v3577 = vadd.f32 %v3240, %v3576
      %v3578 = vpop.f32.mrb[0].mxu0
      %v3579 = vpop.f32.mrb[0].mxu0
      %v3580 = vadd.f32 %v3243, %v3579
      %v3581 = vpop.f32.mrb[0].mxu0
      %3582 = vmatprep.mubr.bf16.mxu0 0
      %3583 = vmatmul.mubr.bf16.gmra.mrb[0].mxu0 %v1555
      %v3584 = vpop.f32.mrb[0].mxu0
      %v3585 = vadd.f32 %v3248, %v3584
      %v3586 = vpop.f32.mrb[0].mxu0
      %v3587 = vpop.f32.mrb[0].mxu0
      %v3588 = vadd.f32 %v3251, %v3587
      %v3589 = vpop.f32.mrb[0].mxu0
      %3590 = vmatprep.mubr.bf16.mxu0 0
      %3591 = vmatmul.mubr.bf16.gmra.mrb[0].mxu0 %v1556
      %v3592 = vpop.f32.mrb[0].mxu0
      %v3593 = vadd.f32 %v3256, %v3592
      %v3594 = vpop.f32.mrb[0].mxu0
      %v3595 = vpop.f32.mrb[0].mxu0
      %v3596 = vadd.f32 %v3259, %v3595
      %v3597 = vpop.f32.mrb[0].mxu0
      %3598 = vmatprep.mubr.bf16.mxu0 0
      %3599 = vmatmul.mubr.bf16.gmra.mrb[0].mxu0 %v1557
      %v3600 = vpop.f32.mrb[0].mxu0
      %v3601 = vadd.f32 %v3264, %v3600
      %v3602 = vpop.f32.mrb[0].mxu0
      %v3603 = vpop.f32.mrb[0].mxu0
      %v3604 = vadd.f32 %v3267, %v3603
      %v3605 = vpop.f32.mrb[0].mxu0
      %3606 = vmatprep.mubr.bf16.mxu0 0
      %3607 = vmatmul.mubr.bf16.gmra.mrb[0].mxu0 %v1558
      %v3608 = vpop.f32.mrb[0].mxu0
      %v3609 = vadd.f32 %v3272, %v3608
      %v3610 = vpop.f32.mrb[0].mxu0
      %v3611 = vpop.f32.mrb[0].mxu0
      %v3612 = vadd.f32 %v3275, %v3611
      %v3613 = vpop.f32.mrb[0].mxu0
      %3614 = vmatprep.mubr.bf16.mxu0 0
      %3615 = vmatmul.mubr.bf16.gmra.mrb[0].mxu0 %v1559
      %v3616 = vpop.f32.mrb[0].mxu0
      %v3617 = vadd.f32 %v3280, %v3616
      %v3618 = vpop.f32.mrb[0].mxu0
      %v3619 = vpop.f32.mrb[0].mxu0
      %v3620 = vadd.f32 %v3283, %v3619
      %v3621 = vpop.f32.mrb[0].mxu0
      %3622 = vmatprep.mubr.bf16.mxu0 0
      %3623 = vmatmul.mubr.bf16.gmra.mrb[0].mxu0 %v1560
      %v3624 = vpop.f32.mrb[0].mxu0
      %v3625 = vadd.f32 %v3288, %v3624
      %v3626 = vpop.f32.mrb[0].mxu0
      %v3627 = vpop.f32.mrb[0].mxu0
      %v3628 = vadd.f32 %v3291, %v3627
      %v3629 = vpop.f32.mrb[0].mxu0
      %3630 = vmatprep.mubr.bf16.mxu0 0
      %3631 = vmatmul.mubr.bf16.gmra.mrb[0].mxu0 %v1561
      %v3632 = vpop.f32.mrb[0].mxu0
      %v3633 = vadd.f32 %v3296, %v3632
      %v3634 = vpop.f32.mrb[0].mxu0
      %v3635 = vpop.f32.mrb[0].mxu0
      %v3636 = vadd.f32 %v3299, %v3635
      %v3637 = vpop.f32.mrb[0].mxu0
      %3638 = vmatprep.mubr.bf16.mxu0 0
      %3639 = vmatmul.mubr.bf16.gmra.mrb[0].mxu0 %v1562
      %v3640 = vpop.f32.mrb[0].mxu0
      %v3641 = vadd.f32 %v3304, %v3640
      %v3642 = vpop.f32.mrb[0].mxu0
      %v3643 = vpop.f32.mrb[0].mxu0
      %v3644 = vadd.f32 %v3307, %v3643
      %v3645 = vpop.f32.mrb[0].mxu0
      %3646 = vmatprep.mubr.bf16.mxu0 0
      %3647 = vmatmul.mubr.bf16.gmra.mrb[0].mxu0 %v1563
      %v3648 = vpop.f32.mrb[0].mxu0
      %v3649 = vadd.f32 %v3312, %v3648
      %v3650 = vpop.f32.mrb[0].mxu0
      %v3651 = vpop.f32.mrb[0].mxu0
      %v3652 = vadd.f32 %v3315, %v3651
      %v3653 = vpop.f32.mrb[0].mxu0
      %3654 = vmatprep.mubr.bf16.mxu0 0
      %3655 = vmatmul.mubr.bf16.gmra.mrb[0].mxu0 %v1564
      %v3656 = vpop.f32.mrb[0].mxu0
      %v3657 = vadd.f32 %v3320, %v3656
      %v3658 = vpop.f32.mrb[0].mxu0
      %v3659 = vpop.f32.mrb[0].mxu0
      %v3660 = vadd.f32 %v3323, %v3659
      %v3661 = vpop.f32.mrb[0].mxu0
      %3662 = vmatprep.mubr.bf16.mxu0 0
      %3663 = vmatmul.mubr.bf16.gmra.mrb[0].mxu0 %v1565
      %v3664 = vpop.f32.mrb[0].mxu0
      %v3665 = vadd.f32 %v3328, %v3664
      %v3666 = vpop.f32.mrb[0].mxu0
      %v3667 = vpop.f32.mrb[0].mxu0
      %v3668 = vadd.f32 %v3331, %v3667
      %v3669 = vpop.f32.mrb[0].mxu0
      %3670 = vmatprep.mubr.bf16.mxu0 0
      %3671 = vmatmul.mubr.bf16.gmra.mrb[0].mxu0 %v1566
      %v3672 = vpop.f32.mrb[0].mxu0
      %v3673 = vadd.f32 %v3336, %v3672
      %v3674 = vpop.f32.mrb[0].mxu0
      %v3675 = vpop.f32.mrb[0].mxu0
      %v3676 = vadd.f32 %v3339, %v3675
      %v3677 = vpop.f32.mrb[0].mxu0
      %3678 = vmatprep.mubr.bf16.mxu0 0
      %3679 = vmatmul.mubr.bf16.gmra.mrb[0].mxu0 %v1567
      %v3680 = vpop.f32.mrb[0].mxu0
      %v3681 = vadd.f32 %v3344, %v3680
      %v3682 = vpop.f32.mrb[0].mxu0
      %v3683 = vpop.f32.mrb[0].mxu0
      %v3684 = vadd.f32 %v3347, %v3683
      %v3685 = vpop.f32.mrb[0].mxu0
      %3686 = vmatprep.mubr.bf16.mxu0 0
      %3687 = vmatmul.mubr.bf16.gmra.mrb[0].mxu0 %v1568
      %v3688 = vpop.f32.mrb[0].mxu0
      %v3689 = vadd.f32 %v3352, %v3688
      %v3690 = vpop.f32.mrb[0].mxu0
      %v3691 = vpop.f32.mrb[0].mxu0
      %v3692 = vadd.f32 %v3355, %v3691
      %v3693 = vpop.f32.mrb[0].mxu0
      %3694 = vmatprep.mubr.bf16.mxu0 0
      %3695 = vmatmul.mubr.bf16.gmra.mrb[0].mxu0 %v1569
      %v3696 = vpop.f32.mrb[0].mxu0
      %v3697 = vadd.f32 %v3360, %v3696
      %v3698 = vpop.f32.mrb[0].mxu0
      %v3699 = vpop.f32.mrb[0].mxu0
      %v3700 = vadd.f32 %v3363, %v3699
      %v3701 = vpop.f32.mrb[0].mxu0
      %3702 = vmatprep.mubr.bf16.mxu0 0
      %3703 = vmatmul.mubr.bf16.gmra.mrb[0].mxu0 %v1570
      %v3704 = vpop.f32.mrb[0].mxu0
      %v3705 = vadd.f32 %v3368, %v3704
      %v3706 = vpop.f32.mrb[0].mxu0
      %v3707 = vpop.f32.mrb[0].mxu0
      %v3708 = vadd.f32 %v3371, %v3707
      %v3709 = vpop.f32.mrb[0].mxu0
      %3710 = vmatprep.mubr.bf16.mxu0 0
      %3711 = vmatmul.mubr.bf16.gmra.mrb[0].mxu0 %v1571
      %v3712 = vpop.f32.mrb[0].mxu0
      %v3713 = vadd.f32 %v3376, %v3712
      %v3714 = vpop.f32.mrb[0].mxu0
      %v3715 = vpop.f32.mrb[0].mxu0
      %v3716 = vadd.f32 %v3379, %v3715
      %v3717 = vpop.f32.mrb[0].mxu0
      %3718 = vmatprep.mubr.bf16.mxu0 0
      %3719 = vmatmul.mubr.bf16.gmra.mrb[0].mxu0 %v1572
      %v3720 = vpop.f32.mrb[0].mxu0
      %v3721 = vadd.f32 %v3384, %v3720
      %v3722 = vpop.f32.mrb[0].mxu0
      %v3723 = vpop.f32.mrb[0].mxu0
      %v3724 = vadd.f32 %v3387, %v3723
      %v3725 = vpop.f32.mrb[0].mxu0
      %3726 = vmatprep.mubr.bf16.mxu0 0
      %3727 = vmatmul.mubr.bf16.gmra.mrb[0].mxu0 %v1573
      %v3728 = vpop.f32.mrb[0].mxu0
      %v3729 = vadd.f32 %v3392, %v3728
      %v3730 = vpop.f32.mrb[0].mxu0
      %v3731 = vpop.f32.mrb[0].mxu0
      %v3732 = vadd.f32 %v3395, %v3731
      %v3733 = vpop.f32.mrb[0].mxu0
      %3734 = vmatprep.mubr.bf16.mxu0 0
      %3735 = vmatmul.mubr.bf16.gmra.mrb[0].mxu0 %v1574
      %v3736 = vpop.f32.mrb[0].mxu0
      %v3737 = vadd.f32 %v3400, %v3736
      %v3738 = vpop.f32.mrb[0].mxu0
      %v3739 = vpop.f32.mrb[0].mxu0
      %v3740 = vadd.f32 %v3403, %v3739
      %v3741 = vpop.f32.mrb[0].mxu0
      %3742 = vmatprep.mubr.bf16.mxu0 0
      %3743 = vmatmul.mubr.bf16.gmra.mrb[0].mxu0 %v1575
      %v3744 = vpop.f32.mrb[0].mxu0
      %v3745 = vadd.f32 %v3408, %v3744
      %v3746 = vpop.f32.mrb[0].mxu0
      %v3747 = vpop.f32.mrb[0].mxu0
      %v3748 = vadd.f32 %v3411, %v3747
      %v3749 = vpop.f32.mrb[0].mxu0
      %3750 = vmatprep.mubr.bf16.mxu0 0
      %3751 = vmatmul.mubr.bf16.gmra.mrb[0].mxu0 %v1576
      %v3752 = vpop.f32.mrb[0].mxu0
      %v3753 = vadd.f32 %v3416, %v3752
      %v3754 = vpop.f32.mrb[0].mxu0
      %v3755 = vpop.f32.mrb[0].mxu0
      %v3756 = vadd.f32 %v3419, %v3755
      %v3757 = vpop.f32.mrb[0].mxu0
      %3758 = vmatprep.mubr.bf16.mxu0 0
      %3759 = vmatmul.mubr.bf16.gmra.mrb[0].mxu0 %v1577
      %v3760 = vpop.f32.mrb[0].mxu0
      %v3761 = vadd.f32 %v3424, %v3760
      %v3762 = vpop.f32.mrb[0].mxu0
      %v3763 = vpop.f32.mrb[0].mxu0
      %v3764 = vadd.f32 %v3427, %v3763
      %v3765 = vpop.f32.mrb[0].mxu0
      %3766 = vmatprep.mubr.bf16.mxu0 0
      %3767 = vmatmul.mubr.bf16.gmra.mrb[0].mxu0 %v1578
      %v3768 = vpop.f32.mrb[0].mxu0
      %v3769 = vadd.f32 %v3432, %v3768
      %v3770 = vpop.f32.mrb[0].mxu0
      %v3771 = vpop.f32.mrb[0].mxu0
      %v3772 = vadd.f32 %v3435, %v3771
      %v3773 = vpop.f32.mrb[0].mxu0
      %3774 = vmatprep.mubr.bf16.mxu0 0
      %3775 = vmatmul.mubr.bf16.gmra.mrb[0].mxu0 %v1579
      %v3776 = vpop.f32.mrb[0].mxu0
      %v3777 = vadd.f32 %v3440, %v3776
      %v3778 = vpop.f32.mrb[0].mxu0
      %v3779 = vpop.f32.mrb[0].mxu0
      %v3780 = vadd.f32 %v3443, %v3779
      %v3781 = vpop.f32.mrb[0].mxu0
      %3782 = vmatprep.mubr.bf16.mxu0 0
      %3783 = vmatmul.mubr.bf16.gmra.mrb[0].mxu0 %v1580
      %v3784 = vpop.f32.mrb[0].mxu0
      %v3785 = vadd.f32 %v3448, %v3784
      %v3786 = vpop.f32.mrb[0].mxu0
      %v3787 = vpop.f32.mrb[0].mxu0
      %v3788 = vadd.f32 %v3451, %v3787
      %v3789 = vpop.f32.mrb[0].mxu0
      %3790 = vmatprep.mubr.bf16.mxu0 0
      %3791 = vmatmul.mubr.bf16.gmra.mrb[0].mxu0 %v1581
      %v3792 = vpop.f32.mrb[0].mxu0
      %v3793 = vadd.f32 %v3456, %v3792
      %v3794 = vpop.f32.mrb[0].mxu0
      %v3795 = vpop.f32.mrb[0].mxu0
      %v3796 = vadd.f32 %v3459, %v3795
      %v3797 = vpop.f32.mrb[0].mxu0
      %3798 = vmatprep.mubr.bf16.mxu0 0
      %3799 = vmatmul.mubr.bf16.gmra.mrb[0].mxu0 %v1582
      %v3800 = vpop.f32.mrb[0].mxu0
      %v3801 = vadd.f32 %v3464, %v3800
      %v3802 = vpop.f32.mrb[0].mxu0
      %v3803 = vpop.f32.mrb[0].mxu0
      %v3804 = vadd.f32 %v3467, %v3803
      %v3805 = vpop.f32.mrb[0].mxu0
      %3806 = vmatprep.mubr.bf16.mxu0 0
      %3807 = vmatmul.mubr.bf16.gmra.mrb[0].mxu0 %v1583
      %v3808 = vpop.f32.mrb[0].mxu0
      %v3809 = vadd.f32 %v3472, %v3808
      %v3810 = vpop.f32.mrb[0].mxu0
      %v3811 = vpop.f32.mrb[0].mxu0
      %v3812 = vadd.f32 %v3475, %v3811
      %v3813 = vpop.f32.mrb[0].mxu0
      %3814 = vdwg.mxu0
      %s3815 = scalar_lea.vmem %s1, 448
      %v3816 = vld [vmem:[%s3815] sm:$0xf]
      %v3817 = vld [vmem:[%s3815 + $0x4] sm:$0xf]
      %v3818 = vld [vmem:[%s3815 + $0x8] sm:$0xf]
      %v3819 = vld [vmem:[%s3815 + $0xc] sm:$0xf]
      %v3820 = vld [vmem:[%s3815 + $0x10] sm:$0xf]
      %v3821 = vld [vmem:[%s3815 + $0x14] sm:$0xf]
      %v3822 = vld [vmem:[%s3815 + $0x18] sm:$0xf]
      %v3823 = vld [vmem:[%s3815 + $0x1c] sm:$0xf]
      %v3824 = vld [vmem:[%s3815 + $0x20] sm:$0xf]
      %v3825 = vld [vmem:[%s3815 + $0x24] sm:$0xf]
      %v3826 = vld [vmem:[%s3815 + $0x28] sm:$0xf]
      %v3827 = vld [vmem:[%s3815 + $0x2c] sm:$0xf]
      %v3828 = vld [vmem:[%s3815 + $0x30] sm:$0xf]
      %v3829 = vld [vmem:[%s3815 + $0x34] sm:$0xf]
      %v3830 = vld [vmem:[%s3815 + $0x38] sm:$0xf]
      %v3831 = vld [vmem:[%s3815 + $0x3c] sm:$0xf]
      %v3848 = vunpack.c.l.b16 %v3816
      %v3849 = vunpack.c.l.b16 %v3817
      %v3850 = vunpack.c.l.b16 %v3818
      %v3851 = vunpack.c.l.b16 %v3819
      %v3852 = vunpack.c.l.b16 %v3820
      %v3853 = vunpack.c.l.b16 %v3821
      %v3854 = vunpack.c.l.b16 %v3822
      %v3855 = vunpack.c.l.b16 %v3823
      %v3856 = vunpack.c.l.b16 %v3824
      %v3857 = vunpack.c.l.b16 %v3825
      %v3858 = vunpack.c.l.b16 %v3826
      %v3859 = vunpack.c.l.b16 %v3827
      %v3860 = vunpack.c.l.b16 %v3828
      %v3861 = vunpack.c.l.b16 %v3829
      %v3862 = vunpack.c.l.b16 %v3830
      %v3863 = vunpack.c.l.b16 %v3831
      %v3864 = vpack.c.b16 %v3849, %v3848
      %v3865 = vpack.c.b16 %v3851, %v3850
      %v3866 = vpack.c.b16 %v3853, %v3852
      %v3867 = vpack.c.b16 %v3855, %v3854
      %v3868 = vpack.c.b16 %v3857, %v3856
      %v3869 = vpack.c.b16 %v3859, %v3858
      %v3870 = vpack.c.b16 %v3861, %v3860
      %v3871 = vpack.c.b16 %v3863, %v3862
      %3880 = vmatprep.subr.bf16.mxu0 0
      %3881 = vmatpush1.bf16.msra.mxu0 %v3864
      %3882 = vmatprep.subr.bf16.mxu0 0
      %3883 = vmatpush1.bf16.msra.mxu0 %v3865
      %3884 = vmatprep.subr.bf16.mxu0 0
      %3885 = vmatpush1.bf16.msra.mxu0 %v3866
      %3886 = vmatprep.subr.bf16.mxu0 0
      %3887 = vmatpush1.bf16.msra.mxu0 %v3867
      %3888 = vmatprep.subr.bf16.mxu0 0
      %3889 = vmatpush1.bf16.msra.mxu0 %v3868
      %3890 = vmatprep.subr.bf16.mxu0 0
      %3891 = vmatpush1.bf16.msra.mxu0 %v3869
      %3892 = vmatprep.subr.bf16.mxu0 0
      %3893 = vmatpush1.bf16.msra.mxu0 %v3870
      %3894 = vmatprep.subr.bf16.mxu0 0
      %3895 = vmatpush1.bf16.msra.mxu0 %v3871
      %3896 = vmatprep.subr.bf16.mxu0 0
      %3897 = vmatpush1.bf16.msra.mxu0 0
      %3898 = vmatprep.subr.bf16.mxu0 0
      %3899 = vmatpush1.bf16.msra.mxu0 0
      %3900 = vmatprep.subr.bf16.mxu0 0
      %3901 = vmatpush1.bf16.msra.mxu0 0
      %3902 = vmatprep.subr.bf16.mxu0 0
      %3903 = vmatpush1.bf16.msra.mxu0 0
      %3904 = vmatprep.subr.bf16.mxu0 0
      %3905 = vmatpush1.bf16.msra.mxu0 0
      %3906 = vmatprep.subr.bf16.mxu0 0
      %3907 = vmatpush1.bf16.msra.mxu0 0
      %3908 = vmatprep.subr.bf16.mxu0 0
      %3909 = vmatpush1.bf16.msra.mxu0 0
      %3910 = vmatprep.subr.bf16.mxu0 0
      %3911 = vmatpush1.bf16.msra.mxu0 0
      %3912 = vmatprep.mubr.bf16.mxu0 0
      %3913 = vmatmul.mubr.bf16.gmra.mrb[0].mxu0 %v2513
      %v3914 = vpop.f32.mrb[0].mxu0
      %v3915 = vadd.f32 0.0, %v3914
      %v3916 = vpop.f32.mrb[0].mxu0
      %v3917 = vpop.f32.mrb[0].mxu0
      %v3918 = vadd.f32 0.0, %v3917
      %v3919 = vpop.f32.mrb[0].mxu0
      %3920 = vmatprep.mubr.bf16.mxu0 0
      %3921 = vmatmul.mubr.bf16.gmra.mrb[0].mxu0 %v2514
      %v3922 = vpop.f32.mrb[0].mxu0
      %v3923 = vadd.f32 0.0, %v3922
      %v3924 = vpop.f32.mrb[0].mxu0
      %v3925 = vpop.f32.mrb[0].mxu0
      %v3926 = vadd.f32 0.0, %v3925
      %v3927 = vpop.f32.mrb[0].mxu0
      %3928 = vmatprep.mubr.bf16.mxu0 0
      %3929 = vmatmul.mubr.bf16.gmra.mrb[0].mxu0 %v2515
      %v3930 = vpop.f32.mrb[0].mxu0
      %v3931 = vadd.f32 0.0, %v3930
      %v3932 = vpop.f32.mrb[0].mxu0
      %v3933 = vpop.f32.mrb[0].mxu0
      %v3934 = vadd.f32 0.0, %v3933
      %v3935 = vpop.f32.mrb[0].mxu0
      %3936 = vmatprep.mubr.bf16.mxu0 0
      %3937 = vmatmul.mubr.bf16.gmra.mrb[0].mxu0 %v2516
      %v3938 = vpop.f32.mrb[0].mxu0
      %v3939 = vadd.f32 0.0, %v3938
      %v3940 = vpop.f32.mrb[0].mxu0
      %v3941 = vpop.f32.mrb[0].mxu0
      %v3942 = vadd.f32 0.0, %v3941
      %v3943 = vpop.f32.mrb[0].mxu0
      %3944 = vmatprep.mubr.bf16.mxu0 0
      %3945 = vmatmul.mubr.bf16.gmra.mrb[0].mxu0 %v2517
      %v3946 = vpop.f32.mrb[0].mxu0
      %v3947 = vadd.f32 0.0, %v3946
      %v3948 = vpop.f32.mrb[0].mxu0
      %v3949 = vpop.f32.mrb[0].mxu0
      %v3950 = vadd.f32 0.0, %v3949
      %v3951 = vpop.f32.mrb[0].mxu0
      %3952 = vmatprep.mubr.bf16.mxu0 0
      %3953 = vmatmul.mubr.bf16.gmra.mrb[0].mxu0 %v2518
      %v3954 = vpop.f32.mrb[0].mxu0
      %v3955 = vadd.f32 0.0, %v3954
      %v3956 = vpop.f32.mrb[0].mxu0
      %v3957 = vpop.f32.mrb[0].mxu0
      %v3958 = vadd.f32 0.0, %v3957
      %v3959 = vpop.f32.mrb[0].mxu0
      %3960 = vmatprep.mubr.bf16.mxu0 0
      %3961 = vmatmul.mubr.bf16.gmra.mrb[0].mxu0 %v2519
      %v3962 = vpop.f32.mrb[0].mxu0
      %v3963 = vadd.f32 0.0, %v3962
      %v3964 = vpop.f32.mrb[0].mxu0
      %v3965 = vpop.f32.mrb[0].mxu0
      %v3966 = vadd.f32 0.0, %v3965
      %v3967 = vpop.f32.mrb[0].mxu0
      %3968 = vmatprep.mubr.bf16.mxu0 0
      %3969 = vmatmul.mubr.bf16.gmra.mrb[0].mxu0 %v2520
      %v3970 = vpop.f32.mrb[0].mxu0
      %v3971 = vadd.f32 0.0, %v3970
      %v3972 = vpop.f32.mrb[0].mxu0
      %v3973 = vpop.f32.mrb[0].mxu0
      %v3974 = vadd.f32 0.0, %v3973
      %v3975 = vpop.f32.mrb[0].mxu0
      %3976 = vmatprep.mubr.bf16.mxu0 0
      %3977 = vmatmul.mubr.bf16.gmra.mrb[0].mxu0 %v2521
      %v3978 = vpop.f32.mrb[0].mxu0
      %v3979 = vadd.f32 0.0, %v3978
      %v3980 = vpop.f32.mrb[0].mxu0
      %v3981 = vpop.f32.mrb[0].mxu0
      %v3982 = vadd.f32 0.0, %v3981
      %v3983 = vpop.f32.mrb[0].mxu0
      %3984 = vmatprep.mubr.bf16.mxu0 0
      %3985 = vmatmul.mubr.bf16.gmra.mrb[0].mxu0 %v2522
      %v3986 = vpop.f32.mrb[0].mxu0
      %v3987 = vadd.f32 0.0, %v3986
      %v3988 = vpop.f32.mrb[0].mxu0
      %v3989 = vpop.f32.mrb[0].mxu0
      %v3990 = vadd.f32 0.0, %v3989
      %v3991 = vpop.f32.mrb[0].mxu0
      %3992 = vmatprep.mubr.bf16.mxu0 0
      %3993 = vmatmul.mubr.bf16.gmra.mrb[0].mxu0 %v2523
      %v3994 = vpop.f32.mrb[0].mxu0
      %v3995 = vadd.f32 0.0, %v3994
      %v3996 = vpop.f32.mrb[0].mxu0
      %v3997 = vpop.f32.mrb[0].mxu0
      %v3998 = vadd.f32 0.0, %v3997
      %v3999 = vpop.f32.mrb[0].mxu0
      %4000 = vmatprep.mubr.bf16.mxu0 0
      %4001 = vmatmul.mubr.bf16.gmra.mrb[0].mxu0 %v2524
      %v4002 = vpop.f32.mrb[0].mxu0
      %v4003 = vadd.f32 0.0, %v4002
      %v4004 = vpop.f32.mrb[0].mxu0
      %v4005 = vpop.f32.mrb[0].mxu0
      %v4006 = vadd.f32 0.0, %v4005
      %v4007 = vpop.f32.mrb[0].mxu0
      %4008 = vmatprep.mubr.bf16.mxu0 0
      %4009 = vmatmul.mubr.bf16.gmra.mrb[0].mxu0 %v2525
      %v4010 = vpop.f32.mrb[0].mxu0
      %v4011 = vadd.f32 0.0, %v4010
      %v4012 = vpop.f32.mrb[0].mxu0
      %v4013 = vpop.f32.mrb[0].mxu0
      %v4014 = vadd.f32 0.0, %v4013
      %v4015 = vpop.f32.mrb[0].mxu0
      %4016 = vmatprep.mubr.bf16.mxu0 0
      %4017 = vmatmul.mubr.bf16.gmra.mrb[0].mxu0 %v2526
      %v4018 = vpop.f32.mrb[0].mxu0
      %v4019 = vadd.f32 0.0, %v4018
      %v4020 = vpop.f32.mrb[0].mxu0
      %v4021 = vpop.f32.mrb[0].mxu0
      %v4022 = vadd.f32 0.0, %v4021
      %v4023 = vpop.f32.mrb[0].mxu0
      %4024 = vmatprep.mubr.bf16.mxu0 0
      %4025 = vmatmul.mubr.bf16.gmra.mrb[0].mxu0 %v2527
      %v4026 = vpop.f32.mrb[0].mxu0
      %v4027 = vadd.f32 0.0, %v4026
      %v4028 = vpop.f32.mrb[0].mxu0
      %v4029 = vpop.f32.mrb[0].mxu0
      %v4030 = vadd.f32 0.0, %v4029
      %v4031 = vpop.f32.mrb[0].mxu0
      %4032 = vmatprep.mubr.bf16.mxu0 0
      %4033 = vmatmul.mubr.bf16.gmra.mrb[0].mxu0 %v2528
      %v4034 = vpop.f32.mrb[0].mxu0
      %v4035 = vadd.f32 0.0, %v4034
      %v4036 = vpop.f32.mrb[0].mxu0
      %v4037 = vpop.f32.mrb[0].mxu0
      %v4038 = vadd.f32 0.0, %v4037
      %v4039 = vpop.f32.mrb[0].mxu0
      %4040 = vmatprep.mubr.bf16.mxu0 0
      %4041 = vmatmul.mubr.bf16.gmra.mrb[0].mxu0 %v2529
      %v4042 = vpop.f32.mrb[0].mxu0
      %v4043 = vadd.f32 0.0, %v4042
      %v4044 = vpop.f32.mrb[0].mxu0
      %v4045 = vpop.f32.mrb[0].mxu0
      %v4046 = vadd.f32 0.0, %v4045
      %v4047 = vpop.f32.mrb[0].mxu0
      %4048 = vmatprep.mubr.bf16.mxu0 0
      %4049 = vmatmul.mubr.bf16.gmra.mrb[0].mxu0 %v2530
      %v4050 = vpop.f32.mrb[0].mxu0
      %v4051 = vadd.f32 0.0, %v4050
      %v4052 = vpop.f32.mrb[0].mxu0
      %v4053 = vpop.f32.mrb[0].mxu0
      %v4054 = vadd.f32 0.0, %v4053
      %v4055 = vpop.f32.mrb[0].mxu0
      %4056 = vmatprep.mubr.bf16.mxu0 0
      %4057 = vmatmul.mubr.bf16.gmra.mrb[0].mxu0 %v2531
      %v4058 = vpop.f32.mrb[0].mxu0
      %v4059 = vadd.f32 0.0, %v4058
      %v4060 = vpop.f32.mrb[0].mxu0
      %v4061 = vpop.f32.mrb[0].mxu0
      %v4062 = vadd.f32 0.0, %v4061
      %v4063 = vpop.f32.mrb[0].mxu0
      %4064 = vmatprep.mubr.bf16.mxu0 0
      %4065 = vmatmul.mubr.bf16.gmra.mrb[0].mxu0 %v2532
      %v4066 = vpop.f32.mrb[0].mxu0
      %v4067 = vadd.f32 0.0, %v4066
      %v4068 = vpop.f32.mrb[0].mxu0
      %v4069 = vpop.f32.mrb[0].mxu0
      %v4070 = vadd.f32 0.0, %v4069
      %v4071 = vpop.f32.mrb[0].mxu0
      %4072 = vmatprep.mubr.bf16.mxu0 0
      %4073 = vmatmul.mubr.bf16.gmra.mrb[0].mxu0 %v2533
      %v4074 = vpop.f32.mrb[0].mxu0
      %v4075 = vadd.f32 0.0, %v4074
      %v4076 = vpop.f32.mrb[0].mxu0
      %v4077 = vpop.f32.mrb[0].mxu0
      %v4078 = vadd.f32 0.0, %v4077
      %v4079 = vpop.f32.mrb[0].mxu0
      %4080 = vmatprep.mubr.bf16.mxu0 0
      %4081 = vmatmul.mubr.bf16.gmra.mrb[0].mxu0 %v2534
      %v4082 = vpop.f32.mrb[0].mxu0
      %v4083 = vadd.f32 0.0, %v4082
      %v4084 = vpop.f32.mrb[0].mxu0
      %v4085 = vpop.f32.mrb[0].mxu0
      %v4086 = vadd.f32 0.0, %v4085
      %v4087 = vpop.f32.mrb[0].mxu0
      %4088 = vmatprep.mubr.bf16.mxu0 0
      %4089 = vmatmul.mubr.bf16.gmra.mrb[0].mxu0 %v2535
      %v4090 = vpop.f32.mrb[0].mxu0
      %v4091 = vadd.f32 0.0, %v4090
      %v4092 = vpop.f32.mrb[0].mxu0
      %v4093 = vpop.f32.mrb[0].mxu0
      %v4094 = vadd.f32 0.0, %v4093
      %v4095 = vpop.f32.mrb[0].mxu0
      %4096 = vmatprep.mubr.bf16.mxu0 0
      %4097 = vmatmul.mubr.bf16.gmra.mrb[0].mxu0 %v2536
      %v4098 = vpop.f32.mrb[0].mxu0
      %v4099 = vadd.f32 0.0, %v4098
      %v4100 = vpop.f32.mrb[0].mxu0
      %v4101 = vpop.f32.mrb[0].mxu0
      %v4102 = vadd.f32 0.0, %v4101
      %v4103 = vpop.f32.mrb[0].mxu0
      %4104 = vmatprep.mubr.bf16.mxu0 0
      %4105 = vmatmul.mubr.bf16.gmra.mrb[0].mxu0 %v2537
      %v4106 = vpop.f32.mrb[0].mxu0
      %v4107 = vadd.f32 0.0, %v4106
      %v4108 = vpop.f32.mrb[0].mxu0
      %v4109 = vpop.f32.mrb[0].mxu0
      %v4110 = vadd.f32 0.0, %v4109
      %v4111 = vpop.f32.mrb[0].mxu0
      %4112 = vmatprep.mubr.bf16.mxu0 0
      %4113 = vmatmul.mubr.bf16.gmra.mrb[0].mxu0 %v2538
      %v4114 = vpop.f32.mrb[0].mxu0
      %v4115 = vadd.f32 0.0, %v4114
      %v4116 = vpop.f32.mrb[0].mxu0
      %v4117 = vpop.f32.mrb[0].mxu0
      %v4118 = vadd.f32 0.0, %v4117
      %v4119 = vpop.f32.mrb[0].mxu0
      %4120 = vmatprep.mubr.bf16.mxu0 0
      %4121 = vmatmul.mubr.bf16.gmra.mrb[0].mxu0 %v2539
      %v4122 = vpop.f32.mrb[0].mxu0
      %v4123 = vadd.f32 0.0, %v4122
      %v4124 = vpop.f32.mrb[0].mxu0
      %v4125 = vpop.f32.mrb[0].mxu0
      %v4126 = vadd.f32 0.0, %v4125
      %v4127 = vpop.f32.mrb[0].mxu0
      %4128 = vmatprep.mubr.bf16.mxu0 0
      %4129 = vmatmul.mubr.bf16.gmra.mrb[0].mxu0 %v2540
      %v4130 = vpop.f32.mrb[0].mxu0
      %v4131 = vadd.f32 0.0, %v4130
      %v4132 = vpop.f32.mrb[0].mxu0
      %v4133 = vpop.f32.mrb[0].mxu0
      %v4134 = vadd.f32 0.0, %v4133
      %v4135 = vpop.f32.mrb[0].mxu0
      %4136 = vmatprep.mubr.bf16.mxu0 0
      %4137 = vmatmul.mubr.bf16.gmra.mrb[0].mxu0 %v2541
      %v4138 = vpop.f32.mrb[0].mxu0
      %v4139 = vadd.f32 0.0, %v4138
      %v4140 = vpop.f32.mrb[0].mxu0
      %v4141 = vpop.f32.mrb[0].mxu0
      %v4142 = vadd.f32 0.0, %v4141
      %v4143 = vpop.f32.mrb[0].mxu0
      %4144 = vmatprep.mubr.bf16.mxu0 0
      %4145 = vmatmul.mubr.bf16.gmra.mrb[0].mxu0 %v2542
      %v4146 = vpop.f32.mrb[0].mxu0
      %v4147 = vadd.f32 0.0, %v4146
      %v4148 = vpop.f32.mrb[0].mxu0
      %v4149 = vpop.f32.mrb[0].mxu0
      %v4150 = vadd.f32 0.0, %v4149
      %v4151 = vpop.f32.mrb[0].mxu0
      %4152 = vmatprep.mubr.bf16.mxu0 0
      %4153 = vmatmul.mubr.bf16.gmra.mrb[0].mxu0 %v2543
      %v4154 = vpop.f32.mrb[0].mxu0
      %v4155 = vadd.f32 0.0, %v4154
      %v4156 = vpop.f32.mrb[0].mxu0
      %v4157 = vpop.f32.mrb[0].mxu0
      %v4158 = vadd.f32 0.0, %v4157
      %v4159 = vpop.f32.mrb[0].mxu0
      %4160 = vmatprep.mubr.bf16.mxu0 0
      %4161 = vmatmul.mubr.bf16.gmra.mrb[0].mxu0 %v2544
      %v4162 = vpop.f32.mrb[0].mxu0
      %v4163 = vadd.f32 0.0, %v4162
      %v4164 = vpop.f32.mrb[0].mxu0
      %v4165 = vpop.f32.mrb[0].mxu0
      %v4166 = vadd.f32 0.0, %v4165
      %v4167 = vpop.f32.mrb[0].mxu0
      %4168 = vdwg.mxu0
      %v4169 = vadd.f32 %v3561, %v3915
      %v4170 = vadd.f32 %v3564, %v3918
      %v4171 = vadd.f32 %v3569, %v3923
      %v4172 = vadd.f32 %v3572, %v3926
      %v4173 = vadd.f32 %v3577, %v3931
      %v4174 = vadd.f32 %v3580, %v3934
      %v4175 = vadd.f32 %v3585, %v3939
      %v4176 = vadd.f32 %v3588, %v3942
      %v4177 = vadd.f32 %v3593, %v3947
      %v4178 = vadd.f32 %v3596, %v3950
      %v4179 = vadd.f32 %v3601, %v3955
      %v4180 = vadd.f32 %v3604, %v3958
      %v4181 = vadd.f32 %v3609, %v3963
      %v4182 = vadd.f32 %v3612, %v3966
      %v4183 = vadd.f32 %v3617, %v3971
      %v4184 = vadd.f32 %v3620, %v3974
      %v4185 = vadd.f32 %v3625, %v3979
      %v4186 = vadd.f32 %v3628, %v3982
      %v4187 = vadd.f32 %v3633, %v3987
      %v4188 = vadd.f32 %v3636, %v3990
      %v4189 = vadd.f32 %v3641, %v3995
      %v4190 = vadd.f32 %v3644, %v3998
      %v4191 = vadd.f32 %v3649, %v4003
      %v4192 = vadd.f32 %v3652, %v4006
      %v4193 = vadd.f32 %v3657, %v4011
      %v4194 = vadd.f32 %v3660, %v4014
      %v4195 = vadd.f32 %v3665, %v4019
      %v4196 = vadd.f32 %v3668, %v4022
      %v4197 = vadd.f32 %v3673, %v4027
      %v4198 = vadd.f32 %v3676, %v4030
      %v4199 = vadd.f32 %v3681, %v4035
      %v4200 = vadd.f32 %v3684, %v4038
      %v4201 = vadd.f32 %v3689, %v4043
      %v4202 = vadd.f32 %v3692, %v4046
      %v4203 = vadd.f32 %v3697, %v4051
      %v4204 = vadd.f32 %v3700, %v4054
      %v4205 = vadd.f32 %v3705, %v4059
      %v4206 = vadd.f32 %v3708, %v4062
      %v4207 = vadd.f32 %v3713, %v4067
      %v4208 = vadd.f32 %v3716, %v4070
      %v4209 = vadd.f32 %v3721, %v4075
      %v4210 = vadd.f32 %v3724, %v4078
      %v4211 = vadd.f32 %v3729, %v4083
      %v4212 = vadd.f32 %v3732, %v4086
      %v4213 = vadd.f32 %v3737, %v4091
      %v4214 = vadd.f32 %v3740, %v4094
      %v4215 = vadd.f32 %v3745, %v4099
      %v4216 = vadd.f32 %v3748, %v4102
      %v4217 = vadd.f32 %v3753, %v4107
      %v4218 = vadd.f32 %v3756, %v4110
      %v4219 = vadd.f32 %v3761, %v4115
      %v4220 = vadd.f32 %v3764, %v4118
      %v4221 = vadd.f32 %v3769, %v4123
      %v4222 = vadd.f32 %v3772, %v4126
      %v4223 = vadd.f32 %v3777, %v4131
      %v4224 = vadd.f32 %v3780, %v4134
      %v4225 = vadd.f32 %v3785, %v4139
      %v4226 = vadd.f32 %v3788, %v4142
      %v4227 = vadd.f32 %v3793, %v4147
      %v4228 = vadd.f32 %v3796, %v4150
      %v4229 = vadd.f32 %v3801, %v4155
      %v4230 = vadd.f32 %v3804, %v4158
      %v4231 = vadd.f32 %v3809, %v4163
      %v4232 = vadd.f32 %v3812, %v4166
      %v4233 = vadd.f32 %v3106, %v4169
      %v4234 = vadd.f32 %v3105, %v4170
      %v4235 = vadd.f32 %v3104, %v4171
      %v4236 = vadd.f32 %v3103, %v4172
      %v4237 = vadd.f32 %v3102, %v4173
      %v4238 = vadd.f32 %v3101, %v4174
      %v4239 = vadd.f32 %v3100, %v4175
      %v4240 = vadd.f32 %v3099, %v4176
      %v4241 = vadd.f32 %v3098, %v4177
      %v4242 = vadd.f32 %v3097, %v4178
      %v4243 = vadd.f32 %v3096, %v4179
      %v4244 = vadd.f32 %v3095, %v4180
      %v4245 = vadd.f32 %v3094, %v4181
      %v4246 = vadd.f32 %v3093, %v4182
      %v4247 = vadd.f32 %v3092, %v4183
      %v4248 = vadd.f32 %v3091, %v4184
      %v4249 = vadd.f32 %v3090, %v4185
      %v4250 = vadd.f32 %v3089, %v4186
      %v4251 = vadd.f32 %v3088, %v4187
      %v4252 = vadd.f32 %v3087, %v4188
      %v4253 = vadd.f32 %v3086, %v4189
      %v4254 = vadd.f32 %v3085, %v4190
      %v4255 = vadd.f32 %v3084, %v4191
      %v4256 = vadd.f32 %v3083, %v4192
      %v4257 = vadd.f32 %v3082, %v4193
      %v4258 = vadd.f32 %v3081, %v4194
      %v4259 = vadd.f32 %v3080, %v4195
      %v4260 = vadd.f32 %v3079, %v4196
      %v4261 = vadd.f32 %v3078, %v4197
      %v4262 = vadd.f32 %v3077, %v4198
      %v4263 = vadd.f32 %v3076, %v4199
      %v4264 = vadd.f32 %v3075, %v4200
      %v4265 = vadd.f32 %v3074, %v4201
      %v4266 = vadd.f32 %v3073, %v4202
      %v4267 = vadd.f32 %v3072, %v4203
      %v4268 = vadd.f32 %v3071, %v4204
      %v4269 = vadd.f32 %v3070, %v4205
      %v4270 = vadd.f32 %v3069, %v4206
      %v4271 = vadd.f32 %v3068, %v4207
      %v4272 = vadd.f32 %v3067, %v4208
      %v4273 = vadd.f32 %v3066, %v4209
      %v4274 = vadd.f32 %v3065, %v4210
      %v4275 = vadd.f32 %v3064, %v4211
      %v4276 = vadd.f32 %v3063, %v4212
      %v4277 = vadd.f32 %v3062, %v4213
      %v4278 = vadd.f32 %v3061, %v4214
      %v4279 = vadd.f32 %v3060, %v4215
      %v4280 = vadd.f32 %v3059, %v4216
      %v4281 = vadd.f32 %v3058, %v4217
      %v4282 = vadd.f32 %v3057, %v4218
      %v4283 = vadd.f32 %v3056, %v4219
      %v4284 = vadd.f32 %v3055, %v4220
      %v4285 = vadd.f32 %v3054, %v4221
      %v4286 = vadd.f32 %v3053, %v4222
      %v4287 = vadd.f32 %v3052, %v4223
      %v4288 = vadd.f32 %v3051, %v4224
      %v4289 = vadd.f32 %v3050, %v4225
      %v4290 = vadd.f32 %v3049, %v4226
      %v4291 = vadd.f32 %v3048, %v4227
      %v4292 = vadd.f32 %v3047, %v4228
      %v4293 = vadd.f32 %v3046, %v4229
      %v4294 = vadd.f32 %v3045, %v4230
      %v4295 = vadd.f32 %v3044, %v4231
      %v4296 = vadd.f32 %v3043, %v4232
      %s4297 = scalar_lea.vmem %s1, 128
      %v4298 = vld [vmem:[%s4297] sm:$0xf]
      %v4299 = vld [vmem:[%s4297 + $0x4] sm:$0xf]
      %v4300 = vld [vmem:[%s4297 + $0x8] sm:$0xf]
      %v4301 = vld [vmem:[%s4297 + $0xc] sm:$0xf]
      %v4302 = vld [vmem:[%s4297 + $0x10] sm:$0xf]
      %v4303 = vld [vmem:[%s4297 + $0x14] sm:$0xf]
      %v4304 = vld [vmem:[%s4297 + $0x18] sm:$0xf]
      %v4305 = vld [vmem:[%s4297 + $0x1c] sm:$0xf]
      %v4306 = vld [vmem:[%s4297 + $0x20] sm:$0xf]
      %v4307 = vld [vmem:[%s4297 + $0x24] sm:$0xf]
      %v4308 = vld [vmem:[%s4297 + $0x28] sm:$0xf]
      %v4309 = vld [vmem:[%s4297 + $0x2c] sm:$0xf]
      %v4310 = vld [vmem:[%s4297 + $0x30] sm:$0xf]
      %v4311 = vld [vmem:[%s4297 + $0x34] sm:$0xf]
      %v4312 = vld [vmem:[%s4297 + $0x38] sm:$0xf]
      %v4313 = vld [vmem:[%s4297 + $0x3c] sm:$0xf]
      %s4314 = scalar_lea.vmem %s1, 320
      %v4315 = vld [vmem:[%s4314] sm:$0xf]
      %v4316 = vld [vmem:[%s4314 + $0x4] sm:$0xf]
      %v4317 = vld [vmem:[%s4314 + $0x8] sm:$0xf]
      %v4318 = vld [vmem:[%s4314 + $0xc] sm:$0xf]
      %v4319 = vld [vmem:[%s4314 + $0x10] sm:$0xf]
      %v4320 = vld [vmem:[%s4314 + $0x14] sm:$0xf]
      %v4321 = vld [vmem:[%s4314 + $0x18] sm:$0xf]
      %v4322 = vld [vmem:[%s4314 + $0x1c] sm:$0xf]
      %v4323 = vld [vmem:[%s4314 + $0x20] sm:$0xf]
      %v4324 = vld [vmem:[%s4314 + $0x24] sm:$0xf]
      %v4325 = vld [vmem:[%s4314 + $0x28] sm:$0xf]
      %v4326 = vld [vmem:[%s4314 + $0x2c] sm:$0xf]
      %v4327 = vld [vmem:[%s4314 + $0x30] sm:$0xf]
      %v4328 = vld [vmem:[%s4314 + $0x34] sm:$0xf]
      %v4329 = vld [vmem:[%s4314 + $0x38] sm:$0xf]
      %v4330 = vld [vmem:[%s4314 + $0x3c] sm:$0xf]
      %v4347 = vunpack.c.l.b16 %v4315
      %v4348 = vunpack.c.l.b16 %v4316
      %v4349 = vunpack.c.l.b16 %v4317
      %v4350 = vunpack.c.l.b16 %v4318
      %v4351 = vunpack.c.l.b16 %v4319
      %v4352 = vunpack.c.l.b16 %v4320
      %v4353 = vunpack.c.l.b16 %v4321
      %v4354 = vunpack.c.l.b16 %v4322
      %v4355 = vunpack.c.l.b16 %v4323
      %v4356 = vunpack.c.l.b16 %v4324
      %v4357 = vunpack.c.l.b16 %v4325
      %v4358 = vunpack.c.l.b16 %v4326
      %v4359 = vunpack.c.l.b16 %v4327
      %v4360 = vunpack.c.l.b16 %v4328
      %v4361 = vunpack.c.l.b16 %v4329
      %v4362 = vunpack.c.l.b16 %v4330
      %v4363 = vpack.c.b16 %v4348, %v4347
      %v4364 = vpack.c.b16 %v4350, %v4349
      %v4365 = vpack.c.b16 %v4352, %v4351
      %v4366 = vpack.c.b16 %v4354, %v4353
      %v4367 = vpack.c.b16 %v4356, %v4355
      %v4368 = vpack.c.b16 %v4358, %v4357
      %v4369 = vpack.c.b16 %v4360, %v4359
      %v4370 = vpack.c.b16 %v4362, %v4361
      %4379 = vmatprep.subr.bf16.mxu0 0
      %4380 = vmatpush1.bf16.msra.mxu0 %v4363
      %4381 = vmatprep.subr.bf16.mxu0 0
      %4382 = vmatpush1.bf16.msra.mxu0 %v4364
      %4383 = vmatprep.subr.bf16.mxu0 0
      %4384 = vmatpush1.bf16.msra.mxu0 %v4365
      %4385 = vmatprep.subr.bf16.mxu0 0
      %4386 = vmatpush1.bf16.msra.mxu0 %v4366
      %4387 = vmatprep.subr.bf16.mxu0 0
      %4388 = vmatpush1.bf16.msra.mxu0 %v4367
      %4389 = vmatprep.subr.bf16.mxu0 0
      %4390 = vmatpush1.bf16.msra.mxu0 %v4368
      %4391 = vmatprep.subr.bf16.mxu0 0
      %4392 = vmatpush1.bf16.msra.mxu0 %v4369
      %4393 = vmatprep.subr.bf16.mxu0 0
      %4394 = vmatpush1.bf16.msra.mxu0 %v4370
      %4395 = vmatprep.subr.bf16.mxu0 0
      %4396 = vmatpush1.bf16.msra.mxu0 0
      %4397 = vmatprep.subr.bf16.mxu0 0
      %4398 = vmatpush1.bf16.msra.mxu0 0
      %4399 = vmatprep.subr.bf16.mxu0 0
      %4400 = vmatpush1.bf16.msra.mxu0 0
      %4401 = vmatprep.subr.bf16.mxu0 0
      %4402 = vmatpush1.bf16.msra.mxu0 0
      %4403 = vmatprep.subr.bf16.mxu0 0
      %4404 = vmatpush1.bf16.msra.mxu0 0
      %4405 = vmatprep.subr.bf16.mxu0 0
      %4406 = vmatpush1.bf16.msra.mxu0 0
      %4407 = vmatprep.subr.bf16.mxu0 0
      %4408 = vmatpush1.bf16.msra.mxu0 0
      %4409 = vmatprep.subr.bf16.mxu0 0
      %4410 = vmatpush1.bf16.msra.mxu0 0
      %4411 = vmatprep.mubr.bf16.mxu0 0
      %4412 = vmatmul.mubr.bf16.gmra.mrb[0].mxu0 %v1554
      %v4413 = vpop.f32.mrb[0].mxu0
      %v4414 = vadd.f32 0.0, %v4413
      %v4415 = vpop.f32.mrb[0].mxu0
      %v4416 = vpop.f32.mrb[0].mxu0
      %v4417 = vadd.f32 0.0, %v4416
      %v4418 = vpop.f32.mrb[0].mxu0
      %4419 = vmatprep.mubr.bf16.mxu0 0
      %4420 = vmatmul.mubr.bf16.gmra.mrb[0].mxu0 %v1555
      %v4421 = vpop.f32.mrb[0].mxu0
      %v4422 = vadd.f32 0.0, %v4421
      %v4423 = vpop.f32.mrb[0].mxu0
      %v4424 = vpop.f32.mrb[0].mxu0
      %v4425 = vadd.f32 0.0, %v4424
      %v4426 = vpop.f32.mrb[0].mxu0
      %4427 = vmatprep.mubr.bf16.mxu0 0
      %4428 = vmatmul.mubr.bf16.gmra.mrb[0].mxu0 %v1556
      %v4429 = vpop.f32.mrb[0].mxu0
      %v4430 = vadd.f32 0.0, %v4429
      %v4431 = vpop.f32.mrb[0].mxu0
      %v4432 = vpop.f32.mrb[0].mxu0
      %v4433 = vadd.f32 0.0, %v4432
      %v4434 = vpop.f32.mrb[0].mxu0
      %4435 = vmatprep.mubr.bf16.mxu0 0
      %4436 = vmatmul.mubr.bf16.gmra.mrb[0].mxu0 %v1557
      %v4437 = vpop.f32.mrb[0].mxu0
      %v4438 = vadd.f32 0.0, %v4437
      %v4439 = vpop.f32.mrb[0].mxu0
      %v4440 = vpop.f32.mrb[0].mxu0
      %v4441 = vadd.f32 0.0, %v4440
      %v4442 = vpop.f32.mrb[0].mxu0
      %4443 = vmatprep.mubr.bf16.mxu0 0
      %4444 = vmatmul.mubr.bf16.gmra.mrb[0].mxu0 %v1558
      %v4445 = vpop.f32.mrb[0].mxu0
      %v4446 = vadd.f32 0.0, %v4445
      %v4447 = vpop.f32.mrb[0].mxu0
      %v4448 = vpop.f32.mrb[0].mxu0
      %v4449 = vadd.f32 0.0, %v4448
      %v4450 = vpop.f32.mrb[0].mxu0
      %4451 = vmatprep.mubr.bf16.mxu0 0
      %4452 = vmatmul.mubr.bf16.gmra.mrb[0].mxu0 %v1559
      %v4453 = vpop.f32.mrb[0].mxu0
      %v4454 = vadd.f32 0.0, %v4453
      %v4455 = vpop.f32.mrb[0].mxu0
      %v4456 = vpop.f32.mrb[0].mxu0
      %v4457 = vadd.f32 0.0, %v4456
      %v4458 = vpop.f32.mrb[0].mxu0
      %4459 = vmatprep.mubr.bf16.mxu0 0
      %4460 = vmatmul.mubr.bf16.gmra.mrb[0].mxu0 %v1560
      %v4461 = vpop.f32.mrb[0].mxu0
      %v4462 = vadd.f32 0.0, %v4461
      %v4463 = vpop.f32.mrb[0].mxu0
      %v4464 = vpop.f32.mrb[0].mxu0
      %v4465 = vadd.f32 0.0, %v4464
      %v4466 = vpop.f32.mrb[0].mxu0
      %4467 = vmatprep.mubr.bf16.mxu0 0
      %4468 = vmatmul.mubr.bf16.gmra.mrb[0].mxu0 %v1561
      %v4469 = vpop.f32.mrb[0].mxu0
      %v4470 = vadd.f32 0.0, %v4469
      %v4471 = vpop.f32.mrb[0].mxu0
      %v4472 = vpop.f32.mrb[0].mxu0
      %v4473 = vadd.f32 0.0, %v4472
      %v4474 = vpop.f32.mrb[0].mxu0
      %4475 = vmatprep.mubr.bf16.mxu0 0
      %4476 = vmatmul.mubr.bf16.gmra.mrb[0].mxu0 %v1562
      %v4477 = vpop.f32.mrb[0].mxu0
      %v4478 = vadd.f32 0.0, %v4477
      %v4479 = vpop.f32.mrb[0].mxu0
      %v4480 = vpop.f32.mrb[0].mxu0
      %v4481 = vadd.f32 0.0, %v4480
      %v4482 = vpop.f32.mrb[0].mxu0
      %4483 = vmatprep.mubr.bf16.mxu0 0
      %4484 = vmatmul.mubr.bf16.gmra.mrb[0].mxu0 %v1563
      %v4485 = vpop.f32.mrb[0].mxu0
      %v4486 = vadd.f32 0.0, %v4485
      %v4487 = vpop.f32.mrb[0].mxu0
      %v4488 = vpop.f32.mrb[0].mxu0
      %v4489 = vadd.f32 0.0, %v4488
      %v4490 = vpop.f32.mrb[0].mxu0
      %4491 = vmatprep.mubr.bf16.mxu0 0
      %4492 = vmatmul.mubr.bf16.gmra.mrb[0].mxu0 %v1564
      %v4493 = vpop.f32.mrb[0].mxu0
      %v4494 = vadd.f32 0.0, %v4493
      %v4495 = vpop.f32.mrb[0].mxu0
      %v4496 = vpop.f32.mrb[0].mxu0
      %v4497 = vadd.f32 0.0, %v4496
      %v4498 = vpop.f32.mrb[0].mxu0
      %4499 = vmatprep.mubr.bf16.mxu0 0
      %4500 = vmatmul.mubr.bf16.gmra.mrb[0].mxu0 %v1565
      %v4501 = vpop.f32.mrb[0].mxu0
      %v4502 = vadd.f32 0.0, %v4501
      %v4503 = vpop.f32.mrb[0].mxu0
      %v4504 = vpop.f32.mrb[0].mxu0
      %v4505 = vadd.f32 0.0, %v4504
      %v4506 = vpop.f32.mrb[0].mxu0
      %4507 = vmatprep.mubr.bf16.mxu0 0
      %4508 = vmatmul.mubr.bf16.gmra.mrb[0].mxu0 %v1566
      %v4509 = vpop.f32.mrb[0].mxu0
      %v4510 = vadd.f32 0.0, %v4509
      %v4511 = vpop.f32.mrb[0].mxu0
      %v4512 = vpop.f32.mrb[0].mxu0
      %v4513 = vadd.f32 0.0, %v4512
      %v4514 = vpop.f32.mrb[0].mxu0
      %4515 = vmatprep.mubr.bf16.mxu0 0
      %4516 = vmatmul.mubr.bf16.gmra.mrb[0].mxu0 %v1567
      %v4517 = vpop.f32.mrb[0].mxu0
      %v4518 = vadd.f32 0.0, %v4517
      %v4519 = vpop.f32.mrb[0].mxu0
      %v4520 = vpop.f32.mrb[0].mxu0
      %v4521 = vadd.f32 0.0, %v4520
      %v4522 = vpop.f32.mrb[0].mxu0
      %4523 = vmatprep.mubr.bf16.mxu0 0
      %4524 = vmatmul.mubr.bf16.gmra.mrb[0].mxu0 %v1568
      %v4525 = vpop.f32.mrb[0].mxu0
      %v4526 = vadd.f32 0.0, %v4525
      %v4527 = vpop.f32.mrb[0].mxu0
      %v4528 = vpop.f32.mrb[0].mxu0
      %v4529 = vadd.f32 0.0, %v4528
      %v4530 = vpop.f32.mrb[0].mxu0
      %4531 = vmatprep.mubr.bf16.mxu0 0
      %4532 = vmatmul.mubr.bf16.gmra.mrb[0].mxu0 %v1569
      %v4533 = vpop.f32.mrb[0].mxu0
      %v4534 = vadd.f32 0.0, %v4533
      %v4535 = vpop.f32.mrb[0].mxu0
      %v4536 = vpop.f32.mrb[0].mxu0
      %v4537 = vadd.f32 0.0, %v4536
      %v4538 = vpop.f32.mrb[0].mxu0
      %4539 = vmatprep.mubr.bf16.mxu0 0
      %4540 = vmatmul.mubr.bf16.gmra.mrb[0].mxu0 %v1570
      %v4541 = vpop.f32.mrb[0].mxu0
      %v4542 = vadd.f32 0.0, %v4541
      %v4543 = vpop.f32.mrb[0].mxu0
      %v4544 = vpop.f32.mrb[0].mxu0
      %v4545 = vadd.f32 0.0, %v4544
      %v4546 = vpop.f32.mrb[0].mxu0
      %4547 = vmatprep.mubr.bf16.mxu0 0
      %4548 = vmatmul.mubr.bf16.gmra.mrb[0].mxu0 %v1571
      %v4549 = vpop.f32.mrb[0].mxu0
      %v4550 = vadd.f32 0.0, %v4549
      %v4551 = vpop.f32.mrb[0].mxu0
      %v4552 = vpop.f32.mrb[0].mxu0
      %v4553 = vadd.f32 0.0, %v4552
      %v4554 = vpop.f32.mrb[0].mxu0
      %4555 = vmatprep.mubr.bf16.mxu0 0
      %4556 = vmatmul.mubr.bf16.gmra.mrb[0].mxu0 %v1572
      %v4557 = vpop.f32.mrb[0].mxu0
      %v4558 = vadd.f32 0.0, %v4557
      %v4559 = vpop.f32.mrb[0].mxu0
      %v4560 = vpop.f32.mrb[0].mxu0
      %v4561 = vadd.f32 0.0, %v4560
      %v4562 = vpop.f32.mrb[0].mxu0
      %4563 = vmatprep.mubr.bf16.mxu0 0
      %4564 = vmatmul.mubr.bf16.gmra.mrb[0].mxu0 %v1573
      %v4565 = vpop.f32.mrb[0].mxu0
      %v4566 = vadd.f32 0.0, %v4565
      %v4567 = vpop.f32.mrb[0].mxu0
      %v4568 = vpop.f32.mrb[0].mxu0
      %v4569 = vadd.f32 0.0, %v4568
      %v4570 = vpop.f32.mrb[0].mxu0
      %4571 = vmatprep.mubr.bf16.mxu0 0
      %4572 = vmatmul.mubr.bf16.gmra.mrb[0].mxu0 %v1574
      %v4573 = vpop.f32.mrb[0].mxu0
      %v4574 = vadd.f32 0.0, %v4573
      %v4575 = vpop.f32.mrb[0].mxu0
      %v4576 = vpop.f32.mrb[0].mxu0
      %v4577 = vadd.f32 0.0, %v4576
      %v4578 = vpop.f32.mrb[0].mxu0
      %4579 = vmatprep.mubr.bf16.mxu0 0
      %4580 = vmatmul.mubr.bf16.gmra.mrb[0].mxu0 %v1575
      %v4581 = vpop.f32.mrb[0].mxu0
      %v4582 = vadd.f32 0.0, %v4581
      %v4583 = vpop.f32.mrb[0].mxu0
      %v4584 = vpop.f32.mrb[0].mxu0
      %v4585 = vadd.f32 0.0, %v4584
      %v4586 = vpop.f32.mrb[0].mxu0
      %4587 = vmatprep.mubr.bf16.mxu0 0
      %4588 = vmatmul.mubr.bf16.gmra.mrb[0].mxu0 %v1576
      %v4589 = vpop.f32.mrb[0].mxu0
      %v4590 = vadd.f32 0.0, %v4589
      %v4591 = vpop.f32.mrb[0].mxu0
      %v4592 = vpop.f32.mrb[0].mxu0
      %v4593 = vadd.f32 0.0, %v4592
      %v4594 = vpop.f32.mrb[0].mxu0
      %4595 = vmatprep.mubr.bf16.mxu0 0
      %4596 = vmatmul.mubr.bf16.gmra.mrb[0].mxu0 %v1577
      %v4597 = vpop.f32.mrb[0].mxu0
      %v4598 = vadd.f32 0.0, %v4597
      %v4599 = vpop.f32.mrb[0].mxu0
      %v4600 = vpop.f32.mrb[0].mxu0
      %v4601 = vadd.f32 0.0, %v4600
      %v4602 = vpop.f32.mrb[0].mxu0
      %4603 = vmatprep.mubr.bf16.mxu0 0
      %4604 = vmatmul.mubr.bf16.gmra.mrb[0].mxu0 %v1578
      %v4605 = vpop.f32.mrb[0].mxu0
      %v4606 = vadd.f32 0.0, %v4605
      %v4607 = vpop.f32.mrb[0].mxu0
      %v4608 = vpop.f32.mrb[0].mxu0
      %v4609 = vadd.f32 0.0, %v4608
      %v4610 = vpop.f32.mrb[0].mxu0
      %4611 = vmatprep.mubr.bf16.mxu0 0
      %4612 = vmatmul.mubr.bf16.gmra.mrb[0].mxu0 %v1579
      %v4613 = vpop.f32.mrb[0].mxu0
      %v4614 = vadd.f32 0.0, %v4613
      %v4615 = vpop.f32.mrb[0].mxu0
      %v4616 = vpop.f32.mrb[0].mxu0
      %v4617 = vadd.f32 0.0, %v4616
      %v4618 = vpop.f32.mrb[0].mxu0
      %4619 = vmatprep.mubr.bf16.mxu0 0
      %4620 = vmatmul.mubr.bf16.gmra.mrb[0].mxu0 %v1580
      %v4621 = vpop.f32.mrb[0].mxu0
      %v4622 = vadd.f32 0.0, %v4621
      %v4623 = vpop.f32.mrb[0].mxu0
      %v4624 = vpop.f32.mrb[0].mxu0
      %v4625 = vadd.f32 0.0, %v4624
      %v4626 = vpop.f32.mrb[0].mxu0
      %4627 = vmatprep.mubr.bf16.mxu0 0
      %4628 = vmatmul.mubr.bf16.gmra.mrb[0].mxu0 %v1581
      %v4629 = vpop.f32.mrb[0].mxu0
      %v4630 = vadd.f32 0.0, %v4629
      %v4631 = vpop.f32.mrb[0].mxu0
      %v4632 = vpop.f32.mrb[0].mxu0
      %v4633 = vadd.f32 0.0, %v4632
      %v4634 = vpop.f32.mrb[0].mxu0
      %4635 = vmatprep.mubr.bf16.mxu0 0
      %4636 = vmatmul.mubr.bf16.gmra.mrb[0].mxu0 %v1582
      %v4637 = vpop.f32.mrb[0].mxu0
      %v4638 = vadd.f32 0.0, %v4637
      %v4639 = vpop.f32.mrb[0].mxu0
      %v4640 = vpop.f32.mrb[0].mxu0
      %v4641 = vadd.f32 0.0, %v4640
      %v4642 = vpop.f32.mrb[0].mxu0
      %4643 = vmatprep.mubr.bf16.mxu0 0
      %4644 = vmatmul.mubr.bf16.gmra.mrb[0].mxu0 %v1583
      %v4645 = vpop.f32.mrb[0].mxu0
      %v4646 = vadd.f32 0.0, %v4645
      %v4647 = vpop.f32.mrb[0].mxu0
      %v4648 = vpop.f32.mrb[0].mxu0
      %v4649 = vadd.f32 0.0, %v4648
      %v4650 = vpop.f32.mrb[0].mxu0
      %4651 = vmatprep.mubr.bf16.mxu0 0
      %4652 = vmatmul.mubr.bf16.gmra.mrb[0].mxu0 %v1584
      %v4653 = vpop.f32.mrb[0].mxu0
      %v4654 = vadd.f32 0.0, %v4653
      %v4655 = vpop.f32.mrb[0].mxu0
      %v4656 = vpop.f32.mrb[0].mxu0
      %v4657 = vadd.f32 0.0, %v4656
      %v4658 = vpop.f32.mrb[0].mxu0
      %4659 = vmatprep.mubr.bf16.mxu0 0
      %4660 = vmatmul.mubr.bf16.gmra.mrb[0].mxu0 %v1585
      %v4661 = vpop.f32.mrb[0].mxu0
      %v4662 = vadd.f32 0.0, %v4661
      %v4663 = vpop.f32.mrb[0].mxu0
      %v4664 = vpop.f32.mrb[0].mxu0
      %v4665 = vadd.f32 0.0, %v4664
      %v4666 = vpop.f32.mrb[0].mxu0
      %4667 = vdwg.mxu0
      %v4684 = vunpack.c.l.b16 %v4298
      %v4685 = vunpack.c.l.b16 %v4299
      %v4686 = vunpack.c.l.b16 %v4300
      %v4687 = vunpack.c.l.b16 %v4301
      %v4688 = vunpack.c.l.b16 %v4302
      %v4689 = vunpack.c.l.b16 %v4303
      %v4690 = vunpack.c.l.b16 %v4304
      %v4691 = vunpack.c.l.b16 %v4305
      %v4692 = vunpack.c.l.b16 %v4306
      %v4693 = vunpack.c.l.b16 %v4307
      %v4694 = vunpack.c.l.b16 %v4308
      %v4695 = vunpack.c.l.b16 %v4309
      %v4696 = vunpack.c.l.b16 %v4310
      %v4697 = vunpack.c.l.b16 %v4311
      %v4698 = vunpack.c.l.b16 %v4312
      %v4699 = vunpack.c.l.b16 %v4313
      %v4700 = vpack.c.b16 %v4685, %v4684
      %v4701 = vpack.c.b16 %v4687, %v4686
      %v4702 = vpack.c.b16 %v4689, %v4688
      %v4703 = vpack.c.b16 %v4691, %v4690
      %v4704 = vpack.c.b16 %v4693, %v4692
      %v4705 = vpack.c.b16 %v4695, %v4694
      %v4706 = vpack.c.b16 %v4697, %v4696
      %v4707 = vpack.c.b16 %v4699, %v4698
      %4716 = vmatprep.subr.bf16.mxu0 0
      %4717 = vmatpush1.bf16.msra.mxu0 %v4700
      %4718 = vmatprep.subr.bf16.mxu0 0
      %4719 = vmatpush1.bf16.msra.mxu0 %v4701
      %4720 = vmatprep.subr.bf16.mxu0 0
      %4721 = vmatpush1.bf16.msra.mxu0 %v4702
      %4722 = vmatprep.subr.bf16.mxu0 0
      %4723 = vmatpush1.bf16.msra.mxu0 %v4703
      %4724 = vmatprep.subr.bf16.mxu0 0
      %4725 = vmatpush1.bf16.msra.mxu0 %v4704
      %4726 = vmatprep.subr.bf16.mxu0 0
      %4727 = vmatpush1.bf16.msra.mxu0 %v4705
      %4728 = vmatprep.subr.bf16.mxu0 0
      %4729 = vmatpush1.bf16.msra.mxu0 %v4706
      %4730 = vmatprep.subr.bf16.mxu0 0
      %4731 = vmatpush1.bf16.msra.mxu0 %v4707
      %4732 = vmatprep.subr.bf16.mxu0 0
      %4733 = vmatpush1.bf16.msra.mxu0 0
      %4734 = vmatprep.subr.bf16.mxu0 0
      %4735 = vmatpush1.bf16.msra.mxu0 0
      %4736 = vmatprep.subr.bf16.mxu0 0
      %4737 = vmatpush1.bf16.msra.mxu0 0
      %4738 = vmatprep.subr.bf16.mxu0 0
      %4739 = vmatpush1.bf16.msra.mxu0 0
      %4740 = vmatprep.subr.bf16.mxu0 0
      %4741 = vmatpush1.bf16.msra.mxu0 0
      %4742 = vmatprep.subr.bf16.mxu0 0
      %4743 = vmatpush1.bf16.msra.mxu0 0
      %4744 = vmatprep.subr.bf16.mxu0 0
      %4745 = vmatpush1.bf16.msra.mxu0 0
      %4746 = vmatprep.subr.bf16.mxu0 0
      %4747 = vmatpush1.bf16.msra.mxu0 0
      %4748 = vmatprep.mubr.bf16.mxu0 0
      %4749 = vmatmul.mubr.bf16.gmra.mrb[0].mxu0 %v1963
      %v4750 = vpop.f32.mrb[0].mxu0
      %v4751 = vadd.f32 %v4414, %v4750
      %v4752 = vpop.f32.mrb[0].mxu0
      %v4753 = vpop.f32.mrb[0].mxu0
      %v4754 = vadd.f32 %v4417, %v4753
      %v4755 = vpop.f32.mrb[0].mxu0
      %4756 = vmatprep.mubr.bf16.mxu0 0
      %4757 = vmatmul.mubr.bf16.gmra.mrb[0].mxu0 %v1964
      %v4758 = vpop.f32.mrb[0].mxu0
      %v4759 = vadd.f32 %v4422, %v4758
      %v4760 = vpop.f32.mrb[0].mxu0
      %v4761 = vpop.f32.mrb[0].mxu0
      %v4762 = vadd.f32 %v4425, %v4761
      %v4763 = vpop.f32.mrb[0].mxu0
      %4764 = vmatprep.mubr.bf16.mxu0 0
      %4765 = vmatmul.mubr.bf16.gmra.mrb[0].mxu0 %v1554
      %v4766 = vpop.f32.mrb[0].mxu0
      %v4767 = vadd.f32 %v4430, %v4766
      %v4768 = vpop.f32.mrb[0].mxu0
      %v4769 = vpop.f32.mrb[0].mxu0
      %v4770 = vadd.f32 %v4433, %v4769
      %v4771 = vpop.f32.mrb[0].mxu0
      %4772 = vmatprep.mubr.bf16.mxu0 0
      %4773 = vmatmul.mubr.bf16.gmra.mrb[0].mxu0 %v1555
      %v4774 = vpop.f32.mrb[0].mxu0
      %v4775 = vadd.f32 %v4438, %v4774
      %v4776 = vpop.f32.mrb[0].mxu0
      %v4777 = vpop.f32.mrb[0].mxu0
      %v4778 = vadd.f32 %v4441, %v4777
      %v4779 = vpop.f32.mrb[0].mxu0
      %4780 = vmatprep.mubr.bf16.mxu0 0
      %4781 = vmatmul.mubr.bf16.gmra.mrb[0].mxu0 %v1556
      %v4782 = vpop.f32.mrb[0].mxu0
      %v4783 = vadd.f32 %v4446, %v4782
      %v4784 = vpop.f32.mrb[0].mxu0
      %v4785 = vpop.f32.mrb[0].mxu0
      %v4786 = vadd.f32 %v4449, %v4785
      %v4787 = vpop.f32.mrb[0].mxu0
      %4788 = vmatprep.mubr.bf16.mxu0 0
      %4789 = vmatmul.mubr.bf16.gmra.mrb[0].mxu0 %v1557
      %v4790 = vpop.f32.mrb[0].mxu0
      %v4791 = vadd.f32 %v4454, %v4790
      %v4792 = vpop.f32.mrb[0].mxu0
      %v4793 = vpop.f32.mrb[0].mxu0
      %v4794 = vadd.f32 %v4457, %v4793
      %v4795 = vpop.f32.mrb[0].mxu0
      %4796 = vmatprep.mubr.bf16.mxu0 0
      %4797 = vmatmul.mubr.bf16.gmra.mrb[0].mxu0 %v1558
      %v4798 = vpop.f32.mrb[0].mxu0
      %v4799 = vadd.f32 %v4462, %v4798
      %v4800 = vpop.f32.mrb[0].mxu0
      %v4801 = vpop.f32.mrb[0].mxu0
      %v4802 = vadd.f32 %v4465, %v4801
      %v4803 = vpop.f32.mrb[0].mxu0
      %4804 = vmatprep.mubr.bf16.mxu0 0
      %4805 = vmatmul.mubr.bf16.gmra.mrb[0].mxu0 %v1559
      %v4806 = vpop.f32.mrb[0].mxu0
      %v4807 = vadd.f32 %v4470, %v4806
      %v4808 = vpop.f32.mrb[0].mxu0
      %v4809 = vpop.f32.mrb[0].mxu0
      %v4810 = vadd.f32 %v4473, %v4809
      %v4811 = vpop.f32.mrb[0].mxu0
      %4812 = vmatprep.mubr.bf16.mxu0 0
      %4813 = vmatmul.mubr.bf16.gmra.mrb[0].mxu0 %v1560
      %v4814 = vpop.f32.mrb[0].mxu0
      %v4815 = vadd.f32 %v4478, %v4814
      %v4816 = vpop.f32.mrb[0].mxu0
      %v4817 = vpop.f32.mrb[0].mxu0
      %v4818 = vadd.f32 %v4481, %v4817
      %v4819 = vpop.f32.mrb[0].mxu0
      %4820 = vmatprep.mubr.bf16.mxu0 0
      %4821 = vmatmul.mubr.bf16.gmra.mrb[0].mxu0 %v1561
      %v4822 = vpop.f32.mrb[0].mxu0
      %v4823 = vadd.f32 %v4486, %v4822
      %v4824 = vpop.f32.mrb[0].mxu0
      %v4825 = vpop.f32.mrb[0].mxu0
      %v4826 = vadd.f32 %v4489, %v4825
      %v4827 = vpop.f32.mrb[0].mxu0
      %4828 = vmatprep.mubr.bf16.mxu0 0
      %4829 = vmatmul.mubr.bf16.gmra.mrb[0].mxu0 %v1562
      %v4830 = vpop.f32.mrb[0].mxu0
      %v4831 = vadd.f32 %v4494, %v4830
      %v4832 = vpop.f32.mrb[0].mxu0
      %v4833 = vpop.f32.mrb[0].mxu0
      %v4834 = vadd.f32 %v4497, %v4833
      %v4835 = vpop.f32.mrb[0].mxu0
      %4836 = vmatprep.mubr.bf16.mxu0 0
      %4837 = vmatmul.mubr.bf16.gmra.mrb[0].mxu0 %v1563
      %v4838 = vpop.f32.mrb[0].mxu0
      %v4839 = vadd.f32 %v4502, %v4838
      %v4840 = vpop.f32.mrb[0].mxu0
      %v4841 = vpop.f32.mrb[0].mxu0
      %v4842 = vadd.f32 %v4505, %v4841
      %v4843 = vpop.f32.mrb[0].mxu0
      %4844 = vmatprep.mubr.bf16.mxu0 0
      %4845 = vmatmul.mubr.bf16.gmra.mrb[0].mxu0 %v1564
      %v4846 = vpop.f32.mrb[0].mxu0
      %v4847 = vadd.f32 %v4510, %v4846
      %v4848 = vpop.f32.mrb[0].mxu0
      %v4849 = vpop.f32.mrb[0].mxu0
      %v4850 = vadd.f32 %v4513, %v4849
      %v4851 = vpop.f32.mrb[0].mxu0
      %4852 = vmatprep.mubr.bf16.mxu0 0
      %4853 = vmatmul.mubr.bf16.gmra.mrb[0].mxu0 %v1565
      %v4854 = vpop.f32.mrb[0].mxu0
      %v4855 = vadd.f32 %v4518, %v4854
      %v4856 = vpop.f32.mrb[0].mxu0
      %v4857 = vpop.f32.mrb[0].mxu0
      %v4858 = vadd.f32 %v4521, %v4857
      %v4859 = vpop.f32.mrb[0].mxu0
      %4860 = vmatprep.mubr.bf16.mxu0 0
      %4861 = vmatmul.mubr.bf16.gmra.mrb[0].mxu0 %v1566
      %v4862 = vpop.f32.mrb[0].mxu0
      %v4863 = vadd.f32 %v4526, %v4862
      %v4864 = vpop.f32.mrb[0].mxu0
      %v4865 = vpop.f32.mrb[0].mxu0
      %v4866 = vadd.f32 %v4529, %v4865
      %v4867 = vpop.f32.mrb[0].mxu0
      %4868 = vmatprep.mubr.bf16.mxu0 0
      %4869 = vmatmul.mubr.bf16.gmra.mrb[0].mxu0 %v1567
      %v4870 = vpop.f32.mrb[0].mxu0
      %v4871 = vadd.f32 %v4534, %v4870
      %v4872 = vpop.f32.mrb[0].mxu0
      %v4873 = vpop.f32.mrb[0].mxu0
      %v4874 = vadd.f32 %v4537, %v4873
      %v4875 = vpop.f32.mrb[0].mxu0
      %4876 = vmatprep.mubr.bf16.mxu0 0
      %4877 = vmatmul.mubr.bf16.gmra.mrb[0].mxu0 %v1568
      %v4878 = vpop.f32.mrb[0].mxu0
      %v4879 = vadd.f32 %v4542, %v4878
      %v4880 = vpop.f32.mrb[0].mxu0
      %v4881 = vpop.f32.mrb[0].mxu0
      %v4882 = vadd.f32 %v4545, %v4881
      %v4883 = vpop.f32.mrb[0].mxu0
      %4884 = vmatprep.mubr.bf16.mxu0 0
      %4885 = vmatmul.mubr.bf16.gmra.mrb[0].mxu0 %v1569
      %v4886 = vpop.f32.mrb[0].mxu0
      %v4887 = vadd.f32 %v4550, %v4886
      %v4888 = vpop.f32.mrb[0].mxu0
      %v4889 = vpop.f32.mrb[0].mxu0
      %v4890 = vadd.f32 %v4553, %v4889
      %v4891 = vpop.f32.mrb[0].mxu0
      %4892 = vmatprep.mubr.bf16.mxu0 0
      %4893 = vmatmul.mubr.bf16.gmra.mrb[0].mxu0 %v1570
      %v4894 = vpop.f32.mrb[0].mxu0
      %v4895 = vadd.f32 %v4558, %v4894
      %v4896 = vpop.f32.mrb[0].mxu0
      %v4897 = vpop.f32.mrb[0].mxu0
      %v4898 = vadd.f32 %v4561, %v4897
      %v4899 = vpop.f32.mrb[0].mxu0
      %4900 = vmatprep.mubr.bf16.mxu0 0
      %4901 = vmatmul.mubr.bf16.gmra.mrb[0].mxu0 %v1571
      %v4902 = vpop.f32.mrb[0].mxu0
      %v4903 = vadd.f32 %v4566, %v4902
      %v4904 = vpop.f32.mrb[0].mxu0
      %v4905 = vpop.f32.mrb[0].mxu0
      %v4906 = vadd.f32 %v4569, %v4905
      %v4907 = vpop.f32.mrb[0].mxu0
      %4908 = vmatprep.mubr.bf16.mxu0 0
      %4909 = vmatmul.mubr.bf16.gmra.mrb[0].mxu0 %v1572
      %v4910 = vpop.f32.mrb[0].mxu0
      %v4911 = vadd.f32 %v4574, %v4910
      %v4912 = vpop.f32.mrb[0].mxu0
      %v4913 = vpop.f32.mrb[0].mxu0
      %v4914 = vadd.f32 %v4577, %v4913
      %v4915 = vpop.f32.mrb[0].mxu0
      %4916 = vmatprep.mubr.bf16.mxu0 0
      %4917 = vmatmul.mubr.bf16.gmra.mrb[0].mxu0 %v1573
      %v4918 = vpop.f32.mrb[0].mxu0
      %v4919 = vadd.f32 %v4582, %v4918
      %v4920 = vpop.f32.mrb[0].mxu0
      %v4921 = vpop.f32.mrb[0].mxu0
      %v4922 = vadd.f32 %v4585, %v4921
      %v4923 = vpop.f32.mrb[0].mxu0
      %4924 = vmatprep.mubr.bf16.mxu0 0
      %4925 = vmatmul.mubr.bf16.gmra.mrb[0].mxu0 %v1574
      %v4926 = vpop.f32.mrb[0].mxu0
      %v4927 = vadd.f32 %v4590, %v4926
      %v4928 = vpop.f32.mrb[0].mxu0
      %v4929 = vpop.f32.mrb[0].mxu0
      %v4930 = vadd.f32 %v4593, %v4929
      %v4931 = vpop.f32.mrb[0].mxu0
      %4932 = vmatprep.mubr.bf16.mxu0 0
      %4933 = vmatmul.mubr.bf16.gmra.mrb[0].mxu0 %v1575
      %v4934 = vpop.f32.mrb[0].mxu0
      %v4935 = vadd.f32 %v4598, %v4934
      %v4936 = vpop.f32.mrb[0].mxu0
      %v4937 = vpop.f32.mrb[0].mxu0
      %v4938 = vadd.f32 %v4601, %v4937
      %v4939 = vpop.f32.mrb[0].mxu0
      %4940 = vmatprep.mubr.bf16.mxu0 0
      %4941 = vmatmul.mubr.bf16.gmra.mrb[0].mxu0 %v1576
      %v4942 = vpop.f32.mrb[0].mxu0
      %v4943 = vadd.f32 %v4606, %v4942
      %v4944 = vpop.f32.mrb[0].mxu0
      %v4945 = vpop.f32.mrb[0].mxu0
      %v4946 = vadd.f32 %v4609, %v4945
      %v4947 = vpop.f32.mrb[0].mxu0
      %4948 = vmatprep.mubr.bf16.mxu0 0
      %4949 = vmatmul.mubr.bf16.gmra.mrb[0].mxu0 %v1577
      %v4950 = vpop.f32.mrb[0].mxu0
      %v4951 = vadd.f32 %v4614, %v4950
      %v4952 = vpop.f32.mrb[0].mxu0
      %v4953 = vpop.f32.mrb[0].mxu0
      %v4954 = vadd.f32 %v4617, %v4953
      %v4955 = vpop.f32.mrb[0].mxu0
      %4956 = vmatprep.mubr.bf16.mxu0 0
      %4957 = vmatmul.mubr.bf16.gmra.mrb[0].mxu0 %v1578
      %v4958 = vpop.f32.mrb[0].mxu0
      %v4959 = vadd.f32 %v4622, %v4958
      %v4960 = vpop.f32.mrb[0].mxu0
      %v4961 = vpop.f32.mrb[0].mxu0
      %v4962 = vadd.f32 %v4625, %v4961
      %v4963 = vpop.f32.mrb[0].mxu0
      %4964 = vmatprep.mubr.bf16.mxu0 0
      %4965 = vmatmul.mubr.bf16.gmra.mrb[0].mxu0 %v1579
      %v4966 = vpop.f32.mrb[0].mxu0
      %v4967 = vadd.f32 %v4630, %v4966
      %v4968 = vpop.f32.mrb[0].mxu0
      %v4969 = vpop.f32.mrb[0].mxu0
      %v4970 = vadd.f32 %v4633, %v4969
      %v4971 = vpop.f32.mrb[0].mxu0
      %4972 = vmatprep.mubr.bf16.mxu0 0
      %4973 = vmatmul.mubr.bf16.gmra.mrb[0].mxu0 %v1580
      %v4974 = vpop.f32.mrb[0].mxu0
      %v4975 = vadd.f32 %v4638, %v4974
      %v4976 = vpop.f32.mrb[0].mxu0
      %v4977 = vpop.f32.mrb[0].mxu0
      %v4978 = vadd.f32 %v4641, %v4977
      %v4979 = vpop.f32.mrb[0].mxu0
      %4980 = vmatprep.mubr.bf16.mxu0 0
      %4981 = vmatmul.mubr.bf16.gmra.mrb[0].mxu0 %v1581
      %v4982 = vpop.f32.mrb[0].mxu0
      %v4983 = vadd.f32 %v4646, %v4982
      %v4984 = vpop.f32.mrb[0].mxu0
      %v4985 = vpop.f32.mrb[0].mxu0
      %v4986 = vadd.f32 %v4649, %v4985
      %v4987 = vpop.f32.mrb[0].mxu0
      %4988 = vmatprep.mubr.bf16.mxu0 0
      %4989 = vmatmul.mubr.bf16.gmra.mrb[0].mxu0 %v1582
      %v4990 = vpop.f32.mrb[0].mxu0
      %v4991 = vadd.f32 %v4654, %v4990
      %v4992 = vpop.f32.mrb[0].mxu0
      %v4993 = vpop.f32.mrb[0].mxu0
      %v4994 = vadd.f32 %v4657, %v4993
      %v4995 = vpop.f32.mrb[0].mxu0
      %4996 = vmatprep.mubr.bf16.mxu0 0
      %4997 = vmatmul.mubr.bf16.gmra.mrb[0].mxu0 %v1583
      %v4998 = vpop.f32.mrb[0].mxu0
      %v4999 = vadd.f32 %v4662, %v4998
      %v5000 = vpop.f32.mrb[0].mxu0
      %v5001 = vpop.f32.mrb[0].mxu0
      %v5002 = vadd.f32 %v4665, %v5001
      %v5003 = vpop.f32.mrb[0].mxu0
      %5004 = vdwg.mxu0
      %s5005 = scalar_lea.vmem %s1, 512
      %v5006 = vld [vmem:[%s5005] sm:$0xf]
      %v5007 = vld [vmem:[%s5005 + $0x4] sm:$0xf]
      %v5008 = vld [vmem:[%s5005 + $0x8] sm:$0xf]
      %v5009 = vld [vmem:[%s5005 + $0xc] sm:$0xf]
      %v5010 = vld [vmem:[%s5005 + $0x10] sm:$0xf]
      %v5011 = vld [vmem:[%s5005 + $0x14] sm:$0xf]
      %v5012 = vld [vmem:[%s5005 + $0x18] sm:$0xf]
      %v5013 = vld [vmem:[%s5005 + $0x1c] sm:$0xf]
      %v5014 = vld [vmem:[%s5005 + $0x20] sm:$0xf]
      %v5015 = vld [vmem:[%s5005 + $0x24] sm:$0xf]
      %v5016 = vld [vmem:[%s5005 + $0x28] sm:$0xf]
      %v5017 = vld [vmem:[%s5005 + $0x2c] sm:$0xf]
      %v5018 = vld [vmem:[%s5005 + $0x30] sm:$0xf]
      %v5019 = vld [vmem:[%s5005 + $0x34] sm:$0xf]
      %v5020 = vld [vmem:[%s5005 + $0x38] sm:$0xf]
      %v5021 = vld [vmem:[%s5005 + $0x3c] sm:$0xf]
      %v5038 = vunpack.c.l.b16 %v5006
      %v5039 = vunpack.c.l.b16 %v5007
      %v5040 = vunpack.c.l.b16 %v5008
      %v5041 = vunpack.c.l.b16 %v5009
      %v5042 = vunpack.c.l.b16 %v5010
      %v5043 = vunpack.c.l.b16 %v5011
      %v5044 = vunpack.c.l.b16 %v5012
      %v5045 = vunpack.c.l.b16 %v5013
      %v5046 = vunpack.c.l.b16 %v5014
      %v5047 = vunpack.c.l.b16 %v5015
      %v5048 = vunpack.c.l.b16 %v5016
      %v5049 = vunpack.c.l.b16 %v5017
      %v5050 = vunpack.c.l.b16 %v5018
      %v5051 = vunpack.c.l.b16 %v5019
      %v5052 = vunpack.c.l.b16 %v5020
      %v5053 = vunpack.c.l.b16 %v5021
      %v5054 = vpack.c.b16 %v5039, %v5038
      %v5055 = vpack.c.b16 %v5041, %v5040
      %v5056 = vpack.c.b16 %v5043, %v5042
      %v5057 = vpack.c.b16 %v5045, %v5044
      %v5058 = vpack.c.b16 %v5047, %v5046
      %v5059 = vpack.c.b16 %v5049, %v5048
      %v5060 = vpack.c.b16 %v5051, %v5050
      %v5061 = vpack.c.b16 %v5053, %v5052
      %5070 = vmatprep.subr.bf16.mxu0 0
      %5071 = vmatpush1.bf16.msra.mxu0 %v5054
      %5072 = vmatprep.subr.bf16.mxu0 0
      %5073 = vmatpush1.bf16.msra.mxu0 %v5055
      %5074 = vmatprep.subr.bf16.mxu0 0
      %5075 = vmatpush1.bf16.msra.mxu0 %v5056
      %5076 = vmatprep.subr.bf16.mxu0 0
      %5077 = vmatpush1.bf16.msra.mxu0 %v5057
      %5078 = vmatprep.subr.bf16.mxu0 0
      %5079 = vmatpush1.bf16.msra.mxu0 %v5058
      %5080 = vmatprep.subr.bf16.mxu0 0
      %5081 = vmatpush1.bf16.msra.mxu0 %v5059
      %5082 = vmatprep.subr.bf16.mxu0 0
      %5083 = vmatpush1.bf16.msra.mxu0 %v5060
      %5084 = vmatprep.subr.bf16.mxu0 0
      %5085 = vmatpush1.bf16.msra.mxu0 %v5061
      %5086 = vmatprep.subr.bf16.mxu0 0
      %5087 = vmatpush1.bf16.msra.mxu0 0
      %5088 = vmatprep.subr.bf16.mxu0 0
      %5089 = vmatpush1.bf16.msra.mxu0 0
      %5090 = vmatprep.subr.bf16.mxu0 0
      %5091 = vmatpush1.bf16.msra.mxu0 0
      %5092 = vmatprep.subr.bf16.mxu0 0
      %5093 = vmatpush1.bf16.msra.mxu0 0
      %5094 = vmatprep.subr.bf16.mxu0 0
      %5095 = vmatpush1.bf16.msra.mxu0 0
      %5096 = vmatprep.subr.bf16.mxu0 0
      %5097 = vmatpush1.bf16.msra.mxu0 0
      %5098 = vmatprep.subr.bf16.mxu0 0
      %5099 = vmatpush1.bf16.msra.mxu0 0
      %5100 = vmatprep.subr.bf16.mxu0 0
      %5101 = vmatpush1.bf16.msra.mxu0 0
      %5102 = vmatprep.mubr.bf16.mxu0 0
      %5103 = vmatmul.mubr.bf16.gmra.mrb[0].mxu0 %v2513
      %v5104 = vpop.f32.mrb[0].mxu0
      %v5105 = vadd.f32 0.0, %v5104
      %v5106 = vpop.f32.mrb[0].mxu0
      %v5107 = vpop.f32.mrb[0].mxu0
      %v5108 = vadd.f32 0.0, %v5107
      %v5109 = vpop.f32.mrb[0].mxu0
      %5110 = vmatprep.mubr.bf16.mxu0 0
      %5111 = vmatmul.mubr.bf16.gmra.mrb[0].mxu0 %v2514
      %v5112 = vpop.f32.mrb[0].mxu0
      %v5113 = vadd.f32 0.0, %v5112
      %v5114 = vpop.f32.mrb[0].mxu0
      %v5115 = vpop.f32.mrb[0].mxu0
      %v5116 = vadd.f32 0.0, %v5115
      %v5117 = vpop.f32.mrb[0].mxu0
      %5118 = vmatprep.mubr.bf16.mxu0 0
      %5119 = vmatmul.mubr.bf16.gmra.mrb[0].mxu0 %v2515
      %v5120 = vpop.f32.mrb[0].mxu0
      %v5121 = vadd.f32 0.0, %v5120
      %v5122 = vpop.f32.mrb[0].mxu0
      %v5123 = vpop.f32.mrb[0].mxu0
      %v5124 = vadd.f32 0.0, %v5123
      %v5125 = vpop.f32.mrb[0].mxu0
      %5126 = vmatprep.mubr.bf16.mxu0 0
      %5127 = vmatmul.mubr.bf16.gmra.mrb[0].mxu0 %v2516
      %v5128 = vpop.f32.mrb[0].mxu0
      %v5129 = vadd.f32 0.0, %v5128
      %v5130 = vpop.f32.mrb[0].mxu0
      %v5131 = vpop.f32.mrb[0].mxu0
      %v5132 = vadd.f32 0.0, %v5131
      %v5133 = vpop.f32.mrb[0].mxu0
      %5134 = vmatprep.mubr.bf16.mxu0 0
      %5135 = vmatmul.mubr.bf16.gmra.mrb[0].mxu0 %v2517
      %v5136 = vpop.f32.mrb[0].mxu0
      %v5137 = vadd.f32 0.0, %v5136
      %v5138 = vpop.f32.mrb[0].mxu0
      %v5139 = vpop.f32.mrb[0].mxu0
      %v5140 = vadd.f32 0.0, %v5139
      %v5141 = vpop.f32.mrb[0].mxu0
      %5142 = vmatprep.mubr.bf16.mxu0 0
      %5143 = vmatmul.mubr.bf16.gmra.mrb[0].mxu0 %v2518
      %v5144 = vpop.f32.mrb[0].mxu0
      %v5145 = vadd.f32 0.0, %v5144
      %v5146 = vpop.f32.mrb[0].mxu0
      %v5147 = vpop.f32.mrb[0].mxu0
      %v5148 = vadd.f32 0.0, %v5147
      %v5149 = vpop.f32.mrb[0].mxu0
      %5150 = vmatprep.mubr.bf16.mxu0 0
      %5151 = vmatmul.mubr.bf16.gmra.mrb[0].mxu0 %v2519
      %v5152 = vpop.f32.mrb[0].mxu0
      %v5153 = vadd.f32 0.0, %v5152
      %v5154 = vpop.f32.mrb[0].mxu0
      %v5155 = vpop.f32.mrb[0].mxu0
      %v5156 = vadd.f32 0.0, %v5155
      %v5157 = vpop.f32.mrb[0].mxu0
      %5158 = vmatprep.mubr.bf16.mxu0 0
      %5159 = vmatmul.mubr.bf16.gmra.mrb[0].mxu0 %v2520
      %v5160 = vpop.f32.mrb[0].mxu0
      %v5161 = vadd.f32 0.0, %v5160
      %v5162 = vpop.f32.mrb[0].mxu0
      %v5163 = vpop.f32.mrb[0].mxu0
      %v5164 = vadd.f32 0.0, %v5163
      %v5165 = vpop.f32.mrb[0].mxu0
      %5166 = vmatprep.mubr.bf16.mxu0 0
      %5167 = vmatmul.mubr.bf16.gmra.mrb[0].mxu0 %v2521
      %v5168 = vpop.f32.mrb[0].mxu0
      %v5169 = vadd.f32 0.0, %v5168
      %v5170 = vpop.f32.mrb[0].mxu0
      %v5171 = vpop.f32.mrb[0].mxu0
      %v5172 = vadd.f32 0.0, %v5171
      %v5173 = vpop.f32.mrb[0].mxu0
      %5174 = vmatprep.mubr.bf16.mxu0 0
      %5175 = vmatmul.mubr.bf16.gmra.mrb[0].mxu0 %v2522
      %v5176 = vpop.f32.mrb[0].mxu0
      %v5177 = vadd.f32 0.0, %v5176
      %v5178 = vpop.f32.mrb[0].mxu0
      %v5179 = vpop.f32.mrb[0].mxu0
      %v5180 = vadd.f32 0.0, %v5179
      %v5181 = vpop.f32.mrb[0].mxu0
      %5182 = vmatprep.mubr.bf16.mxu0 0
      %5183 = vmatmul.mubr.bf16.gmra.mrb[0].mxu0 %v2523
      %v5184 = vpop.f32.mrb[0].mxu0
      %v5185 = vadd.f32 0.0, %v5184
      %v5186 = vpop.f32.mrb[0].mxu0
      %v5187 = vpop.f32.mrb[0].mxu0
      %v5188 = vadd.f32 0.0, %v5187
      %v5189 = vpop.f32.mrb[0].mxu0
      %5190 = vmatprep.mubr.bf16.mxu0 0
      %5191 = vmatmul.mubr.bf16.gmra.mrb[0].mxu0 %v2524
      %v5192 = vpop.f32.mrb[0].mxu0
      %v5193 = vadd.f32 0.0, %v5192
      %v5194 = vpop.f32.mrb[0].mxu0
      %v5195 = vpop.f32.mrb[0].mxu0
      %v5196 = vadd.f32 0.0, %v5195
      %v5197 = vpop.f32.mrb[0].mxu0
      %5198 = vmatprep.mubr.bf16.mxu0 0
      %5199 = vmatmul.mubr.bf16.gmra.mrb[0].mxu0 %v2525
      %v5200 = vpop.f32.mrb[0].mxu0
      %v5201 = vadd.f32 0.0, %v5200
      %v5202 = vpop.f32.mrb[0].mxu0
      %v5203 = vpop.f32.mrb[0].mxu0
      %v5204 = vadd.f32 0.0, %v5203
      %v5205 = vpop.f32.mrb[0].mxu0
      %5206 = vmatprep.mubr.bf16.mxu0 0
      %5207 = vmatmul.mubr.bf16.gmra.mrb[0].mxu0 %v2526
      %v5208 = vpop.f32.mrb[0].mxu0
      %v5209 = vadd.f32 0.0, %v5208
      %v5210 = vpop.f32.mrb[0].mxu0
      %v5211 = vpop.f32.mrb[0].mxu0
      %v5212 = vadd.f32 0.0, %v5211
      %v5213 = vpop.f32.mrb[0].mxu0
      %5214 = vmatprep.mubr.bf16.mxu0 0
      %5215 = vmatmul.mubr.bf16.gmra.mrb[0].mxu0 %v2527
      %v5216 = vpop.f32.mrb[0].mxu0
      %v5217 = vadd.f32 0.0, %v5216
      %v5218 = vpop.f32.mrb[0].mxu0
      %v5219 = vpop.f32.mrb[0].mxu0
      %v5220 = vadd.f32 0.0, %v5219
      %v5221 = vpop.f32.mrb[0].mxu0
      %5222 = vmatprep.mubr.bf16.mxu0 0
      %5223 = vmatmul.mubr.bf16.gmra.mrb[0].mxu0 %v2528
      %v5224 = vpop.f32.mrb[0].mxu0
      %v5225 = vadd.f32 0.0, %v5224
      %v5226 = vpop.f32.mrb[0].mxu0
      %v5227 = vpop.f32.mrb[0].mxu0
      %v5228 = vadd.f32 0.0, %v5227
      %v5229 = vpop.f32.mrb[0].mxu0
      %5230 = vmatprep.mubr.bf16.mxu0 0
      %5231 = vmatmul.mubr.bf16.gmra.mrb[0].mxu0 %v2529
      %v5232 = vpop.f32.mrb[0].mxu0
      %v5233 = vadd.f32 0.0, %v5232
      %v5234 = vpop.f32.mrb[0].mxu0
      %v5235 = vpop.f32.mrb[0].mxu0
      %v5236 = vadd.f32 0.0, %v5235
      %v5237 = vpop.f32.mrb[0].mxu0
      %5238 = vmatprep.mubr.bf16.mxu0 0
      %5239 = vmatmul.mubr.bf16.gmra.mrb[0].mxu0 %v2530
      %v5240 = vpop.f32.mrb[0].mxu0
      %v5241 = vadd.f32 0.0, %v5240
      %v5242 = vpop.f32.mrb[0].mxu0
      %v5243 = vpop.f32.mrb[0].mxu0
      %v5244 = vadd.f32 0.0, %v5243
      %v5245 = vpop.f32.mrb[0].mxu0
      %5246 = vmatprep.mubr.bf16.mxu0 0
      %5247 = vmatmul.mubr.bf16.gmra.mrb[0].mxu0 %v2531
      %v5248 = vpop.f32.mrb[0].mxu0
      %v5249 = vadd.f32 0.0, %v5248
      %v5250 = vpop.f32.mrb[0].mxu0
      %v5251 = vpop.f32.mrb[0].mxu0
      %v5252 = vadd.f32 0.0, %v5251
      %v5253 = vpop.f32.mrb[0].mxu0
      %5254 = vmatprep.mubr.bf16.mxu0 0
      %5255 = vmatmul.mubr.bf16.gmra.mrb[0].mxu0 %v2532
      %v5256 = vpop.f32.mrb[0].mxu0
      %v5257 = vadd.f32 0.0, %v5256
      %v5258 = vpop.f32.mrb[0].mxu0
      %v5259 = vpop.f32.mrb[0].mxu0
      %v5260 = vadd.f32 0.0, %v5259
      %v5261 = vpop.f32.mrb[0].mxu0
      %5262 = vmatprep.mubr.bf16.mxu0 0
      %5263 = vmatmul.mubr.bf16.gmra.mrb[0].mxu0 %v2533
      %v5264 = vpop.f32.mrb[0].mxu0
      %v5265 = vadd.f32 0.0, %v5264
      %v5266 = vpop.f32.mrb[0].mxu0
      %v5267 = vpop.f32.mrb[0].mxu0
      %v5268 = vadd.f32 0.0, %v5267
      %v5269 = vpop.f32.mrb[0].mxu0
      %5270 = vmatprep.mubr.bf16.mxu0 0
      %5271 = vmatmul.mubr.bf16.gmra.mrb[0].mxu0 %v2534
      %v5272 = vpop.f32.mrb[0].mxu0
      %v5273 = vadd.f32 0.0, %v5272
      %v5274 = vpop.f32.mrb[0].mxu0
      %v5275 = vpop.f32.mrb[0].mxu0
      %v5276 = vadd.f32 0.0, %v5275
      %v5277 = vpop.f32.mrb[0].mxu0
      %5278 = vmatprep.mubr.bf16.mxu0 0
      %5279 = vmatmul.mubr.bf16.gmra.mrb[0].mxu0 %v2535
      %v5280 = vpop.f32.mrb[0].mxu0
      %v5281 = vadd.f32 0.0, %v5280
      %v5282 = vpop.f32.mrb[0].mxu0
      %v5283 = vpop.f32.mrb[0].mxu0
      %v5284 = vadd.f32 0.0, %v5283
      %v5285 = vpop.f32.mrb[0].mxu0
      %5286 = vmatprep.mubr.bf16.mxu0 0
      %5287 = vmatmul.mubr.bf16.gmra.mrb[0].mxu0 %v2536
      %v5288 = vpop.f32.mrb[0].mxu0
      %v5289 = vadd.f32 0.0, %v5288
      %v5290 = vpop.f32.mrb[0].mxu0
      %v5291 = vpop.f32.mrb[0].mxu0
      %v5292 = vadd.f32 0.0, %v5291
      %v5293 = vpop.f32.mrb[0].mxu0
      %5294 = vmatprep.mubr.bf16.mxu0 0
      %5295 = vmatmul.mubr.bf16.gmra.mrb[0].mxu0 %v2537
      %v5296 = vpop.f32.mrb[0].mxu0
      %v5297 = vadd.f32 0.0, %v5296
      %v5298 = vpop.f32.mrb[0].mxu0
      %v5299 = vpop.f32.mrb[0].mxu0
      %v5300 = vadd.f32 0.0, %v5299
      %v5301 = vpop.f32.mrb[0].mxu0
      %5302 = vmatprep.mubr.bf16.mxu0 0
      %5303 = vmatmul.mubr.bf16.gmra.mrb[0].mxu0 %v2538
      %v5304 = vpop.f32.mrb[0].mxu0
      %v5305 = vadd.f32 0.0, %v5304
      %v5306 = vpop.f32.mrb[0].mxu0
      %v5307 = vpop.f32.mrb[0].mxu0
      %v5308 = vadd.f32 0.0, %v5307
      %v5309 = vpop.f32.mrb[0].mxu0
      %5310 = vmatprep.mubr.bf16.mxu0 0
      %5311 = vmatmul.mubr.bf16.gmra.mrb[0].mxu0 %v2539
      %v5312 = vpop.f32.mrb[0].mxu0
      %v5313 = vadd.f32 0.0, %v5312
      %v5314 = vpop.f32.mrb[0].mxu0
      %v5315 = vpop.f32.mrb[0].mxu0
      %v5316 = vadd.f32 0.0, %v5315
      %v5317 = vpop.f32.mrb[0].mxu0
      %5318 = vmatprep.mubr.bf16.mxu0 0
      %5319 = vmatmul.mubr.bf16.gmra.mrb[0].mxu0 %v2540
      %v5320 = vpop.f32.mrb[0].mxu0
      %v5321 = vadd.f32 0.0, %v5320
      %v5322 = vpop.f32.mrb[0].mxu0
      %v5323 = vpop.f32.mrb[0].mxu0
      %v5324 = vadd.f32 0.0, %v5323
      %v5325 = vpop.f32.mrb[0].mxu0
      %5326 = vmatprep.mubr.bf16.mxu0 0
      %5327 = vmatmul.mubr.bf16.gmra.mrb[0].mxu0 %v2541
      %v5328 = vpop.f32.mrb[0].mxu0
      %v5329 = vadd.f32 0.0, %v5328
      %v5330 = vpop.f32.mrb[0].mxu0
      %v5331 = vpop.f32.mrb[0].mxu0
      %v5332 = vadd.f32 0.0, %v5331
      %v5333 = vpop.f32.mrb[0].mxu0
      %5334 = vmatprep.mubr.bf16.mxu0 0
      %5335 = vmatmul.mubr.bf16.gmra.mrb[0].mxu0 %v2542
      %v5336 = vpop.f32.mrb[0].mxu0
      %v5337 = vadd.f32 0.0, %v5336
      %v5338 = vpop.f32.mrb[0].mxu0
      %v5339 = vpop.f32.mrb[0].mxu0
      %v5340 = vadd.f32 0.0, %v5339
      %v5341 = vpop.f32.mrb[0].mxu0
      %5342 = vmatprep.mubr.bf16.mxu0 0
      %5343 = vmatmul.mubr.bf16.gmra.mrb[0].mxu0 %v2543
      %v5344 = vpop.f32.mrb[0].mxu0
      %v5345 = vadd.f32 0.0, %v5344
      %v5346 = vpop.f32.mrb[0].mxu0
      %v5347 = vpop.f32.mrb[0].mxu0
      %v5348 = vadd.f32 0.0, %v5347
      %v5349 = vpop.f32.mrb[0].mxu0
      %5350 = vmatprep.mubr.bf16.mxu0 0
      %5351 = vmatmul.mubr.bf16.gmra.mrb[0].mxu0 %v2544
      %v5352 = vpop.f32.mrb[0].mxu0
      %v5353 = vadd.f32 0.0, %v5352
      %v5354 = vpop.f32.mrb[0].mxu0
      %v5355 = vpop.f32.mrb[0].mxu0
      %v5356 = vadd.f32 0.0, %v5355
      %v5357 = vpop.f32.mrb[0].mxu0
      %5358 = vdwg.mxu0
      %v5359 = vadd.f32 %v4751, %v5105
      %v5360 = vadd.f32 %v4754, %v5108
      %v5361 = vadd.f32 %v4759, %v5113
      %v5362 = vadd.f32 %v4762, %v5116
      %v5363 = vadd.f32 %v4767, %v5121
      %v5364 = vadd.f32 %v4770, %v5124
      %v5365 = vadd.f32 %v4775, %v5129
      %v5366 = vadd.f32 %v4778, %v5132
      %v5367 = vadd.f32 %v4783, %v5137
      %v5368 = vadd.f32 %v4786, %v5140
      %v5369 = vadd.f32 %v4791, %v5145
      %v5370 = vadd.f32 %v4794, %v5148
      %v5371 = vadd.f32 %v4799, %v5153
      %v5372 = vadd.f32 %v4802, %v5156
      %v5373 = vadd.f32 %v4807, %v5161
      %v5374 = vadd.f32 %v4810, %v5164
      %v5375 = vadd.f32 %v4815, %v5169
      %v5376 = vadd.f32 %v4818, %v5172
      %v5377 = vadd.f32 %v4823, %v5177
      %v5378 = vadd.f32 %v4826, %v5180
      %v5379 = vadd.f32 %v4831, %v5185
      %v5380 = vadd.f32 %v4834, %v5188
      %v5381 = vadd.f32 %v4839, %v5193
      %v5382 = vadd.f32 %v4842, %v5196
      %v5383 = vadd.f32 %v4847, %v5201
      %v5384 = vadd.f32 %v4850, %v5204
      %v5385 = vadd.f32 %v4855, %v5209
      %v5386 = vadd.f32 %v4858, %v5212
      %v5387 = vadd.f32 %v4863, %v5217
      %v5388 = vadd.f32 %v4866, %v5220
      %v5389 = vadd.f32 %v4871, %v5225
      %v5390 = vadd.f32 %v4874, %v5228
      %v5391 = vadd.f32 %v4879, %v5233
      %v5392 = vadd.f32 %v4882, %v5236
      %v5393 = vadd.f32 %v4887, %v5241
      %v5394 = vadd.f32 %v4890, %v5244
      %v5395 = vadd.f32 %v4895, %v5249
      %v5396 = vadd.f32 %v4898, %v5252
      %v5397 = vadd.f32 %v4903, %v5257
      %v5398 = vadd.f32 %v4906, %v5260
      %v5399 = vadd.f32 %v4911, %v5265
      %v5400 = vadd.f32 %v4914, %v5268
      %v5401 = vadd.f32 %v4919, %v5273
      %v5402 = vadd.f32 %v4922, %v5276
      %v5403 = vadd.f32 %v4927, %v5281
      %v5404 = vadd.f32 %v4930, %v5284
      %v5405 = vadd.f32 %v4935, %v5289
      %v5406 = vadd.f32 %v4938, %v5292
      %v5407 = vadd.f32 %v4943, %v5297
      %v5408 = vadd.f32 %v4946, %v5300
      %v5409 = vadd.f32 %v4951, %v5305
      %v5410 = vadd.f32 %v4954, %v5308
      %v5411 = vadd.f32 %v4959, %v5313
      %v5412 = vadd.f32 %v4962, %v5316
      %v5413 = vadd.f32 %v4967, %v5321
      %v5414 = vadd.f32 %v4970, %v5324
      %v5415 = vadd.f32 %v4975, %v5329
      %v5416 = vadd.f32 %v4978, %v5332
      %v5417 = vadd.f32 %v4983, %v5337
      %v5418 = vadd.f32 %v4986, %v5340
      %v5419 = vadd.f32 %v4991, %v5345
      %v5420 = vadd.f32 %v4994, %v5348
      %v5421 = vadd.f32 %v4999, %v5353
      %v5422 = vadd.f32 %v5002, %v5356
      %v5423 = vrot.slane %v5359, 1
      %v5424 = vrot.slane %v5360, 1
      %v5425 = vrot.slane %v5361, 1
      %v5426 = vrot.slane %v5362, 1
      %v5427 = vrot.slane %v5363, 1
      %v5428 = vrot.slane %v5364, 1
      %v5429 = vrot.slane %v5365, 1
      %v5430 = vrot.slane %v5366, 1
      %v5431 = vrot.slane %v5367, 1
      %v5432 = vrot.slane %v5368, 1
      %v5433 = vrot.slane %v5369, 1
      %v5434 = vrot.slane %v5370, 1
      %v5435 = vrot.slane %v5371, 1
      %v5436 = vrot.slane %v5372, 1
      %v5437 = vrot.slane %v5373, 1
      %v5438 = vrot.slane %v5374, 1
      %v5439 = vrot.slane %v5375, 1
      %v5440 = vrot.slane %v5376, 1
      %v5441 = vrot.slane %v5377, 1
      %v5442 = vrot.slane %v5378, 1
      %v5443 = vrot.slane %v5379, 1
      %v5444 = vrot.slane %v5380, 1
      %v5445 = vrot.slane %v5381, 1
      %v5446 = vrot.slane %v5382, 1
      %v5447 = vrot.slane %v5383, 1
      %v5448 = vrot.slane %v5384, 1
      %v5449 = vrot.slane %v5385, 1
      %v5450 = vrot.slane %v5386, 1
      %v5451 = vrot.slane %v5387, 1
      %v5452 = vrot.slane %v5388, 1
      %v5453 = vrot.slane %v5389, 1
      %v5454 = vrot.slane %v5390, 1
      %v5455 = vrot.slane %v5391, 1
      %v5456 = vrot.slane %v5392, 1
      %v5457 = vrot.slane %v5393, 1
      %v5458 = vrot.slane %v5394, 1
      %v5459 = vrot.slane %v5395, 1
      %v5460 = vrot.slane %v5396, 1
      %v5461 = vrot.slane %v5397, 1
      %v5462 = vrot.slane %v5398, 1
      %v5463 = vrot.slane %v5399, 1
      %v5464 = vrot.slane %v5400, 1
      %v5465 = vrot.slane %v5401, 1
      %v5466 = vrot.slane %v5402, 1
      %v5467 = vrot.slane %v5403, 1
      %v5468 = vrot.slane %v5404, 1
      %v5469 = vrot.slane %v5405, 1
      %v5470 = vrot.slane %v5406, 1
      %v5471 = vrot.slane %v5407, 1
      %v5472 = vrot.slane %v5408, 1
      %v5473 = vrot.slane %v5409, 1
      %v5474 = vrot.slane %v5410, 1
      %v5475 = vrot.slane %v5411, 1
      %v5476 = vrot.slane %v5412, 1
      %v5477 = vrot.slane %v5413, 1
      %v5478 = vrot.slane %v5414, 1
      %v5479 = vrot.slane %v5415, 1
      %v5480 = vrot.slane %v5416, 1
      %v5481 = vrot.slane %v5417, 1
      %v5482 = vrot.slane %v5418, 1
      %v5483 = vrot.slane %v5419, 1
      %v5484 = vrot.slane %v5420, 1
      %v5485 = vrot.slane %v5421, 1
      %v5486 = vrot.slane %v5422, 1
      %vm5487 = vcmp.lt.s32.totalorder %v173, 7
      %v5488 = vsel %vm5487, %v5485, %v5486
      %v5489 = vsel %vm5487, %v5484, %v5485
      %v5490 = vsel %vm5487, %v5483, %v5484
      %v5491 = vsel %vm5487, %v5482, %v5483
      %v5492 = vsel %vm5487, %v5481, %v5482
      %v5493 = vsel %vm5487, %v5480, %v5481
      %v5494 = vsel %vm5487, %v5479, %v5480
      %v5495 = vsel %vm5487, %v5478, %v5479
      %v5496 = vsel %vm5487, %v5477, %v5478
      %v5497 = vsel %vm5487, %v5476, %v5477
      %v5498 = vsel %vm5487, %v5475, %v5476
      %v5499 = vsel %vm5487, %v5474, %v5475
      %v5500 = vsel %vm5487, %v5473, %v5474
      %v5501 = vsel %vm5487, %v5472, %v5473
      %v5502 = vsel %vm5487, %v5471, %v5472
      %v5503 = vsel %vm5487, %v5470, %v5471
      %v5504 = vsel %vm5487, %v5469, %v5470
      %v5505 = vsel %vm5487, %v5468, %v5469
      %v5506 = vsel %vm5487, %v5467, %v5468
      %v5507 = vsel %vm5487, %v5466, %v5467
      %v5508 = vsel %vm5487, %v5465, %v5466
      %v5509 = vsel %vm5487, %v5464, %v5465
      %v5510 = vsel %vm5487, %v5463, %v5464
      %v5511 = vsel %vm5487, %v5462, %v5463
      %v5512 = vsel %vm5487, %v5461, %v5462
      %v5513 = vsel %vm5487, %v5460, %v5461
      %v5514 = vsel %vm5487, %v5459, %v5460
      %v5515 = vsel %vm5487, %v5458, %v5459
      %v5516 = vsel %vm5487, %v5457, %v5458
      %v5517 = vsel %vm5487, %v5456, %v5457
      %v5518 = vsel %vm5487, %v5455, %v5456
      %v5519 = vsel %vm5487, %v5454, %v5455
      %v5520 = vsel %vm5487, %v5453, %v5454
      %v5521 = vsel %vm5487, %v5452, %v5453
      %v5522 = vsel %vm5487, %v5451, %v5452
      %v5523 = vsel %vm5487, %v5450, %v5451
      %v5524 = vsel %vm5487, %v5449, %v5450
      %v5525 = vsel %vm5487, %v5448, %v5449
      %v5526 = vsel %vm5487, %v5447, %v5448
      %v5527 = vsel %vm5487, %v5446, %v5447
      %v5528 = vsel %vm5487, %v5445, %v5446
      %v5529 = vsel %vm5487, %v5444, %v5445
      %v5530 = vsel %vm5487, %v5443, %v5444
      %v5531 = vsel %vm5487, %v5442, %v5443
      %v5532 = vsel %vm5487, %v5441, %v5442
      %v5533 = vsel %vm5487, %v5440, %v5441
      %v5534 = vsel %vm5487, %v5439, %v5440
      %v5535 = vsel %vm5487, %v5438, %v5439
      %v5536 = vsel %vm5487, %v5437, %v5438
      %v5537 = vsel %vm5487, %v5436, %v5437
      %v5538 = vsel %vm5487, %v5435, %v5436
      %v5539 = vsel %vm5487, %v5434, %v5435
      %v5540 = vsel %vm5487, %v5433, %v5434
      %v5541 = vsel %vm5487, %v5432, %v5433
      %v5542 = vsel %vm5487, %v5431, %v5432
      %v5543 = vsel %vm5487, %v5430, %v5431
      %v5544 = vsel %vm5487, %v5429, %v5430
      %v5545 = vsel %vm5487, %v5428, %v5429
      %v5546 = vsel %vm5487, %v5427, %v5428
      %v5547 = vsel %vm5487, %v5426, %v5427
      %v5548 = vsel %vm5487, %v5425, %v5426
      %v5549 = vsel %vm5487, %v5424, %v5425
      %v5550 = vsel %vm5487, %v5423, %v5424
      %v5551 = vsel %vm5487, %v5486, %v5423
      %v5552 = vadd.f32 %v4233, %v5550
      %v5553 = vadd.f32 %v4234, %v5549
      %v5554 = vadd.f32 %v4235, %v5548
      %v5555 = vadd.f32 %v4236, %v5547
      %v5556 = vadd.f32 %v4237, %v5546
      %v5557 = vadd.f32 %v4238, %v5545
      %v5558 = vadd.f32 %v4239, %v5544
      %v5559 = vadd.f32 %v4240, %v5543
      %v5560 = vadd.f32 %v4241, %v5542
      %v5561 = vadd.f32 %v4242, %v5541
      %v5562 = vadd.f32 %v4243, %v5540
      %v5563 = vadd.f32 %v4244, %v5539
      %v5564 = vadd.f32 %v4245, %v5538
      %v5565 = vadd.f32 %v4246, %v5537
      %v5566 = vadd.f32 %v4247, %v5536
      %v5567 = vadd.f32 %v4248, %v5535
      %v5568 = vadd.f32 %v4249, %v5534
      %v5569 = vadd.f32 %v4250, %v5533
      %v5570 = vadd.f32 %v4251, %v5532
      %v5571 = vadd.f32 %v4252, %v5531
      %v5572 = vadd.f32 %v4253, %v5530
      %v5573 = vadd.f32 %v4254, %v5529
      %v5574 = vadd.f32 %v4255, %v5528
      %v5575 = vadd.f32 %v4256, %v5527
      %v5576 = vadd.f32 %v4257, %v5526
      %v5577 = vadd.f32 %v4258, %v5525
      %v5578 = vadd.f32 %v4259, %v5524
      %v5579 = vadd.f32 %v4260, %v5523
      %v5580 = vadd.f32 %v4261, %v5522
      %v5581 = vadd.f32 %v4262, %v5521
      %v5582 = vadd.f32 %v4263, %v5520
      %v5583 = vadd.f32 %v4264, %v5519
      %v5584 = vadd.f32 %v4265, %v5518
      %v5585 = vadd.f32 %v4266, %v5517
      %v5586 = vadd.f32 %v4267, %v5516
      %v5587 = vadd.f32 %v4268, %v5515
      %v5588 = vadd.f32 %v4269, %v5514
      %v5589 = vadd.f32 %v4270, %v5513
      %v5590 = vadd.f32 %v4271, %v5512
      %v5591 = vadd.f32 %v4272, %v5511
      %v5592 = vadd.f32 %v4273, %v5510
      %v5593 = vadd.f32 %v4274, %v5509
      %v5594 = vadd.f32 %v4275, %v5508
      %v5595 = vadd.f32 %v4276, %v5507
      %v5596 = vadd.f32 %v4277, %v5506
      %v5597 = vadd.f32 %v4278, %v5505
      %v5598 = vadd.f32 %v4279, %v5504
      %v5599 = vadd.f32 %v4280, %v5503
      %v5600 = vadd.f32 %v4281, %v5502
      %v5601 = vadd.f32 %v4282, %v5501
      %v5602 = vadd.f32 %v4283, %v5500
      %v5603 = vadd.f32 %v4284, %v5499
      %v5604 = vadd.f32 %v4285, %v5498
      %v5605 = vadd.f32 %v4286, %v5497
      %v5606 = vadd.f32 %v4287, %v5496
      %v5607 = vadd.f32 %v4288, %v5495
      %v5608 = vadd.f32 %v4289, %v5494
      %v5609 = vadd.f32 %v4290, %v5493
      %v5610 = vadd.f32 %v4291, %v5492
      %v5611 = vadd.f32 %v4292, %v5491
      %v5612 = vadd.f32 %v4293, %v5490
      %v5613 = vadd.f32 %v4294, %v5489
      %v5614 = vadd.f32 %v4295, %v5488
      %v5615 = vadd.f32 %v4296, %v5551
      %v5616 = vmul.f32 %v5552, %v1261
      %v5617 = vmul.f32 %v5553, %v1262
      %v5618 = vmul.f32 %v5554, %v1263
      %v5619 = vmul.f32 %v5555, %v1264
      %v5620 = vmul.f32 %v5556, %v1265
      %v5621 = vmul.f32 %v5557, %v1266
      %v5622 = vmul.f32 %v5558, %v1267
      %v5623 = vmul.f32 %v5559, %v1268
      %v5624 = vmul.f32 %v5560, %v1269
      %v5625 = vmul.f32 %v5561, %v1270
      %v5626 = vmul.f32 %v5562, %v1271
      %v5627 = vmul.f32 %v5563, %v1272
      %v5628 = vmul.f32 %v5564, %v1273
      %v5629 = vmul.f32 %v5565, %v1274
      %v5630 = vmul.f32 %v5566, %v1275
      %v5631 = vmul.f32 %v5567, %v1276
      %v5632 = vmul.f32 %v5568, %v1277
      %v5633 = vmul.f32 %v5569, %v1278
      %v5634 = vmul.f32 %v5570, %v1279
      %v5635 = vmul.f32 %v5571, %v1280
      %v5636 = vmul.f32 %v5572, %v1281
      %v5637 = vmul.f32 %v5573, %v1282
      %v5638 = vmul.f32 %v5574, %v1283
      %v5639 = vmul.f32 %v5575, %v1284
      %v5640 = vmul.f32 %v5576, %v1285
      %v5641 = vmul.f32 %v5577, %v1286
      %v5642 = vmul.f32 %v5578, %v1287
      %v5643 = vmul.f32 %v5579, %v1288
      %v5644 = vmul.f32 %v5580, %v1289
      %v5645 = vmul.f32 %v5581, %v1290
      %v5646 = vmul.f32 %v5582, %v1291
      %v5647 = vmul.f32 %v5583, %v1292
      %v5648 = vmul.f32 %v5584, %v1293
      %v5649 = vmul.f32 %v5585, %v1294
      %v5650 = vmul.f32 %v5586, %v1295
      %v5651 = vmul.f32 %v5587, %v1296
      %v5652 = vmul.f32 %v5588, %v1297
      %v5653 = vmul.f32 %v5589, %v1298
      %v5654 = vmul.f32 %v5590, %v1299
      %v5655 = vmul.f32 %v5591, %v1300
      %v5656 = vmul.f32 %v5592, %v1301
      %v5657 = vmul.f32 %v5593, %v1302
      %v5658 = vmul.f32 %v5594, %v1303
      %v5659 = vmul.f32 %v5595, %v1304
      %v5660 = vmul.f32 %v5596, %v1305
      %v5661 = vmul.f32 %v5597, %v1306
      %v5662 = vmul.f32 %v5598, %v1307
      %v5663 = vmul.f32 %v5599, %v1308
      %v5664 = vmul.f32 %v5600, %v1309
      %v5665 = vmul.f32 %v5601, %v1310
      %v5666 = vmul.f32 %v5602, %v1311
      %v5667 = vmul.f32 %v5603, %v1312
      %v5668 = vmul.f32 %v5604, %v1313
      %v5669 = vmul.f32 %v5605, %v1314
      %v5670 = vmul.f32 %v5606, %v1315
      %v5671 = vmul.f32 %v5607, %v1316
      %v5672 = vmul.f32 %v5608, %v1317
      %v5673 = vmul.f32 %v5609, %v1318
      %v5674 = vmul.f32 %v5610, %v1319
      %v5675 = vmul.f32 %v5611, %v1320
      %v5676 = vmul.f32 %v5612, %v1321
      %v5677 = vmul.f32 %v5613, %v1322
      %v5678 = vmul.f32 %v5614, %v1323
      %v5679 = vmul.f32 %v5615, %v1324
      %v5680 = vadd.f32 %v5616, %v5617
      %v5681 = vadd.f32 %v5680, %v5618
      %v5682 = vadd.f32 %v5681, %v5619
      %v5683 = vadd.f32 %v5682, %v5620
      %v5684 = vadd.f32 %v5683, %v5621
      %v5685 = vadd.f32 %v5684, %v5622
      %v5686 = vadd.f32 %v5685, %v5623
      %v5687 = vadd.f32 %v5686, %v5624
      %v5688 = vadd.f32 %v5687, %v5625
      %v5689 = vadd.f32 %v5688, %v5626
      %v5690 = vadd.f32 %v5689, %v5627
      %v5691 = vadd.f32 %v5690, %v5628
      %v5692 = vadd.f32 %v5691, %v5629
      %v5693 = vadd.f32 %v5692, %v5630
      %v5694 = vadd.f32 %v5693, %v5631
      %v5695 = vadd.f32 %v5694, %v5632
      %v5696 = vadd.f32 %v5695, %v5633
      %v5697 = vadd.f32 %v5696, %v5634
      %v5698 = vadd.f32 %v5697, %v5635
      %v5699 = vadd.f32 %v5698, %v5636
      %v5700 = vadd.f32 %v5699, %v5637
      %v5701 = vadd.f32 %v5700, %v5638
      %v5702 = vadd.f32 %v5701, %v5639
      %v5703 = vadd.f32 %v5702, %v5640
      %v5704 = vadd.f32 %v5703, %v5641
      %v5705 = vadd.f32 %v5704, %v5642
      %v5706 = vadd.f32 %v5705, %v5643
      %v5707 = vadd.f32 %v5706, %v5644
      %v5708 = vadd.f32 %v5707, %v5645
      %v5709 = vadd.f32 %v5708, %v5646
      %v5710 = vadd.f32 %v5709, %v5647
      %v5711 = vadd.f32 %v5710, %v5648
      %v5712 = vadd.f32 %v5711, %v5649
      %v5713 = vadd.f32 %v5712, %v5650
      %v5714 = vadd.f32 %v5713, %v5651
      %v5715 = vadd.f32 %v5714, %v5652
      %v5716 = vadd.f32 %v5715, %v5653
      %v5717 = vadd.f32 %v5716, %v5654
      %v5718 = vadd.f32 %v5717, %v5655
      %v5719 = vadd.f32 %v5718, %v5656
      %v5720 = vadd.f32 %v5719, %v5657
      %v5721 = vadd.f32 %v5720, %v5658
      %v5722 = vadd.f32 %v5721, %v5659
      %v5723 = vadd.f32 %v5722, %v5660
      %v5724 = vadd.f32 %v5723, %v5661
      %v5725 = vadd.f32 %v5724, %v5662
      %v5726 = vadd.f32 %v5725, %v5663
      %v5727 = vadd.f32 %v5726, %v5664
      %v5728 = vadd.f32 %v5727, %v5665
      %v5729 = vadd.f32 %v5728, %v5666
      %v5730 = vadd.f32 %v5729, %v5667
      %v5731 = vadd.f32 %v5730, %v5668
      %v5732 = vadd.f32 %v5731, %v5669
      %v5733 = vadd.f32 %v5732, %v5670
      %v5734 = vadd.f32 %v5733, %v5671
      %v5735 = vadd.f32 %v5734, %v5672
      %v5736 = vadd.f32 %v5735, %v5673
      %v5737 = vadd.f32 %v5736, %v5674
      %v5738 = vadd.f32 %v5737, %v5675
      %v5739 = vadd.f32 %v5738, %v5676
      %v5740 = vadd.f32 %v5739, %v5677
      %v5741 = vadd.f32 %v5740, %v5678
      %v5742 = vadd.f32 %v5741, %v5679
      %v5743 = vrot.slane %v5742, 4
      %v5744 = vadd.f32 %v5742, %v5743
      %v5745 = vrot.slane %v5744, 2
      %v5746 = vadd.f32 %v5744, %v5745
      %v5747 = vrot.slane %v5746, 1
      %v5748 = vadd.f32 %v5746, %v5747
      %v5749 = vmul.f32 %v5748, 0.00390625
      %v5750 = vsub.f32 %v5552, %v5749
      %v5751 = vsub.f32 %v5553, %v5749
      %v5752 = vsub.f32 %v5554, %v5749
      %v5753 = vsub.f32 %v5555, %v5749
      %v5754 = vsub.f32 %v5556, %v5749
      %v5755 = vsub.f32 %v5557, %v5749
      %v5756 = vsub.f32 %v5558, %v5749
      %v5757 = vsub.f32 %v5559, %v5749
      %v5758 = vsub.f32 %v5560, %v5749
      %v5759 = vsub.f32 %v5561, %v5749
      %v5760 = vsub.f32 %v5562, %v5749
      %v5761 = vsub.f32 %v5563, %v5749
      %v5762 = vsub.f32 %v5564, %v5749
      %v5763 = vsub.f32 %v5565, %v5749
      %v5764 = vsub.f32 %v5566, %v5749
      %v5765 = vsub.f32 %v5567, %v5749
      %v5766 = vsub.f32 %v5568, %v5749
      %v5767 = vsub.f32 %v5569, %v5749
      %v5768 = vsub.f32 %v5570, %v5749
      %v5769 = vsub.f32 %v5571, %v5749
      %v5770 = vsub.f32 %v5572, %v5749
      %v5771 = vsub.f32 %v5573, %v5749
      %v5772 = vsub.f32 %v5574, %v5749
      %v5773 = vsub.f32 %v5575, %v5749
      %v5774 = vsub.f32 %v5576, %v5749
      %v5775 = vsub.f32 %v5577, %v5749
      %v5776 = vsub.f32 %v5578, %v5749
      %v5777 = vsub.f32 %v5579, %v5749
      %v5778 = vsub.f32 %v5580, %v5749
      %v5779 = vsub.f32 %v5581, %v5749
      %v5780 = vsub.f32 %v5582, %v5749
      %v5781 = vsub.f32 %v5583, %v5749
      %v5782 = vsub.f32 %v5584, %v5749
      %v5783 = vsub.f32 %v5585, %v5749
      %v5784 = vsub.f32 %v5586, %v5749
      %v5785 = vsub.f32 %v5587, %v5749
      %v5786 = vsub.f32 %v5588, %v5749
      %v5787 = vsub.f32 %v5589, %v5749
      %v5788 = vsub.f32 %v5590, %v5749
      %v5789 = vsub.f32 %v5591, %v5749
      %v5790 = vsub.f32 %v5592, %v5749
      %v5791 = vsub.f32 %v5593, %v5749
      %v5792 = vsub.f32 %v5594, %v5749
      %v5793 = vsub.f32 %v5595, %v5749
      %v5794 = vsub.f32 %v5596, %v5749
      %v5795 = vsub.f32 %v5597, %v5749
      %v5796 = vsub.f32 %v5598, %v5749
      %v5797 = vsub.f32 %v5599, %v5749
      %v5798 = vsub.f32 %v5600, %v5749
      %v5799 = vsub.f32 %v5601, %v5749
      %v5800 = vsub.f32 %v5602, %v5749
      %v5801 = vsub.f32 %v5603, %v5749
      %v5802 = vsub.f32 %v5604, %v5749
      %v5803 = vsub.f32 %v5605, %v5749
      %v5804 = vsub.f32 %v5606, %v5749
      %v5805 = vsub.f32 %v5607, %v5749
      %v5806 = vsub.f32 %v5608, %v5749
      %v5807 = vsub.f32 %v5609, %v5749
      %v5808 = vsub.f32 %v5610, %v5749
      %v5809 = vsub.f32 %v5611, %v5749
      %v5810 = vsub.f32 %v5612, %v5749
      %v5811 = vsub.f32 %v5613, %v5749
      %v5812 = vsub.f32 %v5614, %v5749
      %v5813 = vsub.f32 %v5615, %v5749
      %v5814 = vmul.f32 %v5750, %v1261
      %v5815 = vmul.f32 %v5751, %v1262
      %v5816 = vmul.f32 %v5752, %v1263
      %v5817 = vmul.f32 %v5753, %v1264
      %v5818 = vmul.f32 %v5754, %v1265
      %v5819 = vmul.f32 %v5755, %v1266
      %v5820 = vmul.f32 %v5756, %v1267
      %v5821 = vmul.f32 %v5757, %v1268
      %v5822 = vmul.f32 %v5758, %v1269
      %v5823 = vmul.f32 %v5759, %v1270
      %v5824 = vmul.f32 %v5760, %v1271
      %v5825 = vmul.f32 %v5761, %v1272
      %v5826 = vmul.f32 %v5762, %v1273
      %v5827 = vmul.f32 %v5763, %v1274
      %v5828 = vmul.f32 %v5764, %v1275
      %v5829 = vmul.f32 %v5765, %v1276
      %v5830 = vmul.f32 %v5766, %v1277
      %v5831 = vmul.f32 %v5767, %v1278
      %v5832 = vmul.f32 %v5768, %v1279
      %v5833 = vmul.f32 %v5769, %v1280
      %v5834 = vmul.f32 %v5770, %v1281
      %v5835 = vmul.f32 %v5771, %v1282
      %v5836 = vmul.f32 %v5772, %v1283
      %v5837 = vmul.f32 %v5773, %v1284
      %v5838 = vmul.f32 %v5774, %v1285
      %v5839 = vmul.f32 %v5775, %v1286
      %v5840 = vmul.f32 %v5776, %v1287
      %v5841 = vmul.f32 %v5777, %v1288
      %v5842 = vmul.f32 %v5778, %v1289
      %v5843 = vmul.f32 %v5779, %v1290
      %v5844 = vmul.f32 %v5780, %v1291
      %v5845 = vmul.f32 %v5781, %v1292
      %v5846 = vmul.f32 %v5782, %v1293
      %v5847 = vmul.f32 %v5783, %v1294
      %v5848 = vmul.f32 %v5784, %v1295
      %v5849 = vmul.f32 %v5785, %v1296
      %v5850 = vmul.f32 %v5786, %v1297
      %v5851 = vmul.f32 %v5787, %v1298
      %v5852 = vmul.f32 %v5788, %v1299
      %v5853 = vmul.f32 %v5789, %v1300
      %v5854 = vmul.f32 %v5790, %v1301
      %v5855 = vmul.f32 %v5791, %v1302
      %v5856 = vmul.f32 %v5792, %v1303
      %v5857 = vmul.f32 %v5793, %v1304
      %v5858 = vmul.f32 %v5794, %v1305
      %v5859 = vmul.f32 %v5795, %v1306
      %v5860 = vmul.f32 %v5796, %v1307
      %v5861 = vmul.f32 %v5797, %v1308
      %v5862 = vmul.f32 %v5798, %v1309
      %v5863 = vmul.f32 %v5799, %v1310
      %v5864 = vmul.f32 %v5800, %v1311
      %v5865 = vmul.f32 %v5801, %v1312
      %v5866 = vmul.f32 %v5802, %v1313
      %v5867 = vmul.f32 %v5803, %v1314
      %v5868 = vmul.f32 %v5804, %v1315
      %v5869 = vmul.f32 %v5805, %v1316
      %v5870 = vmul.f32 %v5806, %v1317
      %v5871 = vmul.f32 %v5807, %v1318
      %v5872 = vmul.f32 %v5808, %v1319
      %v5873 = vmul.f32 %v5809, %v1320
      %v5874 = vmul.f32 %v5810, %v1321
      %v5875 = vmul.f32 %v5811, %v1322
      %v5876 = vmul.f32 %v5812, %v1323
      %v5877 = vmul.f32 %v5813, %v1324
      %v5878 = vmul.f32 %v5814, %v5814
      %v5879 = vmul.f32 %v5815, %v5815
      %v5880 = vmul.f32 %v5816, %v5816
      %v5881 = vmul.f32 %v5817, %v5817
      %v5882 = vmul.f32 %v5818, %v5818
      %v5883 = vmul.f32 %v5819, %v5819
      %v5884 = vmul.f32 %v5820, %v5820
      %v5885 = vmul.f32 %v5821, %v5821
      %v5886 = vmul.f32 %v5822, %v5822
      %v5887 = vmul.f32 %v5823, %v5823
      %v5888 = vmul.f32 %v5824, %v5824
      %v5889 = vmul.f32 %v5825, %v5825
      %v5890 = vmul.f32 %v5826, %v5826
      %v5891 = vmul.f32 %v5827, %v5827
      %v5892 = vmul.f32 %v5828, %v5828
      %v5893 = vmul.f32 %v5829, %v5829
      %v5894 = vmul.f32 %v5830, %v5830
      %v5895 = vmul.f32 %v5831, %v5831
      %v5896 = vmul.f32 %v5832, %v5832
      %v5897 = vmul.f32 %v5833, %v5833
      %v5898 = vmul.f32 %v5834, %v5834
      %v5899 = vmul.f32 %v5835, %v5835
      %v5900 = vmul.f32 %v5836, %v5836
      %v5901 = vmul.f32 %v5837, %v5837
      %v5902 = vmul.f32 %v5838, %v5838
      %v5903 = vmul.f32 %v5839, %v5839
      %v5904 = vmul.f32 %v5840, %v5840
      %v5905 = vmul.f32 %v5841, %v5841
      %v5906 = vmul.f32 %v5842, %v5842
      %v5907 = vmul.f32 %v5843, %v5843
      %v5908 = vmul.f32 %v5844, %v5844
      %v5909 = vmul.f32 %v5845, %v5845
      %v5910 = vmul.f32 %v5846, %v5846
      %v5911 = vmul.f32 %v5847, %v5847
      %v5912 = vmul.f32 %v5848, %v5848
      %v5913 = vmul.f32 %v5849, %v5849
      %v5914 = vmul.f32 %v5850, %v5850
      %v5915 = vmul.f32 %v5851, %v5851
      %v5916 = vmul.f32 %v5852, %v5852
      %v5917 = vmul.f32 %v5853, %v5853
      %v5918 = vmul.f32 %v5854, %v5854
      %v5919 = vmul.f32 %v5855, %v5855
      %v5920 = vmul.f32 %v5856, %v5856
      %v5921 = vmul.f32 %v5857, %v5857
      %v5922 = vmul.f32 %v5858, %v5858
      %v5923 = vmul.f32 %v5859, %v5859
      %v5924 = vmul.f32 %v5860, %v5860
      %v5925 = vmul.f32 %v5861, %v5861
      %v5926 = vmul.f32 %v5862, %v5862
      %v5927 = vmul.f32 %v5863, %v5863
      %v5928 = vmul.f32 %v5864, %v5864
      %v5929 = vmul.f32 %v5865, %v5865
      %v5930 = vmul.f32 %v5866, %v5866
      %v5931 = vmul.f32 %v5867, %v5867
      %v5932 = vmul.f32 %v5868, %v5868
      %v5933 = vmul.f32 %v5869, %v5869
      %v5934 = vmul.f32 %v5870, %v5870
      %v5935 = vmul.f32 %v5871, %v5871
      %v5936 = vmul.f32 %v5872, %v5872
      %v5937 = vmul.f32 %v5873, %v5873
      %v5938 = vmul.f32 %v5874, %v5874
      %v5939 = vmul.f32 %v5875, %v5875
      %v5940 = vmul.f32 %v5876, %v5876
      %v5941 = vmul.f32 %v5877, %v5877
      %v5942 = vadd.f32 %v5878, %v5879
      %v5943 = vadd.f32 %v5942, %v5880
      %v5944 = vadd.f32 %v5943, %v5881
      %v5945 = vadd.f32 %v5944, %v5882
      %v5946 = vadd.f32 %v5945, %v5883
      %v5947 = vadd.f32 %v5946, %v5884
      %v5948 = vadd.f32 %v5947, %v5885
      %v5949 = vadd.f32 %v5948, %v5886
      %v5950 = vadd.f32 %v5949, %v5887
      %v5951 = vadd.f32 %v5950, %v5888
      %v5952 = vadd.f32 %v5951, %v5889
      %v5953 = vadd.f32 %v5952, %v5890
      %v5954 = vadd.f32 %v5953, %v5891
      %v5955 = vadd.f32 %v5954, %v5892
      %v5956 = vadd.f32 %v5955, %v5893
      %v5957 = vadd.f32 %v5956, %v5894
      %v5958 = vadd.f32 %v5957, %v5895
      %v5959 = vadd.f32 %v5958, %v5896
      %v5960 = vadd.f32 %v5959, %v5897
      %v5961 = vadd.f32 %v5960, %v5898
      %v5962 = vadd.f32 %v5961, %v5899
      %v5963 = vadd.f32 %v5962, %v5900
      %v5964 = vadd.f32 %v5963, %v5901
      %v5965 = vadd.f32 %v5964, %v5902
      %v5966 = vadd.f32 %v5965, %v5903
      %v5967 = vadd.f32 %v5966, %v5904
      %v5968 = vadd.f32 %v5967, %v5905
      %v5969 = vadd.f32 %v5968, %v5906
      %v5970 = vadd.f32 %v5969, %v5907
      %v5971 = vadd.f32 %v5970, %v5908
      %v5972 = vadd.f32 %v5971, %v5909
      %v5973 = vadd.f32 %v5972, %v5910
      %v5974 = vadd.f32 %v5973, %v5911
      %v5975 = vadd.f32 %v5974, %v5912
      %v5976 = vadd.f32 %v5975, %v5913
      %v5977 = vadd.f32 %v5976, %v5914
      %v5978 = vadd.f32 %v5977, %v5915
      %v5979 = vadd.f32 %v5978, %v5916
      %v5980 = vadd.f32 %v5979, %v5917
      %v5981 = vadd.f32 %v5980, %v5918
      %v5982 = vadd.f32 %v5981, %v5919
      %v5983 = vadd.f32 %v5982, %v5920
      %v5984 = vadd.f32 %v5983, %v5921
      %v5985 = vadd.f32 %v5984, %v5922
      %v5986 = vadd.f32 %v5985, %v5923
      %v5987 = vadd.f32 %v5986, %v5924
      %v5988 = vadd.f32 %v5987, %v5925
      %v5989 = vadd.f32 %v5988, %v5926
      %v5990 = vadd.f32 %v5989, %v5927
      %v5991 = vadd.f32 %v5990, %v5928
      %v5992 = vadd.f32 %v5991, %v5929
      %v5993 = vadd.f32 %v5992, %v5930
      %v5994 = vadd.f32 %v5993, %v5931
      %v5995 = vadd.f32 %v5994, %v5932
      %v5996 = vadd.f32 %v5995, %v5933
      %v5997 = vadd.f32 %v5996, %v5934
      %v5998 = vadd.f32 %v5997, %v5935
      %v5999 = vadd.f32 %v5998, %v5936
      %v6000 = vadd.f32 %v5999, %v5937
      %v6001 = vadd.f32 %v6000, %v5938
      %v6002 = vadd.f32 %v6001, %v5939
      %v6003 = vadd.f32 %v6002, %v5940
      %v6004 = vadd.f32 %v6003, %v5941
      %v6005 = vrot.slane %v6004, 4
      %v6006 = vadd.f32 %v6004, %v6005
      %v6007 = vrot.slane %v6006, 2
      %v6008 = vadd.f32 %v6006, %v6007
      %v6009 = vrot.slane %v6008, 1
      %v6010 = vadd.f32 %v6008, %v6009
      %v6011 = vmul.f32 %v6010, 0.00390625
      %v6012 = vadd.f32 %v6011, 1e-05
      %v6013 = vrsqrt.pop %v6012
      %v6014 = vmul.f32 %v5814, %v6013
      %v6015 = vmul.f32 %v5815, %v6013
      %v6016 = vmul.f32 %v5816, %v6013
      %v6017 = vmul.f32 %v5817, %v6013
      %v6018 = vmul.f32 %v5818, %v6013
      %v6019 = vmul.f32 %v5819, %v6013
      %v6020 = vmul.f32 %v5820, %v6013
      %v6021 = vmul.f32 %v5821, %v6013
      %v6022 = vmul.f32 %v5822, %v6013
      %v6023 = vmul.f32 %v5823, %v6013
      %v6024 = vmul.f32 %v5824, %v6013
      %v6025 = vmul.f32 %v5825, %v6013
      %v6026 = vmul.f32 %v5826, %v6013
      %v6027 = vmul.f32 %v5827, %v6013
      %v6028 = vmul.f32 %v5828, %v6013
      %v6029 = vmul.f32 %v5829, %v6013
      %v6030 = vmul.f32 %v5830, %v6013
      %v6031 = vmul.f32 %v5831, %v6013
      %v6032 = vmul.f32 %v5832, %v6013
      %v6033 = vmul.f32 %v5833, %v6013
      %v6034 = vmul.f32 %v5834, %v6013
      %v6035 = vmul.f32 %v5835, %v6013
      %v6036 = vmul.f32 %v5836, %v6013
      %v6037 = vmul.f32 %v5837, %v6013
      %v6038 = vmul.f32 %v5838, %v6013
      %v6039 = vmul.f32 %v5839, %v6013
      %v6040 = vmul.f32 %v5840, %v6013
      %v6041 = vmul.f32 %v5841, %v6013
      %v6042 = vmul.f32 %v5842, %v6013
      %v6043 = vmul.f32 %v5843, %v6013
      %v6044 = vmul.f32 %v5844, %v6013
      %v6045 = vmul.f32 %v5845, %v6013
      %v6046 = vmul.f32 %v5846, %v6013
      %v6047 = vmul.f32 %v5847, %v6013
      %v6048 = vmul.f32 %v5848, %v6013
      %v6049 = vmul.f32 %v5849, %v6013
      %v6050 = vmul.f32 %v5850, %v6013
      %v6051 = vmul.f32 %v5851, %v6013
      %v6052 = vmul.f32 %v5852, %v6013
      %v6053 = vmul.f32 %v5853, %v6013
      %v6054 = vmul.f32 %v5854, %v6013
      %v6055 = vmul.f32 %v5855, %v6013
      %v6056 = vmul.f32 %v5856, %v6013
      %v6057 = vmul.f32 %v5857, %v6013
      %v6058 = vmul.f32 %v5858, %v6013
      %v6059 = vmul.f32 %v5859, %v6013
      %v6060 = vmul.f32 %v5860, %v6013
      %v6061 = vmul.f32 %v5861, %v6013
      %v6062 = vmul.f32 %v5862, %v6013
      %v6063 = vmul.f32 %v5863, %v6013
      %v6064 = vmul.f32 %v5864, %v6013
      %v6065 = vmul.f32 %v5865, %v6013
      %v6066 = vmul.f32 %v5866, %v6013
      %v6067 = vmul.f32 %v5867, %v6013
      %v6068 = vmul.f32 %v5868, %v6013
      %v6069 = vmul.f32 %v5869, %v6013
      %v6070 = vmul.f32 %v5870, %v6013
      %v6071 = vmul.f32 %v5871, %v6013
      %v6072 = vmul.f32 %v5872, %v6013
      %v6073 = vmul.f32 %v5873, %v6013
      %v6074 = vmul.f32 %v5874, %v6013
      %v6075 = vmul.f32 %v5875, %v6013
      %v6076 = vmul.f32 %v5876, %v6013
      %v6077 = vmul.f32 %v5877, %v6013
      %v6078 = vmax.f32 %v6014, 0.0
      %v6079 = vmax.f32 %v6015, 0.0
      %v6080 = vmax.f32 %v6016, 0.0
      %v6081 = vmax.f32 %v6017, 0.0
      %v6082 = vmax.f32 %v6018, 0.0
      %v6083 = vmax.f32 %v6019, 0.0
      %v6084 = vmax.f32 %v6020, 0.0
      %v6085 = vmax.f32 %v6021, 0.0
      %v6086 = vmax.f32 %v6022, 0.0
      %v6087 = vmax.f32 %v6023, 0.0
      %v6088 = vmax.f32 %v6024, 0.0
      %v6089 = vmax.f32 %v6025, 0.0
      %v6090 = vmax.f32 %v6026, 0.0
      %v6091 = vmax.f32 %v6027, 0.0
      %v6092 = vmax.f32 %v6028, 0.0
      %v6093 = vmax.f32 %v6029, 0.0
      %v6094 = vmax.f32 %v6030, 0.0
      %v6095 = vmax.f32 %v6031, 0.0
      %v6096 = vmax.f32 %v6032, 0.0
      %v6097 = vmax.f32 %v6033, 0.0
      %v6098 = vmax.f32 %v6034, 0.0
      %v6099 = vmax.f32 %v6035, 0.0
      %v6100 = vmax.f32 %v6036, 0.0
      %v6101 = vmax.f32 %v6037, 0.0
      %v6102 = vmax.f32 %v6038, 0.0
      %v6103 = vmax.f32 %v6039, 0.0
      %v6104 = vmax.f32 %v6040, 0.0
      %v6105 = vmax.f32 %v6041, 0.0
      %v6106 = vmax.f32 %v6042, 0.0
      %v6107 = vmax.f32 %v6043, 0.0
      %v6108 = vmax.f32 %v6044, 0.0
      %v6109 = vmax.f32 %v6045, 0.0
      %v6110 = vmax.f32 %v6046, 0.0
      %v6111 = vmax.f32 %v6047, 0.0
      %v6112 = vmax.f32 %v6048, 0.0
      %v6113 = vmax.f32 %v6049, 0.0
      %v6114 = vmax.f32 %v6050, 0.0
      %v6115 = vmax.f32 %v6051, 0.0
      %v6116 = vmax.f32 %v6052, 0.0
      %v6117 = vmax.f32 %v6053, 0.0
      %v6118 = vmax.f32 %v6054, 0.0
      %v6119 = vmax.f32 %v6055, 0.0
      %v6120 = vmax.f32 %v6056, 0.0
      %v6121 = vmax.f32 %v6057, 0.0
      %v6122 = vmax.f32 %v6058, 0.0
      %v6123 = vmax.f32 %v6059, 0.0
      %v6124 = vmax.f32 %v6060, 0.0
      %v6125 = vmax.f32 %v6061, 0.0
      %v6126 = vmax.f32 %v6062, 0.0
      %v6127 = vmax.f32 %v6063, 0.0
      %v6128 = vmax.f32 %v6064, 0.0
      %v6129 = vmax.f32 %v6065, 0.0
      %v6130 = vmax.f32 %v6066, 0.0
      %v6131 = vmax.f32 %v6067, 0.0
      %v6132 = vmax.f32 %v6068, 0.0
      %v6133 = vmax.f32 %v6069, 0.0
      %v6134 = vmax.f32 %v6070, 0.0
      %v6135 = vmax.f32 %v6071, 0.0
      %v6136 = vmax.f32 %v6072, 0.0
      %v6137 = vmax.f32 %v6073, 0.0
      %v6138 = vmax.f32 %v6074, 0.0
      %v6139 = vmax.f32 %v6075, 0.0
      %v6140 = vmax.f32 %v6076, 0.0
      %v6141 = vmax.f32 %v6077, 0.0
      %v6142 = vrot.slane %v6078, 2
      %v6143 = vrot.slane %v6079, 2
      %v6144 = vrot.slane %v6080, 2
      %v6145 = vrot.slane %v6081, 2
      %v6146 = vrot.slane %v6082, 2
      %v6147 = vrot.slane %v6083, 2
      %v6148 = vrot.slane %v6084, 2
      %v6149 = vrot.slane %v6085, 2
      %v6150 = vrot.slane %v6086, 2
      %v6151 = vrot.slane %v6087, 2
      %v6152 = vrot.slane %v6088, 2
      %v6153 = vrot.slane %v6089, 2
      %v6154 = vrot.slane %v6090, 2
      %v6155 = vrot.slane %v6091, 2
      %v6156 = vrot.slane %v6092, 2
      %v6157 = vrot.slane %v6093, 2
      %v6158 = vrot.slane %v6094, 2
      %v6159 = vrot.slane %v6095, 2
      %v6160 = vrot.slane %v6096, 2
      %v6161 = vrot.slane %v6097, 2
      %v6162 = vrot.slane %v6098, 2
      %v6163 = vrot.slane %v6099, 2
      %v6164 = vrot.slane %v6100, 2
      %v6165 = vrot.slane %v6101, 2
      %v6166 = vrot.slane %v6102, 2
      %v6167 = vrot.slane %v6103, 2
      %v6168 = vrot.slane %v6104, 2
      %v6169 = vrot.slane %v6105, 2
      %v6170 = vrot.slane %v6106, 2
      %v6171 = vrot.slane %v6107, 2
      %v6172 = vrot.slane %v6108, 2
      %v6173 = vrot.slane %v6109, 2
      %v6174 = vrot.slane %v6110, 2
      %v6175 = vrot.slane %v6111, 2
      %v6176 = vrot.slane %v6112, 2
      %v6177 = vrot.slane %v6113, 2
      %v6178 = vrot.slane %v6114, 2
      %v6179 = vrot.slane %v6115, 2
      %v6180 = vrot.slane %v6116, 2
      %v6181 = vrot.slane %v6117, 2
      %v6182 = vrot.slane %v6118, 2
      %v6183 = vrot.slane %v6119, 2
      %v6184 = vrot.slane %v6120, 2
      %v6185 = vrot.slane %v6121, 2
      %v6186 = vrot.slane %v6122, 2
      %v6187 = vrot.slane %v6123, 2
      %v6188 = vrot.slane %v6124, 2
      %v6189 = vrot.slane %v6125, 2
      %v6190 = vrot.slane %v6126, 2
      %v6191 = vrot.slane %v6127, 2
      %v6192 = vrot.slane %v6128, 2
      %v6193 = vrot.slane %v6129, 2
      %v6194 = vrot.slane %v6130, 2
      %v6195 = vrot.slane %v6131, 2
      %v6196 = vrot.slane %v6132, 2
      %v6197 = vrot.slane %v6133, 2
      %v6198 = vrot.slane %v6134, 2
      %v6199 = vrot.slane %v6135, 2
      %v6200 = vrot.slane %v6136, 2
      %v6201 = vrot.slane %v6137, 2
      %v6202 = vrot.slane %v6138, 2
      %v6203 = vrot.slane %v6139, 2
      %v6204 = vrot.slane %v6140, 2
      %v6205 = vrot.slane %v6141, 2
      %vm6206 = vcmp.lt.s32.totalorder %v173, 6
      %v6207 = vsel %vm6206, %v6204, %v6205
      %v6208 = vsel %vm6206, %v6203, %v6204
      %v6209 = vsel %vm6206, %v6202, %v6203
      %v6210 = vsel %vm6206, %v6201, %v6202
      %v6211 = vsel %vm6206, %v6200, %v6201
      %v6212 = vsel %vm6206, %v6199, %v6200
      %v6213 = vsel %vm6206, %v6198, %v6199
      %v6214 = vsel %vm6206, %v6197, %v6198
      %v6215 = vsel %vm6206, %v6196, %v6197
      %v6216 = vsel %vm6206, %v6195, %v6196
      %v6217 = vsel %vm6206, %v6194, %v6195
      %v6218 = vsel %vm6206, %v6193, %v6194
      %v6219 = vsel %vm6206, %v6192, %v6193
      %v6220 = vsel %vm6206, %v6191, %v6192
      %v6221 = vsel %vm6206, %v6190, %v6191
      %v6222 = vsel %vm6206, %v6189, %v6190
      %v6223 = vsel %vm6206, %v6188, %v6189
      %v6224 = vsel %vm6206, %v6187, %v6188
      %v6225 = vsel %vm6206, %v6186, %v6187
      %v6226 = vsel %vm6206, %v6185, %v6186
      %v6227 = vsel %vm6206, %v6184, %v6185
      %v6228 = vsel %vm6206, %v6183, %v6184
      %v6229 = vsel %vm6206, %v6182, %v6183
      %v6230 = vsel %vm6206, %v6181, %v6182
      %v6231 = vsel %vm6206, %v6180, %v6181
      %v6232 = vsel %vm6206, %v6179, %v6180
      %v6233 = vsel %vm6206, %v6178, %v6179
      %v6234 = vsel %vm6206, %v6177, %v6178
      %v6235 = vsel %vm6206, %v6176, %v6177
      %v6236 = vsel %vm6206, %v6175, %v6176
      %v6237 = vsel %vm6206, %v6174, %v6175
      %v6238 = vsel %vm6206, %v6173, %v6174
      %v6239 = vsel %vm6206, %v6172, %v6173
      %v6240 = vsel %vm6206, %v6171, %v6172
      %v6241 = vsel %vm6206, %v6170, %v6171
      %v6242 = vsel %vm6206, %v6169, %v6170
      %v6243 = vsel %vm6206, %v6168, %v6169
      %v6244 = vsel %vm6206, %v6167, %v6168
      %v6245 = vsel %vm6206, %v6166, %v6167
      %v6246 = vsel %vm6206, %v6165, %v6166
      %v6247 = vsel %vm6206, %v6164, %v6165
      %v6248 = vsel %vm6206, %v6163, %v6164
      %v6249 = vsel %vm6206, %v6162, %v6163
      %v6250 = vsel %vm6206, %v6161, %v6162
      %v6251 = vsel %vm6206, %v6160, %v6161
      %v6252 = vsel %vm6206, %v6159, %v6160
      %v6253 = vsel %vm6206, %v6158, %v6159
      %v6254 = vsel %vm6206, %v6157, %v6158
      %v6255 = vsel %vm6206, %v6156, %v6157
      %v6256 = vsel %vm6206, %v6155, %v6156
      %v6257 = vsel %vm6206, %v6154, %v6155
      %v6258 = vsel %vm6206, %v6153, %v6154
      %v6259 = vsel %vm6206, %v6152, %v6153
      %v6260 = vsel %vm6206, %v6151, %v6152
      %v6261 = vsel %vm6206, %v6150, %v6151
      %v6262 = vsel %vm6206, %v6149, %v6150
      %v6263 = vsel %vm6206, %v6148, %v6149
      %v6264 = vsel %vm6206, %v6147, %v6148
      %v6265 = vsel %vm6206, %v6146, %v6147
      %v6266 = vsel %vm6206, %v6145, %v6146
      %v6267 = vsel %vm6206, %v6144, %v6145
      %v6268 = vsel %vm6206, %v6143, %v6144
      %v6269 = vsel %vm6206, %v6142, %v6143
      %v6270 = vsel %vm6206, %v6205, %v6142
      %v6271 = vrot.slane %v6078, 6
      %v6272 = vrot.slane %v6079, 6
      %v6273 = vrot.slane %v6080, 6
      %v6274 = vrot.slane %v6081, 6
      %v6275 = vrot.slane %v6082, 6
      %v6276 = vrot.slane %v6083, 6
      %v6277 = vrot.slane %v6084, 6
      %v6278 = vrot.slane %v6085, 6
      %v6279 = vrot.slane %v6086, 6
      %v6280 = vrot.slane %v6087, 6
      %v6281 = vrot.slane %v6088, 6
      %v6282 = vrot.slane %v6089, 6
      %v6283 = vrot.slane %v6090, 6
      %v6284 = vrot.slane %v6091, 6
      %v6285 = vrot.slane %v6092, 6
      %v6286 = vrot.slane %v6093, 6
      %v6287 = vrot.slane %v6094, 6
      %v6288 = vrot.slane %v6095, 6
      %v6289 = vrot.slane %v6096, 6
      %v6290 = vrot.slane %v6097, 6
      %v6291 = vrot.slane %v6098, 6
      %v6292 = vrot.slane %v6099, 6
      %v6293 = vrot.slane %v6100, 6
      %v6294 = vrot.slane %v6101, 6
      %v6295 = vrot.slane %v6102, 6
      %v6296 = vrot.slane %v6103, 6
      %v6297 = vrot.slane %v6104, 6
      %v6298 = vrot.slane %v6105, 6
      %v6299 = vrot.slane %v6106, 6
      %v6300 = vrot.slane %v6107, 6
      %v6301 = vrot.slane %v6108, 6
      %v6302 = vrot.slane %v6109, 6
      %v6303 = vrot.slane %v6110, 6
      %v6304 = vrot.slane %v6111, 6
      %v6305 = vrot.slane %v6112, 6
      %v6306 = vrot.slane %v6113, 6
      %v6307 = vrot.slane %v6114, 6
      %v6308 = vrot.slane %v6115, 6
      %v6309 = vrot.slane %v6116, 6
      %v6310 = vrot.slane %v6117, 6
      %v6311 = vrot.slane %v6118, 6
      %v6312 = vrot.slane %v6119, 6
      %v6313 = vrot.slane %v6120, 6
      %v6314 = vrot.slane %v6121, 6
      %v6315 = vrot.slane %v6122, 6
      %v6316 = vrot.slane %v6123, 6
      %v6317 = vrot.slane %v6124, 6
      %v6318 = vrot.slane %v6125, 6
      %v6319 = vrot.slane %v6126, 6
      %v6320 = vrot.slane %v6127, 6
      %v6321 = vrot.slane %v6128, 6
      %v6322 = vrot.slane %v6129, 6
      %v6323 = vrot.slane %v6130, 6
      %v6324 = vrot.slane %v6131, 6
      %v6325 = vrot.slane %v6132, 6
      %v6326 = vrot.slane %v6133, 6
      %v6327 = vrot.slane %v6134, 6
      %v6328 = vrot.slane %v6135, 6
      %v6329 = vrot.slane %v6136, 6
      %v6330 = vrot.slane %v6137, 6
      %v6331 = vrot.slane %v6138, 6
      %v6332 = vrot.slane %v6139, 6
      %v6333 = vrot.slane %v6140, 6
      %v6334 = vrot.slane %v6141, 6
      %vm6335 = vcmp.lt.s32.totalorder %v173, 2
      %v6336 = vsel %vm6335, %v6333, %v6334
      %v6337 = vsel %vm6335, %v6332, %v6333
      %v6338 = vsel %vm6335, %v6331, %v6332
      %v6339 = vsel %vm6335, %v6330, %v6331
      %v6340 = vsel %vm6335, %v6329, %v6330
      %v6341 = vsel %vm6335, %v6328, %v6329
      %v6342 = vsel %vm6335, %v6327, %v6328
      %v6343 = vsel %vm6335, %v6326, %v6327
      %v6344 = vsel %vm6335, %v6325, %v6326
      %v6345 = vsel %vm6335, %v6324, %v6325
      %v6346 = vsel %vm6335, %v6323, %v6324
      %v6347 = vsel %vm6335, %v6322, %v6323
      %v6348 = vsel %vm6335, %v6321, %v6322
      %v6349 = vsel %vm6335, %v6320, %v6321
      %v6350 = vsel %vm6335, %v6319, %v6320
      %v6351 = vsel %vm6335, %v6318, %v6319
      %v6352 = vsel %vm6335, %v6317, %v6318
      %v6353 = vsel %vm6335, %v6316, %v6317
      %v6354 = vsel %vm6335, %v6315, %v6316
      %v6355 = vsel %vm6335, %v6314, %v6315
      %v6356 = vsel %vm6335, %v6313, %v6314
      %v6357 = vsel %vm6335, %v6312, %v6313
      %v6358 = vsel %vm6335, %v6311, %v6312
      %v6359 = vsel %vm6335, %v6310, %v6311
      %v6360 = vsel %vm6335, %v6309, %v6310
      %v6361 = vsel %vm6335, %v6308, %v6309
      %v6362 = vsel %vm6335, %v6307, %v6308
      %v6363 = vsel %vm6335, %v6306, %v6307
      %v6364 = vsel %vm6335, %v6305, %v6306
      %v6365 = vsel %vm6335, %v6304, %v6305
      %v6366 = vsel %vm6335, %v6303, %v6304
      %v6367 = vsel %vm6335, %v6302, %v6303
      %v6368 = vsel %vm6335, %v6301, %v6302
      %v6369 = vsel %vm6335, %v6300, %v6301
      %v6370 = vsel %vm6335, %v6299, %v6300
      %v6371 = vsel %vm6335, %v6298, %v6299
      %v6372 = vsel %vm6335, %v6297, %v6298
      %v6373 = vsel %vm6335, %v6296, %v6297
      %v6374 = vsel %vm6335, %v6295, %v6296
      %v6375 = vsel %vm6335, %v6294, %v6295
      %v6376 = vsel %vm6335, %v6293, %v6294
      %v6377 = vsel %vm6335, %v6292, %v6293
      %v6378 = vsel %vm6335, %v6291, %v6292
      %v6379 = vsel %vm6335, %v6290, %v6291
      %v6380 = vsel %vm6335, %v6289, %v6290
      %v6381 = vsel %vm6335, %v6288, %v6289
      %v6382 = vsel %vm6335, %v6287, %v6288
      %v6383 = vsel %vm6335, %v6286, %v6287
      %v6384 = vsel %vm6335, %v6285, %v6286
      %v6385 = vsel %vm6335, %v6284, %v6285
      %v6386 = vsel %vm6335, %v6283, %v6284
      %v6387 = vsel %vm6335, %v6282, %v6283
      %v6388 = vsel %vm6335, %v6281, %v6282
      %v6389 = vsel %vm6335, %v6280, %v6281
      %v6390 = vsel %vm6335, %v6279, %v6280
      %v6391 = vsel %vm6335, %v6278, %v6279
      %v6392 = vsel %vm6335, %v6277, %v6278
      %v6393 = vsel %vm6335, %v6276, %v6277
      %v6394 = vsel %vm6335, %v6275, %v6276
      %v6395 = vsel %vm6335, %v6274, %v6275
      %v6396 = vsel %vm6335, %v6273, %v6274
      %v6397 = vsel %vm6335, %v6272, %v6273
      %v6398 = vsel %vm6335, %v6271, %v6272
      %v6399 = vsel %vm6335, %v6334, %v6271
      %vm6400 = vcmp.eq.s32.totalorder %v941, 0
      %vm6401 = vcmp.eq.s32.totalorder %v942, 0
      %vm6402 = vcmp.eq.s32.totalorder %v943, 0
      %vm6403 = vcmp.eq.s32.totalorder %v944, 0
      %vm6404 = vcmp.eq.s32.totalorder %v945, 0
      %vm6405 = vcmp.eq.s32.totalorder %v946, 0
      %vm6406 = vcmp.eq.s32.totalorder %v947, 0
      %vm6407 = vcmp.eq.s32.totalorder %v948, 0
      %vm6408 = vcmp.eq.s32.totalorder %v949, 0
      %vm6409 = vcmp.eq.s32.totalorder %v950, 0
      %vm6410 = vcmp.eq.s32.totalorder %v951, 0
      %vm6411 = vcmp.eq.s32.totalorder %v952, 0
      %vm6412 = vcmp.eq.s32.totalorder %v953, 0
      %vm6413 = vcmp.eq.s32.totalorder %v954, 0
      %vm6414 = vcmp.eq.s32.totalorder %v955, 0
      %vm6415 = vcmp.eq.s32.totalorder %v956, 0
      %vm6416 = vcmp.eq.s32.totalorder %v957, 0
      %vm6417 = vcmp.eq.s32.totalorder %v958, 0
      %vm6418 = vcmp.eq.s32.totalorder %v959, 0
      %vm6419 = vcmp.eq.s32.totalorder %v960, 0
      %vm6420 = vcmp.eq.s32.totalorder %v961, 0
      %vm6421 = vcmp.eq.s32.totalorder %v962, 0
      %vm6422 = vcmp.eq.s32.totalorder %v963, 0
      %vm6423 = vcmp.eq.s32.totalorder %v964, 0
      %vm6424 = vcmp.eq.s32.totalorder %v965, 0
      %vm6425 = vcmp.eq.s32.totalorder %v966, 0
      %vm6426 = vcmp.eq.s32.totalorder %v967, 0
      %vm6427 = vcmp.eq.s32.totalorder %v968, 0
      %vm6428 = vcmp.eq.s32.totalorder %v969, 0
      %vm6429 = vcmp.eq.s32.totalorder %v970, 0
      %vm6430 = vcmp.eq.s32.totalorder %v971, 0
      %vm6431 = vcmp.eq.s32.totalorder %v972, 0
      %vm6432 = vcmp.eq.s32.totalorder %v973, 0
      %vm6433 = vcmp.eq.s32.totalorder %v974, 0
      %vm6434 = vcmp.eq.s32.totalorder %v975, 0
      %vm6435 = vcmp.eq.s32.totalorder %v976, 0
      %vm6436 = vcmp.eq.s32.totalorder %v977, 0
      %vm6437 = vcmp.eq.s32.totalorder %v978, 0
      %vm6438 = vcmp.eq.s32.totalorder %v979, 0
      %vm6439 = vcmp.eq.s32.totalorder %v980, 0
      %vm6440 = vcmp.eq.s32.totalorder %v981, 0
      %vm6441 = vcmp.eq.s32.totalorder %v982, 0
      %vm6442 = vcmp.eq.s32.totalorder %v983, 0
      %vm6443 = vcmp.eq.s32.totalorder %v984, 0
      %vm6444 = vcmp.eq.s32.totalorder %v985, 0
      %vm6445 = vcmp.eq.s32.totalorder %v986, 0
      %vm6446 = vcmp.eq.s32.totalorder %v987, 0
      %vm6447 = vcmp.eq.s32.totalorder %v988, 0
      %vm6448 = vcmp.eq.s32.totalorder %v989, 0
      %vm6449 = vcmp.eq.s32.totalorder %v990, 0
      %vm6450 = vcmp.eq.s32.totalorder %v991, 0
      %vm6451 = vcmp.eq.s32.totalorder %v992, 0
      %vm6452 = vcmp.eq.s32.totalorder %v993, 0
      %vm6453 = vcmp.eq.s32.totalorder %v994, 0
      %vm6454 = vcmp.eq.s32.totalorder %v995, 0
      %vm6455 = vcmp.eq.s32.totalorder %v996, 0
      %vm6456 = vcmp.eq.s32.totalorder %v997, 0
      %vm6457 = vcmp.eq.s32.totalorder %v998, 0
      %vm6458 = vcmp.eq.s32.totalorder %v999, 0
      %vm6459 = vcmp.eq.s32.totalorder %v1000, 0
      %vm6460 = vcmp.eq.s32.totalorder %v1001, 0
      %vm6461 = vcmp.eq.s32.totalorder %v1002, 0
      %vm6462 = vcmp.eq.s32.totalorder %v1003, 0
      %vm6463 = vcmp.eq.s32.totalorder %v1004, 0
      %vm6464 = vcmp.eq.s32.totalorder %v941, 17
      %vm6465 = vcmp.eq.s32.totalorder %v942, 17
      %vm6466 = vcmp.eq.s32.totalorder %v943, 17
      %vm6467 = vcmp.eq.s32.totalorder %v944, 17
      %vm6468 = vcmp.eq.s32.totalorder %v945, 17
      %vm6469 = vcmp.eq.s32.totalorder %v946, 17
      %vm6470 = vcmp.eq.s32.totalorder %v947, 17
      %vm6471 = vcmp.eq.s32.totalorder %v948, 17
      %vm6472 = vcmp.eq.s32.totalorder %v949, 17
      %vm6473 = vcmp.eq.s32.totalorder %v950, 17
      %vm6474 = vcmp.eq.s32.totalorder %v951, 17
      %vm6475 = vcmp.eq.s32.totalorder %v952, 17
      %vm6476 = vcmp.eq.s32.totalorder %v953, 17
      %vm6477 = vcmp.eq.s32.totalorder %v954, 17
      %vm6478 = vcmp.eq.s32.totalorder %v955, 17
      %vm6479 = vcmp.eq.s32.totalorder %v956, 17
      %vm6480 = vcmp.eq.s32.totalorder %v957, 17
      %vm6481 = vcmp.eq.s32.totalorder %v958, 17
      %vm6482 = vcmp.eq.s32.totalorder %v959, 17
      %vm6483 = vcmp.eq.s32.totalorder %v960, 17
      %vm6484 = vcmp.eq.s32.totalorder %v961, 17
      %vm6485 = vcmp.eq.s32.totalorder %v962, 17
      %vm6486 = vcmp.eq.s32.totalorder %v963, 17
      %vm6487 = vcmp.eq.s32.totalorder %v964, 17
      %vm6488 = vcmp.eq.s32.totalorder %v965, 17
      %vm6489 = vcmp.eq.s32.totalorder %v966, 17
      %vm6490 = vcmp.eq.s32.totalorder %v967, 17
      %vm6491 = vcmp.eq.s32.totalorder %v968, 17
      %vm6492 = vcmp.eq.s32.totalorder %v969, 17
      %vm6493 = vcmp.eq.s32.totalorder %v970, 17
      %vm6494 = vcmp.eq.s32.totalorder %v971, 17
      %vm6495 = vcmp.eq.s32.totalorder %v972, 17
      %vm6496 = vcmp.eq.s32.totalorder %v973, 17
      %vm6497 = vcmp.eq.s32.totalorder %v974, 17
      %vm6498 = vcmp.eq.s32.totalorder %v975, 17
      %vm6499 = vcmp.eq.s32.totalorder %v976, 17
      %vm6500 = vcmp.eq.s32.totalorder %v977, 17
      %vm6501 = vcmp.eq.s32.totalorder %v978, 17
      %vm6502 = vcmp.eq.s32.totalorder %v979, 17
      %vm6503 = vcmp.eq.s32.totalorder %v980, 17
      %vm6504 = vcmp.eq.s32.totalorder %v981, 17
      %vm6505 = vcmp.eq.s32.totalorder %v982, 17
      %vm6506 = vcmp.eq.s32.totalorder %v983, 17
      %vm6507 = vcmp.eq.s32.totalorder %v984, 17
      %vm6508 = vcmp.eq.s32.totalorder %v985, 17
      %vm6509 = vcmp.eq.s32.totalorder %v986, 17
      %vm6510 = vcmp.eq.s32.totalorder %v987, 17
      %vm6511 = vcmp.eq.s32.totalorder %v988, 17
      %vm6512 = vcmp.eq.s32.totalorder %v989, 17
      %vm6513 = vcmp.eq.s32.totalorder %v990, 17
      %vm6514 = vcmp.eq.s32.totalorder %v991, 17
      %vm6515 = vcmp.eq.s32.totalorder %v992, 17
      %vm6516 = vcmp.eq.s32.totalorder %v993, 17
      %vm6517 = vcmp.eq.s32.totalorder %v994, 17
      %vm6518 = vcmp.eq.s32.totalorder %v995, 17
      %vm6519 = vcmp.eq.s32.totalorder %v996, 17
      %vm6520 = vcmp.eq.s32.totalorder %v997, 17
      %vm6521 = vcmp.eq.s32.totalorder %v998, 17
      %vm6522 = vcmp.eq.s32.totalorder %v999, 17
      %vm6523 = vcmp.eq.s32.totalorder %v1000, 17
      %vm6524 = vcmp.eq.s32.totalorder %v1001, 17
      %vm6525 = vcmp.eq.s32.totalorder %v1002, 17
      %vm6526 = vcmp.eq.s32.totalorder %v1003, 17
      %vm6527 = vcmp.eq.s32.totalorder %v1004, 17
      %v6528 = vsel %vm6464, 1, 0
      %v6529 = vsel %vm6465, 1, 0
      %v6530 = vsel %vm6466, 1, 0
      %v6531 = vsel %vm6467, 1, 0
      %v6532 = vsel %vm6468, 1, 0
      %v6533 = vsel %vm6469, 1, 0
      %v6534 = vsel %vm6470, 1, 0
      %v6535 = vsel %vm6471, 1, 0
      %v6536 = vsel %vm6472, 1, 0
      %v6537 = vsel %vm6473, 1, 0
      %v6538 = vsel %vm6474, 1, 0
      %v6539 = vsel %vm6475, 1, 0
      %v6540 = vsel %vm6476, 1, 0
      %v6541 = vsel %vm6477, 1, 0
      %v6542 = vsel %vm6478, 1, 0
      %v6543 = vsel %vm6479, 1, 0
      %v6544 = vsel %vm6480, 1, 0
      %v6545 = vsel %vm6481, 1, 0
      %v6546 = vsel %vm6482, 1, 0
      %v6547 = vsel %vm6483, 1, 0
      %v6548 = vsel %vm6484, 1, 0
      %v6549 = vsel %vm6485, 1, 0
      %v6550 = vsel %vm6486, 1, 0
      %v6551 = vsel %vm6487, 1, 0
      %v6552 = vsel %vm6488, 1, 0
      %v6553 = vsel %vm6489, 1, 0
      %v6554 = vsel %vm6490, 1, 0
      %v6555 = vsel %vm6491, 1, 0
      %v6556 = vsel %vm6492, 1, 0
      %v6557 = vsel %vm6493, 1, 0
      %v6558 = vsel %vm6494, 1, 0
      %v6559 = vsel %vm6495, 1, 0
      %v6560 = vsel %vm6496, 1, 0
      %v6561 = vsel %vm6497, 1, 0
      %v6562 = vsel %vm6498, 1, 0
      %v6563 = vsel %vm6499, 1, 0
      %v6564 = vsel %vm6500, 1, 0
      %v6565 = vsel %vm6501, 1, 0
      %v6566 = vsel %vm6502, 1, 0
      %v6567 = vsel %vm6503, 1, 0
      %v6568 = vsel %vm6504, 1, 0
      %v6569 = vsel %vm6505, 1, 0
      %v6570 = vsel %vm6506, 1, 0
      %v6571 = vsel %vm6507, 1, 0
      %v6572 = vsel %vm6508, 1, 0
      %v6573 = vsel %vm6509, 1, 0
      %v6574 = vsel %vm6510, 1, 0
      %v6575 = vsel %vm6511, 1, 0
      %v6576 = vsel %vm6512, 1, 0
      %v6577 = vsel %vm6513, 1, 0
      %v6578 = vsel %vm6514, 1, 0
      %v6579 = vsel %vm6515, 1, 0
      %v6580 = vsel %vm6516, 1, 0
      %v6581 = vsel %vm6517, 1, 0
      %v6582 = vsel %vm6518, 1, 0
      %v6583 = vsel %vm6519, 1, 0
      %v6584 = vsel %vm6520, 1, 0
      %v6585 = vsel %vm6521, 1, 0
      %v6586 = vsel %vm6522, 1, 0
      %v6587 = vsel %vm6523, 1, 0
      %v6588 = vsel %vm6524, 1, 0
      %v6589 = vsel %vm6525, 1, 0
      %v6590 = vsel %vm6526, 1, 0
      %v6591 = vsel %vm6527, 1, 0
      %vm6592 = vcmp.eq.s32.totalorder %v6528, 1
      %vm6593 = vcmp.eq.s32.totalorder %v6529, 1
      %vm6594 = vcmp.eq.s32.totalorder %v6530, 1
      %vm6595 = vcmp.eq.s32.totalorder %v6531, 1
      %vm6596 = vcmp.eq.s32.totalorder %v6532, 1
      %vm6597 = vcmp.eq.s32.totalorder %v6533, 1
      %vm6598 = vcmp.eq.s32.totalorder %v6534, 1
      %vm6599 = vcmp.eq.s32.totalorder %v6535, 1
      %vm6600 = vcmp.eq.s32.totalorder %v6536, 1
      %vm6601 = vcmp.eq.s32.totalorder %v6537, 1
      %vm6602 = vcmp.eq.s32.totalorder %v6538, 1
      %vm6603 = vcmp.eq.s32.totalorder %v6539, 1
      %vm6604 = vcmp.eq.s32.totalorder %v6540, 1
      %vm6605 = vcmp.eq.s32.totalorder %v6541, 1
      %vm6606 = vcmp.eq.s32.totalorder %v6542, 1
      %vm6607 = vcmp.eq.s32.totalorder %v6543, 1
      %vm6608 = vcmp.eq.s32.totalorder %v6544, 1
      %vm6609 = vcmp.eq.s32.totalorder %v6545, 1
      %vm6610 = vcmp.eq.s32.totalorder %v6546, 1
      %vm6611 = vcmp.eq.s32.totalorder %v6547, 1
      %vm6612 = vcmp.eq.s32.totalorder %v6548, 1
      %vm6613 = vcmp.eq.s32.totalorder %v6549, 1
      %vm6614 = vcmp.eq.s32.totalorder %v6550, 1
      %vm6615 = vcmp.eq.s32.totalorder %v6551, 1
      %vm6616 = vcmp.eq.s32.totalorder %v6552, 1
      %vm6617 = vcmp.eq.s32.totalorder %v6553, 1
      %vm6618 = vcmp.eq.s32.totalorder %v6554, 1
      %vm6619 = vcmp.eq.s32.totalorder %v6555, 1
      %vm6620 = vcmp.eq.s32.totalorder %v6556, 1
      %vm6621 = vcmp.eq.s32.totalorder %v6557, 1
      %vm6622 = vcmp.eq.s32.totalorder %v6558, 1
      %vm6623 = vcmp.eq.s32.totalorder %v6559, 1
      %vm6624 = vcmp.eq.s32.totalorder %v6560, 1
      %vm6625 = vcmp.eq.s32.totalorder %v6561, 1
      %vm6626 = vcmp.eq.s32.totalorder %v6562, 1
      %vm6627 = vcmp.eq.s32.totalorder %v6563, 1
      %vm6628 = vcmp.eq.s32.totalorder %v6564, 1
      %vm6629 = vcmp.eq.s32.totalorder %v6565, 1
      %vm6630 = vcmp.eq.s32.totalorder %v6566, 1
      %vm6631 = vcmp.eq.s32.totalorder %v6567, 1
      %vm6632 = vcmp.eq.s32.totalorder %v6568, 1
      %vm6633 = vcmp.eq.s32.totalorder %v6569, 1
      %vm6634 = vcmp.eq.s32.totalorder %v6570, 1
      %vm6635 = vcmp.eq.s32.totalorder %v6571, 1
      %vm6636 = vcmp.eq.s32.totalorder %v6572, 1
      %vm6637 = vcmp.eq.s32.totalorder %v6573, 1
      %vm6638 = vcmp.eq.s32.totalorder %v6574, 1
      %vm6639 = vcmp.eq.s32.totalorder %v6575, 1
      %vm6640 = vcmp.eq.s32.totalorder %v6576, 1
      %vm6641 = vcmp.eq.s32.totalorder %v6577, 1
      %vm6642 = vcmp.eq.s32.totalorder %v6578, 1
      %vm6643 = vcmp.eq.s32.totalorder %v6579, 1
      %vm6644 = vcmp.eq.s32.totalorder %v6580, 1
      %vm6645 = vcmp.eq.s32.totalorder %v6581, 1
      %vm6646 = vcmp.eq.s32.totalorder %v6582, 1
      %vm6647 = vcmp.eq.s32.totalorder %v6583, 1
      %vm6648 = vcmp.eq.s32.totalorder %v6584, 1
      %vm6649 = vcmp.eq.s32.totalorder %v6585, 1
      %vm6650 = vcmp.eq.s32.totalorder %v6586, 1
      %vm6651 = vcmp.eq.s32.totalorder %v6587, 1
      %vm6652 = vcmp.eq.s32.totalorder %v6588, 1
      %vm6653 = vcmp.eq.s32.totalorder %v6589, 1
      %vm6654 = vcmp.eq.s32.totalorder %v6590, 1
      %vm6655 = vcmp.eq.s32.totalorder %v6591, 1
      %v6656 = vsel %vm6592, %v6399, %v6078
      %v6657 = vsel %vm6593, %v6398, %v6079
      %v6658 = vsel %vm6594, %v6397, %v6080
      %v6659 = vsel %vm6595, %v6396, %v6081
      %v6660 = vsel %vm6596, %v6395, %v6082
      %v6661 = vsel %vm6597, %v6394, %v6083
      %v6662 = vsel %vm6598, %v6393, %v6084
      %v6663 = vsel %vm6599, %v6392, %v6085
      %v6664 = vsel %vm6600, %v6391, %v6086
      %v6665 = vsel %vm6601, %v6390, %v6087
      %v6666 = vsel %vm6602, %v6389, %v6088
      %v6667 = vsel %vm6603, %v6388, %v6089
      %v6668 = vsel %vm6604, %v6387, %v6090
      %v6669 = vsel %vm6605, %v6386, %v6091
      %v6670 = vsel %vm6606, %v6385, %v6092
      %v6671 = vsel %vm6607, %v6384, %v6093
      %v6672 = vsel %vm6608, %v6383, %v6094
      %v6673 = vsel %vm6609, %v6382, %v6095
      %v6674 = vsel %vm6610, %v6381, %v6096
      %v6675 = vsel %vm6611, %v6380, %v6097
      %v6676 = vsel %vm6612, %v6379, %v6098
      %v6677 = vsel %vm6613, %v6378, %v6099
      %v6678 = vsel %vm6614, %v6377, %v6100
      %v6679 = vsel %vm6615, %v6376, %v6101
      %v6680 = vsel %vm6616, %v6375, %v6102
      %v6681 = vsel %vm6617, %v6374, %v6103
      %v6682 = vsel %vm6618, %v6373, %v6104
      %v6683 = vsel %vm6619, %v6372, %v6105
      %v6684 = vsel %vm6620, %v6371, %v6106
      %v6685 = vsel %vm6621, %v6370, %v6107
      %v6686 = vsel %vm6622, %v6369, %v6108
      %v6687 = vsel %vm6623, %v6368, %v6109
      %v6688 = vsel %vm6624, %v6367, %v6110
      %v6689 = vsel %vm6625, %v6366, %v6111
      %v6690 = vsel %vm6626, %v6365, %v6112
      %v6691 = vsel %vm6627, %v6364, %v6113
      %v6692 = vsel %vm6628, %v6363, %v6114
      %v6693 = vsel %vm6629, %v6362, %v6115
      %v6694 = vsel %vm6630, %v6361, %v6116
      %v6695 = vsel %vm6631, %v6360, %v6117
      %v6696 = vsel %vm6632, %v6359, %v6118
      %v6697 = vsel %vm6633, %v6358, %v6119
      %v6698 = vsel %vm6634, %v6357, %v6120
      %v6699 = vsel %vm6635, %v6356, %v6121
      %v6700 = vsel %vm6636, %v6355, %v6122
      %v6701 = vsel %vm6637, %v6354, %v6123
      %v6702 = vsel %vm6638, %v6353, %v6124
      %v6703 = vsel %vm6639, %v6352, %v6125
      %v6704 = vsel %vm6640, %v6351, %v6126
      %v6705 = vsel %vm6641, %v6350, %v6127
      %v6706 = vsel %vm6642, %v6349, %v6128
      %v6707 = vsel %vm6643, %v6348, %v6129
      %v6708 = vsel %vm6644, %v6347, %v6130
      %v6709 = vsel %vm6645, %v6346, %v6131
      %v6710 = vsel %vm6646, %v6345, %v6132
      %v6711 = vsel %vm6647, %v6344, %v6133
      %v6712 = vsel %vm6648, %v6343, %v6134
      %v6713 = vsel %vm6649, %v6342, %v6135
      %v6714 = vsel %vm6650, %v6341, %v6136
      %v6715 = vsel %vm6651, %v6340, %v6137
      %v6716 = vsel %vm6652, %v6339, %v6138
      %v6717 = vsel %vm6653, %v6338, %v6139
      %v6718 = vsel %vm6654, %v6337, %v6140
      %v6719 = vsel %vm6655, %v6336, %v6141
      %v6720 = vsel %vm6400, 1, 0
      %v6721 = vsel %vm6401, 1, 0
      %v6722 = vsel %vm6402, 1, 0
      %v6723 = vsel %vm6403, 1, 0
      %v6724 = vsel %vm6404, 1, 0
      %v6725 = vsel %vm6405, 1, 0
      %v6726 = vsel %vm6406, 1, 0
      %v6727 = vsel %vm6407, 1, 0
      %v6728 = vsel %vm6408, 1, 0
      %v6729 = vsel %vm6409, 1, 0
      %v6730 = vsel %vm6410, 1, 0
      %v6731 = vsel %vm6411, 1, 0
      %v6732 = vsel %vm6412, 1, 0
      %v6733 = vsel %vm6413, 1, 0
      %v6734 = vsel %vm6414, 1, 0
      %v6735 = vsel %vm6415, 1, 0
      %v6736 = vsel %vm6416, 1, 0
      %v6737 = vsel %vm6417, 1, 0
      %v6738 = vsel %vm6418, 1, 0
      %v6739 = vsel %vm6419, 1, 0
      %v6740 = vsel %vm6420, 1, 0
      %v6741 = vsel %vm6421, 1, 0
      %v6742 = vsel %vm6422, 1, 0
      %v6743 = vsel %vm6423, 1, 0
      %v6744 = vsel %vm6424, 1, 0
      %v6745 = vsel %vm6425, 1, 0
      %v6746 = vsel %vm6426, 1, 0
      %v6747 = vsel %vm6427, 1, 0
      %v6748 = vsel %vm6428, 1, 0
      %v6749 = vsel %vm6429, 1, 0
      %v6750 = vsel %vm6430, 1, 0
      %v6751 = vsel %vm6431, 1, 0
      %v6752 = vsel %vm6432, 1, 0
      %v6753 = vsel %vm6433, 1, 0
      %v6754 = vsel %vm6434, 1, 0
      %v6755 = vsel %vm6435, 1, 0
      %v6756 = vsel %vm6436, 1, 0
      %v6757 = vsel %vm6437, 1, 0
      %v6758 = vsel %vm6438, 1, 0
      %v6759 = vsel %vm6439, 1, 0
      %v6760 = vsel %vm6440, 1, 0
      %v6761 = vsel %vm6441, 1, 0
      %v6762 = vsel %vm6442, 1, 0
      %v6763 = vsel %vm6443, 1, 0
      %v6764 = vsel %vm6444, 1, 0
      %v6765 = vsel %vm6445, 1, 0
      %v6766 = vsel %vm6446, 1, 0
      %v6767 = vsel %vm6447, 1, 0
      %v6768 = vsel %vm6448, 1, 0
      %v6769 = vsel %vm6449, 1, 0
      %v6770 = vsel %vm6450, 1, 0
      %v6771 = vsel %vm6451, 1, 0
      %v6772 = vsel %vm6452, 1, 0
      %v6773 = vsel %vm6453, 1, 0
      %v6774 = vsel %vm6454, 1, 0
      %v6775 = vsel %vm6455, 1, 0
      %v6776 = vsel %vm6456, 1, 0
      %v6777 = vsel %vm6457, 1, 0
      %v6778 = vsel %vm6458, 1, 0
      %v6779 = vsel %vm6459, 1, 0
      %v6780 = vsel %vm6460, 1, 0
      %v6781 = vsel %vm6461, 1, 0
      %v6782 = vsel %vm6462, 1, 0
      %v6783 = vsel %vm6463, 1, 0
      %vm6784 = vcmp.eq.s32.totalorder %v6720, 1
      %vm6785 = vcmp.eq.s32.totalorder %v6721, 1
      %vm6786 = vcmp.eq.s32.totalorder %v6722, 1
      %vm6787 = vcmp.eq.s32.totalorder %v6723, 1
      %vm6788 = vcmp.eq.s32.totalorder %v6724, 1
      %vm6789 = vcmp.eq.s32.totalorder %v6725, 1
      %vm6790 = vcmp.eq.s32.totalorder %v6726, 1
      %vm6791 = vcmp.eq.s32.totalorder %v6727, 1
      %vm6792 = vcmp.eq.s32.totalorder %v6728, 1
      %vm6793 = vcmp.eq.s32.totalorder %v6729, 1
      %vm6794 = vcmp.eq.s32.totalorder %v6730, 1
      %vm6795 = vcmp.eq.s32.totalorder %v6731, 1
      %vm6796 = vcmp.eq.s32.totalorder %v6732, 1
      %vm6797 = vcmp.eq.s32.totalorder %v6733, 1
      %vm6798 = vcmp.eq.s32.totalorder %v6734, 1
      %vm6799 = vcmp.eq.s32.totalorder %v6735, 1
      %vm6800 = vcmp.eq.s32.totalorder %v6736, 1
      %vm6801 = vcmp.eq.s32.totalorder %v6737, 1
      %vm6802 = vcmp.eq.s32.totalorder %v6738, 1
      %vm6803 = vcmp.eq.s32.totalorder %v6739, 1
      %vm6804 = vcmp.eq.s32.totalorder %v6740, 1
      %vm6805 = vcmp.eq.s32.totalorder %v6741, 1
      %vm6806 = vcmp.eq.s32.totalorder %v6742, 1
      %vm6807 = vcmp.eq.s32.totalorder %v6743, 1
      %vm6808 = vcmp.eq.s32.totalorder %v6744, 1
      %vm6809 = vcmp.eq.s32.totalorder %v6745, 1
      %vm6810 = vcmp.eq.s32.totalorder %v6746, 1
      %vm6811 = vcmp.eq.s32.totalorder %v6747, 1
      %vm6812 = vcmp.eq.s32.totalorder %v6748, 1
      %vm6813 = vcmp.eq.s32.totalorder %v6749, 1
      %vm6814 = vcmp.eq.s32.totalorder %v6750, 1
      %vm6815 = vcmp.eq.s32.totalorder %v6751, 1
      %vm6816 = vcmp.eq.s32.totalorder %v6752, 1
      %vm6817 = vcmp.eq.s32.totalorder %v6753, 1
      %vm6818 = vcmp.eq.s32.totalorder %v6754, 1
      %vm6819 = vcmp.eq.s32.totalorder %v6755, 1
      %vm6820 = vcmp.eq.s32.totalorder %v6756, 1
      %vm6821 = vcmp.eq.s32.totalorder %v6757, 1
      %vm6822 = vcmp.eq.s32.totalorder %v6758, 1
      %vm6823 = vcmp.eq.s32.totalorder %v6759, 1
      %vm6824 = vcmp.eq.s32.totalorder %v6760, 1
      %vm6825 = vcmp.eq.s32.totalorder %v6761, 1
      %vm6826 = vcmp.eq.s32.totalorder %v6762, 1
      %vm6827 = vcmp.eq.s32.totalorder %v6763, 1
      %vm6828 = vcmp.eq.s32.totalorder %v6764, 1
      %vm6829 = vcmp.eq.s32.totalorder %v6765, 1
      %vm6830 = vcmp.eq.s32.totalorder %v6766, 1
      %vm6831 = vcmp.eq.s32.totalorder %v6767, 1
      %vm6832 = vcmp.eq.s32.totalorder %v6768, 1
      %vm6833 = vcmp.eq.s32.totalorder %v6769, 1
      %vm6834 = vcmp.eq.s32.totalorder %v6770, 1
      %vm6835 = vcmp.eq.s32.totalorder %v6771, 1
      %vm6836 = vcmp.eq.s32.totalorder %v6772, 1
      %vm6837 = vcmp.eq.s32.totalorder %v6773, 1
      %vm6838 = vcmp.eq.s32.totalorder %v6774, 1
      %vm6839 = vcmp.eq.s32.totalorder %v6775, 1
      %vm6840 = vcmp.eq.s32.totalorder %v6776, 1
      %vm6841 = vcmp.eq.s32.totalorder %v6777, 1
      %vm6842 = vcmp.eq.s32.totalorder %v6778, 1
      %vm6843 = vcmp.eq.s32.totalorder %v6779, 1
      %vm6844 = vcmp.eq.s32.totalorder %v6780, 1
      %vm6845 = vcmp.eq.s32.totalorder %v6781, 1
      %vm6846 = vcmp.eq.s32.totalorder %v6782, 1
      %vm6847 = vcmp.eq.s32.totalorder %v6783, 1
      %v6848 = vsel %vm6784, %v6269, %v6656
      %v6849 = vsel %vm6785, %v6268, %v6657
      %v6850 = vsel %vm6786, %v6267, %v6658
      %v6851 = vsel %vm6787, %v6266, %v6659
      %v6852 = vsel %vm6788, %v6265, %v6660
      %v6853 = vsel %vm6789, %v6264, %v6661
      %v6854 = vsel %vm6790, %v6263, %v6662
      %v6855 = vsel %vm6791, %v6262, %v6663
      %v6856 = vsel %vm6792, %v6261, %v6664
      %v6857 = vsel %vm6793, %v6260, %v6665
      %v6858 = vsel %vm6794, %v6259, %v6666
      %v6859 = vsel %vm6795, %v6258, %v6667
      %v6860 = vsel %vm6796, %v6257, %v6668
      %v6861 = vsel %vm6797, %v6256, %v6669
      %v6862 = vsel %vm6798, %v6255, %v6670
      %v6863 = vsel %vm6799, %v6254, %v6671
      %v6864 = vsel %vm6800, %v6253, %v6672
      %v6865 = vsel %vm6801, %v6252, %v6673
      %v6866 = vsel %vm6802, %v6251, %v6674
      %v6867 = vsel %vm6803, %v6250, %v6675
      %v6868 = vsel %vm6804, %v6249, %v6676
      %v6869 = vsel %vm6805, %v6248, %v6677
      %v6870 = vsel %vm6806, %v6247, %v6678
      %v6871 = vsel %vm6807, %v6246, %v6679
      %v6872 = vsel %vm6808, %v6245, %v6680
      %v6873 = vsel %vm6809, %v6244, %v6681
      %v6874 = vsel %vm6810, %v6243, %v6682
      %v6875 = vsel %vm6811, %v6242, %v6683
      %v6876 = vsel %vm6812, %v6241, %v6684
      %v6877 = vsel %vm6813, %v6240, %v6685
      %v6878 = vsel %vm6814, %v6239, %v6686
      %v6879 = vsel %vm6815, %v6238, %v6687
      %v6880 = vsel %vm6816, %v6237, %v6688
      %v6881 = vsel %vm6817, %v6236, %v6689
      %v6882 = vsel %vm6818, %v6235, %v6690
      %v6883 = vsel %vm6819, %v6234, %v6691
      %v6884 = vsel %vm6820, %v6233, %v6692
      %v6885 = vsel %vm6821, %v6232, %v6693
      %v6886 = vsel %vm6822, %v6231, %v6694
      %v6887 = vsel %vm6823, %v6230, %v6695
      %v6888 = vsel %vm6824, %v6229, %v6696
      %v6889 = vsel %vm6825, %v6228, %v6697
      %v6890 = vsel %vm6826, %v6227, %v6698
      %v6891 = vsel %vm6827, %v6226, %v6699
      %v6892 = vsel %vm6828, %v6225, %v6700
      %v6893 = vsel %vm6829, %v6224, %v6701
      %v6894 = vsel %vm6830, %v6223, %v6702
      %v6895 = vsel %vm6831, %v6222, %v6703
      %v6896 = vsel %vm6832, %v6221, %v6704
      %v6897 = vsel %vm6833, %v6220, %v6705
      %v6898 = vsel %vm6834, %v6219, %v6706
      %v6899 = vsel %vm6835, %v6218, %v6707
      %v6900 = vsel %vm6836, %v6217, %v6708
      %v6901 = vsel %vm6837, %v6216, %v6709
      %v6902 = vsel %vm6838, %v6215, %v6710
      %v6903 = vsel %vm6839, %v6214, %v6711
      %v6904 = vsel %vm6840, %v6213, %v6712
      %v6905 = vsel %vm6841, %v6212, %v6713
      %v6906 = vsel %vm6842, %v6211, %v6714
      %v6907 = vsel %vm6843, %v6210, %v6715
      %v6908 = vsel %vm6844, %v6209, %v6716
      %v6909 = vsel %vm6845, %v6208, %v6717
      %v6910 = vsel %vm6846, %v6207, %v6718
      %v6911 = vsel %vm6847, %v6270, %v6719
      %v6912 = vpack.c.bf16 %v6849, %v6848
      %v6913 = vpack.c.bf16 %v6851, %v6850
      %v6914 = vpack.c.bf16 %v6853, %v6852
      %v6915 = vpack.c.bf16 %v6855, %v6854
      %v6916 = vpack.c.bf16 %v6857, %v6856
      %v6917 = vpack.c.bf16 %v6859, %v6858
      %v6918 = vpack.c.bf16 %v6861, %v6860
      %v6919 = vpack.c.bf16 %v6863, %v6862
      %v6920 = vpack.c.bf16 %v6865, %v6864
      %v6921 = vpack.c.bf16 %v6867, %v6866
      %v6922 = vpack.c.bf16 %v6869, %v6868
      %v6923 = vpack.c.bf16 %v6871, %v6870
      %v6924 = vpack.c.bf16 %v6873, %v6872
      %v6925 = vpack.c.bf16 %v6875, %v6874
      %v6926 = vpack.c.bf16 %v6877, %v6876
      %v6927 = vpack.c.bf16 %v6879, %v6878
      %v6928 = vpack.c.bf16 %v6881, %v6880
      %v6929 = vpack.c.bf16 %v6883, %v6882
      %v6930 = vpack.c.bf16 %v6885, %v6884
      %v6931 = vpack.c.bf16 %v6887, %v6886
      %v6932 = vpack.c.bf16 %v6889, %v6888
      %v6933 = vpack.c.bf16 %v6891, %v6890
      %v6934 = vpack.c.bf16 %v6893, %v6892
      %v6935 = vpack.c.bf16 %v6895, %v6894
      %v6936 = vpack.c.bf16 %v6897, %v6896
      %v6937 = vpack.c.bf16 %v6899, %v6898
      %v6938 = vpack.c.bf16 %v6901, %v6900
      %v6939 = vpack.c.bf16 %v6903, %v6902
      %v6940 = vpack.c.bf16 %v6905, %v6904
      %v6941 = vpack.c.bf16 %v6907, %v6906
      %v6942 = vpack.c.bf16 %v6909, %v6908
      %v6943 = vpack.c.bf16 %v6911, %v6910
      %6944 = vst [vmem:[#allocation2 + $0x10] sm:$0xff] %v6912
      %6945 = vst [vmem:[#allocation2 + $0x18] sm:$0xff] %v6913
      %6946 = vst [vmem:[#allocation2 + $0x20] sm:$0xff] %v6914
      %6947 = vst [vmem:[#allocation2 + $0x28] sm:$0xff] %v6915
      %6948 = vst [vmem:[#allocation2 + $0x30] sm:$0xff] %v6916
      %6949 = vst [vmem:[#allocation2 + $0x38] sm:$0xff] %v6917
      %6950 = vst [vmem:[#allocation2 + $0x40] sm:$0xff] %v6918
      %6951 = vst [vmem:[#allocation2 + $0x48] sm:$0xff] %v6919
      %6952 = vst [vmem:[#allocation2 + $0x50] sm:$0xff] %v6920
      %6953 = vst [vmem:[#allocation2 + $0x58] sm:$0xff] %v6921
      %6954 = vst [vmem:[#allocation2 + $0x60] sm:$0xff] %v6922
      %6955 = vst [vmem:[#allocation2 + $0x68] sm:$0xff] %v6923
      %6956 = vst [vmem:[#allocation2 + $0x70] sm:$0xff] %v6924
      %6957 = vst [vmem:[#allocation2 + $0x78] sm:$0xff] %v6925
      %6958 = vst [vmem:[#allocation2 + $0x80] sm:$0xff] %v6926
      %6959 = vst [vmem:[#allocation2 + $0x88] sm:$0xff] %v6927
      %6960 = vst [vmem:[#allocation2 + $0x90] sm:$0xff] %v6928
      %6961 = vst [vmem:[#allocation2 + $0x98] sm:$0xff] %v6929
      %6962 = vst [vmem:[#allocation2 + $0xa0] sm:$0xff] %v6930
      %6963 = vst [vmem:[#allocation2 + $0xa8] sm:$0xff] %v6931
      %6964 = vst [vmem:[#allocation2 + $0xb0] sm:$0xff] %v6932
      %6965 = vst [vmem:[#allocation2 + $0xb8] sm:$0xff] %v6933
      %6966 = vst [vmem:[#allocation2 + $0xc0] sm:$0xff] %v6934
      %6967 = vst [vmem:[#allocation2 + $0xc8] sm:$0xff] %v6935
      %6968 = vst [vmem:[#allocation2 + $0xd0] sm:$0xff] %v6936
      %6969 = vst [vmem:[#allocation2 + $0xd8] sm:$0xff] %v6937
      %6970 = vst [vmem:[#allocation2 + $0xe0] sm:$0xff] %v6938
      %6971 = vst [vmem:[#allocation2 + $0xe8] sm:$0xff] %v6939
      %6972 = vst [vmem:[#allocation2 + $0xf0] sm:$0xff] %v6940
      %6973 = vst [vmem:[#allocation2 + $0xf8] sm:$0xff] %v6941
      %6974 = vst [vmem:[#allocation2 + $0x100] sm:$0xff] %v6942
      %6975 = vst [vmem:[#allocation2 + $0x108] sm:$0xff] %v6943
      %v6976 = vld [vmem:[#allocation2 + $0x20] sm:$0xff]
      %v6977 = vld [vmem:[#allocation2 + $0x28] sm:$0xff]
      %6978 = vst [vmem:[#allocation2] sm:$0xff] %v6976
      %6979 = vst [vmem:[#allocation2 + $0x8] sm:$0xff] %v6977
      %v6980 = vld [vmem:[#allocation2 + $0xf0] sm:$0xff]
      %v6981 = vld [vmem:[#allocation2 + $0xf8] sm:$0xff]
      %6982 = vst [vmem:[#allocation2 + $0x110] sm:$0xff] %v6980
      %6983 = vst [vmem:[#allocation2 + $0x118] sm:$0xff] %v6981
      %v6984 = vld [vmem:[#allocation2] sm:$0xff]
      %v6985 = vld [vmem:[#allocation2 + $0x8] sm:$0xff]
      %v6986 = vld [vmem:[#allocation2 + $0x10] sm:$0xff]
      %v6987 = vld [vmem:[#allocation2 + $0x18] sm:$0xff]
      %v6988 = vld [vmem:[#allocation2 + $0x20] sm:$0xff]
      %v6989 = vld [vmem:[#allocation2 + $0x28] sm:$0xff]
      %v6990 = vld [vmem:[#allocation2 + $0x30] sm:$0xff]
      %v6991 = vld [vmem:[#allocation2 + $0x38] sm:$0xff]
      %v6992 = vld [vmem:[#allocation2 + $0x40] sm:$0xff]
      %v6993 = vld [vmem:[#allocation2 + $0x48] sm:$0xff]
      %v6994 = vld [vmem:[#allocation2 + $0x50] sm:$0xff]
      %v6995 = vld [vmem:[#allocation2 + $0x58] sm:$0xff]
      %v6996 = vld [vmem:[#allocation2 + $0x60] sm:$0xff]
      %v6997 = vld [vmem:[#allocation2 + $0x68] sm:$0xff]
      %v6998 = vld [vmem:[#allocation2 + $0x70] sm:$0xff]
      %v6999 = vld [vmem:[#allocation2 + $0x78] sm:$0xff]
      %v7000 = vld [vmem:[#allocation2 + $0x80] sm:$0xff]
      %v7001 = vld [vmem:[#allocation2 + $0x88] sm:$0xff]
      %v7002 = vld [vmem:[#allocation2 + $0x90] sm:$0xff]
      %v7003 = vld [vmem:[#allocation2 + $0x98] sm:$0xff]
      %v7004 = vld [vmem:[#allocation2 + $0xa0] sm:$0xff]
      %v7005 = vld [vmem:[#allocation2 + $0xa8] sm:$0xff]
      %v7006 = vld [vmem:[#allocation2 + $0xb0] sm:$0xff]
      %v7007 = vld [vmem:[#allocation2 + $0xb8] sm:$0xff]
      %v7008 = vld [vmem:[#allocation2 + $0xc0] sm:$0xff]
      %v7009 = vld [vmem:[#allocation2 + $0xc8] sm:$0xff]
      %v7010 = vld [vmem:[#allocation2 + $0xd0] sm:$0xff]
      %v7011 = vld [vmem:[#allocation2 + $0xd8] sm:$0xff]
      %v7012 = vld [vmem:[#allocation2 + $0xe0] sm:$0xff]
      %v7013 = vld [vmem:[#allocation2 + $0xe8] sm:$0xff]
      %v7014 = vld [vmem:[#allocation2 + $0xf0] sm:$0xff]
      %v7015 = vld [vmem:[#allocation2 + $0xf8] sm:$0xff]
      %v7016 = vld [vmem:[%s2] sm:$0xf]
      %v7017 = vld [vmem:[%s2 + $0x4] sm:$0xf]
      %v7018 = vld [vmem:[%s2 + $0x8] sm:$0xf]
      %v7019 = vld [vmem:[%s2 + $0xc] sm:$0xf]
      %v7020 = vld [vmem:[%s2 + $0x10] sm:$0xf]
      %v7021 = vld [vmem:[%s2 + $0x14] sm:$0xf]
      %v7022 = vld [vmem:[%s2 + $0x18] sm:$0xf]
      %v7023 = vld [vmem:[%s2 + $0x1c] sm:$0xf]
      %v7024 = vld [vmem:[%s2 + $0x20] sm:$0xf]
      %v7025 = vld [vmem:[%s2 + $0x24] sm:$0xf]
      %v7026 = vld [vmem:[%s2 + $0x28] sm:$0xf]
      %v7027 = vld [vmem:[%s2 + $0x2c] sm:$0xf]
      %v7028 = vld [vmem:[%s2 + $0x30] sm:$0xf]
      %v7029 = vld [vmem:[%s2 + $0x34] sm:$0xf]
      %v7030 = vld [vmem:[%s2 + $0x38] sm:$0xf]
      %v7031 = vld [vmem:[%s2 + $0x3c] sm:$0xf]
      %v7032 = vld [vmem:[#allocation2 + $0x100] sm:$0xff]
      %v7033 = vld [vmem:[#allocation2 + $0x108] sm:$0xff]
      %s7034 = scalar_lea.vmem %s2, 192
      %v7035 = vld [vmem:[%s7034] sm:$0xf]
      %v7036 = vld [vmem:[%s7034 + $0x4] sm:$0xf]
      %v7037 = vld [vmem:[%s7034 + $0x8] sm:$0xf]
      %v7038 = vld [vmem:[%s7034 + $0xc] sm:$0xf]
      %v7039 = vld [vmem:[%s7034 + $0x10] sm:$0xf]
      %v7040 = vld [vmem:[%s7034 + $0x14] sm:$0xf]
      %v7041 = vld [vmem:[%s7034 + $0x18] sm:$0xf]
      %v7042 = vld [vmem:[%s7034 + $0x1c] sm:$0xf]
      %v7043 = vld [vmem:[%s7034 + $0x20] sm:$0xf]
      %v7044 = vld [vmem:[%s7034 + $0x24] sm:$0xf]
      %v7045 = vld [vmem:[%s7034 + $0x28] sm:$0xf]
      %v7046 = vld [vmem:[%s7034 + $0x2c] sm:$0xf]
      %v7047 = vld [vmem:[%s7034 + $0x30] sm:$0xf]
      %v7048 = vld [vmem:[%s7034 + $0x34] sm:$0xf]
      %v7049 = vld [vmem:[%s7034 + $0x38] sm:$0xf]
      %v7050 = vld [vmem:[%s7034 + $0x3c] sm:$0xf]
      %v7067 = vunpack.c.l.b16 %v7035
      %v7068 = vunpack.c.l.b16 %v7036
      %v7069 = vunpack.c.l.b16 %v7037
      %v7070 = vunpack.c.l.b16 %v7038
      %v7071 = vunpack.c.l.b16 %v7039
      %v7072 = vunpack.c.l.b16 %v7040
      %v7073 = vunpack.c.l.b16 %v7041
      %v7074 = vunpack.c.l.b16 %v7042
      %v7075 = vunpack.c.l.b16 %v7043
      %v7076 = vunpack.c.l.b16 %v7044
      %v7077 = vunpack.c.l.b16 %v7045
      %v7078 = vunpack.c.l.b16 %v7046
      %v7079 = vunpack.c.l.b16 %v7047
      %v7080 = vunpack.c.l.b16 %v7048
      %v7081 = vunpack.c.l.b16 %v7049
      %v7082 = vunpack.c.l.b16 %v7050
      %v7083 = vpack.c.b16 %v7068, %v7067
      %v7084 = vpack.c.b16 %v7070, %v7069
      %v7085 = vpack.c.b16 %v7072, %v7071
      %v7086 = vpack.c.b16 %v7074, %v7073
      %v7087 = vpack.c.b16 %v7076, %v7075
      %v7088 = vpack.c.b16 %v7078, %v7077
      %v7089 = vpack.c.b16 %v7080, %v7079
      %v7090 = vpack.c.b16 %v7082, %v7081
      %7099 = vmatprep.subr.bf16.mxu0 0
      %7100 = vmatpush1.bf16.msra.mxu0 %v7083
      %7101 = vmatprep.subr.bf16.mxu0 0
      %7102 = vmatpush1.bf16.msra.mxu0 %v7084
      %7103 = vmatprep.subr.bf16.mxu0 0
      %7104 = vmatpush1.bf16.msra.mxu0 %v7085
      %7105 = vmatprep.subr.bf16.mxu0 0
      %7106 = vmatpush1.bf16.msra.mxu0 %v7086
      %7107 = vmatprep.subr.bf16.mxu0 0
      %7108 = vmatpush1.bf16.msra.mxu0 %v7087
      %7109 = vmatprep.subr.bf16.mxu0 0
      %7110 = vmatpush1.bf16.msra.mxu0 %v7088
      %7111 = vmatprep.subr.bf16.mxu0 0
      %7112 = vmatpush1.bf16.msra.mxu0 %v7089
      %7113 = vmatprep.subr.bf16.mxu0 0
      %7114 = vmatpush1.bf16.msra.mxu0 %v7090
      %7115 = vmatprep.subr.bf16.mxu0 0
      %7116 = vmatpush1.bf16.msra.mxu0 0
      %7117 = vmatprep.subr.bf16.mxu0 0
      %7118 = vmatpush1.bf16.msra.mxu0 0
      %7119 = vmatprep.subr.bf16.mxu0 0
      %7120 = vmatpush1.bf16.msra.mxu0 0
      %7121 = vmatprep.subr.bf16.mxu0 0
      %7122 = vmatpush1.bf16.msra.mxu0 0
      %7123 = vmatprep.subr.bf16.mxu0 0
      %7124 = vmatpush1.bf16.msra.mxu0 0
      %7125 = vmatprep.subr.bf16.mxu0 0
      %7126 = vmatpush1.bf16.msra.mxu0 0
      %7127 = vmatprep.subr.bf16.mxu0 0
      %7128 = vmatpush1.bf16.msra.mxu0 0
      %7129 = vmatprep.subr.bf16.mxu0 0
      %7130 = vmatpush1.bf16.msra.mxu0 0
      %7131 = vmatprep.mubr.bf16.mxu0 0
      %7132 = vmatmul.mubr.bf16.gmra.mrb[0].mxu0 %v6986
      %v7133 = vpop.f32.mrb[0].mxu0
      %v7134 = vadd.f32 0.0, %v7133
      %v7135 = vpop.f32.mrb[0].mxu0
      %v7136 = vpop.f32.mrb[0].mxu0
      %v7137 = vadd.f32 0.0, %v7136
      %v7138 = vpop.f32.mrb[0].mxu0
      %7139 = vmatprep.mubr.bf16.mxu0 0
      %7140 = vmatmul.mubr.bf16.gmra.mrb[0].mxu0 %v6987
      %v7141 = vpop.f32.mrb[0].mxu0
      %v7142 = vadd.f32 0.0, %v7141
      %v7143 = vpop.f32.mrb[0].mxu0
      %v7144 = vpop.f32.mrb[0].mxu0
      %v7145 = vadd.f32 0.0, %v7144
      %v7146 = vpop.f32.mrb[0].mxu0
      %7147 = vmatprep.mubr.bf16.mxu0 0
      %7148 = vmatmul.mubr.bf16.gmra.mrb[0].mxu0 %v6988
      %v7149 = vpop.f32.mrb[0].mxu0
      %v7150 = vadd.f32 0.0, %v7149
      %v7151 = vpop.f32.mrb[0].mxu0
      %v7152 = vpop.f32.mrb[0].mxu0
      %v7153 = vadd.f32 0.0, %v7152
      %v7154 = vpop.f32.mrb[0].mxu0
      %7155 = vmatprep.mubr.bf16.mxu0 0
      %7156 = vmatmul.mubr.bf16.gmra.mrb[0].mxu0 %v6989
      %v7157 = vpop.f32.mrb[0].mxu0
      %v7158 = vadd.f32 0.0, %v7157
      %v7159 = vpop.f32.mrb[0].mxu0
      %v7160 = vpop.f32.mrb[0].mxu0
      %v7161 = vadd.f32 0.0, %v7160
      %v7162 = vpop.f32.mrb[0].mxu0
      %7163 = vmatprep.mubr.bf16.mxu0 0
      %7164 = vmatmul.mubr.bf16.gmra.mrb[0].mxu0 %v6990
      %v7165 = vpop.f32.mrb[0].mxu0
      %v7166 = vadd.f32 0.0, %v7165
      %v7167 = vpop.f32.mrb[0].mxu0
      %v7168 = vpop.f32.mrb[0].mxu0
      %v7169 = vadd.f32 0.0, %v7168
      %v7170 = vpop.f32.mrb[0].mxu0
      %7171 = vmatprep.mubr.bf16.mxu0 0
      %7172 = vmatmul.mubr.bf16.gmra.mrb[0].mxu0 %v6991
      %v7173 = vpop.f32.mrb[0].mxu0
      %v7174 = vadd.f32 0.0, %v7173
      %v7175 = vpop.f32.mrb[0].mxu0
      %v7176 = vpop.f32.mrb[0].mxu0
      %v7177 = vadd.f32 0.0, %v7176
      %v7178 = vpop.f32.mrb[0].mxu0
      %7179 = vmatprep.mubr.bf16.mxu0 0
      %7180 = vmatmul.mubr.bf16.gmra.mrb[0].mxu0 %v6992
      %v7181 = vpop.f32.mrb[0].mxu0
      %v7182 = vadd.f32 0.0, %v7181
      %v7183 = vpop.f32.mrb[0].mxu0
      %v7184 = vpop.f32.mrb[0].mxu0
      %v7185 = vadd.f32 0.0, %v7184
      %v7186 = vpop.f32.mrb[0].mxu0
      %7187 = vmatprep.mubr.bf16.mxu0 0
      %7188 = vmatmul.mubr.bf16.gmra.mrb[0].mxu0 %v6993
      %v7189 = vpop.f32.mrb[0].mxu0
      %v7190 = vadd.f32 0.0, %v7189
      %v7191 = vpop.f32.mrb[0].mxu0
      %v7192 = vpop.f32.mrb[0].mxu0
      %v7193 = vadd.f32 0.0, %v7192
      %v7194 = vpop.f32.mrb[0].mxu0
      %7195 = vmatprep.mubr.bf16.mxu0 0
      %7196 = vmatmul.mubr.bf16.gmra.mrb[0].mxu0 %v6994
      %v7197 = vpop.f32.mrb[0].mxu0
      %v7198 = vadd.f32 0.0, %v7197
      %v7199 = vpop.f32.mrb[0].mxu0
      %v7200 = vpop.f32.mrb[0].mxu0
      %v7201 = vadd.f32 0.0, %v7200
      %v7202 = vpop.f32.mrb[0].mxu0
      %7203 = vmatprep.mubr.bf16.mxu0 0
      %7204 = vmatmul.mubr.bf16.gmra.mrb[0].mxu0 %v6995
      %v7205 = vpop.f32.mrb[0].mxu0
      %v7206 = vadd.f32 0.0, %v7205
      %v7207 = vpop.f32.mrb[0].mxu0
      %v7208 = vpop.f32.mrb[0].mxu0
      %v7209 = vadd.f32 0.0, %v7208
      %v7210 = vpop.f32.mrb[0].mxu0
      %7211 = vmatprep.mubr.bf16.mxu0 0
      %7212 = vmatmul.mubr.bf16.gmra.mrb[0].mxu0 %v6996
      %v7213 = vpop.f32.mrb[0].mxu0
      %v7214 = vadd.f32 0.0, %v7213
      %v7215 = vpop.f32.mrb[0].mxu0
      %v7216 = vpop.f32.mrb[0].mxu0
      %v7217 = vadd.f32 0.0, %v7216
      %v7218 = vpop.f32.mrb[0].mxu0
      %7219 = vmatprep.mubr.bf16.mxu0 0
      %7220 = vmatmul.mubr.bf16.gmra.mrb[0].mxu0 %v6997
      %v7221 = vpop.f32.mrb[0].mxu0
      %v7222 = vadd.f32 0.0, %v7221
      %v7223 = vpop.f32.mrb[0].mxu0
      %v7224 = vpop.f32.mrb[0].mxu0
      %v7225 = vadd.f32 0.0, %v7224
      %v7226 = vpop.f32.mrb[0].mxu0
      %7227 = vmatprep.mubr.bf16.mxu0 0
      %7228 = vmatmul.mubr.bf16.gmra.mrb[0].mxu0 %v6998
      %v7229 = vpop.f32.mrb[0].mxu0
      %v7230 = vadd.f32 0.0, %v7229
      %v7231 = vpop.f32.mrb[0].mxu0
      %v7232 = vpop.f32.mrb[0].mxu0
      %v7233 = vadd.f32 0.0, %v7232
      %v7234 = vpop.f32.mrb[0].mxu0
      %7235 = vmatprep.mubr.bf16.mxu0 0
      %7236 = vmatmul.mubr.bf16.gmra.mrb[0].mxu0 %v6999
      %v7237 = vpop.f32.mrb[0].mxu0
      %v7238 = vadd.f32 0.0, %v7237
      %v7239 = vpop.f32.mrb[0].mxu0
      %v7240 = vpop.f32.mrb[0].mxu0
      %v7241 = vadd.f32 0.0, %v7240
      %v7242 = vpop.f32.mrb[0].mxu0
      %7243 = vmatprep.mubr.bf16.mxu0 0
      %7244 = vmatmul.mubr.bf16.gmra.mrb[0].mxu0 %v7000
      %v7245 = vpop.f32.mrb[0].mxu0
      %v7246 = vadd.f32 0.0, %v7245
      %v7247 = vpop.f32.mrb[0].mxu0
      %v7248 = vpop.f32.mrb[0].mxu0
      %v7249 = vadd.f32 0.0, %v7248
      %v7250 = vpop.f32.mrb[0].mxu0
      %7251 = vmatprep.mubr.bf16.mxu0 0
      %7252 = vmatmul.mubr.bf16.gmra.mrb[0].mxu0 %v7001
      %v7253 = vpop.f32.mrb[0].mxu0
      %v7254 = vadd.f32 0.0, %v7253
      %v7255 = vpop.f32.mrb[0].mxu0
      %v7256 = vpop.f32.mrb[0].mxu0
      %v7257 = vadd.f32 0.0, %v7256
      %v7258 = vpop.f32.mrb[0].mxu0
      %7259 = vmatprep.mubr.bf16.mxu0 0
      %7260 = vmatmul.mubr.bf16.gmra.mrb[0].mxu0 %v7002
      %v7261 = vpop.f32.mrb[0].mxu0
      %v7262 = vadd.f32 0.0, %v7261
      %v7263 = vpop.f32.mrb[0].mxu0
      %v7264 = vpop.f32.mrb[0].mxu0
      %v7265 = vadd.f32 0.0, %v7264
      %v7266 = vpop.f32.mrb[0].mxu0
      %7267 = vmatprep.mubr.bf16.mxu0 0
      %7268 = vmatmul.mubr.bf16.gmra.mrb[0].mxu0 %v7003
      %v7269 = vpop.f32.mrb[0].mxu0
      %v7270 = vadd.f32 0.0, %v7269
      %v7271 = vpop.f32.mrb[0].mxu0
      %v7272 = vpop.f32.mrb[0].mxu0
      %v7273 = vadd.f32 0.0, %v7272
      %v7274 = vpop.f32.mrb[0].mxu0
      %7275 = vmatprep.mubr.bf16.mxu0 0
      %7276 = vmatmul.mubr.bf16.gmra.mrb[0].mxu0 %v7004
      %v7277 = vpop.f32.mrb[0].mxu0
      %v7278 = vadd.f32 0.0, %v7277
      %v7279 = vpop.f32.mrb[0].mxu0
      %v7280 = vpop.f32.mrb[0].mxu0
      %v7281 = vadd.f32 0.0, %v7280
      %v7282 = vpop.f32.mrb[0].mxu0
      %7283 = vmatprep.mubr.bf16.mxu0 0
      %7284 = vmatmul.mubr.bf16.gmra.mrb[0].mxu0 %v7005
      %v7285 = vpop.f32.mrb[0].mxu0
      %v7286 = vadd.f32 0.0, %v7285
      %v7287 = vpop.f32.mrb[0].mxu0
      %v7288 = vpop.f32.mrb[0].mxu0
      %v7289 = vadd.f32 0.0, %v7288
      %v7290 = vpop.f32.mrb[0].mxu0
      %7291 = vmatprep.mubr.bf16.mxu0 0
      %7292 = vmatmul.mubr.bf16.gmra.mrb[0].mxu0 %v7006
      %v7293 = vpop.f32.mrb[0].mxu0
      %v7294 = vadd.f32 0.0, %v7293
      %v7295 = vpop.f32.mrb[0].mxu0
      %v7296 = vpop.f32.mrb[0].mxu0
      %v7297 = vadd.f32 0.0, %v7296
      %v7298 = vpop.f32.mrb[0].mxu0
      %7299 = vmatprep.mubr.bf16.mxu0 0
      %7300 = vmatmul.mubr.bf16.gmra.mrb[0].mxu0 %v7007
      %v7301 = vpop.f32.mrb[0].mxu0
      %v7302 = vadd.f32 0.0, %v7301
      %v7303 = vpop.f32.mrb[0].mxu0
      %v7304 = vpop.f32.mrb[0].mxu0
      %v7305 = vadd.f32 0.0, %v7304
      %v7306 = vpop.f32.mrb[0].mxu0
      %7307 = vmatprep.mubr.bf16.mxu0 0
      %7308 = vmatmul.mubr.bf16.gmra.mrb[0].mxu0 %v7008
      %v7309 = vpop.f32.mrb[0].mxu0
      %v7310 = vadd.f32 0.0, %v7309
      %v7311 = vpop.f32.mrb[0].mxu0
      %v7312 = vpop.f32.mrb[0].mxu0
      %v7313 = vadd.f32 0.0, %v7312
      %v7314 = vpop.f32.mrb[0].mxu0
      %7315 = vmatprep.mubr.bf16.mxu0 0
      %7316 = vmatmul.mubr.bf16.gmra.mrb[0].mxu0 %v7009
      %v7317 = vpop.f32.mrb[0].mxu0
      %v7318 = vadd.f32 0.0, %v7317
      %v7319 = vpop.f32.mrb[0].mxu0
      %v7320 = vpop.f32.mrb[0].mxu0
      %v7321 = vadd.f32 0.0, %v7320
      %v7322 = vpop.f32.mrb[0].mxu0
      %7323 = vmatprep.mubr.bf16.mxu0 0
      %7324 = vmatmul.mubr.bf16.gmra.mrb[0].mxu0 %v7010
      %v7325 = vpop.f32.mrb[0].mxu0
      %v7326 = vadd.f32 0.0, %v7325
      %v7327 = vpop.f32.mrb[0].mxu0
      %v7328 = vpop.f32.mrb[0].mxu0
      %v7329 = vadd.f32 0.0, %v7328
      %v7330 = vpop.f32.mrb[0].mxu0
      %7331 = vmatprep.mubr.bf16.mxu0 0
      %7332 = vmatmul.mubr.bf16.gmra.mrb[0].mxu0 %v7011
      %v7333 = vpop.f32.mrb[0].mxu0
      %v7334 = vadd.f32 0.0, %v7333
      %v7335 = vpop.f32.mrb[0].mxu0
      %v7336 = vpop.f32.mrb[0].mxu0
      %v7337 = vadd.f32 0.0, %v7336
      %v7338 = vpop.f32.mrb[0].mxu0
      %7339 = vmatprep.mubr.bf16.mxu0 0
      %7340 = vmatmul.mubr.bf16.gmra.mrb[0].mxu0 %v7012
      %v7341 = vpop.f32.mrb[0].mxu0
      %v7342 = vadd.f32 0.0, %v7341
      %v7343 = vpop.f32.mrb[0].mxu0
      %v7344 = vpop.f32.mrb[0].mxu0
      %v7345 = vadd.f32 0.0, %v7344
      %v7346 = vpop.f32.mrb[0].mxu0
      %7347 = vmatprep.mubr.bf16.mxu0 0
      %7348 = vmatmul.mubr.bf16.gmra.mrb[0].mxu0 %v7013
      %v7349 = vpop.f32.mrb[0].mxu0
      %v7350 = vadd.f32 0.0, %v7349
      %v7351 = vpop.f32.mrb[0].mxu0
      %v7352 = vpop.f32.mrb[0].mxu0
      %v7353 = vadd.f32 0.0, %v7352
      %v7354 = vpop.f32.mrb[0].mxu0
      %7355 = vmatprep.mubr.bf16.mxu0 0
      %7356 = vmatmul.mubr.bf16.gmra.mrb[0].mxu0 %v7014
      %v7357 = vpop.f32.mrb[0].mxu0
      %v7358 = vadd.f32 0.0, %v7357
      %v7359 = vpop.f32.mrb[0].mxu0
      %v7360 = vpop.f32.mrb[0].mxu0
      %v7361 = vadd.f32 0.0, %v7360
      %v7362 = vpop.f32.mrb[0].mxu0
      %7363 = vmatprep.mubr.bf16.mxu0 0
      %7364 = vmatmul.mubr.bf16.gmra.mrb[0].mxu0 %v7015
      %v7365 = vpop.f32.mrb[0].mxu0
      %v7366 = vadd.f32 0.0, %v7365
      %v7367 = vpop.f32.mrb[0].mxu0
      %v7368 = vpop.f32.mrb[0].mxu0
      %v7369 = vadd.f32 0.0, %v7368
      %v7370 = vpop.f32.mrb[0].mxu0
      %7371 = vmatprep.mubr.bf16.mxu0 0
      %7372 = vmatmul.mubr.bf16.gmra.mrb[0].mxu0 %v7032
      %v7373 = vpop.f32.mrb[0].mxu0
      %v7374 = vadd.f32 0.0, %v7373
      %v7375 = vpop.f32.mrb[0].mxu0
      %v7376 = vpop.f32.mrb[0].mxu0
      %v7377 = vadd.f32 0.0, %v7376
      %v7378 = vpop.f32.mrb[0].mxu0
      %7379 = vmatprep.mubr.bf16.mxu0 0
      %7380 = vmatmul.mubr.bf16.gmra.mrb[0].mxu0 %v7033
      %v7381 = vpop.f32.mrb[0].mxu0
      %v7382 = vadd.f32 0.0, %v7381
      %v7383 = vpop.f32.mrb[0].mxu0
      %v7384 = vpop.f32.mrb[0].mxu0
      %v7385 = vadd.f32 0.0, %v7384
      %v7386 = vpop.f32.mrb[0].mxu0
      %7387 = vdwg.mxu0
      %v7404 = vunpack.c.l.b16 %v7016
      %v7405 = vunpack.c.l.b16 %v7017
      %v7406 = vunpack.c.l.b16 %v7018
      %v7407 = vunpack.c.l.b16 %v7019
      %v7408 = vunpack.c.l.b16 %v7020
      %v7409 = vunpack.c.l.b16 %v7021
      %v7410 = vunpack.c.l.b16 %v7022
      %v7411 = vunpack.c.l.b16 %v7023
      %v7412 = vunpack.c.l.b16 %v7024
      %v7413 = vunpack.c.l.b16 %v7025
      %v7414 = vunpack.c.l.b16 %v7026
      %v7415 = vunpack.c.l.b16 %v7027
      %v7416 = vunpack.c.l.b16 %v7028
      %v7417 = vunpack.c.l.b16 %v7029
      %v7418 = vunpack.c.l.b16 %v7030
      %v7419 = vunpack.c.l.b16 %v7031
      %v7420 = vpack.c.b16 %v7405, %v7404
      %v7421 = vpack.c.b16 %v7407, %v7406
      %v7422 = vpack.c.b16 %v7409, %v7408
      %v7423 = vpack.c.b16 %v7411, %v7410
      %v7424 = vpack.c.b16 %v7413, %v7412
      %v7425 = vpack.c.b16 %v7415, %v7414
      %v7426 = vpack.c.b16 %v7417, %v7416
      %v7427 = vpack.c.b16 %v7419, %v7418
      %7436 = vmatprep.subr.bf16.mxu0 0
      %7437 = vmatpush1.bf16.msra.mxu0 %v7420
      %7438 = vmatprep.subr.bf16.mxu0 0
      %7439 = vmatpush1.bf16.msra.mxu0 %v7421
      %7440 = vmatprep.subr.bf16.mxu0 0
      %7441 = vmatpush1.bf16.msra.mxu0 %v7422
      %7442 = vmatprep.subr.bf16.mxu0 0
      %7443 = vmatpush1.bf16.msra.mxu0 %v7423
      %7444 = vmatprep.subr.bf16.mxu0 0
      %7445 = vmatpush1.bf16.msra.mxu0 %v7424
      %7446 = vmatprep.subr.bf16.mxu0 0
      %7447 = vmatpush1.bf16.msra.mxu0 %v7425
      %7448 = vmatprep.subr.bf16.mxu0 0
      %7449 = vmatpush1.bf16.msra.mxu0 %v7426
      %7450 = vmatprep.subr.bf16.mxu0 0
      %7451 = vmatpush1.bf16.msra.mxu0 %v7427
      %7452 = vmatprep.subr.bf16.mxu0 0
      %7453 = vmatpush1.bf16.msra.mxu0 0
      %7454 = vmatprep.subr.bf16.mxu0 0
      %7455 = vmatpush1.bf16.msra.mxu0 0
      %7456 = vmatprep.subr.bf16.mxu0 0
      %7457 = vmatpush1.bf16.msra.mxu0 0
      %7458 = vmatprep.subr.bf16.mxu0 0
      %7459 = vmatpush1.bf16.msra.mxu0 0
      %7460 = vmatprep.subr.bf16.mxu0 0
      %7461 = vmatpush1.bf16.msra.mxu0 0
      %7462 = vmatprep.subr.bf16.mxu0 0
      %7463 = vmatpush1.bf16.msra.mxu0 0
      %7464 = vmatprep.subr.bf16.mxu0 0
      %7465 = vmatpush1.bf16.msra.mxu0 0
      %7466 = vmatprep.subr.bf16.mxu0 0
      %7467 = vmatpush1.bf16.msra.mxu0 0
      %7468 = vmatprep.mubr.bf16.mxu0 0
      %7469 = vmatmul.mubr.bf16.gmra.mrb[0].mxu0 %v6984
      %v7470 = vpop.f32.mrb[0].mxu0
      %v7471 = vadd.f32 %v7134, %v7470
      %v7472 = vpop.f32.mrb[0].mxu0
      %v7473 = vpop.f32.mrb[0].mxu0
      %v7474 = vadd.f32 %v7137, %v7473
      %v7475 = vpop.f32.mrb[0].mxu0
      %7476 = vmatprep.mubr.bf16.mxu0 0
      %7477 = vmatmul.mubr.bf16.gmra.mrb[0].mxu0 %v6985
      %v7478 = vpop.f32.mrb[0].mxu0
      %v7479 = vadd.f32 %v7142, %v7478
      %v7480 = vpop.f32.mrb[0].mxu0
      %v7481 = vpop.f32.mrb[0].mxu0
      %v7482 = vadd.f32 %v7145, %v7481
      %v7483 = vpop.f32.mrb[0].mxu0
      %7484 = vmatprep.mubr.bf16.mxu0 0
      %7485 = vmatmul.mubr.bf16.gmra.mrb[0].mxu0 %v6986
      %v7486 = vpop.f32.mrb[0].mxu0
      %v7487 = vadd.f32 %v7150, %v7486
      %v7488 = vpop.f32.mrb[0].mxu0
      %v7489 = vpop.f32.mrb[0].mxu0
      %v7490 = vadd.f32 %v7153, %v7489
      %v7491 = vpop.f32.mrb[0].mxu0
      %7492 = vmatprep.mubr.bf16.mxu0 0
      %7493 = vmatmul.mubr.bf16.gmra.mrb[0].mxu0 %v6987
      %v7494 = vpop.f32.mrb[0].mxu0
      %v7495 = vadd.f32 %v7158, %v7494
      %v7496 = vpop.f32.mrb[0].mxu0
      %v7497 = vpop.f32.mrb[0].mxu0
      %v7498 = vadd.f32 %v7161, %v7497
      %v7499 = vpop.f32.mrb[0].mxu0
      %7500 = vmatprep.mubr.bf16.mxu0 0
      %7501 = vmatmul.mubr.bf16.gmra.mrb[0].mxu0 %v6988
      %v7502 = vpop.f32.mrb[0].mxu0
      %v7503 = vadd.f32 %v7166, %v7502
      %v7504 = vpop.f32.mrb[0].mxu0
      %v7505 = vpop.f32.mrb[0].mxu0
      %v7506 = vadd.f32 %v7169, %v7505
      %v7507 = vpop.f32.mrb[0].mxu0
      %7508 = vmatprep.mubr.bf16.mxu0 0
      %7509 = vmatmul.mubr.bf16.gmra.mrb[0].mxu0 %v6989
      %v7510 = vpop.f32.mrb[0].mxu0
      %v7511 = vadd.f32 %v7174, %v7510
      %v7512 = vpop.f32.mrb[0].mxu0
      %v7513 = vpop.f32.mrb[0].mxu0
      %v7514 = vadd.f32 %v7177, %v7513
      %v7515 = vpop.f32.mrb[0].mxu0
      %7516 = vmatprep.mubr.bf16.mxu0 0
      %7517 = vmatmul.mubr.bf16.gmra.mrb[0].mxu0 %v6990
      %v7518 = vpop.f32.mrb[0].mxu0
      %v7519 = vadd.f32 %v7182, %v7518
      %v7520 = vpop.f32.mrb[0].mxu0
      %v7521 = vpop.f32.mrb[0].mxu0
      %v7522 = vadd.f32 %v7185, %v7521
      %v7523 = vpop.f32.mrb[0].mxu0
      %7524 = vmatprep.mubr.bf16.mxu0 0
      %7525 = vmatmul.mubr.bf16.gmra.mrb[0].mxu0 %v6991
      %v7526 = vpop.f32.mrb[0].mxu0
      %v7527 = vadd.f32 %v7190, %v7526
      %v7528 = vpop.f32.mrb[0].mxu0
      %v7529 = vpop.f32.mrb[0].mxu0
      %v7530 = vadd.f32 %v7193, %v7529
      %v7531 = vpop.f32.mrb[0].mxu0
      %7532 = vmatprep.mubr.bf16.mxu0 0
      %7533 = vmatmul.mubr.bf16.gmra.mrb[0].mxu0 %v6992
      %v7534 = vpop.f32.mrb[0].mxu0
      %v7535 = vadd.f32 %v7198, %v7534
      %v7536 = vpop.f32.mrb[0].mxu0
      %v7537 = vpop.f32.mrb[0].mxu0
      %v7538 = vadd.f32 %v7201, %v7537
      %v7539 = vpop.f32.mrb[0].mxu0
      %7540 = vmatprep.mubr.bf16.mxu0 0
      %7541 = vmatmul.mubr.bf16.gmra.mrb[0].mxu0 %v6993
      %v7542 = vpop.f32.mrb[0].mxu0
      %v7543 = vadd.f32 %v7206, %v7542
      %v7544 = vpop.f32.mrb[0].mxu0
      %v7545 = vpop.f32.mrb[0].mxu0
      %v7546 = vadd.f32 %v7209, %v7545
      %v7547 = vpop.f32.mrb[0].mxu0
      %7548 = vmatprep.mubr.bf16.mxu0 0
      %7549 = vmatmul.mubr.bf16.gmra.mrb[0].mxu0 %v6994
      %v7550 = vpop.f32.mrb[0].mxu0
      %v7551 = vadd.f32 %v7214, %v7550
      %v7552 = vpop.f32.mrb[0].mxu0
      %v7553 = vpop.f32.mrb[0].mxu0
      %v7554 = vadd.f32 %v7217, %v7553
      %v7555 = vpop.f32.mrb[0].mxu0
      %7556 = vmatprep.mubr.bf16.mxu0 0
      %7557 = vmatmul.mubr.bf16.gmra.mrb[0].mxu0 %v6995
      %v7558 = vpop.f32.mrb[0].mxu0
      %v7559 = vadd.f32 %v7222, %v7558
      %v7560 = vpop.f32.mrb[0].mxu0
      %v7561 = vpop.f32.mrb[0].mxu0
      %v7562 = vadd.f32 %v7225, %v7561
      %v7563 = vpop.f32.mrb[0].mxu0
      %7564 = vmatprep.mubr.bf16.mxu0 0
      %7565 = vmatmul.mubr.bf16.gmra.mrb[0].mxu0 %v6996
      %v7566 = vpop.f32.mrb[0].mxu0
      %v7567 = vadd.f32 %v7230, %v7566
      %v7568 = vpop.f32.mrb[0].mxu0
      %v7569 = vpop.f32.mrb[0].mxu0
      %v7570 = vadd.f32 %v7233, %v7569
      %v7571 = vpop.f32.mrb[0].mxu0
      %7572 = vmatprep.mubr.bf16.mxu0 0
      %7573 = vmatmul.mubr.bf16.gmra.mrb[0].mxu0 %v6997
      %v7574 = vpop.f32.mrb[0].mxu0
      %v7575 = vadd.f32 %v7238, %v7574
      %v7576 = vpop.f32.mrb[0].mxu0
      %v7577 = vpop.f32.mrb[0].mxu0
      %v7578 = vadd.f32 %v7241, %v7577
      %v7579 = vpop.f32.mrb[0].mxu0
      %7580 = vmatprep.mubr.bf16.mxu0 0
      %7581 = vmatmul.mubr.bf16.gmra.mrb[0].mxu0 %v6998
      %v7582 = vpop.f32.mrb[0].mxu0
      %v7583 = vadd.f32 %v7246, %v7582
      %v7584 = vpop.f32.mrb[0].mxu0
      %v7585 = vpop.f32.mrb[0].mxu0
      %v7586 = vadd.f32 %v7249, %v7585
      %v7587 = vpop.f32.mrb[0].mxu0
      %7588 = vmatprep.mubr.bf16.mxu0 0
      %7589 = vmatmul.mubr.bf16.gmra.mrb[0].mxu0 %v6999
      %v7590 = vpop.f32.mrb[0].mxu0
      %v7591 = vadd.f32 %v7254, %v7590
      %v7592 = vpop.f32.mrb[0].mxu0
      %v7593 = vpop.f32.mrb[0].mxu0
      %v7594 = vadd.f32 %v7257, %v7593
      %v7595 = vpop.f32.mrb[0].mxu0
      %7596 = vmatprep.mubr.bf16.mxu0 0
      %7597 = vmatmul.mubr.bf16.gmra.mrb[0].mxu0 %v7000
      %v7598 = vpop.f32.mrb[0].mxu0
      %v7599 = vadd.f32 %v7262, %v7598
      %v7600 = vpop.f32.mrb[0].mxu0
      %v7601 = vpop.f32.mrb[0].mxu0
      %v7602 = vadd.f32 %v7265, %v7601
      %v7603 = vpop.f32.mrb[0].mxu0
      %7604 = vmatprep.mubr.bf16.mxu0 0
      %7605 = vmatmul.mubr.bf16.gmra.mrb[0].mxu0 %v7001
      %v7606 = vpop.f32.mrb[0].mxu0
      %v7607 = vadd.f32 %v7270, %v7606
      %v7608 = vpop.f32.mrb[0].mxu0
      %v7609 = vpop.f32.mrb[0].mxu0
      %v7610 = vadd.f32 %v7273, %v7609
      %v7611 = vpop.f32.mrb[0].mxu0
      %7612 = vmatprep.mubr.bf16.mxu0 0
      %7613 = vmatmul.mubr.bf16.gmra.mrb[0].mxu0 %v7002
      %v7614 = vpop.f32.mrb[0].mxu0
      %v7615 = vadd.f32 %v7278, %v7614
      %v7616 = vpop.f32.mrb[0].mxu0
      %v7617 = vpop.f32.mrb[0].mxu0
      %v7618 = vadd.f32 %v7281, %v7617
      %v7619 = vpop.f32.mrb[0].mxu0
      %7620 = vmatprep.mubr.bf16.mxu0 0
      %7621 = vmatmul.mubr.bf16.gmra.mrb[0].mxu0 %v7003
      %v7622 = vpop.f32.mrb[0].mxu0
      %v7623 = vadd.f32 %v7286, %v7622
      %v7624 = vpop.f32.mrb[0].mxu0
      %v7625 = vpop.f32.mrb[0].mxu0
      %v7626 = vadd.f32 %v7289, %v7625
      %v7627 = vpop.f32.mrb[0].mxu0
      %7628 = vmatprep.mubr.bf16.mxu0 0
      %7629 = vmatmul.mubr.bf16.gmra.mrb[0].mxu0 %v7004
      %v7630 = vpop.f32.mrb[0].mxu0
      %v7631 = vadd.f32 %v7294, %v7630
      %v7632 = vpop.f32.mrb[0].mxu0
      %v7633 = vpop.f32.mrb[0].mxu0
      %v7634 = vadd.f32 %v7297, %v7633
      %v7635 = vpop.f32.mrb[0].mxu0
      %7636 = vmatprep.mubr.bf16.mxu0 0
      %7637 = vmatmul.mubr.bf16.gmra.mrb[0].mxu0 %v7005
      %v7638 = vpop.f32.mrb[0].mxu0
      %v7639 = vadd.f32 %v7302, %v7638
      %v7640 = vpop.f32.mrb[0].mxu0
      %v7641 = vpop.f32.mrb[0].mxu0
      %v7642 = vadd.f32 %v7305, %v7641
      %v7643 = vpop.f32.mrb[0].mxu0
      %7644 = vmatprep.mubr.bf16.mxu0 0
      %7645 = vmatmul.mubr.bf16.gmra.mrb[0].mxu0 %v7006
      %v7646 = vpop.f32.mrb[0].mxu0
      %v7647 = vadd.f32 %v7310, %v7646
      %v7648 = vpop.f32.mrb[0].mxu0
      %v7649 = vpop.f32.mrb[0].mxu0
      %v7650 = vadd.f32 %v7313, %v7649
      %v7651 = vpop.f32.mrb[0].mxu0
      %7652 = vmatprep.mubr.bf16.mxu0 0
      %7653 = vmatmul.mubr.bf16.gmra.mrb[0].mxu0 %v7007
      %v7654 = vpop.f32.mrb[0].mxu0
      %v7655 = vadd.f32 %v7318, %v7654
      %v7656 = vpop.f32.mrb[0].mxu0
      %v7657 = vpop.f32.mrb[0].mxu0
      %v7658 = vadd.f32 %v7321, %v7657
      %v7659 = vpop.f32.mrb[0].mxu0
      %7660 = vmatprep.mubr.bf16.mxu0 0
      %7661 = vmatmul.mubr.bf16.gmra.mrb[0].mxu0 %v7008
      %v7662 = vpop.f32.mrb[0].mxu0
      %v7663 = vadd.f32 %v7326, %v7662
      %v7664 = vpop.f32.mrb[0].mxu0
      %v7665 = vpop.f32.mrb[0].mxu0
      %v7666 = vadd.f32 %v7329, %v7665
      %v7667 = vpop.f32.mrb[0].mxu0
      %7668 = vmatprep.mubr.bf16.mxu0 0
      %7669 = vmatmul.mubr.bf16.gmra.mrb[0].mxu0 %v7009
      %v7670 = vpop.f32.mrb[0].mxu0
      %v7671 = vadd.f32 %v7334, %v7670
      %v7672 = vpop.f32.mrb[0].mxu0
      %v7673 = vpop.f32.mrb[0].mxu0
      %v7674 = vadd.f32 %v7337, %v7673
      %v7675 = vpop.f32.mrb[0].mxu0
      %7676 = vmatprep.mubr.bf16.mxu0 0
      %7677 = vmatmul.mubr.bf16.gmra.mrb[0].mxu0 %v7010
      %v7678 = vpop.f32.mrb[0].mxu0
      %v7679 = vadd.f32 %v7342, %v7678
      %v7680 = vpop.f32.mrb[0].mxu0
      %v7681 = vpop.f32.mrb[0].mxu0
      %v7682 = vadd.f32 %v7345, %v7681
      %v7683 = vpop.f32.mrb[0].mxu0
      %7684 = vmatprep.mubr.bf16.mxu0 0
      %7685 = vmatmul.mubr.bf16.gmra.mrb[0].mxu0 %v7011
      %v7686 = vpop.f32.mrb[0].mxu0
      %v7687 = vadd.f32 %v7350, %v7686
      %v7688 = vpop.f32.mrb[0].mxu0
      %v7689 = vpop.f32.mrb[0].mxu0
      %v7690 = vadd.f32 %v7353, %v7689
      %v7691 = vpop.f32.mrb[0].mxu0
      %7692 = vmatprep.mubr.bf16.mxu0 0
      %7693 = vmatmul.mubr.bf16.gmra.mrb[0].mxu0 %v7012
      %v7694 = vpop.f32.mrb[0].mxu0
      %v7695 = vadd.f32 %v7358, %v7694
      %v7696 = vpop.f32.mrb[0].mxu0
      %v7697 = vpop.f32.mrb[0].mxu0
      %v7698 = vadd.f32 %v7361, %v7697
      %v7699 = vpop.f32.mrb[0].mxu0
      %7700 = vmatprep.mubr.bf16.mxu0 0
      %7701 = vmatmul.mubr.bf16.gmra.mrb[0].mxu0 %v7013
      %v7702 = vpop.f32.mrb[0].mxu0
      %v7703 = vadd.f32 %v7366, %v7702
      %v7704 = vpop.f32.mrb[0].mxu0
      %v7705 = vpop.f32.mrb[0].mxu0
      %v7706 = vadd.f32 %v7369, %v7705
      %v7707 = vpop.f32.mrb[0].mxu0
      %7708 = vmatprep.mubr.bf16.mxu0 0
      %7709 = vmatmul.mubr.bf16.gmra.mrb[0].mxu0 %v7014
      %v7710 = vpop.f32.mrb[0].mxu0
      %v7711 = vadd.f32 %v7374, %v7710
      %v7712 = vpop.f32.mrb[0].mxu0
      %v7713 = vpop.f32.mrb[0].mxu0
      %v7714 = vadd.f32 %v7377, %v7713
      %v7715 = vpop.f32.mrb[0].mxu0
      %7716 = vmatprep.mubr.bf16.mxu0 0
      %7717 = vmatmul.mubr.bf16.gmra.mrb[0].mxu0 %v7015
      %v7718 = vpop.f32.mrb[0].mxu0
      %v7719 = vadd.f32 %v7382, %v7718
      %v7720 = vpop.f32.mrb[0].mxu0
      %v7721 = vpop.f32.mrb[0].mxu0
      %v7722 = vadd.f32 %v7385, %v7721
      %v7723 = vpop.f32.mrb[0].mxu0
      %7724 = vdwg.mxu0
      %v7725 = vld [vmem:[#allocation2 + $0x20] sm:$0xff]
      %v7726 = vld [vmem:[#allocation2 + $0x28] sm:$0xff]
      %v7727 = vld [vmem:[#allocation2 + $0x30] sm:$0xff]
      %v7728 = vld [vmem:[#allocation2 + $0x38] sm:$0xff]
      %v7729 = vld [vmem:[#allocation2 + $0x40] sm:$0xff]
      %v7730 = vld [vmem:[#allocation2 + $0x48] sm:$0xff]
      %v7731 = vld [vmem:[#allocation2 + $0x50] sm:$0xff]
      %v7732 = vld [vmem:[#allocation2 + $0x58] sm:$0xff]
      %v7733 = vld [vmem:[#allocation2 + $0x60] sm:$0xff]
      %v7734 = vld [vmem:[#allocation2 + $0x68] sm:$0xff]
      %v7735 = vld [vmem:[#allocation2 + $0x70] sm:$0xff]
      %v7736 = vld [vmem:[#allocation2 + $0x78] sm:$0xff]
      %v7737 = vld [vmem:[#allocation2 + $0x80] sm:$0xff]
      %v7738 = vld [vmem:[#allocation2 + $0x88] sm:$0xff]
      %v7739 = vld [vmem:[#allocation2 + $0x90] sm:$0xff]
      %v7740 = vld [vmem:[#allocation2 + $0x98] sm:$0xff]
      %v7741 = vld [vmem:[#allocation2 + $0xa0] sm:$0xff]
      %v7742 = vld [vmem:[#allocation2 + $0xa8] sm:$0xff]
      %v7743 = vld [vmem:[#allocation2 + $0xb0] sm:$0xff]
      %v7744 = vld [vmem:[#allocation2 + $0xb8] sm:$0xff]
      %v7745 = vld [vmem:[#allocation2 + $0xc0] sm:$0xff]
      %v7746 = vld [vmem:[#allocation2 + $0xc8] sm:$0xff]
      %v7747 = vld [vmem:[#allocation2 + $0xd0] sm:$0xff]
      %v7748 = vld [vmem:[#allocation2 + $0xd8] sm:$0xff]
      %v7749 = vld [vmem:[#allocation2 + $0xe0] sm:$0xff]
      %v7750 = vld [vmem:[#allocation2 + $0xe8] sm:$0xff]
      %v7751 = vld [vmem:[#allocation2 + $0xf0] sm:$0xff]
      %v7752 = vld [vmem:[#allocation2 + $0xf8] sm:$0xff]
      %v7753 = vld [vmem:[#allocation2 + $0x100] sm:$0xff]
      %v7754 = vld [vmem:[#allocation2 + $0x108] sm:$0xff]
      %v7755 = vld [vmem:[#allocation2 + $0x110] sm:$0xff]
      %v7756 = vld [vmem:[#allocation2 + $0x118] sm:$0xff]
      %s7757 = scalar_lea.vmem %s2, 384
      %v7758 = vld [vmem:[%s7757] sm:$0xf]
      %v7759 = vld [vmem:[%s7757 + $0x4] sm:$0xf]
      %v7760 = vld [vmem:[%s7757 + $0x8] sm:$0xf]
      %v7761 = vld [vmem:[%s7757 + $0xc] sm:$0xf]
      %v7762 = vld [vmem:[%s7757 + $0x10] sm:$0xf]
      %v7763 = vld [vmem:[%s7757 + $0x14] sm:$0xf]
      %v7764 = vld [vmem:[%s7757 + $0x18] sm:$0xf]
      %v7765 = vld [vmem:[%s7757 + $0x1c] sm:$0xf]
      %v7766 = vld [vmem:[%s7757 + $0x20] sm:$0xf]
      %v7767 = vld [vmem:[%s7757 + $0x24] sm:$0xf]
      %v7768 = vld [vmem:[%s7757 + $0x28] sm:$0xf]
      %v7769 = vld [vmem:[%s7757 + $0x2c] sm:$0xf]
      %v7770 = vld [vmem:[%s7757 + $0x30] sm:$0xf]
      %v7771 = vld [vmem:[%s7757 + $0x34] sm:$0xf]
      %v7772 = vld [vmem:[%s7757 + $0x38] sm:$0xf]
      %v7773 = vld [vmem:[%s7757 + $0x3c] sm:$0xf]
      %v7790 = vunpack.c.l.b16 %v7758
      %v7791 = vunpack.c.l.b16 %v7759
      %v7792 = vunpack.c.l.b16 %v7760
      %v7793 = vunpack.c.l.b16 %v7761
      %v7794 = vunpack.c.l.b16 %v7762
      %v7795 = vunpack.c.l.b16 %v7763
      %v7796 = vunpack.c.l.b16 %v7764
      %v7797 = vunpack.c.l.b16 %v7765
      %v7798 = vunpack.c.l.b16 %v7766
      %v7799 = vunpack.c.l.b16 %v7767
      %v7800 = vunpack.c.l.b16 %v7768
      %v7801 = vunpack.c.l.b16 %v7769
      %v7802 = vunpack.c.l.b16 %v7770
      %v7803 = vunpack.c.l.b16 %v7771
      %v7804 = vunpack.c.l.b16 %v7772
      %v7805 = vunpack.c.l.b16 %v7773
      %v7806 = vpack.c.b16 %v7791, %v7790
      %v7807 = vpack.c.b16 %v7793, %v7792
      %v7808 = vpack.c.b16 %v7795, %v7794
      %v7809 = vpack.c.b16 %v7797, %v7796
      %v7810 = vpack.c.b16 %v7799, %v7798
      %v7811 = vpack.c.b16 %v7801, %v7800
      %v7812 = vpack.c.b16 %v7803, %v7802
      %v7813 = vpack.c.b16 %v7805, %v7804
      %7822 = vmatprep.subr.bf16.mxu0 0
      %7823 = vmatpush1.bf16.msra.mxu0 %v7806
      %7824 = vmatprep.subr.bf16.mxu0 0
      %7825 = vmatpush1.bf16.msra.mxu0 %v7807
      %7826 = vmatprep.subr.bf16.mxu0 0
      %7827 = vmatpush1.bf16.msra.mxu0 %v7808
      %7828 = vmatprep.subr.bf16.mxu0 0
      %7829 = vmatpush1.bf16.msra.mxu0 %v7809
      %7830 = vmatprep.subr.bf16.mxu0 0
      %7831 = vmatpush1.bf16.msra.mxu0 %v7810
      %7832 = vmatprep.subr.bf16.mxu0 0
      %7833 = vmatpush1.bf16.msra.mxu0 %v7811
      %7834 = vmatprep.subr.bf16.mxu0 0
      %7835 = vmatpush1.bf16.msra.mxu0 %v7812
      %7836 = vmatprep.subr.bf16.mxu0 0
      %7837 = vmatpush1.bf16.msra.mxu0 %v7813
      %7838 = vmatprep.subr.bf16.mxu0 0
      %7839 = vmatpush1.bf16.msra.mxu0 0
      %7840 = vmatprep.subr.bf16.mxu0 0
      %7841 = vmatpush1.bf16.msra.mxu0 0
      %7842 = vmatprep.subr.bf16.mxu0 0
      %7843 = vmatpush1.bf16.msra.mxu0 0
      %7844 = vmatprep.subr.bf16.mxu0 0
      %7845 = vmatpush1.bf16.msra.mxu0 0
      %7846 = vmatprep.subr.bf16.mxu0 0
      %7847 = vmatpush1.bf16.msra.mxu0 0
      %7848 = vmatprep.subr.bf16.mxu0 0
      %7849 = vmatpush1.bf16.msra.mxu0 0
      %7850 = vmatprep.subr.bf16.mxu0 0
      %7851 = vmatpush1.bf16.msra.mxu0 0
      %7852 = vmatprep.subr.bf16.mxu0 0
      %7853 = vmatpush1.bf16.msra.mxu0 0
      %7854 = vmatprep.mubr.bf16.mxu0 0
      %7855 = vmatmul.mubr.bf16.gmra.mrb[0].mxu0 %v7725
      %v7856 = vpop.f32.mrb[0].mxu0
      %v7857 = vadd.f32 0.0, %v7856
      %v7858 = vpop.f32.mrb[0].mxu0
      %v7859 = vpop.f32.mrb[0].mxu0
      %v7860 = vadd.f32 0.0, %v7859
      %v7861 = vpop.f32.mrb[0].mxu0
      %7862 = vmatprep.mubr.bf16.mxu0 0
      %7863 = vmatmul.mubr.bf16.gmra.mrb[0].mxu0 %v7726
      %v7864 = vpop.f32.mrb[0].mxu0
      %v7865 = vadd.f32 0.0, %v7864
      %v7866 = vpop.f32.mrb[0].mxu0
      %v7867 = vpop.f32.mrb[0].mxu0
      %v7868 = vadd.f32 0.0, %v7867
      %v7869 = vpop.f32.mrb[0].mxu0
      %7870 = vmatprep.mubr.bf16.mxu0 0
      %7871 = vmatmul.mubr.bf16.gmra.mrb[0].mxu0 %v7727
      %v7872 = vpop.f32.mrb[0].mxu0
      %v7873 = vadd.f32 0.0, %v7872
      %v7874 = vpop.f32.mrb[0].mxu0
      %v7875 = vpop.f32.mrb[0].mxu0
      %v7876 = vadd.f32 0.0, %v7875
      %v7877 = vpop.f32.mrb[0].mxu0
      %7878 = vmatprep.mubr.bf16.mxu0 0
      %7879 = vmatmul.mubr.bf16.gmra.mrb[0].mxu0 %v7728
      %v7880 = vpop.f32.mrb[0].mxu0
      %v7881 = vadd.f32 0.0, %v7880
      %v7882 = vpop.f32.mrb[0].mxu0
      %v7883 = vpop.f32.mrb[0].mxu0
      %v7884 = vadd.f32 0.0, %v7883
      %v7885 = vpop.f32.mrb[0].mxu0
      %7886 = vmatprep.mubr.bf16.mxu0 0
      %7887 = vmatmul.mubr.bf16.gmra.mrb[0].mxu0 %v7729
      %v7888 = vpop.f32.mrb[0].mxu0
      %v7889 = vadd.f32 0.0, %v7888
      %v7890 = vpop.f32.mrb[0].mxu0
      %v7891 = vpop.f32.mrb[0].mxu0
      %v7892 = vadd.f32 0.0, %v7891
      %v7893 = vpop.f32.mrb[0].mxu0
      %7894 = vmatprep.mubr.bf16.mxu0 0
      %7895 = vmatmul.mubr.bf16.gmra.mrb[0].mxu0 %v7730
      %v7896 = vpop.f32.mrb[0].mxu0
      %v7897 = vadd.f32 0.0, %v7896
      %v7898 = vpop.f32.mrb[0].mxu0
      %v7899 = vpop.f32.mrb[0].mxu0
      %v7900 = vadd.f32 0.0, %v7899
      %v7901 = vpop.f32.mrb[0].mxu0
      %7902 = vmatprep.mubr.bf16.mxu0 0
      %7903 = vmatmul.mubr.bf16.gmra.mrb[0].mxu0 %v7731
      %v7904 = vpop.f32.mrb[0].mxu0
      %v7905 = vadd.f32 0.0, %v7904
      %v7906 = vpop.f32.mrb[0].mxu0
      %v7907 = vpop.f32.mrb[0].mxu0
      %v7908 = vadd.f32 0.0, %v7907
      %v7909 = vpop.f32.mrb[0].mxu0
      %7910 = vmatprep.mubr.bf16.mxu0 0
      %7911 = vmatmul.mubr.bf16.gmra.mrb[0].mxu0 %v7732
      %v7912 = vpop.f32.mrb[0].mxu0
      %v7913 = vadd.f32 0.0, %v7912
      %v7914 = vpop.f32.mrb[0].mxu0
      %v7915 = vpop.f32.mrb[0].mxu0
      %v7916 = vadd.f32 0.0, %v7915
      %v7917 = vpop.f32.mrb[0].mxu0
      %7918 = vmatprep.mubr.bf16.mxu0 0
      %7919 = vmatmul.mubr.bf16.gmra.mrb[0].mxu0 %v7733
      %v7920 = vpop.f32.mrb[0].mxu0
      %v7921 = vadd.f32 0.0, %v7920
      %v7922 = vpop.f32.mrb[0].mxu0
      %v7923 = vpop.f32.mrb[0].mxu0
      %v7924 = vadd.f32 0.0, %v7923
      %v7925 = vpop.f32.mrb[0].mxu0
      %7926 = vmatprep.mubr.bf16.mxu0 0
      %7927 = vmatmul.mubr.bf16.gmra.mrb[0].mxu0 %v7734
      %v7928 = vpop.f32.mrb[0].mxu0
      %v7929 = vadd.f32 0.0, %v7928
      %v7930 = vpop.f32.mrb[0].mxu0
      %v7931 = vpop.f32.mrb[0].mxu0
      %v7932 = vadd.f32 0.0, %v7931
      %v7933 = vpop.f32.mrb[0].mxu0
      %7934 = vmatprep.mubr.bf16.mxu0 0
      %7935 = vmatmul.mubr.bf16.gmra.mrb[0].mxu0 %v7735
      %v7936 = vpop.f32.mrb[0].mxu0
      %v7937 = vadd.f32 0.0, %v7936
      %v7938 = vpop.f32.mrb[0].mxu0
      %v7939 = vpop.f32.mrb[0].mxu0
      %v7940 = vadd.f32 0.0, %v7939
      %v7941 = vpop.f32.mrb[0].mxu0
      %7942 = vmatprep.mubr.bf16.mxu0 0
      %7943 = vmatmul.mubr.bf16.gmra.mrb[0].mxu0 %v7736
      %v7944 = vpop.f32.mrb[0].mxu0
      %v7945 = vadd.f32 0.0, %v7944
      %v7946 = vpop.f32.mrb[0].mxu0
      %v7947 = vpop.f32.mrb[0].mxu0
      %v7948 = vadd.f32 0.0, %v7947
      %v7949 = vpop.f32.mrb[0].mxu0
      %7950 = vmatprep.mubr.bf16.mxu0 0
      %7951 = vmatmul.mubr.bf16.gmra.mrb[0].mxu0 %v7737
      %v7952 = vpop.f32.mrb[0].mxu0
      %v7953 = vadd.f32 0.0, %v7952
      %v7954 = vpop.f32.mrb[0].mxu0
      %v7955 = vpop.f32.mrb[0].mxu0
      %v7956 = vadd.f32 0.0, %v7955
      %v7957 = vpop.f32.mrb[0].mxu0
      %7958 = vmatprep.mubr.bf16.mxu0 0
      %7959 = vmatmul.mubr.bf16.gmra.mrb[0].mxu0 %v7738
      %v7960 = vpop.f32.mrb[0].mxu0
      %v7961 = vadd.f32 0.0, %v7960
      %v7962 = vpop.f32.mrb[0].mxu0
      %v7963 = vpop.f32.mrb[0].mxu0
      %v7964 = vadd.f32 0.0, %v7963
      %v7965 = vpop.f32.mrb[0].mxu0
      %7966 = vmatprep.mubr.bf16.mxu0 0
      %7967 = vmatmul.mubr.bf16.gmra.mrb[0].mxu0 %v7739
      %v7968 = vpop.f32.mrb[0].mxu0
      %v7969 = vadd.f32 0.0, %v7968
      %v7970 = vpop.f32.mrb[0].mxu0
      %v7971 = vpop.f32.mrb[0].mxu0
      %v7972 = vadd.f32 0.0, %v7971
      %v7973 = vpop.f32.mrb[0].mxu0
      %7974 = vmatprep.mubr.bf16.mxu0 0
      %7975 = vmatmul.mubr.bf16.gmra.mrb[0].mxu0 %v7740
      %v7976 = vpop.f32.mrb[0].mxu0
      %v7977 = vadd.f32 0.0, %v7976
      %v7978 = vpop.f32.mrb[0].mxu0
      %v7979 = vpop.f32.mrb[0].mxu0
      %v7980 = vadd.f32 0.0, %v7979
      %v7981 = vpop.f32.mrb[0].mxu0
      %7982 = vmatprep.mubr.bf16.mxu0 0
      %7983 = vmatmul.mubr.bf16.gmra.mrb[0].mxu0 %v7741
      %v7984 = vpop.f32.mrb[0].mxu0
      %v7985 = vadd.f32 0.0, %v7984
      %v7986 = vpop.f32.mrb[0].mxu0
      %v7987 = vpop.f32.mrb[0].mxu0
      %v7988 = vadd.f32 0.0, %v7987
      %v7989 = vpop.f32.mrb[0].mxu0
      %7990 = vmatprep.mubr.bf16.mxu0 0
      %7991 = vmatmul.mubr.bf16.gmra.mrb[0].mxu0 %v7742
      %v7992 = vpop.f32.mrb[0].mxu0
      %v7993 = vadd.f32 0.0, %v7992
      %v7994 = vpop.f32.mrb[0].mxu0
      %v7995 = vpop.f32.mrb[0].mxu0
      %v7996 = vadd.f32 0.0, %v7995
      %v7997 = vpop.f32.mrb[0].mxu0
      %7998 = vmatprep.mubr.bf16.mxu0 0
      %7999 = vmatmul.mubr.bf16.gmra.mrb[0].mxu0 %v7743
      %v8000 = vpop.f32.mrb[0].mxu0
      %v8001 = vadd.f32 0.0, %v8000
      %v8002 = vpop.f32.mrb[0].mxu0
      %v8003 = vpop.f32.mrb[0].mxu0
      %v8004 = vadd.f32 0.0, %v8003
      %v8005 = vpop.f32.mrb[0].mxu0
      %8006 = vmatprep.mubr.bf16.mxu0 0
      %8007 = vmatmul.mubr.bf16.gmra.mrb[0].mxu0 %v7744
      %v8008 = vpop.f32.mrb[0].mxu0
      %v8009 = vadd.f32 0.0, %v8008
      %v8010 = vpop.f32.mrb[0].mxu0
      %v8011 = vpop.f32.mrb[0].mxu0
      %v8012 = vadd.f32 0.0, %v8011
      %v8013 = vpop.f32.mrb[0].mxu0
      %8014 = vmatprep.mubr.bf16.mxu0 0
      %8015 = vmatmul.mubr.bf16.gmra.mrb[0].mxu0 %v7745
      %v8016 = vpop.f32.mrb[0].mxu0
      %v8017 = vadd.f32 0.0, %v8016
      %v8018 = vpop.f32.mrb[0].mxu0
      %v8019 = vpop.f32.mrb[0].mxu0
      %v8020 = vadd.f32 0.0, %v8019
      %v8021 = vpop.f32.mrb[0].mxu0
      %8022 = vmatprep.mubr.bf16.mxu0 0
      %8023 = vmatmul.mubr.bf16.gmra.mrb[0].mxu0 %v7746
      %v8024 = vpop.f32.mrb[0].mxu0
      %v8025 = vadd.f32 0.0, %v8024
      %v8026 = vpop.f32.mrb[0].mxu0
      %v8027 = vpop.f32.mrb[0].mxu0
      %v8028 = vadd.f32 0.0, %v8027
      %v8029 = vpop.f32.mrb[0].mxu0
      %8030 = vmatprep.mubr.bf16.mxu0 0
      %8031 = vmatmul.mubr.bf16.gmra.mrb[0].mxu0 %v7747
      %v8032 = vpop.f32.mrb[0].mxu0
      %v8033 = vadd.f32 0.0, %v8032
      %v8034 = vpop.f32.mrb[0].mxu0
      %v8035 = vpop.f32.mrb[0].mxu0
      %v8036 = vadd.f32 0.0, %v8035
      %v8037 = vpop.f32.mrb[0].mxu0
      %8038 = vmatprep.mubr.bf16.mxu0 0
      %8039 = vmatmul.mubr.bf16.gmra.mrb[0].mxu0 %v7748
      %v8040 = vpop.f32.mrb[0].mxu0
      %v8041 = vadd.f32 0.0, %v8040
      %v8042 = vpop.f32.mrb[0].mxu0
      %v8043 = vpop.f32.mrb[0].mxu0
      %v8044 = vadd.f32 0.0, %v8043
      %v8045 = vpop.f32.mrb[0].mxu0
      %8046 = vmatprep.mubr.bf16.mxu0 0
      %8047 = vmatmul.mubr.bf16.gmra.mrb[0].mxu0 %v7749
      %v8048 = vpop.f32.mrb[0].mxu0
      %v8049 = vadd.f32 0.0, %v8048
      %v8050 = vpop.f32.mrb[0].mxu0
      %v8051 = vpop.f32.mrb[0].mxu0
      %v8052 = vadd.f32 0.0, %v8051
      %v8053 = vpop.f32.mrb[0].mxu0
      %8054 = vmatprep.mubr.bf16.mxu0 0
      %8055 = vmatmul.mubr.bf16.gmra.mrb[0].mxu0 %v7750
      %v8056 = vpop.f32.mrb[0].mxu0
      %v8057 = vadd.f32 0.0, %v8056
      %v8058 = vpop.f32.mrb[0].mxu0
      %v8059 = vpop.f32.mrb[0].mxu0
      %v8060 = vadd.f32 0.0, %v8059
      %v8061 = vpop.f32.mrb[0].mxu0
      %8062 = vmatprep.mubr.bf16.mxu0 0
      %8063 = vmatmul.mubr.bf16.gmra.mrb[0].mxu0 %v7751
      %v8064 = vpop.f32.mrb[0].mxu0
      %v8065 = vadd.f32 0.0, %v8064
      %v8066 = vpop.f32.mrb[0].mxu0
      %v8067 = vpop.f32.mrb[0].mxu0
      %v8068 = vadd.f32 0.0, %v8067
      %v8069 = vpop.f32.mrb[0].mxu0
      %8070 = vmatprep.mubr.bf16.mxu0 0
      %8071 = vmatmul.mubr.bf16.gmra.mrb[0].mxu0 %v7752
      %v8072 = vpop.f32.mrb[0].mxu0
      %v8073 = vadd.f32 0.0, %v8072
      %v8074 = vpop.f32.mrb[0].mxu0
      %v8075 = vpop.f32.mrb[0].mxu0
      %v8076 = vadd.f32 0.0, %v8075
      %v8077 = vpop.f32.mrb[0].mxu0
      %8078 = vmatprep.mubr.bf16.mxu0 0
      %8079 = vmatmul.mubr.bf16.gmra.mrb[0].mxu0 %v7753
      %v8080 = vpop.f32.mrb[0].mxu0
      %v8081 = vadd.f32 0.0, %v8080
      %v8082 = vpop.f32.mrb[0].mxu0
      %v8083 = vpop.f32.mrb[0].mxu0
      %v8084 = vadd.f32 0.0, %v8083
      %v8085 = vpop.f32.mrb[0].mxu0
      %8086 = vmatprep.mubr.bf16.mxu0 0
      %8087 = vmatmul.mubr.bf16.gmra.mrb[0].mxu0 %v7754
      %v8088 = vpop.f32.mrb[0].mxu0
      %v8089 = vadd.f32 0.0, %v8088
      %v8090 = vpop.f32.mrb[0].mxu0
      %v8091 = vpop.f32.mrb[0].mxu0
      %v8092 = vadd.f32 0.0, %v8091
      %v8093 = vpop.f32.mrb[0].mxu0
      %8094 = vmatprep.mubr.bf16.mxu0 0
      %8095 = vmatmul.mubr.bf16.gmra.mrb[0].mxu0 %v7755
      %v8096 = vpop.f32.mrb[0].mxu0
      %v8097 = vadd.f32 0.0, %v8096
      %v8098 = vpop.f32.mrb[0].mxu0
      %v8099 = vpop.f32.mrb[0].mxu0
      %v8100 = vadd.f32 0.0, %v8099
      %v8101 = vpop.f32.mrb[0].mxu0
      %8102 = vmatprep.mubr.bf16.mxu0 0
      %8103 = vmatmul.mubr.bf16.gmra.mrb[0].mxu0 %v7756
      %v8104 = vpop.f32.mrb[0].mxu0
      %v8105 = vadd.f32 0.0, %v8104
      %v8106 = vpop.f32.mrb[0].mxu0
      %v8107 = vpop.f32.mrb[0].mxu0
      %v8108 = vadd.f32 0.0, %v8107
      %v8109 = vpop.f32.mrb[0].mxu0
      %8110 = vdwg.mxu0
      %v8111 = vadd.f32 %v7471, %v7857
      %v8112 = vadd.f32 %v7474, %v7860
      %v8113 = vadd.f32 %v7479, %v7865
      %v8114 = vadd.f32 %v7482, %v7868
      %v8115 = vadd.f32 %v7487, %v7873
      %v8116 = vadd.f32 %v7490, %v7876
      %v8117 = vadd.f32 %v7495, %v7881
      %v8118 = vadd.f32 %v7498, %v7884
      %v8119 = vadd.f32 %v7503, %v7889
      %v8120 = vadd.f32 %v7506, %v7892
      %v8121 = vadd.f32 %v7511, %v7897
      %v8122 = vadd.f32 %v7514, %v7900
      %v8123 = vadd.f32 %v7519, %v7905
      %v8124 = vadd.f32 %v7522, %v7908
      %v8125 = vadd.f32 %v7527, %v7913
      %v8126 = vadd.f32 %v7530, %v7916
      %v8127 = vadd.f32 %v7535, %v7921
      %v8128 = vadd.f32 %v7538, %v7924
      %v8129 = vadd.f32 %v7543, %v7929
      %v8130 = vadd.f32 %v7546, %v7932
      %v8131 = vadd.f32 %v7551, %v7937
      %v8132 = vadd.f32 %v7554, %v7940
      %v8133 = vadd.f32 %v7559, %v7945
      %v8134 = vadd.f32 %v7562, %v7948
      %v8135 = vadd.f32 %v7567, %v7953
      %v8136 = vadd.f32 %v7570, %v7956
      %v8137 = vadd.f32 %v7575, %v7961
      %v8138 = vadd.f32 %v7578, %v7964
      %v8139 = vadd.f32 %v7583, %v7969
      %v8140 = vadd.f32 %v7586, %v7972
      %v8141 = vadd.f32 %v7591, %v7977
      %v8142 = vadd.f32 %v7594, %v7980
      %v8143 = vadd.f32 %v7599, %v7985
      %v8144 = vadd.f32 %v7602, %v7988
      %v8145 = vadd.f32 %v7607, %v7993
      %v8146 = vadd.f32 %v7610, %v7996
      %v8147 = vadd.f32 %v7615, %v8001
      %v8148 = vadd.f32 %v7618, %v8004
      %v8149 = vadd.f32 %v7623, %v8009
      %v8150 = vadd.f32 %v7626, %v8012
      %v8151 = vadd.f32 %v7631, %v8017
      %v8152 = vadd.f32 %v7634, %v8020
      %v8153 = vadd.f32 %v7639, %v8025
      %v8154 = vadd.f32 %v7642, %v8028
      %v8155 = vadd.f32 %v7647, %v8033
      %v8156 = vadd.f32 %v7650, %v8036
      %v8157 = vadd.f32 %v7655, %v8041
      %v8158 = vadd.f32 %v7658, %v8044
      %v8159 = vadd.f32 %v7663, %v8049
      %v8160 = vadd.f32 %v7666, %v8052
      %v8161 = vadd.f32 %v7671, %v8057
      %v8162 = vadd.f32 %v7674, %v8060
      %v8163 = vadd.f32 %v7679, %v8065
      %v8164 = vadd.f32 %v7682, %v8068
      %v8165 = vadd.f32 %v7687, %v8073
      %v8166 = vadd.f32 %v7690, %v8076
      %v8167 = vadd.f32 %v7695, %v8081
      %v8168 = vadd.f32 %v7698, %v8084
      %v8169 = vadd.f32 %v7703, %v8089
      %v8170 = vadd.f32 %v7706, %v8092
      %v8171 = vadd.f32 %v7711, %v8097
      %v8172 = vadd.f32 %v7714, %v8100
      %v8173 = vadd.f32 %v7719, %v8105
      %v8174 = vadd.f32 %v7722, %v8108
      %v8175 = vrot.slane %v8111, 7
      %v8176 = vrot.slane %v8112, 7
      %v8177 = vrot.slane %v8113, 7
      %v8178 = vrot.slane %v8114, 7
      %v8179 = vrot.slane %v8115, 7
      %v8180 = vrot.slane %v8116, 7
      %v8181 = vrot.slane %v8117, 7
      %v8182 = vrot.slane %v8118, 7
      %v8183 = vrot.slane %v8119, 7
      %v8184 = vrot.slane %v8120, 7
      %v8185 = vrot.slane %v8121, 7
      %v8186 = vrot.slane %v8122, 7
      %v8187 = vrot.slane %v8123, 7
      %v8188 = vrot.slane %v8124, 7
      %v8189 = vrot.slane %v8125, 7
      %v8190 = vrot.slane %v8126, 7
      %v8191 = vrot.slane %v8127, 7
      %v8192 = vrot.slane %v8128, 7
      %v8193 = vrot.slane %v8129, 7
      %v8194 = vrot.slane %v8130, 7
      %v8195 = vrot.slane %v8131, 7
      %v8196 = vrot.slane %v8132, 7
      %v8197 = vrot.slane %v8133, 7
      %v8198 = vrot.slane %v8134, 7
      %v8199 = vrot.slane %v8135, 7
      %v8200 = vrot.slane %v8136, 7
      %v8201 = vrot.slane %v8137, 7
      %v8202 = vrot.slane %v8138, 7
      %v8203 = vrot.slane %v8139, 7
      %v8204 = vrot.slane %v8140, 7
      %v8205 = vrot.slane %v8141, 7
      %v8206 = vrot.slane %v8142, 7
      %v8207 = vrot.slane %v8143, 7
      %v8208 = vrot.slane %v8144, 7
      %v8209 = vrot.slane %v8145, 7
      %v8210 = vrot.slane %v8146, 7
      %v8211 = vrot.slane %v8147, 7
      %v8212 = vrot.slane %v8148, 7
      %v8213 = vrot.slane %v8149, 7
      %v8214 = vrot.slane %v8150, 7
      %v8215 = vrot.slane %v8151, 7
      %v8216 = vrot.slane %v8152, 7
      %v8217 = vrot.slane %v8153, 7
      %v8218 = vrot.slane %v8154, 7
      %v8219 = vrot.slane %v8155, 7
      %v8220 = vrot.slane %v8156, 7
      %v8221 = vrot.slane %v8157, 7
      %v8222 = vrot.slane %v8158, 7
      %v8223 = vrot.slane %v8159, 7
      %v8224 = vrot.slane %v8160, 7
      %v8225 = vrot.slane %v8161, 7
      %v8226 = vrot.slane %v8162, 7
      %v8227 = vrot.slane %v8163, 7
      %v8228 = vrot.slane %v8164, 7
      %v8229 = vrot.slane %v8165, 7
      %v8230 = vrot.slane %v8166, 7
      %v8231 = vrot.slane %v8167, 7
      %v8232 = vrot.slane %v8168, 7
      %v8233 = vrot.slane %v8169, 7
      %v8234 = vrot.slane %v8170, 7
      %v8235 = vrot.slane %v8171, 7
      %v8236 = vrot.slane %v8172, 7
      %v8237 = vrot.slane %v8173, 7
      %v8238 = vrot.slane %v8174, 7
      %v8239 = vsel %vm3042, %v8237, %v8238
      %v8240 = vsel %vm3042, %v8236, %v8237
      %v8241 = vsel %vm3042, %v8235, %v8236
      %v8242 = vsel %vm3042, %v8234, %v8235
      %v8243 = vsel %vm3042, %v8233, %v8234
      %v8244 = vsel %vm3042, %v8232, %v8233
      %v8245 = vsel %vm3042, %v8231, %v8232
      %v8246 = vsel %vm3042, %v8230, %v8231
      %v8247 = vsel %vm3042, %v8229, %v8230
      %v8248 = vsel %vm3042, %v8228, %v8229
      %v8249 = vsel %vm3042, %v8227, %v8228
      %v8250 = vsel %vm3042, %v8226, %v8227
      %v8251 = vsel %vm3042, %v8225, %v8226
      %v8252 = vsel %vm3042, %v8224, %v8225
      %v8253 = vsel %vm3042, %v8223, %v8224
      %v8254 = vsel %vm3042, %v8222, %v8223
      %v8255 = vsel %vm3042, %v8221, %v8222
      %v8256 = vsel %vm3042, %v8220, %v8221
      %v8257 = vsel %vm3042, %v8219, %v8220
      %v8258 = vsel %vm3042, %v8218, %v8219
      %v8259 = vsel %vm3042, %v8217, %v8218
      %v8260 = vsel %vm3042, %v8216, %v8217
      %v8261 = vsel %vm3042, %v8215, %v8216
      %v8262 = vsel %vm3042, %v8214, %v8215
      %v8263 = vsel %vm3042, %v8213, %v8214
      %v8264 = vsel %vm3042, %v8212, %v8213
      %v8265 = vsel %vm3042, %v8211, %v8212
      %v8266 = vsel %vm3042, %v8210, %v8211
      %v8267 = vsel %vm3042, %v8209, %v8210
      %v8268 = vsel %vm3042, %v8208, %v8209
      %v8269 = vsel %vm3042, %v8207, %v8208
      %v8270 = vsel %vm3042, %v8206, %v8207
      %v8271 = vsel %vm3042, %v8205, %v8206
      %v8272 = vsel %vm3042, %v8204, %v8205
      %v8273 = vsel %vm3042, %v8203, %v8204
      %v8274 = vsel %vm3042, %v8202, %v8203
      %v8275 = vsel %vm3042, %v8201, %v8202
      %v8276 = vsel %vm3042, %v8200, %v8201
      %v8277 = vsel %vm3042, %v8199, %v8200
      %v8278 = vsel %vm3042, %v8198, %v8199
      %v8279 = vsel %vm3042, %v8197, %v8198
      %v8280 = vsel %vm3042, %v8196, %v8197
      %v8281 = vsel %vm3042, %v8195, %v8196
      %v8282 = vsel %vm3042, %v8194, %v8195
      %v8283 = vsel %vm3042, %v8193, %v8194
      %v8284 = vsel %vm3042, %v8192, %v8193
      %v8285 = vsel %vm3042, %v8191, %v8192
      %v8286 = vsel %vm3042, %v8190, %v8191
      %v8287 = vsel %vm3042, %v8189, %v8190
      %v8288 = vsel %vm3042, %v8188, %v8189
      %v8289 = vsel %vm3042, %v8187, %v8188
      %v8290 = vsel %vm3042, %v8186, %v8187
      %v8291 = vsel %vm3042, %v8185, %v8186
      %v8292 = vsel %vm3042, %v8184, %v8185
      %v8293 = vsel %vm3042, %v8183, %v8184
      %v8294 = vsel %vm3042, %v8182, %v8183
      %v8295 = vsel %vm3042, %v8181, %v8182
      %v8296 = vsel %vm3042, %v8180, %v8181
      %v8297 = vsel %vm3042, %v8179, %v8180
      %v8298 = vsel %vm3042, %v8178, %v8179
      %v8299 = vsel %vm3042, %v8177, %v8178
      %v8300 = vsel %vm3042, %v8176, %v8177
      %v8301 = vsel %vm3042, %v8175, %v8176
      %v8302 = vsel %vm3042, %v8238, %v8175
      %s8303 = scalar_lea.vmem %s2, 64
      %v8304 = vld [vmem:[%s8303] sm:$0xf]
      %v8305 = vld [vmem:[%s8303 + $0x4] sm:$0xf]
      %v8306 = vld [vmem:[%s8303 + $0x8] sm:$0xf]
      %v8307 = vld [vmem:[%s8303 + $0xc] sm:$0xf]
      %v8308 = vld [vmem:[%s8303 + $0x10] sm:$0xf]
      %v8309 = vld [vmem:[%s8303 + $0x14] sm:$0xf]
      %v8310 = vld [vmem:[%s8303 + $0x18] sm:$0xf]
      %v8311 = vld [vmem:[%s8303 + $0x1c] sm:$0xf]
      %v8312 = vld [vmem:[%s8303 + $0x20] sm:$0xf]
      %v8313 = vld [vmem:[%s8303 + $0x24] sm:$0xf]
      %v8314 = vld [vmem:[%s8303 + $0x28] sm:$0xf]
      %v8315 = vld [vmem:[%s8303 + $0x2c] sm:$0xf]
      %v8316 = vld [vmem:[%s8303 + $0x30] sm:$0xf]
      %v8317 = vld [vmem:[%s8303 + $0x34] sm:$0xf]
      %v8318 = vld [vmem:[%s8303 + $0x38] sm:$0xf]
      %v8319 = vld [vmem:[%s8303 + $0x3c] sm:$0xf]
      %s8320 = scalar_lea.vmem %s2, 256
      %v8321 = vld [vmem:[%s8320] sm:$0xf]
      %v8322 = vld [vmem:[%s8320 + $0x4] sm:$0xf]
      %v8323 = vld [vmem:[%s8320 + $0x8] sm:$0xf]
      %v8324 = vld [vmem:[%s8320 + $0xc] sm:$0xf]
      %v8325 = vld [vmem:[%s8320 + $0x10] sm:$0xf]
      %v8326 = vld [vmem:[%s8320 + $0x14] sm:$0xf]
      %v8327 = vld [vmem:[%s8320 + $0x18] sm:$0xf]
      %v8328 = vld [vmem:[%s8320 + $0x1c] sm:$0xf]
      %v8329 = vld [vmem:[%s8320 + $0x20] sm:$0xf]
      %v8330 = vld [vmem:[%s8320 + $0x24] sm:$0xf]
      %v8331 = vld [vmem:[%s8320 + $0x28] sm:$0xf]
      %v8332 = vld [vmem:[%s8320 + $0x2c] sm:$0xf]
      %v8333 = vld [vmem:[%s8320 + $0x30] sm:$0xf]
      %v8334 = vld [vmem:[%s8320 + $0x34] sm:$0xf]
      %v8335 = vld [vmem:[%s8320 + $0x38] sm:$0xf]
      %v8336 = vld [vmem:[%s8320 + $0x3c] sm:$0xf]
      %v8353 = vunpack.c.l.b16 %v8321
      %v8354 = vunpack.c.l.b16 %v8322
      %v8355 = vunpack.c.l.b16 %v8323
      %v8356 = vunpack.c.l.b16 %v8324
      %v8357 = vunpack.c.l.b16 %v8325
      %v8358 = vunpack.c.l.b16 %v8326
      %v8359 = vunpack.c.l.b16 %v8327
      %v8360 = vunpack.c.l.b16 %v8328
      %v8361 = vunpack.c.l.b16 %v8329
      %v8362 = vunpack.c.l.b16 %v8330
      %v8363 = vunpack.c.l.b16 %v8331
      %v8364 = vunpack.c.l.b16 %v8332
      %v8365 = vunpack.c.l.b16 %v8333
      %v8366 = vunpack.c.l.b16 %v8334
      %v8367 = vunpack.c.l.b16 %v8335
      %v8368 = vunpack.c.l.b16 %v8336
      %v8369 = vpack.c.b16 %v8354, %v8353
      %v8370 = vpack.c.b16 %v8356, %v8355
      %v8371 = vpack.c.b16 %v8358, %v8357
      %v8372 = vpack.c.b16 %v8360, %v8359
      %v8373 = vpack.c.b16 %v8362, %v8361
      %v8374 = vpack.c.b16 %v8364, %v8363
      %v8375 = vpack.c.b16 %v8366, %v8365
      %v8376 = vpack.c.b16 %v8368, %v8367
      %8385 = vmatprep.subr.bf16.mxu0 0
      %8386 = vmatpush1.bf16.msra.mxu0 %v8369
      %8387 = vmatprep.subr.bf16.mxu0 0
      %8388 = vmatpush1.bf16.msra.mxu0 %v8370
      %8389 = vmatprep.subr.bf16.mxu0 0
      %8390 = vmatpush1.bf16.msra.mxu0 %v8371
      %8391 = vmatprep.subr.bf16.mxu0 0
      %8392 = vmatpush1.bf16.msra.mxu0 %v8372
      %8393 = vmatprep.subr.bf16.mxu0 0
      %8394 = vmatpush1.bf16.msra.mxu0 %v8373
      %8395 = vmatprep.subr.bf16.mxu0 0
      %8396 = vmatpush1.bf16.msra.mxu0 %v8374
      %8397 = vmatprep.subr.bf16.mxu0 0
      %8398 = vmatpush1.bf16.msra.mxu0 %v8375
      %8399 = vmatprep.subr.bf16.mxu0 0
      %8400 = vmatpush1.bf16.msra.mxu0 %v8376
      %8401 = vmatprep.subr.bf16.mxu0 0
      %8402 = vmatpush1.bf16.msra.mxu0 0
      %8403 = vmatprep.subr.bf16.mxu0 0
      %8404 = vmatpush1.bf16.msra.mxu0 0
      %8405 = vmatprep.subr.bf16.mxu0 0
      %8406 = vmatpush1.bf16.msra.mxu0 0
      %8407 = vmatprep.subr.bf16.mxu0 0
      %8408 = vmatpush1.bf16.msra.mxu0 0
      %8409 = vmatprep.subr.bf16.mxu0 0
      %8410 = vmatpush1.bf16.msra.mxu0 0
      %8411 = vmatprep.subr.bf16.mxu0 0
      %8412 = vmatpush1.bf16.msra.mxu0 0
      %8413 = vmatprep.subr.bf16.mxu0 0
      %8414 = vmatpush1.bf16.msra.mxu0 0
      %8415 = vmatprep.subr.bf16.mxu0 0
      %8416 = vmatpush1.bf16.msra.mxu0 0
      %8417 = vmatprep.mubr.bf16.mxu0 0
      %8418 = vmatmul.mubr.bf16.gmra.mrb[0].mxu0 %v6986
      %v8419 = vpop.f32.mrb[0].mxu0
      %v8420 = vadd.f32 0.0, %v8419
      %v8421 = vpop.f32.mrb[0].mxu0
      %v8422 = vpop.f32.mrb[0].mxu0
      %v8423 = vadd.f32 0.0, %v8422
      %v8424 = vpop.f32.mrb[0].mxu0
      %8425 = vmatprep.mubr.bf16.mxu0 0
      %8426 = vmatmul.mubr.bf16.gmra.mrb[0].mxu0 %v6987
      %v8427 = vpop.f32.mrb[0].mxu0
      %v8428 = vadd.f32 0.0, %v8427
      %v8429 = vpop.f32.mrb[0].mxu0
      %v8430 = vpop.f32.mrb[0].mxu0
      %v8431 = vadd.f32 0.0, %v8430
      %v8432 = vpop.f32.mrb[0].mxu0
      %8433 = vmatprep.mubr.bf16.mxu0 0
      %8434 = vmatmul.mubr.bf16.gmra.mrb[0].mxu0 %v6988
      %v8435 = vpop.f32.mrb[0].mxu0
      %v8436 = vadd.f32 0.0, %v8435
      %v8437 = vpop.f32.mrb[0].mxu0
      %v8438 = vpop.f32.mrb[0].mxu0
      %v8439 = vadd.f32 0.0, %v8438
      %v8440 = vpop.f32.mrb[0].mxu0
      %8441 = vmatprep.mubr.bf16.mxu0 0
      %8442 = vmatmul.mubr.bf16.gmra.mrb[0].mxu0 %v6989
      %v8443 = vpop.f32.mrb[0].mxu0
      %v8444 = vadd.f32 0.0, %v8443
      %v8445 = vpop.f32.mrb[0].mxu0
      %v8446 = vpop.f32.mrb[0].mxu0
      %v8447 = vadd.f32 0.0, %v8446
      %v8448 = vpop.f32.mrb[0].mxu0
      %8449 = vmatprep.mubr.bf16.mxu0 0
      %8450 = vmatmul.mubr.bf16.gmra.mrb[0].mxu0 %v6990
      %v8451 = vpop.f32.mrb[0].mxu0
      %v8452 = vadd.f32 0.0, %v8451
      %v8453 = vpop.f32.mrb[0].mxu0
      %v8454 = vpop.f32.mrb[0].mxu0
      %v8455 = vadd.f32 0.0, %v8454
      %v8456 = vpop.f32.mrb[0].mxu0
      %8457 = vmatprep.mubr.bf16.mxu0 0
      %8458 = vmatmul.mubr.bf16.gmra.mrb[0].mxu0 %v6991
      %v8459 = vpop.f32.mrb[0].mxu0
      %v8460 = vadd.f32 0.0, %v8459
      %v8461 = vpop.f32.mrb[0].mxu0
      %v8462 = vpop.f32.mrb[0].mxu0
      %v8463 = vadd.f32 0.0, %v8462
      %v8464 = vpop.f32.mrb[0].mxu0
      %8465 = vmatprep.mubr.bf16.mxu0 0
      %8466 = vmatmul.mubr.bf16.gmra.mrb[0].mxu0 %v6992
      %v8467 = vpop.f32.mrb[0].mxu0
      %v8468 = vadd.f32 0.0, %v8467
      %v8469 = vpop.f32.mrb[0].mxu0
      %v8470 = vpop.f32.mrb[0].mxu0
      %v8471 = vadd.f32 0.0, %v8470
      %v8472 = vpop.f32.mrb[0].mxu0
      %8473 = vmatprep.mubr.bf16.mxu0 0
      %8474 = vmatmul.mubr.bf16.gmra.mrb[0].mxu0 %v6993
      %v8475 = vpop.f32.mrb[0].mxu0
      %v8476 = vadd.f32 0.0, %v8475
      %v8477 = vpop.f32.mrb[0].mxu0
      %v8478 = vpop.f32.mrb[0].mxu0
      %v8479 = vadd.f32 0.0, %v8478
      %v8480 = vpop.f32.mrb[0].mxu0
      %8481 = vmatprep.mubr.bf16.mxu0 0
      %8482 = vmatmul.mubr.bf16.gmra.mrb[0].mxu0 %v6994
      %v8483 = vpop.f32.mrb[0].mxu0
      %v8484 = vadd.f32 0.0, %v8483
      %v8485 = vpop.f32.mrb[0].mxu0
      %v8486 = vpop.f32.mrb[0].mxu0
      %v8487 = vadd.f32 0.0, %v8486
      %v8488 = vpop.f32.mrb[0].mxu0
      %8489 = vmatprep.mubr.bf16.mxu0 0
      %8490 = vmatmul.mubr.bf16.gmra.mrb[0].mxu0 %v6995
      %v8491 = vpop.f32.mrb[0].mxu0
      %v8492 = vadd.f32 0.0, %v8491
      %v8493 = vpop.f32.mrb[0].mxu0
      %v8494 = vpop.f32.mrb[0].mxu0
      %v8495 = vadd.f32 0.0, %v8494
      %v8496 = vpop.f32.mrb[0].mxu0
      %8497 = vmatprep.mubr.bf16.mxu0 0
      %8498 = vmatmul.mubr.bf16.gmra.mrb[0].mxu0 %v6996
      %v8499 = vpop.f32.mrb[0].mxu0
      %v8500 = vadd.f32 0.0, %v8499
      %v8501 = vpop.f32.mrb[0].mxu0
      %v8502 = vpop.f32.mrb[0].mxu0
      %v8503 = vadd.f32 0.0, %v8502
      %v8504 = vpop.f32.mrb[0].mxu0
      %8505 = vmatprep.mubr.bf16.mxu0 0
      %8506 = vmatmul.mubr.bf16.gmra.mrb[0].mxu0 %v6997
      %v8507 = vpop.f32.mrb[0].mxu0
      %v8508 = vadd.f32 0.0, %v8507
      %v8509 = vpop.f32.mrb[0].mxu0
      %v8510 = vpop.f32.mrb[0].mxu0
      %v8511 = vadd.f32 0.0, %v8510
      %v8512 = vpop.f32.mrb[0].mxu0
      %8513 = vmatprep.mubr.bf16.mxu0 0
      %8514 = vmatmul.mubr.bf16.gmra.mrb[0].mxu0 %v6998
      %v8515 = vpop.f32.mrb[0].mxu0
      %v8516 = vadd.f32 0.0, %v8515
      %v8517 = vpop.f32.mrb[0].mxu0
      %v8518 = vpop.f32.mrb[0].mxu0
      %v8519 = vadd.f32 0.0, %v8518
      %v8520 = vpop.f32.mrb[0].mxu0
      %8521 = vmatprep.mubr.bf16.mxu0 0
      %8522 = vmatmul.mubr.bf16.gmra.mrb[0].mxu0 %v6999
      %v8523 = vpop.f32.mrb[0].mxu0
      %v8524 = vadd.f32 0.0, %v8523
      %v8525 = vpop.f32.mrb[0].mxu0
      %v8526 = vpop.f32.mrb[0].mxu0
      %v8527 = vadd.f32 0.0, %v8526
      %v8528 = vpop.f32.mrb[0].mxu0
      %8529 = vmatprep.mubr.bf16.mxu0 0
      %8530 = vmatmul.mubr.bf16.gmra.mrb[0].mxu0 %v7000
      %v8531 = vpop.f32.mrb[0].mxu0
      %v8532 = vadd.f32 0.0, %v8531
      %v8533 = vpop.f32.mrb[0].mxu0
      %v8534 = vpop.f32.mrb[0].mxu0
      %v8535 = vadd.f32 0.0, %v8534
      %v8536 = vpop.f32.mrb[0].mxu0
      %8537 = vmatprep.mubr.bf16.mxu0 0
      %8538 = vmatmul.mubr.bf16.gmra.mrb[0].mxu0 %v7001
      %v8539 = vpop.f32.mrb[0].mxu0
      %v8540 = vadd.f32 0.0, %v8539
      %v8541 = vpop.f32.mrb[0].mxu0
      %v8542 = vpop.f32.mrb[0].mxu0
      %v8543 = vadd.f32 0.0, %v8542
      %v8544 = vpop.f32.mrb[0].mxu0
      %8545 = vmatprep.mubr.bf16.mxu0 0
      %8546 = vmatmul.mubr.bf16.gmra.mrb[0].mxu0 %v7002
      %v8547 = vpop.f32.mrb[0].mxu0
      %v8548 = vadd.f32 0.0, %v8547
      %v8549 = vpop.f32.mrb[0].mxu0
      %v8550 = vpop.f32.mrb[0].mxu0
      %v8551 = vadd.f32 0.0, %v8550
      %v8552 = vpop.f32.mrb[0].mxu0
      %8553 = vmatprep.mubr.bf16.mxu0 0
      %8554 = vmatmul.mubr.bf16.gmra.mrb[0].mxu0 %v7003
      %v8555 = vpop.f32.mrb[0].mxu0
      %v8556 = vadd.f32 0.0, %v8555
      %v8557 = vpop.f32.mrb[0].mxu0
      %v8558 = vpop.f32.mrb[0].mxu0
      %v8559 = vadd.f32 0.0, %v8558
      %v8560 = vpop.f32.mrb[0].mxu0
      %8561 = vmatprep.mubr.bf16.mxu0 0
      %8562 = vmatmul.mubr.bf16.gmra.mrb[0].mxu0 %v7004
      %v8563 = vpop.f32.mrb[0].mxu0
      %v8564 = vadd.f32 0.0, %v8563
      %v8565 = vpop.f32.mrb[0].mxu0
      %v8566 = vpop.f32.mrb[0].mxu0
      %v8567 = vadd.f32 0.0, %v8566
      %v8568 = vpop.f32.mrb[0].mxu0
      %8569 = vmatprep.mubr.bf16.mxu0 0
      %8570 = vmatmul.mubr.bf16.gmra.mrb[0].mxu0 %v7005
      %v8571 = vpop.f32.mrb[0].mxu0
      %v8572 = vadd.f32 0.0, %v8571
      %v8573 = vpop.f32.mrb[0].mxu0
      %v8574 = vpop.f32.mrb[0].mxu0
      %v8575 = vadd.f32 0.0, %v8574
      %v8576 = vpop.f32.mrb[0].mxu0
      %8577 = vmatprep.mubr.bf16.mxu0 0
      %8578 = vmatmul.mubr.bf16.gmra.mrb[0].mxu0 %v7006
      %v8579 = vpop.f32.mrb[0].mxu0
      %v8580 = vadd.f32 0.0, %v8579
      %v8581 = vpop.f32.mrb[0].mxu0
      %v8582 = vpop.f32.mrb[0].mxu0
      %v8583 = vadd.f32 0.0, %v8582
      %v8584 = vpop.f32.mrb[0].mxu0
      %8585 = vmatprep.mubr.bf16.mxu0 0
      %8586 = vmatmul.mubr.bf16.gmra.mrb[0].mxu0 %v7007
      %v8587 = vpop.f32.mrb[0].mxu0
      %v8588 = vadd.f32 0.0, %v8587
      %v8589 = vpop.f32.mrb[0].mxu0
      %v8590 = vpop.f32.mrb[0].mxu0
      %v8591 = vadd.f32 0.0, %v8590
      %v8592 = vpop.f32.mrb[0].mxu0
      %8593 = vmatprep.mubr.bf16.mxu0 0
      %8594 = vmatmul.mubr.bf16.gmra.mrb[0].mxu0 %v7008
      %v8595 = vpop.f32.mrb[0].mxu0
      %v8596 = vadd.f32 0.0, %v8595
      %v8597 = vpop.f32.mrb[0].mxu0
      %v8598 = vpop.f32.mrb[0].mxu0
      %v8599 = vadd.f32 0.0, %v8598
      %v8600 = vpop.f32.mrb[0].mxu0
      %8601 = vmatprep.mubr.bf16.mxu0 0
      %8602 = vmatmul.mubr.bf16.gmra.mrb[0].mxu0 %v7009
      %v8603 = vpop.f32.mrb[0].mxu0
      %v8604 = vadd.f32 0.0, %v8603
      %v8605 = vpop.f32.mrb[0].mxu0
      %v8606 = vpop.f32.mrb[0].mxu0
      %v8607 = vadd.f32 0.0, %v8606
      %v8608 = vpop.f32.mrb[0].mxu0
      %8609 = vmatprep.mubr.bf16.mxu0 0
      %8610 = vmatmul.mubr.bf16.gmra.mrb[0].mxu0 %v7010
      %v8611 = vpop.f32.mrb[0].mxu0
      %v8612 = vadd.f32 0.0, %v8611
      %v8613 = vpop.f32.mrb[0].mxu0
      %v8614 = vpop.f32.mrb[0].mxu0
      %v8615 = vadd.f32 0.0, %v8614
      %v8616 = vpop.f32.mrb[0].mxu0
      %8617 = vmatprep.mubr.bf16.mxu0 0
      %8618 = vmatmul.mubr.bf16.gmra.mrb[0].mxu0 %v7011
      %v8619 = vpop.f32.mrb[0].mxu0
      %v8620 = vadd.f32 0.0, %v8619
      %v8621 = vpop.f32.mrb[0].mxu0
      %v8622 = vpop.f32.mrb[0].mxu0
      %v8623 = vadd.f32 0.0, %v8622
      %v8624 = vpop.f32.mrb[0].mxu0
      %8625 = vmatprep.mubr.bf16.mxu0 0
      %8626 = vmatmul.mubr.bf16.gmra.mrb[0].mxu0 %v7012
      %v8627 = vpop.f32.mrb[0].mxu0
      %v8628 = vadd.f32 0.0, %v8627
      %v8629 = vpop.f32.mrb[0].mxu0
      %v8630 = vpop.f32.mrb[0].mxu0
      %v8631 = vadd.f32 0.0, %v8630
      %v8632 = vpop.f32.mrb[0].mxu0
      %8633 = vmatprep.mubr.bf16.mxu0 0
      %8634 = vmatmul.mubr.bf16.gmra.mrb[0].mxu0 %v7013
      %v8635 = vpop.f32.mrb[0].mxu0
      %v8636 = vadd.f32 0.0, %v8635
      %v8637 = vpop.f32.mrb[0].mxu0
      %v8638 = vpop.f32.mrb[0].mxu0
      %v8639 = vadd.f32 0.0, %v8638
      %v8640 = vpop.f32.mrb[0].mxu0
      %8641 = vmatprep.mubr.bf16.mxu0 0
      %8642 = vmatmul.mubr.bf16.gmra.mrb[0].mxu0 %v7014
      %v8643 = vpop.f32.mrb[0].mxu0
      %v8644 = vadd.f32 0.0, %v8643
      %v8645 = vpop.f32.mrb[0].mxu0
      %v8646 = vpop.f32.mrb[0].mxu0
      %v8647 = vadd.f32 0.0, %v8646
      %v8648 = vpop.f32.mrb[0].mxu0
      %8649 = vmatprep.mubr.bf16.mxu0 0
      %8650 = vmatmul.mubr.bf16.gmra.mrb[0].mxu0 %v7015
      %v8651 = vpop.f32.mrb[0].mxu0
      %v8652 = vadd.f32 0.0, %v8651
      %v8653 = vpop.f32.mrb[0].mxu0
      %v8654 = vpop.f32.mrb[0].mxu0
      %v8655 = vadd.f32 0.0, %v8654
      %v8656 = vpop.f32.mrb[0].mxu0
      %8657 = vmatprep.mubr.bf16.mxu0 0
      %8658 = vmatmul.mubr.bf16.gmra.mrb[0].mxu0 %v7032
      %v8659 = vpop.f32.mrb[0].mxu0
      %v8660 = vadd.f32 0.0, %v8659
      %v8661 = vpop.f32.mrb[0].mxu0
      %v8662 = vpop.f32.mrb[0].mxu0
      %v8663 = vadd.f32 0.0, %v8662
      %v8664 = vpop.f32.mrb[0].mxu0
      %8665 = vmatprep.mubr.bf16.mxu0 0
      %8666 = vmatmul.mubr.bf16.gmra.mrb[0].mxu0 %v7033
      %v8667 = vpop.f32.mrb[0].mxu0
      %v8668 = vadd.f32 0.0, %v8667
      %v8669 = vpop.f32.mrb[0].mxu0
      %v8670 = vpop.f32.mrb[0].mxu0
      %v8671 = vadd.f32 0.0, %v8670
      %v8672 = vpop.f32.mrb[0].mxu0
      %8673 = vdwg.mxu0
      %v8690 = vunpack.c.l.b16 %v8304
      %v8691 = vunpack.c.l.b16 %v8305
      %v8692 = vunpack.c.l.b16 %v8306
      %v8693 = vunpack.c.l.b16 %v8307
      %v8694 = vunpack.c.l.b16 %v8308
      %v8695 = vunpack.c.l.b16 %v8309
      %v8696 = vunpack.c.l.b16 %v8310
      %v8697 = vunpack.c.l.b16 %v8311
      %v8698 = vunpack.c.l.b16 %v8312
      %v8699 = vunpack.c.l.b16 %v8313
      %v8700 = vunpack.c.l.b16 %v8314
      %v8701 = vunpack.c.l.b16 %v8315
      %v8702 = vunpack.c.l.b16 %v8316
      %v8703 = vunpack.c.l.b16 %v8317
      %v8704 = vunpack.c.l.b16 %v8318
      %v8705 = vunpack.c.l.b16 %v8319
      %v8706 = vpack.c.b16 %v8691, %v8690
      %v8707 = vpack.c.b16 %v8693, %v8692
      %v8708 = vpack.c.b16 %v8695, %v8694
      %v8709 = vpack.c.b16 %v8697, %v8696
      %v8710 = vpack.c.b16 %v8699, %v8698
      %v8711 = vpack.c.b16 %v8701, %v8700
      %v8712 = vpack.c.b16 %v8703, %v8702
      %v8713 = vpack.c.b16 %v8705, %v8704
      %8722 = vmatprep.subr.bf16.mxu0 0
      %8723 = vmatpush1.bf16.msra.mxu0 %v8706
      %8724 = vmatprep.subr.bf16.mxu0 0
      %8725 = vmatpush1.bf16.msra.mxu0 %v8707
      %8726 = vmatprep.subr.bf16.mxu0 0
      %8727 = vmatpush1.bf16.msra.mxu0 %v8708
      %8728 = vmatprep.subr.bf16.mxu0 0
      %8729 = vmatpush1.bf16.msra.mxu0 %v8709
      %8730 = vmatprep.subr.bf16.mxu0 0
      %8731 = vmatpush1.bf16.msra.mxu0 %v8710
      %8732 = vmatprep.subr.bf16.mxu0 0
      %8733 = vmatpush1.bf16.msra.mxu0 %v8711
      %8734 = vmatprep.subr.bf16.mxu0 0
      %8735 = vmatpush1.bf16.msra.mxu0 %v8712
      %8736 = vmatprep.subr.bf16.mxu0 0
      %8737 = vmatpush1.bf16.msra.mxu0 %v8713
      %8738 = vmatprep.subr.bf16.mxu0 0
      %8739 = vmatpush1.bf16.msra.mxu0 0
      %8740 = vmatprep.subr.bf16.mxu0 0
      %8741 = vmatpush1.bf16.msra.mxu0 0
      %8742 = vmatprep.subr.bf16.mxu0 0
      %8743 = vmatpush1.bf16.msra.mxu0 0
      %8744 = vmatprep.subr.bf16.mxu0 0
      %8745 = vmatpush1.bf16.msra.mxu0 0
      %8746 = vmatprep.subr.bf16.mxu0 0
      %8747 = vmatpush1.bf16.msra.mxu0 0
      %8748 = vmatprep.subr.bf16.mxu0 0
      %8749 = vmatpush1.bf16.msra.mxu0 0
      %8750 = vmatprep.subr.bf16.mxu0 0
      %8751 = vmatpush1.bf16.msra.mxu0 0
      %8752 = vmatprep.subr.bf16.mxu0 0
      %8753 = vmatpush1.bf16.msra.mxu0 0
      %8754 = vmatprep.mubr.bf16.mxu0 0
      %8755 = vmatmul.mubr.bf16.gmra.mrb[0].mxu0 %v6984
      %v8756 = vpop.f32.mrb[0].mxu0
      %v8757 = vadd.f32 %v8420, %v8756
      %v8758 = vpop.f32.mrb[0].mxu0
      %v8759 = vpop.f32.mrb[0].mxu0
      %v8760 = vadd.f32 %v8423, %v8759
      %v8761 = vpop.f32.mrb[0].mxu0
      %8762 = vmatprep.mubr.bf16.mxu0 0
      %8763 = vmatmul.mubr.bf16.gmra.mrb[0].mxu0 %v6985
      %v8764 = vpop.f32.mrb[0].mxu0
      %v8765 = vadd.f32 %v8428, %v8764
      %v8766 = vpop.f32.mrb[0].mxu0
      %v8767 = vpop.f32.mrb[0].mxu0
      %v8768 = vadd.f32 %v8431, %v8767
      %v8769 = vpop.f32.mrb[0].mxu0
      %8770 = vmatprep.mubr.bf16.mxu0 0
      %8771 = vmatmul.mubr.bf16.gmra.mrb[0].mxu0 %v6986
      %v8772 = vpop.f32.mrb[0].mxu0
      %v8773 = vadd.f32 %v8436, %v8772
      %v8774 = vpop.f32.mrb[0].mxu0
      %v8775 = vpop.f32.mrb[0].mxu0
      %v8776 = vadd.f32 %v8439, %v8775
      %v8777 = vpop.f32.mrb[0].mxu0
      %8778 = vmatprep.mubr.bf16.mxu0 0
      %8779 = vmatmul.mubr.bf16.gmra.mrb[0].mxu0 %v6987
      %v8780 = vpop.f32.mrb[0].mxu0
      %v8781 = vadd.f32 %v8444, %v8780
      %v8782 = vpop.f32.mrb[0].mxu0
      %v8783 = vpop.f32.mrb[0].mxu0
      %v8784 = vadd.f32 %v8447, %v8783
      %v8785 = vpop.f32.mrb[0].mxu0
      %8786 = vmatprep.mubr.bf16.mxu0 0
      %8787 = vmatmul.mubr.bf16.gmra.mrb[0].mxu0 %v6988
      %v8788 = vpop.f32.mrb[0].mxu0
      %v8789 = vadd.f32 %v8452, %v8788
      %v8790 = vpop.f32.mrb[0].mxu0
      %v8791 = vpop.f32.mrb[0].mxu0
      %v8792 = vadd.f32 %v8455, %v8791
      %v8793 = vpop.f32.mrb[0].mxu0
      %8794 = vmatprep.mubr.bf16.mxu0 0
      %8795 = vmatmul.mubr.bf16.gmra.mrb[0].mxu0 %v6989
      %v8796 = vpop.f32.mrb[0].mxu0
      %v8797 = vadd.f32 %v8460, %v8796
      %v8798 = vpop.f32.mrb[0].mxu0
      %v8799 = vpop.f32.mrb[0].mxu0
      %v8800 = vadd.f32 %v8463, %v8799
      %v8801 = vpop.f32.mrb[0].mxu0
      %8802 = vmatprep.mubr.bf16.mxu0 0
      %8803 = vmatmul.mubr.bf16.gmra.mrb[0].mxu0 %v6990
      %v8804 = vpop.f32.mrb[0].mxu0
      %v8805 = vadd.f32 %v8468, %v8804
      %v8806 = vpop.f32.mrb[0].mxu0
      %v8807 = vpop.f32.mrb[0].mxu0
      %v8808 = vadd.f32 %v8471, %v8807
      %v8809 = vpop.f32.mrb[0].mxu0
      %8810 = vmatprep.mubr.bf16.mxu0 0
      %8811 = vmatmul.mubr.bf16.gmra.mrb[0].mxu0 %v6991
      %v8812 = vpop.f32.mrb[0].mxu0
      %v8813 = vadd.f32 %v8476, %v8812
      %v8814 = vpop.f32.mrb[0].mxu0
      %v8815 = vpop.f32.mrb[0].mxu0
      %v8816 = vadd.f32 %v8479, %v8815
      %v8817 = vpop.f32.mrb[0].mxu0
      %8818 = vmatprep.mubr.bf16.mxu0 0
      %8819 = vmatmul.mubr.bf16.gmra.mrb[0].mxu0 %v6992
      %v8820 = vpop.f32.mrb[0].mxu0
      %v8821 = vadd.f32 %v8484, %v8820
      %v8822 = vpop.f32.mrb[0].mxu0
      %v8823 = vpop.f32.mrb[0].mxu0
      %v8824 = vadd.f32 %v8487, %v8823
      %v8825 = vpop.f32.mrb[0].mxu0
      %8826 = vmatprep.mubr.bf16.mxu0 0
      %8827 = vmatmul.mubr.bf16.gmra.mrb[0].mxu0 %v6993
      %v8828 = vpop.f32.mrb[0].mxu0
      %v8829 = vadd.f32 %v8492, %v8828
      %v8830 = vpop.f32.mrb[0].mxu0
      %v8831 = vpop.f32.mrb[0].mxu0
      %v8832 = vadd.f32 %v8495, %v8831
      %v8833 = vpop.f32.mrb[0].mxu0
      %8834 = vmatprep.mubr.bf16.mxu0 0
      %8835 = vmatmul.mubr.bf16.gmra.mrb[0].mxu0 %v6994
      %v8836 = vpop.f32.mrb[0].mxu0
      %v8837 = vadd.f32 %v8500, %v8836
      %v8838 = vpop.f32.mrb[0].mxu0
      %v8839 = vpop.f32.mrb[0].mxu0
      %v8840 = vadd.f32 %v8503, %v8839
      %v8841 = vpop.f32.mrb[0].mxu0
      %8842 = vmatprep.mubr.bf16.mxu0 0
      %8843 = vmatmul.mubr.bf16.gmra.mrb[0].mxu0 %v6995
      %v8844 = vpop.f32.mrb[0].mxu0
      %v8845 = vadd.f32 %v8508, %v8844
      %v8846 = vpop.f32.mrb[0].mxu0
      %v8847 = vpop.f32.mrb[0].mxu0
      %v8848 = vadd.f32 %v8511, %v8847
      %v8849 = vpop.f32.mrb[0].mxu0
      %8850 = vmatprep.mubr.bf16.mxu0 0
      %8851 = vmatmul.mubr.bf16.gmra.mrb[0].mxu0 %v6996
      %v8852 = vpop.f32.mrb[0].mxu0
      %v8853 = vadd.f32 %v8516, %v8852
      %v8854 = vpop.f32.mrb[0].mxu0
      %v8855 = vpop.f32.mrb[0].mxu0
      %v8856 = vadd.f32 %v8519, %v8855
      %v8857 = vpop.f32.mrb[0].mxu0
      %8858 = vmatprep.mubr.bf16.mxu0 0
      %8859 = vmatmul.mubr.bf16.gmra.mrb[0].mxu0 %v6997
      %v8860 = vpop.f32.mrb[0].mxu0
      %v8861 = vadd.f32 %v8524, %v8860
      %v8862 = vpop.f32.mrb[0].mxu0
      %v8863 = vpop.f32.mrb[0].mxu0
      %v8864 = vadd.f32 %v8527, %v8863
      %v8865 = vpop.f32.mrb[0].mxu0
      %8866 = vmatprep.mubr.bf16.mxu0 0
      %8867 = vmatmul.mubr.bf16.gmra.mrb[0].mxu0 %v6998
      %v8868 = vpop.f32.mrb[0].mxu0
      %v8869 = vadd.f32 %v8532, %v8868
      %v8870 = vpop.f32.mrb[0].mxu0
      %v8871 = vpop.f32.mrb[0].mxu0
      %v8872 = vadd.f32 %v8535, %v8871
      %v8873 = vpop.f32.mrb[0].mxu0
      %8874 = vmatprep.mubr.bf16.mxu0 0
      %8875 = vmatmul.mubr.bf16.gmra.mrb[0].mxu0 %v6999
      %v8876 = vpop.f32.mrb[0].mxu0
      %v8877 = vadd.f32 %v8540, %v8876
      %v8878 = vpop.f32.mrb[0].mxu0
      %v8879 = vpop.f32.mrb[0].mxu0
      %v8880 = vadd.f32 %v8543, %v8879
      %v8881 = vpop.f32.mrb[0].mxu0
      %8882 = vmatprep.mubr.bf16.mxu0 0
      %8883 = vmatmul.mubr.bf16.gmra.mrb[0].mxu0 %v7000
      %v8884 = vpop.f32.mrb[0].mxu0
      %v8885 = vadd.f32 %v8548, %v8884
      %v8886 = vpop.f32.mrb[0].mxu0
      %v8887 = vpop.f32.mrb[0].mxu0
      %v8888 = vadd.f32 %v8551, %v8887
      %v8889 = vpop.f32.mrb[0].mxu0
      %8890 = vmatprep.mubr.bf16.mxu0 0
      %8891 = vmatmul.mubr.bf16.gmra.mrb[0].mxu0 %v7001
      %v8892 = vpop.f32.mrb[0].mxu0
      %v8893 = vadd.f32 %v8556, %v8892
      %v8894 = vpop.f32.mrb[0].mxu0
      %v8895 = vpop.f32.mrb[0].mxu0
      %v8896 = vadd.f32 %v8559, %v8895
      %v8897 = vpop.f32.mrb[0].mxu0
      %8898 = vmatprep.mubr.bf16.mxu0 0
      %8899 = vmatmul.mubr.bf16.gmra.mrb[0].mxu0 %v7002
      %v8900 = vpop.f32.mrb[0].mxu0
      %v8901 = vadd.f32 %v8564, %v8900
      %v8902 = vpop.f32.mrb[0].mxu0
      %v8903 = vpop.f32.mrb[0].mxu0
      %v8904 = vadd.f32 %v8567, %v8903
      %v8905 = vpop.f32.mrb[0].mxu0
      %8906 = vmatprep.mubr.bf16.mxu0 0
      %8907 = vmatmul.mubr.bf16.gmra.mrb[0].mxu0 %v7003
      %v8908 = vpop.f32.mrb[0].mxu0
      %v8909 = vadd.f32 %v8572, %v8908
      %v8910 = vpop.f32.mrb[0].mxu0
      %v8911 = vpop.f32.mrb[0].mxu0
      %v8912 = vadd.f32 %v8575, %v8911
      %v8913 = vpop.f32.mrb[0].mxu0
      %8914 = vmatprep.mubr.bf16.mxu0 0
      %8915 = vmatmul.mubr.bf16.gmra.mrb[0].mxu0 %v7004
      %v8916 = vpop.f32.mrb[0].mxu0
      %v8917 = vadd.f32 %v8580, %v8916
      %v8918 = vpop.f32.mrb[0].mxu0
      %v8919 = vpop.f32.mrb[0].mxu0
      %v8920 = vadd.f32 %v8583, %v8919
      %v8921 = vpop.f32.mrb[0].mxu0
      %8922 = vmatprep.mubr.bf16.mxu0 0
      %8923 = vmatmul.mubr.bf16.gmra.mrb[0].mxu0 %v7005
      %v8924 = vpop.f32.mrb[0].mxu0
      %v8925 = vadd.f32 %v8588, %v8924
      %v8926 = vpop.f32.mrb[0].mxu0
      %v8927 = vpop.f32.mrb[0].mxu0
      %v8928 = vadd.f32 %v8591, %v8927
      %v8929 = vpop.f32.mrb[0].mxu0
      %8930 = vmatprep.mubr.bf16.mxu0 0
      %8931 = vmatmul.mubr.bf16.gmra.mrb[0].mxu0 %v7006
      %v8932 = vpop.f32.mrb[0].mxu0
      %v8933 = vadd.f32 %v8596, %v8932
      %v8934 = vpop.f32.mrb[0].mxu0
      %v8935 = vpop.f32.mrb[0].mxu0
      %v8936 = vadd.f32 %v8599, %v8935
      %v8937 = vpop.f32.mrb[0].mxu0
      %8938 = vmatprep.mubr.bf16.mxu0 0
      %8939 = vmatmul.mubr.bf16.gmra.mrb[0].mxu0 %v7007
      %v8940 = vpop.f32.mrb[0].mxu0
      %v8941 = vadd.f32 %v8604, %v8940
      %v8942 = vpop.f32.mrb[0].mxu0
      %v8943 = vpop.f32.mrb[0].mxu0
      %v8944 = vadd.f32 %v8607, %v8943
      %v8945 = vpop.f32.mrb[0].mxu0
      %8946 = vmatprep.mubr.bf16.mxu0 0
      %8947 = vmatmul.mubr.bf16.gmra.mrb[0].mxu0 %v7008
      %v8948 = vpop.f32.mrb[0].mxu0
      %v8949 = vadd.f32 %v8612, %v8948
      %v8950 = vpop.f32.mrb[0].mxu0
      %v8951 = vpop.f32.mrb[0].mxu0
      %v8952 = vadd.f32 %v8615, %v8951
      %v8953 = vpop.f32.mrb[0].mxu0
      %8954 = vmatprep.mubr.bf16.mxu0 0
      %8955 = vmatmul.mubr.bf16.gmra.mrb[0].mxu0 %v7009
      %v8956 = vpop.f32.mrb[0].mxu0
      %v8957 = vadd.f32 %v8620, %v8956
      %v8958 = vpop.f32.mrb[0].mxu0
      %v8959 = vpop.f32.mrb[0].mxu0
      %v8960 = vadd.f32 %v8623, %v8959
      %v8961 = vpop.f32.mrb[0].mxu0
      %8962 = vmatprep.mubr.bf16.mxu0 0
      %8963 = vmatmul.mubr.bf16.gmra.mrb[0].mxu0 %v7010
      %v8964 = vpop.f32.mrb[0].mxu0
      %v8965 = vadd.f32 %v8628, %v8964
      %v8966 = vpop.f32.mrb[0].mxu0
      %v8967 = vpop.f32.mrb[0].mxu0
      %v8968 = vadd.f32 %v8631, %v8967
      %v8969 = vpop.f32.mrb[0].mxu0
      %8970 = vmatprep.mubr.bf16.mxu0 0
      %8971 = vmatmul.mubr.bf16.gmra.mrb[0].mxu0 %v7011
      %v8972 = vpop.f32.mrb[0].mxu0
      %v8973 = vadd.f32 %v8636, %v8972
      %v8974 = vpop.f32.mrb[0].mxu0
      %v8975 = vpop.f32.mrb[0].mxu0
      %v8976 = vadd.f32 %v8639, %v8975
      %v8977 = vpop.f32.mrb[0].mxu0
      %8978 = vmatprep.mubr.bf16.mxu0 0
      %8979 = vmatmul.mubr.bf16.gmra.mrb[0].mxu0 %v7012
      %v8980 = vpop.f32.mrb[0].mxu0
      %v8981 = vadd.f32 %v8644, %v8980
      %v8982 = vpop.f32.mrb[0].mxu0
      %v8983 = vpop.f32.mrb[0].mxu0
      %v8984 = vadd.f32 %v8647, %v8983
      %v8985 = vpop.f32.mrb[0].mxu0
      %8986 = vmatprep.mubr.bf16.mxu0 0
      %8987 = vmatmul.mubr.bf16.gmra.mrb[0].mxu0 %v7013
      %v8988 = vpop.f32.mrb[0].mxu0
      %v8989 = vadd.f32 %v8652, %v8988
      %v8990 = vpop.f32.mrb[0].mxu0
      %v8991 = vpop.f32.mrb[0].mxu0
      %v8992 = vadd.f32 %v8655, %v8991
      %v8993 = vpop.f32.mrb[0].mxu0
      %8994 = vmatprep.mubr.bf16.mxu0 0
      %8995 = vmatmul.mubr.bf16.gmra.mrb[0].mxu0 %v7014
      %v8996 = vpop.f32.mrb[0].mxu0
      %v8997 = vadd.f32 %v8660, %v8996
      %v8998 = vpop.f32.mrb[0].mxu0
      %v8999 = vpop.f32.mrb[0].mxu0
      %v9000 = vadd.f32 %v8663, %v8999
      %v9001 = vpop.f32.mrb[0].mxu0
      %9002 = vmatprep.mubr.bf16.mxu0 0
      %9003 = vmatmul.mubr.bf16.gmra.mrb[0].mxu0 %v7015
      %v9004 = vpop.f32.mrb[0].mxu0
      %v9005 = vadd.f32 %v8668, %v9004
      %v9006 = vpop.f32.mrb[0].mxu0
      %v9007 = vpop.f32.mrb[0].mxu0
      %v9008 = vadd.f32 %v8671, %v9007
      %v9009 = vpop.f32.mrb[0].mxu0
      %9010 = vdwg.mxu0
      %s9011 = scalar_lea.vmem %s2, 448
      %v9012 = vld [vmem:[%s9011] sm:$0xf]
      %v9013 = vld [vmem:[%s9011 + $0x4] sm:$0xf]
      %v9014 = vld [vmem:[%s9011 + $0x8] sm:$0xf]
      %v9015 = vld [vmem:[%s9011 + $0xc] sm:$0xf]
      %v9016 = vld [vmem:[%s9011 + $0x10] sm:$0xf]
      %v9017 = vld [vmem:[%s9011 + $0x14] sm:$0xf]
      %v9018 = vld [vmem:[%s9011 + $0x18] sm:$0xf]
      %v9019 = vld [vmem:[%s9011 + $0x1c] sm:$0xf]
      %v9020 = vld [vmem:[%s9011 + $0x20] sm:$0xf]
      %v9021 = vld [vmem:[%s9011 + $0x24] sm:$0xf]
      %v9022 = vld [vmem:[%s9011 + $0x28] sm:$0xf]
      %v9023 = vld [vmem:[%s9011 + $0x2c] sm:$0xf]
      %v9024 = vld [vmem:[%s9011 + $0x30] sm:$0xf]
      %v9025 = vld [vmem:[%s9011 + $0x34] sm:$0xf]
      %v9026 = vld [vmem:[%s9011 + $0x38] sm:$0xf]
      %v9027 = vld [vmem:[%s9011 + $0x3c] sm:$0xf]
      %v9044 = vunpack.c.l.b16 %v9012
      %v9045 = vunpack.c.l.b16 %v9013
      %v9046 = vunpack.c.l.b16 %v9014
      %v9047 = vunpack.c.l.b16 %v9015
      %v9048 = vunpack.c.l.b16 %v9016
      %v9049 = vunpack.c.l.b16 %v9017
      %v9050 = vunpack.c.l.b16 %v9018
      %v9051 = vunpack.c.l.b16 %v9019
      %v9052 = vunpack.c.l.b16 %v9020
      %v9053 = vunpack.c.l.b16 %v9021
      %v9054 = vunpack.c.l.b16 %v9022
      %v9055 = vunpack.c.l.b16 %v9023
      %v9056 = vunpack.c.l.b16 %v9024
      %v9057 = vunpack.c.l.b16 %v9025
      %v9058 = vunpack.c.l.b16 %v9026
      %v9059 = vunpack.c.l.b16 %v9027
      %v9060 = vpack.c.b16 %v9045, %v9044
      %v9061 = vpack.c.b16 %v9047, %v9046
      %v9062 = vpack.c.b16 %v9049, %v9048
      %v9063 = vpack.c.b16 %v9051, %v9050
      %v9064 = vpack.c.b16 %v9053, %v9052
      %v9065 = vpack.c.b16 %v9055, %v9054
      %v9066 = vpack.c.b16 %v9057, %v9056
      %v9067 = vpack.c.b16 %v9059, %v9058
      %9076 = vmatprep.subr.bf16.mxu0 0
      %9077 = vmatpush1.bf16.msra.mxu0 %v9060
      %9078 = vmatprep.subr.bf16.mxu0 0
      %9079 = vmatpush1.bf16.msra.mxu0 %v9061
      %9080 = vmatprep.subr.bf16.mxu0 0
      %9081 = vmatpush1.bf16.msra.mxu0 %v9062
      %9082 = vmatprep.subr.bf16.mxu0 0
      %9083 = vmatpush1.bf16.msra.mxu0 %v9063
      %9084 = vmatprep.subr.bf16.mxu0 0
      %9085 = vmatpush1.bf16.msra.mxu0 %v9064
      %9086 = vmatprep.subr.bf16.mxu0 0
      %9087 = vmatpush1.bf16.msra.mxu0 %v9065
      %9088 = vmatprep.subr.bf16.mxu0 0
      %9089 = vmatpush1.bf16.msra.mxu0 %v9066
      %9090 = vmatprep.subr.bf16.mxu0 0
      %9091 = vmatpush1.bf16.msra.mxu0 %v9067
      %9092 = vmatprep.subr.bf16.mxu0 0
      %9093 = vmatpush1.bf16.msra.mxu0 0
      %9094 = vmatprep.subr.bf16.mxu0 0
      %9095 = vmatpush1.bf16.msra.mxu0 0
      %9096 = vmatprep.subr.bf16.mxu0 0
      %9097 = vmatpush1.bf16.msra.mxu0 0
      %9098 = vmatprep.subr.bf16.mxu0 0
      %9099 = vmatpush1.bf16.msra.mxu0 0
      %9100 = vmatprep.subr.bf16.mxu0 0
      %9101 = vmatpush1.bf16.msra.mxu0 0
      %9102 = vmatprep.subr.bf16.mxu0 0
      %9103 = vmatpush1.bf16.msra.mxu0 0
      %9104 = vmatprep.subr.bf16.mxu0 0
      %9105 = vmatpush1.bf16.msra.mxu0 0
      %9106 = vmatprep.subr.bf16.mxu0 0
      %9107 = vmatpush1.bf16.msra.mxu0 0
      %9108 = vmatprep.mubr.bf16.mxu0 0
      %9109 = vmatmul.mubr.bf16.gmra.mrb[0].mxu0 %v7725
      %v9110 = vpop.f32.mrb[0].mxu0
      %v9111 = vadd.f32 0.0, %v9110
      %v9112 = vpop.f32.mrb[0].mxu0
      %v9113 = vpop.f32.mrb[0].mxu0
      %v9114 = vadd.f32 0.0, %v9113
      %v9115 = vpop.f32.mrb[0].mxu0
      %9116 = vmatprep.mubr.bf16.mxu0 0
      %9117 = vmatmul.mubr.bf16.gmra.mrb[0].mxu0 %v7726
      %v9118 = vpop.f32.mrb[0].mxu0
      %v9119 = vadd.f32 0.0, %v9118
      %v9120 = vpop.f32.mrb[0].mxu0
      %v9121 = vpop.f32.mrb[0].mxu0
      %v9122 = vadd.f32 0.0, %v9121
      %v9123 = vpop.f32.mrb[0].mxu0
      %9124 = vmatprep.mubr.bf16.mxu0 0
      %9125 = vmatmul.mubr.bf16.gmra.mrb[0].mxu0 %v7727
      %v9126 = vpop.f32.mrb[0].mxu0
      %v9127 = vadd.f32 0.0, %v9126
      %v9128 = vpop.f32.mrb[0].mxu0
      %v9129 = vpop.f32.mrb[0].mxu0
      %v9130 = vadd.f32 0.0, %v9129
      %v9131 = vpop.f32.mrb[0].mxu0
      %9132 = vmatprep.mubr.bf16.mxu0 0
      %9133 = vmatmul.mubr.bf16.gmra.mrb[0].mxu0 %v7728
      %v9134 = vpop.f32.mrb[0].mxu0
      %v9135 = vadd.f32 0.0, %v9134
      %v9136 = vpop.f32.mrb[0].mxu0
      %v9137 = vpop.f32.mrb[0].mxu0
      %v9138 = vadd.f32 0.0, %v9137
      %v9139 = vpop.f32.mrb[0].mxu0
      %9140 = vmatprep.mubr.bf16.mxu0 0
      %9141 = vmatmul.mubr.bf16.gmra.mrb[0].mxu0 %v7729
      %v9142 = vpop.f32.mrb[0].mxu0
      %v9143 = vadd.f32 0.0, %v9142
      %v9144 = vpop.f32.mrb[0].mxu0
      %v9145 = vpop.f32.mrb[0].mxu0
      %v9146 = vadd.f32 0.0, %v9145
      %v9147 = vpop.f32.mrb[0].mxu0
      %9148 = vmatprep.mubr.bf16.mxu0 0
      %9149 = vmatmul.mubr.bf16.gmra.mrb[0].mxu0 %v7730
      %v9150 = vpop.f32.mrb[0].mxu0
      %v9151 = vadd.f32 0.0, %v9150
      %v9152 = vpop.f32.mrb[0].mxu0
      %v9153 = vpop.f32.mrb[0].mxu0
      %v9154 = vadd.f32 0.0, %v9153
      %v9155 = vpop.f32.mrb[0].mxu0
      %9156 = vmatprep.mubr.bf16.mxu0 0
      %9157 = vmatmul.mubr.bf16.gmra.mrb[0].mxu0 %v7731
      %v9158 = vpop.f32.mrb[0].mxu0
      %v9159 = vadd.f32 0.0, %v9158
      %v9160 = vpop.f32.mrb[0].mxu0
      %v9161 = vpop.f32.mrb[0].mxu0
      %v9162 = vadd.f32 0.0, %v9161
      %v9163 = vpop.f32.mrb[0].mxu0
      %9164 = vmatprep.mubr.bf16.mxu0 0
      %9165 = vmatmul.mubr.bf16.gmra.mrb[0].mxu0 %v7732
      %v9166 = vpop.f32.mrb[0].mxu0
      %v9167 = vadd.f32 0.0, %v9166
      %v9168 = vpop.f32.mrb[0].mxu0
      %v9169 = vpop.f32.mrb[0].mxu0
      %v9170 = vadd.f32 0.0, %v9169
      %v9171 = vpop.f32.mrb[0].mxu0
      %9172 = vmatprep.mubr.bf16.mxu0 0
      %9173 = vmatmul.mubr.bf16.gmra.mrb[0].mxu0 %v7733
      %v9174 = vpop.f32.mrb[0].mxu0
      %v9175 = vadd.f32 0.0, %v9174
      %v9176 = vpop.f32.mrb[0].mxu0
      %v9177 = vpop.f32.mrb[0].mxu0
      %v9178 = vadd.f32 0.0, %v9177
      %v9179 = vpop.f32.mrb[0].mxu0
      %9180 = vmatprep.mubr.bf16.mxu0 0
      %9181 = vmatmul.mubr.bf16.gmra.mrb[0].mxu0 %v7734
      %v9182 = vpop.f32.mrb[0].mxu0
      %v9183 = vadd.f32 0.0, %v9182
      %v9184 = vpop.f32.mrb[0].mxu0
      %v9185 = vpop.f32.mrb[0].mxu0
      %v9186 = vadd.f32 0.0, %v9185
      %v9187 = vpop.f32.mrb[0].mxu0
      %9188 = vmatprep.mubr.bf16.mxu0 0
      %9189 = vmatmul.mubr.bf16.gmra.mrb[0].mxu0 %v7735
      %v9190 = vpop.f32.mrb[0].mxu0
      %v9191 = vadd.f32 0.0, %v9190
      %v9192 = vpop.f32.mrb[0].mxu0
      %v9193 = vpop.f32.mrb[0].mxu0
      %v9194 = vadd.f32 0.0, %v9193
      %v9195 = vpop.f32.mrb[0].mxu0
      %9196 = vmatprep.mubr.bf16.mxu0 0
      %9197 = vmatmul.mubr.bf16.gmra.mrb[0].mxu0 %v7736
      %v9198 = vpop.f32.mrb[0].mxu0
      %v9199 = vadd.f32 0.0, %v9198
      %v9200 = vpop.f32.mrb[0].mxu0
      %v9201 = vpop.f32.mrb[0].mxu0
      %v9202 = vadd.f32 0.0, %v9201
      %v9203 = vpop.f32.mrb[0].mxu0
      %9204 = vmatprep.mubr.bf16.mxu0 0
      %9205 = vmatmul.mubr.bf16.gmra.mrb[0].mxu0 %v7737
      %v9206 = vpop.f32.mrb[0].mxu0
      %v9207 = vadd.f32 0.0, %v9206
      %v9208 = vpop.f32.mrb[0].mxu0
      %v9209 = vpop.f32.mrb[0].mxu0
      %v9210 = vadd.f32 0.0, %v9209
      %v9211 = vpop.f32.mrb[0].mxu0
      %9212 = vmatprep.mubr.bf16.mxu0 0
      %9213 = vmatmul.mubr.bf16.gmra.mrb[0].mxu0 %v7738
      %v9214 = vpop.f32.mrb[0].mxu0
      %v9215 = vadd.f32 0.0, %v9214
      %v9216 = vpop.f32.mrb[0].mxu0
      %v9217 = vpop.f32.mrb[0].mxu0
      %v9218 = vadd.f32 0.0, %v9217
      %v9219 = vpop.f32.mrb[0].mxu0
      %9220 = vmatprep.mubr.bf16.mxu0 0
      %9221 = vmatmul.mubr.bf16.gmra.mrb[0].mxu0 %v7739
      %v9222 = vpop.f32.mrb[0].mxu0
      %v9223 = vadd.f32 0.0, %v9222
      %v9224 = vpop.f32.mrb[0].mxu0
      %v9225 = vpop.f32.mrb[0].mxu0
      %v9226 = vadd.f32 0.0, %v9225
      %v9227 = vpop.f32.mrb[0].mxu0
      %9228 = vmatprep.mubr.bf16.mxu0 0
      %9229 = vmatmul.mubr.bf16.gmra.mrb[0].mxu0 %v7740
      %v9230 = vpop.f32.mrb[0].mxu0
      %v9231 = vadd.f32 0.0, %v9230
      %v9232 = vpop.f32.mrb[0].mxu0
      %v9233 = vpop.f32.mrb[0].mxu0
      %v9234 = vadd.f32 0.0, %v9233
      %v9235 = vpop.f32.mrb[0].mxu0
      %9236 = vmatprep.mubr.bf16.mxu0 0
      %9237 = vmatmul.mubr.bf16.gmra.mrb[0].mxu0 %v7741
      %v9238 = vpop.f32.mrb[0].mxu0
      %v9239 = vadd.f32 0.0, %v9238
      %v9240 = vpop.f32.mrb[0].mxu0
      %v9241 = vpop.f32.mrb[0].mxu0
      %v9242 = vadd.f32 0.0, %v9241
      %v9243 = vpop.f32.mrb[0].mxu0
      %9244 = vmatprep.mubr.bf16.mxu0 0
      %9245 = vmatmul.mubr.bf16.gmra.mrb[0].mxu0 %v7742
      %v9246 = vpop.f32.mrb[0].mxu0
      %v9247 = vadd.f32 0.0, %v9246
      %v9248 = vpop.f32.mrb[0].mxu0
      %v9249 = vpop.f32.mrb[0].mxu0
      %v9250 = vadd.f32 0.0, %v9249
      %v9251 = vpop.f32.mrb[0].mxu0
      %9252 = vmatprep.mubr.bf16.mxu0 0
      %9253 = vmatmul.mubr.bf16.gmra.mrb[0].mxu0 %v7743
      %v9254 = vpop.f32.mrb[0].mxu0
      %v9255 = vadd.f32 0.0, %v9254
      %v9256 = vpop.f32.mrb[0].mxu0
      %v9257 = vpop.f32.mrb[0].mxu0
      %v9258 = vadd.f32 0.0, %v9257
      %v9259 = vpop.f32.mrb[0].mxu0
      %9260 = vmatprep.mubr.bf16.mxu0 0
      %9261 = vmatmul.mubr.bf16.gmra.mrb[0].mxu0 %v7744
      %v9262 = vpop.f32.mrb[0].mxu0
      %v9263 = vadd.f32 0.0, %v9262
      %v9264 = vpop.f32.mrb[0].mxu0
      %v9265 = vpop.f32.mrb[0].mxu0
      %v9266 = vadd.f32 0.0, %v9265
      %v9267 = vpop.f32.mrb[0].mxu0
      %9268 = vmatprep.mubr.bf16.mxu0 0
      %9269 = vmatmul.mubr.bf16.gmra.mrb[0].mxu0 %v7745
      %v9270 = vpop.f32.mrb[0].mxu0
      %v9271 = vadd.f32 0.0, %v9270
      %v9272 = vpop.f32.mrb[0].mxu0
      %v9273 = vpop.f32.mrb[0].mxu0
      %v9274 = vadd.f32 0.0, %v9273
      %v9275 = vpop.f32.mrb[0].mxu0
      %9276 = vmatprep.mubr.bf16.mxu0 0
      %9277 = vmatmul.mubr.bf16.gmra.mrb[0].mxu0 %v7746
      %v9278 = vpop.f32.mrb[0].mxu0
      %v9279 = vadd.f32 0.0, %v9278
      %v9280 = vpop.f32.mrb[0].mxu0
      %v9281 = vpop.f32.mrb[0].mxu0
      %v9282 = vadd.f32 0.0, %v9281
      %v9283 = vpop.f32.mrb[0].mxu0
      %9284 = vmatprep.mubr.bf16.mxu0 0
      %9285 = vmatmul.mubr.bf16.gmra.mrb[0].mxu0 %v7747
      %v9286 = vpop.f32.mrb[0].mxu0
      %v9287 = vadd.f32 0.0, %v9286
      %v9288 = vpop.f32.mrb[0].mxu0
      %v9289 = vpop.f32.mrb[0].mxu0
      %v9290 = vadd.f32 0.0, %v9289
      %v9291 = vpop.f32.mrb[0].mxu0
      %9292 = vmatprep.mubr.bf16.mxu0 0
      %9293 = vmatmul.mubr.bf16.gmra.mrb[0].mxu0 %v7748
      %v9294 = vpop.f32.mrb[0].mxu0
      %v9295 = vadd.f32 0.0, %v9294
      %v9296 = vpop.f32.mrb[0].mxu0
      %v9297 = vpop.f32.mrb[0].mxu0
      %v9298 = vadd.f32 0.0, %v9297
      %v9299 = vpop.f32.mrb[0].mxu0
      %9300 = vmatprep.mubr.bf16.mxu0 0
      %9301 = vmatmul.mubr.bf16.gmra.mrb[0].mxu0 %v7749
      %v9302 = vpop.f32.mrb[0].mxu0
      %v9303 = vadd.f32 0.0, %v9302
      %v9304 = vpop.f32.mrb[0].mxu0
      %v9305 = vpop.f32.mrb[0].mxu0
      %v9306 = vadd.f32 0.0, %v9305
      %v9307 = vpop.f32.mrb[0].mxu0
      %9308 = vmatprep.mubr.bf16.mxu0 0
      %9309 = vmatmul.mubr.bf16.gmra.mrb[0].mxu0 %v7750
      %v9310 = vpop.f32.mrb[0].mxu0
      %v9311 = vadd.f32 0.0, %v9310
      %v9312 = vpop.f32.mrb[0].mxu0
      %v9313 = vpop.f32.mrb[0].mxu0
      %v9314 = vadd.f32 0.0, %v9313
      %v9315 = vpop.f32.mrb[0].mxu0
      %9316 = vmatprep.mubr.bf16.mxu0 0
      %9317 = vmatmul.mubr.bf16.gmra.mrb[0].mxu0 %v7751
      %v9318 = vpop.f32.mrb[0].mxu0
      %v9319 = vadd.f32 0.0, %v9318
      %v9320 = vpop.f32.mrb[0].mxu0
      %v9321 = vpop.f32.mrb[0].mxu0
      %v9322 = vadd.f32 0.0, %v9321
      %v9323 = vpop.f32.mrb[0].mxu0
      %9324 = vmatprep.mubr.bf16.mxu0 0
      %9325 = vmatmul.mubr.bf16.gmra.mrb[0].mxu0 %v7752
      %v9326 = vpop.f32.mrb[0].mxu0
      %v9327 = vadd.f32 0.0, %v9326
      %v9328 = vpop.f32.mrb[0].mxu0
      %v9329 = vpop.f32.mrb[0].mxu0
      %v9330 = vadd.f32 0.0, %v9329
      %v9331 = vpop.f32.mrb[0].mxu0
      %9332 = vmatprep.mubr.bf16.mxu0 0
      %9333 = vmatmul.mubr.bf16.gmra.mrb[0].mxu0 %v7753
      %v9334 = vpop.f32.mrb[0].mxu0
      %v9335 = vadd.f32 0.0, %v9334
      %v9336 = vpop.f32.mrb[0].mxu0
      %v9337 = vpop.f32.mrb[0].mxu0
      %v9338 = vadd.f32 0.0, %v9337
      %v9339 = vpop.f32.mrb[0].mxu0
      %9340 = vmatprep.mubr.bf16.mxu0 0
      %9341 = vmatmul.mubr.bf16.gmra.mrb[0].mxu0 %v7754
      %v9342 = vpop.f32.mrb[0].mxu0
      %v9343 = vadd.f32 0.0, %v9342
      %v9344 = vpop.f32.mrb[0].mxu0
      %v9345 = vpop.f32.mrb[0].mxu0
      %v9346 = vadd.f32 0.0, %v9345
      %v9347 = vpop.f32.mrb[0].mxu0
      %9348 = vmatprep.mubr.bf16.mxu0 0
      %9349 = vmatmul.mubr.bf16.gmra.mrb[0].mxu0 %v7755
      %v9350 = vpop.f32.mrb[0].mxu0
      %v9351 = vadd.f32 0.0, %v9350
      %v9352 = vpop.f32.mrb[0].mxu0
      %v9353 = vpop.f32.mrb[0].mxu0
      %v9354 = vadd.f32 0.0, %v9353
      %v9355 = vpop.f32.mrb[0].mxu0
      %9356 = vmatprep.mubr.bf16.mxu0 0
      %9357 = vmatmul.mubr.bf16.gmra.mrb[0].mxu0 %v7756
      %v9358 = vpop.f32.mrb[0].mxu0
      %v9359 = vadd.f32 0.0, %v9358
      %v9360 = vpop.f32.mrb[0].mxu0
      %v9361 = vpop.f32.mrb[0].mxu0
      %v9362 = vadd.f32 0.0, %v9361
      %v9363 = vpop.f32.mrb[0].mxu0
      %9364 = vdwg.mxu0
      %v9365 = vadd.f32 %v8757, %v9111
      %v9366 = vadd.f32 %v8760, %v9114
      %v9367 = vadd.f32 %v8765, %v9119
      %v9368 = vadd.f32 %v8768, %v9122
      %v9369 = vadd.f32 %v8773, %v9127
      %v9370 = vadd.f32 %v8776, %v9130
      %v9371 = vadd.f32 %v8781, %v9135
      %v9372 = vadd.f32 %v8784, %v9138
      %v9373 = vadd.f32 %v8789, %v9143
      %v9374 = vadd.f32 %v8792, %v9146
      %v9375 = vadd.f32 %v8797, %v9151
      %v9376 = vadd.f32 %v8800, %v9154
      %v9377 = vadd.f32 %v8805, %v9159
      %v9378 = vadd.f32 %v8808, %v9162
      %v9379 = vadd.f32 %v8813, %v9167
      %v9380 = vadd.f32 %v8816, %v9170
      %v9381 = vadd.f32 %v8821, %v9175
      %v9382 = vadd.f32 %v8824, %v9178
      %v9383 = vadd.f32 %v8829, %v9183
      %v9384 = vadd.f32 %v8832, %v9186
      %v9385 = vadd.f32 %v8837, %v9191
      %v9386 = vadd.f32 %v8840, %v9194
      %v9387 = vadd.f32 %v8845, %v9199
      %v9388 = vadd.f32 %v8848, %v9202
      %v9389 = vadd.f32 %v8853, %v9207
      %v9390 = vadd.f32 %v8856, %v9210
      %v9391 = vadd.f32 %v8861, %v9215
      %v9392 = vadd.f32 %v8864, %v9218
      %v9393 = vadd.f32 %v8869, %v9223
      %v9394 = vadd.f32 %v8872, %v9226
      %v9395 = vadd.f32 %v8877, %v9231
      %v9396 = vadd.f32 %v8880, %v9234
      %v9397 = vadd.f32 %v8885, %v9239
      %v9398 = vadd.f32 %v8888, %v9242
      %v9399 = vadd.f32 %v8893, %v9247
      %v9400 = vadd.f32 %v8896, %v9250
      %v9401 = vadd.f32 %v8901, %v9255
      %v9402 = vadd.f32 %v8904, %v9258
      %v9403 = vadd.f32 %v8909, %v9263
      %v9404 = vadd.f32 %v8912, %v9266
      %v9405 = vadd.f32 %v8917, %v9271
      %v9406 = vadd.f32 %v8920, %v9274
      %v9407 = vadd.f32 %v8925, %v9279
      %v9408 = vadd.f32 %v8928, %v9282
      %v9409 = vadd.f32 %v8933, %v9287
      %v9410 = vadd.f32 %v8936, %v9290
      %v9411 = vadd.f32 %v8941, %v9295
      %v9412 = vadd.f32 %v8944, %v9298
      %v9413 = vadd.f32 %v8949, %v9303
      %v9414 = vadd.f32 %v8952, %v9306
      %v9415 = vadd.f32 %v8957, %v9311
      %v9416 = vadd.f32 %v8960, %v9314
      %v9417 = vadd.f32 %v8965, %v9319
      %v9418 = vadd.f32 %v8968, %v9322
      %v9419 = vadd.f32 %v8973, %v9327
      %v9420 = vadd.f32 %v8976, %v9330
      %v9421 = vadd.f32 %v8981, %v9335
      %v9422 = vadd.f32 %v8984, %v9338
      %v9423 = vadd.f32 %v8989, %v9343
      %v9424 = vadd.f32 %v8992, %v9346
      %v9425 = vadd.f32 %v8997, %v9351
      %v9426 = vadd.f32 %v9000, %v9354
      %v9427 = vadd.f32 %v9005, %v9359
      %v9428 = vadd.f32 %v9008, %v9362
      %v9429 = vadd.f32 %v8302, %v9365
      %v9430 = vadd.f32 %v8301, %v9366
      %v9431 = vadd.f32 %v8300, %v9367
      %v9432 = vadd.f32 %v8299, %v9368
      %v9433 = vadd.f32 %v8298, %v9369
      %v9434 = vadd.f32 %v8297, %v9370
      %v9435 = vadd.f32 %v8296, %v9371
      %v9436 = vadd.f32 %v8295, %v9372
      %v9437 = vadd.f32 %v8294, %v9373
      %v9438 = vadd.f32 %v8293, %v9374
      %v9439 = vadd.f32 %v8292, %v9375
      %v9440 = vadd.f32 %v8291, %v9376
      %v9441 = vadd.f32 %v8290, %v9377
      %v9442 = vadd.f32 %v8289, %v9378
      %v9443 = vadd.f32 %v8288, %v9379
      %v9444 = vadd.f32 %v8287, %v9380
      %v9445 = vadd.f32 %v8286, %v9381
      %v9446 = vadd.f32 %v8285, %v9382
      %v9447 = vadd.f32 %v8284, %v9383
      %v9448 = vadd.f32 %v8283, %v9384
      %v9449 = vadd.f32 %v8282, %v9385
      %v9450 = vadd.f32 %v8281, %v9386
      %v9451 = vadd.f32 %v8280, %v9387
      %v9452 = vadd.f32 %v8279, %v9388
      %v9453 = vadd.f32 %v8278, %v9389
      %v9454 = vadd.f32 %v8277, %v9390
      %v9455 = vadd.f32 %v8276, %v9391
      %v9456 = vadd.f32 %v8275, %v9392
      %v9457 = vadd.f32 %v8274, %v9393
      %v9458 = vadd.f32 %v8273, %v9394
      %v9459 = vadd.f32 %v8272, %v9395
      %v9460 = vadd.f32 %v8271, %v9396
      %v9461 = vadd.f32 %v8270, %v9397
      %v9462 = vadd.f32 %v8269, %v9398
      %v9463 = vadd.f32 %v8268, %v9399
      %v9464 = vadd.f32 %v8267, %v9400
      %v9465 = vadd.f32 %v8266, %v9401
      %v9466 = vadd.f32 %v8265, %v9402
      %v9467 = vadd.f32 %v8264, %v9403
      %v9468 = vadd.f32 %v8263, %v9404
      %v9469 = vadd.f32 %v8262, %v9405
      %v9470 = vadd.f32 %v8261, %v9406
      %v9471 = vadd.f32 %v8260, %v9407
      %v9472 = vadd.f32 %v8259, %v9408
      %v9473 = vadd.f32 %v8258, %v9409
      %v9474 = vadd.f32 %v8257, %v9410
      %v9475 = vadd.f32 %v8256, %v9411
      %v9476 = vadd.f32 %v8255, %v9412
      %v9477 = vadd.f32 %v8254, %v9413
      %v9478 = vadd.f32 %v8253, %v9414
      %v9479 = vadd.f32 %v8252, %v9415
      %v9480 = vadd.f32 %v8251, %v9416
      %v9481 = vadd.f32 %v8250, %v9417
      %v9482 = vadd.f32 %v8249, %v9418
      %v9483 = vadd.f32 %v8248, %v9419
      %v9484 = vadd.f32 %v8247, %v9420
      %v9485 = vadd.f32 %v8246, %v9421
      %v9486 = vadd.f32 %v8245, %v9422
      %v9487 = vadd.f32 %v8244, %v9423
      %v9488 = vadd.f32 %v8243, %v9424
      %v9489 = vadd.f32 %v8242, %v9425
      %v9490 = vadd.f32 %v8241, %v9426
      %v9491 = vadd.f32 %v8240, %v9427
      %v9492 = vadd.f32 %v8239, %v9428
      %s9493 = scalar_lea.vmem %s2, 128
      %v9494 = vld [vmem:[%s9493] sm:$0xf]
      %v9495 = vld [vmem:[%s9493 + $0x4] sm:$0xf]
      %v9496 = vld [vmem:[%s9493 + $0x8] sm:$0xf]
      %v9497 = vld [vmem:[%s9493 + $0xc] sm:$0xf]
      %v9498 = vld [vmem:[%s9493 + $0x10] sm:$0xf]
      %v9499 = vld [vmem:[%s9493 + $0x14] sm:$0xf]
      %v9500 = vld [vmem:[%s9493 + $0x18] sm:$0xf]
      %v9501 = vld [vmem:[%s9493 + $0x1c] sm:$0xf]
      %v9502 = vld [vmem:[%s9493 + $0x20] sm:$0xf]
      %v9503 = vld [vmem:[%s9493 + $0x24] sm:$0xf]
      %v9504 = vld [vmem:[%s9493 + $0x28] sm:$0xf]
      %v9505 = vld [vmem:[%s9493 + $0x2c] sm:$0xf]
      %v9506 = vld [vmem:[%s9493 + $0x30] sm:$0xf]
      %v9507 = vld [vmem:[%s9493 + $0x34] sm:$0xf]
      %v9508 = vld [vmem:[%s9493 + $0x38] sm:$0xf]
      %v9509 = vld [vmem:[%s9493 + $0x3c] sm:$0xf]
      %s9510 = scalar_lea.vmem %s2, 320
      %v9511 = vld [vmem:[%s9510] sm:$0xf]
      %v9512 = vld [vmem:[%s9510 + $0x4] sm:$0xf]
      %v9513 = vld [vmem:[%s9510 + $0x8] sm:$0xf]
      %v9514 = vld [vmem:[%s9510 + $0xc] sm:$0xf]
      %v9515 = vld [vmem:[%s9510 + $0x10] sm:$0xf]
      %v9516 = vld [vmem:[%s9510 + $0x14] sm:$0xf]
      %v9517 = vld [vmem:[%s9510 + $0x18] sm:$0xf]
      %v9518 = vld [vmem:[%s9510 + $0x1c] sm:$0xf]
      %v9519 = vld [vmem:[%s9510 + $0x20] sm:$0xf]
      %v9520 = vld [vmem:[%s9510 + $0x24] sm:$0xf]
      %v9521 = vld [vmem:[%s9510 + $0x28] sm:$0xf]
      %v9522 = vld [vmem:[%s9510 + $0x2c] sm:$0xf]
      %v9523 = vld [vmem:[%s9510 + $0x30] sm:$0xf]
      %v9524 = vld [vmem:[%s9510 + $0x34] sm:$0xf]
      %v9525 = vld [vmem:[%s9510 + $0x38] sm:$0xf]
      %v9526 = vld [vmem:[%s9510 + $0x3c] sm:$0xf]
      %v9543 = vunpack.c.l.b16 %v9511
      %v9544 = vunpack.c.l.b16 %v9512
      %v9545 = vunpack.c.l.b16 %v9513
      %v9546 = vunpack.c.l.b16 %v9514
      %v9547 = vunpack.c.l.b16 %v9515
      %v9548 = vunpack.c.l.b16 %v9516
      %v9549 = vunpack.c.l.b16 %v9517
      %v9550 = vunpack.c.l.b16 %v9518
      %v9551 = vunpack.c.l.b16 %v9519
      %v9552 = vunpack.c.l.b16 %v9520
      %v9553 = vunpack.c.l.b16 %v9521
      %v9554 = vunpack.c.l.b16 %v9522
      %v9555 = vunpack.c.l.b16 %v9523
      %v9556 = vunpack.c.l.b16 %v9524
      %v9557 = vunpack.c.l.b16 %v9525
      %v9558 = vunpack.c.l.b16 %v9526
      %v9559 = vpack.c.b16 %v9544, %v9543
      %v9560 = vpack.c.b16 %v9546, %v9545
      %v9561 = vpack.c.b16 %v9548, %v9547
      %v9562 = vpack.c.b16 %v9550, %v9549
      %v9563 = vpack.c.b16 %v9552, %v9551
      %v9564 = vpack.c.b16 %v9554, %v9553
      %v9565 = vpack.c.b16 %v9556, %v9555
      %v9566 = vpack.c.b16 %v9558, %v9557
      %9575 = vmatprep.subr.bf16.mxu0 0
      %9576 = vmatpush1.bf16.msra.mxu0 %v9559
      %9577 = vmatprep.subr.bf16.mxu0 0
      %9578 = vmatpush1.bf16.msra.mxu0 %v9560
      %9579 = vmatprep.subr.bf16.mxu0 0
      %9580 = vmatpush1.bf16.msra.mxu0 %v9561
      %9581 = vmatprep.subr.bf16.mxu0 0
      %9582 = vmatpush1.bf16.msra.mxu0 %v9562
      %9583 = vmatprep.subr.bf16.mxu0 0
      %9584 = vmatpush1.bf16.msra.mxu0 %v9563
      %9585 = vmatprep.subr.bf16.mxu0 0
      %9586 = vmatpush1.bf16.msra.mxu0 %v9564
      %9587 = vmatprep.subr.bf16.mxu0 0
      %9588 = vmatpush1.bf16.msra.mxu0 %v9565
      %9589 = vmatprep.subr.bf16.mxu0 0
      %9590 = vmatpush1.bf16.msra.mxu0 %v9566
      %9591 = vmatprep.subr.bf16.mxu0 0
      %9592 = vmatpush1.bf16.msra.mxu0 0
      %9593 = vmatprep.subr.bf16.mxu0 0
      %9594 = vmatpush1.bf16.msra.mxu0 0
      %9595 = vmatprep.subr.bf16.mxu0 0
      %9596 = vmatpush1.bf16.msra.mxu0 0
      %9597 = vmatprep.subr.bf16.mxu0 0
      %9598 = vmatpush1.bf16.msra.mxu0 0
      %9599 = vmatprep.subr.bf16.mxu0 0
      %9600 = vmatpush1.bf16.msra.mxu0 0
      %9601 = vmatprep.subr.bf16.mxu0 0
      %9602 = vmatpush1.bf16.msra.mxu0 0
      %9603 = vmatprep.subr.bf16.mxu0 0
      %9604 = vmatpush1.bf16.msra.mxu0 0
      %9605 = vmatprep.subr.bf16.mxu0 0
      %9606 = vmatpush1.bf16.msra.mxu0 0
      %9607 = vmatprep.mubr.bf16.mxu0 0
      %9608 = vmatmul.mubr.bf16.gmra.mrb[0].mxu0 %v6986
      %v9609 = vpop.f32.mrb[0].mxu0
      %v9610 = vadd.f32 0.0, %v9609
      %v9611 = vpop.f32.mrb[0].mxu0
      %v9612 = vpop.f32.mrb[0].mxu0
      %v9613 = vadd.f32 0.0, %v9612
      %v9614 = vpop.f32.mrb[0].mxu0
      %9615 = vmatprep.mubr.bf16.mxu0 0
      %9616 = vmatmul.mubr.bf16.gmra.mrb[0].mxu0 %v6987
      %v9617 = vpop.f32.mrb[0].mxu0
      %v9618 = vadd.f32 0.0, %v9617
      %v9619 = vpop.f32.mrb[0].mxu0
      %v9620 = vpop.f32.mrb[0].mxu0
      %v9621 = vadd.f32 0.0, %v9620
      %v9622 = vpop.f32.mrb[0].mxu0
      %9623 = vmatprep.mubr.bf16.mxu0 0
      %9624 = vmatmul.mubr.bf16.gmra.mrb[0].mxu0 %v6988
      %v9625 = vpop.f32.mrb[0].mxu0
      %v9626 = vadd.f32 0.0, %v9625
      %v9627 = vpop.f32.mrb[0].mxu0
      %v9628 = vpop.f32.mrb[0].mxu0
      %v9629 = vadd.f32 0.0, %v9628
      %v9630 = vpop.f32.mrb[0].mxu0
      %9631 = vmatprep.mubr.bf16.mxu0 0
      %9632 = vmatmul.mubr.bf16.gmra.mrb[0].mxu0 %v6989
      %v9633 = vpop.f32.mrb[0].mxu0
      %v9634 = vadd.f32 0.0, %v9633
      %v9635 = vpop.f32.mrb[0].mxu0
      %v9636 = vpop.f32.mrb[0].mxu0
      %v9637 = vadd.f32 0.0, %v9636
      %v9638 = vpop.f32.mrb[0].mxu0
      %9639 = vmatprep.mubr.bf16.mxu0 0
      %9640 = vmatmul.mubr.bf16.gmra.mrb[0].mxu0 %v6990
      %v9641 = vpop.f32.mrb[0].mxu0
      %v9642 = vadd.f32 0.0, %v9641
      %v9643 = vpop.f32.mrb[0].mxu0
      %v9644 = vpop.f32.mrb[0].mxu0
      %v9645 = vadd.f32 0.0, %v9644
      %v9646 = vpop.f32.mrb[0].mxu0
      %9647 = vmatprep.mubr.bf16.mxu0 0
      %9648 = vmatmul.mubr.bf16.gmra.mrb[0].mxu0 %v6991
      %v9649 = vpop.f32.mrb[0].mxu0
      %v9650 = vadd.f32 0.0, %v9649
      %v9651 = vpop.f32.mrb[0].mxu0
      %v9652 = vpop.f32.mrb[0].mxu0
      %v9653 = vadd.f32 0.0, %v9652
      %v9654 = vpop.f32.mrb[0].mxu0
      %9655 = vmatprep.mubr.bf16.mxu0 0
      %9656 = vmatmul.mubr.bf16.gmra.mrb[0].mxu0 %v6992
      %v9657 = vpop.f32.mrb[0].mxu0
      %v9658 = vadd.f32 0.0, %v9657
      %v9659 = vpop.f32.mrb[0].mxu0
      %v9660 = vpop.f32.mrb[0].mxu0
      %v9661 = vadd.f32 0.0, %v9660
      %v9662 = vpop.f32.mrb[0].mxu0
      %9663 = vmatprep.mubr.bf16.mxu0 0
      %9664 = vmatmul.mubr.bf16.gmra.mrb[0].mxu0 %v6993
      %v9665 = vpop.f32.mrb[0].mxu0
      %v9666 = vadd.f32 0.0, %v9665
      %v9667 = vpop.f32.mrb[0].mxu0
      %v9668 = vpop.f32.mrb[0].mxu0
      %v9669 = vadd.f32 0.0, %v9668
      %v9670 = vpop.f32.mrb[0].mxu0
      %9671 = vmatprep.mubr.bf16.mxu0 0
      %9672 = vmatmul.mubr.bf16.gmra.mrb[0].mxu0 %v6994
      %v9673 = vpop.f32.mrb[0].mxu0
      %v9674 = vadd.f32 0.0, %v9673
      %v9675 = vpop.f32.mrb[0].mxu0
      %v9676 = vpop.f32.mrb[0].mxu0
      %v9677 = vadd.f32 0.0, %v9676
      %v9678 = vpop.f32.mrb[0].mxu0
      %9679 = vmatprep.mubr.bf16.mxu0 0
      %9680 = vmatmul.mubr.bf16.gmra.mrb[0].mxu0 %v6995
      %v9681 = vpop.f32.mrb[0].mxu0
      %v9682 = vadd.f32 0.0, %v9681
      %v9683 = vpop.f32.mrb[0].mxu0
      %v9684 = vpop.f32.mrb[0].mxu0
      %v9685 = vadd.f32 0.0, %v9684
      %v9686 = vpop.f32.mrb[0].mxu0
      %9687 = vmatprep.mubr.bf16.mxu0 0
      %9688 = vmatmul.mubr.bf16.gmra.mrb[0].mxu0 %v6996
      %v9689 = vpop.f32.mrb[0].mxu0
      %v9690 = vadd.f32 0.0, %v9689
      %v9691 = vpop.f32.mrb[0].mxu0
      %v9692 = vpop.f32.mrb[0].mxu0
      %v9693 = vadd.f32 0.0, %v9692
      %v9694 = vpop.f32.mrb[0].mxu0
      %9695 = vmatprep.mubr.bf16.mxu0 0
      %9696 = vmatmul.mubr.bf16.gmra.mrb[0].mxu0 %v6997
      %v9697 = vpop.f32.mrb[0].mxu0
      %v9698 = vadd.f32 0.0, %v9697
      %v9699 = vpop.f32.mrb[0].mxu0
      %v9700 = vpop.f32.mrb[0].mxu0
      %v9701 = vadd.f32 0.0, %v9700
      %v9702 = vpop.f32.mrb[0].mxu0
      %9703 = vmatprep.mubr.bf16.mxu0 0
      %9704 = vmatmul.mubr.bf16.gmra.mrb[0].mxu0 %v6998
      %v9705 = vpop.f32.mrb[0].mxu0
      %v9706 = vadd.f32 0.0, %v9705
      %v9707 = vpop.f32.mrb[0].mxu0
      %v9708 = vpop.f32.mrb[0].mxu0
      %v9709 = vadd.f32 0.0, %v9708
      %v9710 = vpop.f32.mrb[0].mxu0
      %9711 = vmatprep.mubr.bf16.mxu0 0
      %9712 = vmatmul.mubr.bf16.gmra.mrb[0].mxu0 %v6999
      %v9713 = vpop.f32.mrb[0].mxu0
      %v9714 = vadd.f32 0.0, %v9713
      %v9715 = vpop.f32.mrb[0].mxu0
      %v9716 = vpop.f32.mrb[0].mxu0
      %v9717 = vadd.f32 0.0, %v9716
      %v9718 = vpop.f32.mrb[0].mxu0
      %9719 = vmatprep.mubr.bf16.mxu0 0
      %9720 = vmatmul.mubr.bf16.gmra.mrb[0].mxu0 %v7000
      %v9721 = vpop.f32.mrb[0].mxu0
      %v9722 = vadd.f32 0.0, %v9721
      %v9723 = vpop.f32.mrb[0].mxu0
      %v9724 = vpop.f32.mrb[0].mxu0
      %v9725 = vadd.f32 0.0, %v9724
      %v9726 = vpop.f32.mrb[0].mxu0
      %9727 = vmatprep.mubr.bf16.mxu0 0
      %9728 = vmatmul.mubr.bf16.gmra.mrb[0].mxu0 %v7001
      %v9729 = vpop.f32.mrb[0].mxu0
      %v9730 = vadd.f32 0.0, %v9729
      %v9731 = vpop.f32.mrb[0].mxu0
      %v9732 = vpop.f32.mrb[0].mxu0
      %v9733 = vadd.f32 0.0, %v9732
      %v9734 = vpop.f32.mrb[0].mxu0
      %9735 = vmatprep.mubr.bf16.mxu0 0
      %9736 = vmatmul.mubr.bf16.gmra.mrb[0].mxu0 %v7002
      %v9737 = vpop.f32.mrb[0].mxu0
      %v9738 = vadd.f32 0.0, %v9737
      %v9739 = vpop.f32.mrb[0].mxu0
      %v9740 = vpop.f32.mrb[0].mxu0
      %v9741 = vadd.f32 0.0, %v9740
      %v9742 = vpop.f32.mrb[0].mxu0
      %9743 = vmatprep.mubr.bf16.mxu0 0
      %9744 = vmatmul.mubr.bf16.gmra.mrb[0].mxu0 %v7003
      %v9745 = vpop.f32.mrb[0].mxu0
      %v9746 = vadd.f32 0.0, %v9745
      %v9747 = vpop.f32.mrb[0].mxu0
      %v9748 = vpop.f32.mrb[0].mxu0
      %v9749 = vadd.f32 0.0, %v9748
      %v9750 = vpop.f32.mrb[0].mxu0
      %9751 = vmatprep.mubr.bf16.mxu0 0
      %9752 = vmatmul.mubr.bf16.gmra.mrb[0].mxu0 %v7004
      %v9753 = vpop.f32.mrb[0].mxu0
      %v9754 = vadd.f32 0.0, %v9753
      %v9755 = vpop.f32.mrb[0].mxu0
      %v9756 = vpop.f32.mrb[0].mxu0
      %v9757 = vadd.f32 0.0, %v9756
      %v9758 = vpop.f32.mrb[0].mxu0
      %9759 = vmatprep.mubr.bf16.mxu0 0
      %9760 = vmatmul.mubr.bf16.gmra.mrb[0].mxu0 %v7005
      %v9761 = vpop.f32.mrb[0].mxu0
      %v9762 = vadd.f32 0.0, %v9761
      %v9763 = vpop.f32.mrb[0].mxu0
      %v9764 = vpop.f32.mrb[0].mxu0
      %v9765 = vadd.f32 0.0, %v9764
      %v9766 = vpop.f32.mrb[0].mxu0
      %9767 = vmatprep.mubr.bf16.mxu0 0
      %9768 = vmatmul.mubr.bf16.gmra.mrb[0].mxu0 %v7006
      %v9769 = vpop.f32.mrb[0].mxu0
      %v9770 = vadd.f32 0.0, %v9769
      %v9771 = vpop.f32.mrb[0].mxu0
      %v9772 = vpop.f32.mrb[0].mxu0
      %v9773 = vadd.f32 0.0, %v9772
      %v9774 = vpop.f32.mrb[0].mxu0
      %9775 = vmatprep.mubr.bf16.mxu0 0
      %9776 = vmatmul.mubr.bf16.gmra.mrb[0].mxu0 %v7007
      %v9777 = vpop.f32.mrb[0].mxu0
      %v9778 = vadd.f32 0.0, %v9777
      %v9779 = vpop.f32.mrb[0].mxu0
      %v9780 = vpop.f32.mrb[0].mxu0
      %v9781 = vadd.f32 0.0, %v9780
      %v9782 = vpop.f32.mrb[0].mxu0
      %9783 = vmatprep.mubr.bf16.mxu0 0
      %9784 = vmatmul.mubr.bf16.gmra.mrb[0].mxu0 %v7008
      %v9785 = vpop.f32.mrb[0].mxu0
      %v9786 = vadd.f32 0.0, %v9785
      %v9787 = vpop.f32.mrb[0].mxu0
      %v9788 = vpop.f32.mrb[0].mxu0
      %v9789 = vadd.f32 0.0, %v9788
      %v9790 = vpop.f32.mrb[0].mxu0
      %9791 = vmatprep.mubr.bf16.mxu0 0
      %9792 = vmatmul.mubr.bf16.gmra.mrb[0].mxu0 %v7009
      %v9793 = vpop.f32.mrb[0].mxu0
      %v9794 = vadd.f32 0.0, %v9793
      %v9795 = vpop.f32.mrb[0].mxu0
      %v9796 = vpop.f32.mrb[0].mxu0
      %v9797 = vadd.f32 0.0, %v9796
      %v9798 = vpop.f32.mrb[0].mxu0
      %9799 = vmatprep.mubr.bf16.mxu0 0
      %9800 = vmatmul.mubr.bf16.gmra.mrb[0].mxu0 %v7010
      %v9801 = vpop.f32.mrb[0].mxu0
      %v9802 = vadd.f32 0.0, %v9801
      %v9803 = vpop.f32.mrb[0].mxu0
      %v9804 = vpop.f32.mrb[0].mxu0
      %v9805 = vadd.f32 0.0, %v9804
      %v9806 = vpop.f32.mrb[0].mxu0
      %9807 = vmatprep.mubr.bf16.mxu0 0
      %9808 = vmatmul.mubr.bf16.gmra.mrb[0].mxu0 %v7011
      %v9809 = vpop.f32.mrb[0].mxu0
      %v9810 = vadd.f32 0.0, %v9809
      %v9811 = vpop.f32.mrb[0].mxu0
      %v9812 = vpop.f32.mrb[0].mxu0
      %v9813 = vadd.f32 0.0, %v9812
      %v9814 = vpop.f32.mrb[0].mxu0
      %9815 = vmatprep.mubr.bf16.mxu0 0
      %9816 = vmatmul.mubr.bf16.gmra.mrb[0].mxu0 %v7012
      %v9817 = vpop.f32.mrb[0].mxu0
      %v9818 = vadd.f32 0.0, %v9817
      %v9819 = vpop.f32.mrb[0].mxu0
      %v9820 = vpop.f32.mrb[0].mxu0
      %v9821 = vadd.f32 0.0, %v9820
      %v9822 = vpop.f32.mrb[0].mxu0
      %9823 = vmatprep.mubr.bf16.mxu0 0
      %9824 = vmatmul.mubr.bf16.gmra.mrb[0].mxu0 %v7013
      %v9825 = vpop.f32.mrb[0].mxu0
      %v9826 = vadd.f32 0.0, %v9825
      %v9827 = vpop.f32.mrb[0].mxu0
      %v9828 = vpop.f32.mrb[0].mxu0
      %v9829 = vadd.f32 0.0, %v9828
      %v9830 = vpop.f32.mrb[0].mxu0
      %9831 = vmatprep.mubr.bf16.mxu0 0
      %9832 = vmatmul.mubr.bf16.gmra.mrb[0].mxu0 %v7014
      %v9833 = vpop.f32.mrb[0].mxu0
      %v9834 = vadd.f32 0.0, %v9833
      %v9835 = vpop.f32.mrb[0].mxu0
      %v9836 = vpop.f32.mrb[0].mxu0
      %v9837 = vadd.f32 0.0, %v9836
      %v9838 = vpop.f32.mrb[0].mxu0
      %9839 = vmatprep.mubr.bf16.mxu0 0
      %9840 = vmatmul.mubr.bf16.gmra.mrb[0].mxu0 %v7015
      %v9841 = vpop.f32.mrb[0].mxu0
      %v9842 = vadd.f32 0.0, %v9841
      %v9843 = vpop.f32.mrb[0].mxu0
      %v9844 = vpop.f32.mrb[0].mxu0
      %v9845 = vadd.f32 0.0, %v9844
      %v9846 = vpop.f32.mrb[0].mxu0
      %9847 = vmatprep.mubr.bf16.mxu0 0
      %9848 = vmatmul.mubr.bf16.gmra.mrb[0].mxu0 %v7032
      %v9849 = vpop.f32.mrb[0].mxu0
      %v9850 = vadd.f32 0.0, %v9849
      %v9851 = vpop.f32.mrb[0].mxu0
      %v9852 = vpop.f32.mrb[0].mxu0
      %v9853 = vadd.f32 0.0, %v9852
      %v9854 = vpop.f32.mrb[0].mxu0
      %9855 = vmatprep.mubr.bf16.mxu0 0
      %9856 = vmatmul.mubr.bf16.gmra.mrb[0].mxu0 %v7033
      %v9857 = vpop.f32.mrb[0].mxu0
      %v9858 = vadd.f32 0.0, %v9857
      %v9859 = vpop.f32.mrb[0].mxu0
      %v9860 = vpop.f32.mrb[0].mxu0
      %v9861 = vadd.f32 0.0, %v9860
      %v9862 = vpop.f32.mrb[0].mxu0
      %9863 = vdwg.mxu0
      %v9880 = vunpack.c.l.b16 %v9494
      %v9881 = vunpack.c.l.b16 %v9495
      %v9882 = vunpack.c.l.b16 %v9496
      %v9883 = vunpack.c.l.b16 %v9497
      %v9884 = vunpack.c.l.b16 %v9498
      %v9885 = vunpack.c.l.b16 %v9499
      %v9886 = vunpack.c.l.b16 %v9500
      %v9887 = vunpack.c.l.b16 %v9501
      %v9888 = vunpack.c.l.b16 %v9502
      %v9889 = vunpack.c.l.b16 %v9503
      %v9890 = vunpack.c.l.b16 %v9504
      %v9891 = vunpack.c.l.b16 %v9505
      %v9892 = vunpack.c.l.b16 %v9506
      %v9893 = vunpack.c.l.b16 %v9507
      %v9894 = vunpack.c.l.b16 %v9508
      %v9895 = vunpack.c.l.b16 %v9509
      %v9896 = vpack.c.b16 %v9881, %v9880
      %v9897 = vpack.c.b16 %v9883, %v9882
      %v9898 = vpack.c.b16 %v9885, %v9884
      %v9899 = vpack.c.b16 %v9887, %v9886
      %v9900 = vpack.c.b16 %v9889, %v9888
      %v9901 = vpack.c.b16 %v9891, %v9890
      %v9902 = vpack.c.b16 %v9893, %v9892
      %v9903 = vpack.c.b16 %v9895, %v9894
      %9912 = vmatprep.subr.bf16.mxu0 0
      %9913 = vmatpush1.bf16.msra.mxu0 %v9896
      %9914 = vmatprep.subr.bf16.mxu0 0
      %9915 = vmatpush1.bf16.msra.mxu0 %v9897
      %9916 = vmatprep.subr.bf16.mxu0 0
      %9917 = vmatpush1.bf16.msra.mxu0 %v9898
      %9918 = vmatprep.subr.bf16.mxu0 0
      %9919 = vmatpush1.bf16.msra.mxu0 %v9899
      %9920 = vmatprep.subr.bf16.mxu0 0
      %9921 = vmatpush1.bf16.msra.mxu0 %v9900
      %9922 = vmatprep.subr.bf16.mxu0 0
      %9923 = vmatpush1.bf16.msra.mxu0 %v9901
      %9924 = vmatprep.subr.bf16.mxu0 0
      %9925 = vmatpush1.bf16.msra.mxu0 %v9902
      %9926 = vmatprep.subr.bf16.mxu0 0
      %9927 = vmatpush1.bf16.msra.mxu0 %v9903
      %9928 = vmatprep.subr.bf16.mxu0 0
      %9929 = vmatpush1.bf16.msra.mxu0 0
      %9930 = vmatprep.subr.bf16.mxu0 0
      %9931 = vmatpush1.bf16.msra.mxu0 0
      %9932 = vmatprep.subr.bf16.mxu0 0
      %9933 = vmatpush1.bf16.msra.mxu0 0
      %9934 = vmatprep.subr.bf16.mxu0 0
      %9935 = vmatpush1.bf16.msra.mxu0 0
      %9936 = vmatprep.subr.bf16.mxu0 0
      %9937 = vmatpush1.bf16.msra.mxu0 0
      %9938 = vmatprep.subr.bf16.mxu0 0
      %9939 = vmatpush1.bf16.msra.mxu0 0
      %9940 = vmatprep.subr.bf16.mxu0 0
      %9941 = vmatpush1.bf16.msra.mxu0 0
      %9942 = vmatprep.subr.bf16.mxu0 0
      %9943 = vmatpush1.bf16.msra.mxu0 0
      %9944 = vmatprep.mubr.bf16.mxu0 0
      %9945 = vmatmul.mubr.bf16.gmra.mrb[0].mxu0 %v6984
      %v9946 = vpop.f32.mrb[0].mxu0
      %v9947 = vadd.f32 %v9610, %v9946
      %v9948 = vpop.f32.mrb[0].mxu0
      %v9949 = vpop.f32.mrb[0].mxu0
      %v9950 = vadd.f32 %v9613, %v9949
      %v9951 = vpop.f32.mrb[0].mxu0
      %9952 = vmatprep.mubr.bf16.mxu0 0
      %9953 = vmatmul.mubr.bf16.gmra.mrb[0].mxu0 %v6985
      %v9954 = vpop.f32.mrb[0].mxu0
      %v9955 = vadd.f32 %v9618, %v9954
      %v9956 = vpop.f32.mrb[0].mxu0
      %v9957 = vpop.f32.mrb[0].mxu0
      %v9958 = vadd.f32 %v9621, %v9957
      %v9959 = vpop.f32.mrb[0].mxu0
      %9960 = vmatprep.mubr.bf16.mxu0 0
      %9961 = vmatmul.mubr.bf16.gmra.mrb[0].mxu0 %v6986
      %v9962 = vpop.f32.mrb[0].mxu0
      %v9963 = vadd.f32 %v9626, %v9962
      %v9964 = vpop.f32.mrb[0].mxu0
      %v9965 = vpop.f32.mrb[0].mxu0
      %v9966 = vadd.f32 %v9629, %v9965
      %v9967 = vpop.f32.mrb[0].mxu0
      %9968 = vmatprep.mubr.bf16.mxu0 0
      %9969 = vmatmul.mubr.bf16.gmra.mrb[0].mxu0 %v6987
      %v9970 = vpop.f32.mrb[0].mxu0
      %v9971 = vadd.f32 %v9634, %v9970
      %v9972 = vpop.f32.mrb[0].mxu0
      %v9973 = vpop.f32.mrb[0].mxu0
      %v9974 = vadd.f32 %v9637, %v9973
      %v9975 = vpop.f32.mrb[0].mxu0
      %9976 = vmatprep.mubr.bf16.mxu0 0
      %9977 = vmatmul.mubr.bf16.gmra.mrb[0].mxu0 %v6988
      %v9978 = vpop.f32.mrb[0].mxu0
      %v9979 = vadd.f32 %v9642, %v9978
      %v9980 = vpop.f32.mrb[0].mxu0
      %v9981 = vpop.f32.mrb[0].mxu0
      %v9982 = vadd.f32 %v9645, %v9981
      %v9983 = vpop.f32.mrb[0].mxu0
      %9984 = vmatprep.mubr.bf16.mxu0 0
      %9985 = vmatmul.mubr.bf16.gmra.mrb[0].mxu0 %v6989
      %v9986 = vpop.f32.mrb[0].mxu0
      %v9987 = vadd.f32 %v9650, %v9986
      %v9988 = vpop.f32.mrb[0].mxu0
      %v9989 = vpop.f32.mrb[0].mxu0
      %v9990 = vadd.f32 %v9653, %v9989
      %v9991 = vpop.f32.mrb[0].mxu0
      %9992 = vmatprep.mubr.bf16.mxu0 0
      %9993 = vmatmul.mubr.bf16.gmra.mrb[0].mxu0 %v6990
      %v9994 = vpop.f32.mrb[0].mxu0
      %v9995 = vadd.f32 %v9658, %v9994
      %v9996 = vpop.f32.mrb[0].mxu0
      %v9997 = vpop.f32.mrb[0].mxu0
      %v9998 = vadd.f32 %v9661, %v9997
      %v9999 = vpop.f32.mrb[0].mxu0
      %10000 = vmatprep.mubr.bf16.mxu0 0
      %10001 = vmatmul.mubr.bf16.gmra.mrb[0].mxu0 %v6991
      %v10002 = vpop.f32.mrb[0].mxu0
      %v10003 = vadd.f32 %v9666, %v10002
      %v10004 = vpop.f32.mrb[0].mxu0
      %v10005 = vpop.f32.mrb[0].mxu0
      %v10006 = vadd.f32 %v9669, %v10005
      %v10007 = vpop.f32.mrb[0].mxu0
      %10008 = vmatprep.mubr.bf16.mxu0 0
      %10009 = vmatmul.mubr.bf16.gmra.mrb[0].mxu0 %v6992
      %v10010 = vpop.f32.mrb[0].mxu0
      %v10011 = vadd.f32 %v9674, %v10010
      %v10012 = vpop.f32.mrb[0].mxu0
      %v10013 = vpop.f32.mrb[0].mxu0
      %v10014 = vadd.f32 %v9677, %v10013
      %v10015 = vpop.f32.mrb[0].mxu0
      %10016 = vmatprep.mubr.bf16.mxu0 0
      %10017 = vmatmul.mubr.bf16.gmra.mrb[0].mxu0 %v6993
      %v10018 = vpop.f32.mrb[0].mxu0
      %v10019 = vadd.f32 %v9682, %v10018
      %v10020 = vpop.f32.mrb[0].mxu0
      %v10021 = vpop.f32.mrb[0].mxu0
      %v10022 = vadd.f32 %v9685, %v10021
      %v10023 = vpop.f32.mrb[0].mxu0
      %10024 = vmatprep.mubr.bf16.mxu0 0
      %10025 = vmatmul.mubr.bf16.gmra.mrb[0].mxu0 %v6994
      %v10026 = vpop.f32.mrb[0].mxu0
      %v10027 = vadd.f32 %v9690, %v10026
      %v10028 = vpop.f32.mrb[0].mxu0
      %v10029 = vpop.f32.mrb[0].mxu0
      %v10030 = vadd.f32 %v9693, %v10029
      %v10031 = vpop.f32.mrb[0].mxu0
      %10032 = vmatprep.mubr.bf16.mxu0 0
      %10033 = vmatmul.mubr.bf16.gmra.mrb[0].mxu0 %v6995
      %v10034 = vpop.f32.mrb[0].mxu0
      %v10035 = vadd.f32 %v9698, %v10034
      %v10036 = vpop.f32.mrb[0].mxu0
      %v10037 = vpop.f32.mrb[0].mxu0
      %v10038 = vadd.f32 %v9701, %v10037
      %v10039 = vpop.f32.mrb[0].mxu0
      %10040 = vmatprep.mubr.bf16.mxu0 0
      %10041 = vmatmul.mubr.bf16.gmra.mrb[0].mxu0 %v6996
      %v10042 = vpop.f32.mrb[0].mxu0
      %v10043 = vadd.f32 %v9706, %v10042
      %v10044 = vpop.f32.mrb[0].mxu0
      %v10045 = vpop.f32.mrb[0].mxu0
      %v10046 = vadd.f32 %v9709, %v10045
      %v10047 = vpop.f32.mrb[0].mxu0
      %10048 = vmatprep.mubr.bf16.mxu0 0
      %10049 = vmatmul.mubr.bf16.gmra.mrb[0].mxu0 %v6997
      %v10050 = vpop.f32.mrb[0].mxu0
      %v10051 = vadd.f32 %v9714, %v10050
      %v10052 = vpop.f32.mrb[0].mxu0
      %v10053 = vpop.f32.mrb[0].mxu0
      %v10054 = vadd.f32 %v9717, %v10053
      %v10055 = vpop.f32.mrb[0].mxu0
      %10056 = vmatprep.mubr.bf16.mxu0 0
      %10057 = vmatmul.mubr.bf16.gmra.mrb[0].mxu0 %v6998
      %v10058 = vpop.f32.mrb[0].mxu0
      %v10059 = vadd.f32 %v9722, %v10058
      %v10060 = vpop.f32.mrb[0].mxu0
      %v10061 = vpop.f32.mrb[0].mxu0
      %v10062 = vadd.f32 %v9725, %v10061
      %v10063 = vpop.f32.mrb[0].mxu0
      %10064 = vmatprep.mubr.bf16.mxu0 0
      %10065 = vmatmul.mubr.bf16.gmra.mrb[0].mxu0 %v6999
      %v10066 = vpop.f32.mrb[0].mxu0
      %v10067 = vadd.f32 %v9730, %v10066
      %v10068 = vpop.f32.mrb[0].mxu0
      %v10069 = vpop.f32.mrb[0].mxu0
      %v10070 = vadd.f32 %v9733, %v10069
      %v10071 = vpop.f32.mrb[0].mxu0
      %10072 = vmatprep.mubr.bf16.mxu0 0
      %10073 = vmatmul.mubr.bf16.gmra.mrb[0].mxu0 %v7000
      %v10074 = vpop.f32.mrb[0].mxu0
      %v10075 = vadd.f32 %v9738, %v10074
      %v10076 = vpop.f32.mrb[0].mxu0
      %v10077 = vpop.f32.mrb[0].mxu0
      %v10078 = vadd.f32 %v9741, %v10077
      %v10079 = vpop.f32.mrb[0].mxu0
      %10080 = vmatprep.mubr.bf16.mxu0 0
      %10081 = vmatmul.mubr.bf16.gmra.mrb[0].mxu0 %v7001
      %v10082 = vpop.f32.mrb[0].mxu0
      %v10083 = vadd.f32 %v9746, %v10082
      %v10084 = vpop.f32.mrb[0].mxu0
      %v10085 = vpop.f32.mrb[0].mxu0
      %v10086 = vadd.f32 %v9749, %v10085
      %v10087 = vpop.f32.mrb[0].mxu0
      %10088 = vmatprep.mubr.bf16.mxu0 0
      %10089 = vmatmul.mubr.bf16.gmra.mrb[0].mxu0 %v7002
      %v10090 = vpop.f32.mrb[0].mxu0
      %v10091 = vadd.f32 %v9754, %v10090
      %v10092 = vpop.f32.mrb[0].mxu0
      %v10093 = vpop.f32.mrb[0].mxu0
      %v10094 = vadd.f32 %v9757, %v10093
      %v10095 = vpop.f32.mrb[0].mxu0
      %10096 = vmatprep.mubr.bf16.mxu0 0
      %10097 = vmatmul.mubr.bf16.gmra.mrb[0].mxu0 %v7003
      %v10098 = vpop.f32.mrb[0].mxu0
      %v10099 = vadd.f32 %v9762, %v10098
      %v10100 = vpop.f32.mrb[0].mxu0
      %v10101 = vpop.f32.mrb[0].mxu0
      %v10102 = vadd.f32 %v9765, %v10101
      %v10103 = vpop.f32.mrb[0].mxu0
      %10104 = vmatprep.mubr.bf16.mxu0 0
      %10105 = vmatmul.mubr.bf16.gmra.mrb[0].mxu0 %v7004
      %v10106 = vpop.f32.mrb[0].mxu0
      %v10107 = vadd.f32 %v9770, %v10106
      %v10108 = vpop.f32.mrb[0].mxu0
      %v10109 = vpop.f32.mrb[0].mxu0
      %v10110 = vadd.f32 %v9773, %v10109
      %v10111 = vpop.f32.mrb[0].mxu0
      %10112 = vmatprep.mubr.bf16.mxu0 0
      %10113 = vmatmul.mubr.bf16.gmra.mrb[0].mxu0 %v7005
      %v10114 = vpop.f32.mrb[0].mxu0
      %v10115 = vadd.f32 %v9778, %v10114
      %v10116 = vpop.f32.mrb[0].mxu0
      %v10117 = vpop.f32.mrb[0].mxu0
      %v10118 = vadd.f32 %v9781, %v10117
      %v10119 = vpop.f32.mrb[0].mxu0
      %10120 = vmatprep.mubr.bf16.mxu0 0
      %10121 = vmatmul.mubr.bf16.gmra.mrb[0].mxu0 %v7006
      %v10122 = vpop.f32.mrb[0].mxu0
      %v10123 = vadd.f32 %v9786, %v10122
      %v10124 = vpop.f32.mrb[0].mxu0
      %v10125 = vpop.f32.mrb[0].mxu0
      %v10126 = vadd.f32 %v9789, %v10125
      %v10127 = vpop.f32.mrb[0].mxu0
      %10128 = vmatprep.mubr.bf16.mxu0 0
      %10129 = vmatmul.mubr.bf16.gmra.mrb[0].mxu0 %v7007
      %v10130 = vpop.f32.mrb[0].mxu0
      %v10131 = vadd.f32 %v9794, %v10130
      %v10132 = vpop.f32.mrb[0].mxu0
      %v10133 = vpop.f32.mrb[0].mxu0
      %v10134 = vadd.f32 %v9797, %v10133
      %v10135 = vpop.f32.mrb[0].mxu0
      %10136 = vmatprep.mubr.bf16.mxu0 0
      %10137 = vmatmul.mubr.bf16.gmra.mrb[0].mxu0 %v7008
      %v10138 = vpop.f32.mrb[0].mxu0
      %v10139 = vadd.f32 %v9802, %v10138
      %v10140 = vpop.f32.mrb[0].mxu0
      %v10141 = vpop.f32.mrb[0].mxu0
      %v10142 = vadd.f32 %v9805, %v10141
      %v10143 = vpop.f32.mrb[0].mxu0
      %10144 = vmatprep.mubr.bf16.mxu0 0
      %10145 = vmatmul.mubr.bf16.gmra.mrb[0].mxu0 %v7009
      %v10146 = vpop.f32.mrb[0].mxu0
      %v10147 = vadd.f32 %v9810, %v10146
      %v10148 = vpop.f32.mrb[0].mxu0
      %v10149 = vpop.f32.mrb[0].mxu0
      %v10150 = vadd.f32 %v9813, %v10149
      %v10151 = vpop.f32.mrb[0].mxu0
      %10152 = vmatprep.mubr.bf16.mxu0 0
      %10153 = vmatmul.mubr.bf16.gmra.mrb[0].mxu0 %v7010
      %v10154 = vpop.f32.mrb[0].mxu0
      %v10155 = vadd.f32 %v9818, %v10154
      %v10156 = vpop.f32.mrb[0].mxu0
      %v10157 = vpop.f32.mrb[0].mxu0
      %v10158 = vadd.f32 %v9821, %v10157
      %v10159 = vpop.f32.mrb[0].mxu0
      %10160 = vmatprep.mubr.bf16.mxu0 0
      %10161 = vmatmul.mubr.bf16.gmra.mrb[0].mxu0 %v7011
      %v10162 = vpop.f32.mrb[0].mxu0
      %v10163 = vadd.f32 %v9826, %v10162
      %v10164 = vpop.f32.mrb[0].mxu0
      %v10165 = vpop.f32.mrb[0].mxu0
      %v10166 = vadd.f32 %v9829, %v10165
      %v10167 = vpop.f32.mrb[0].mxu0
      %10168 = vmatprep.mubr.bf16.mxu0 0
      %10169 = vmatmul.mubr.bf16.gmra.mrb[0].mxu0 %v7012
      %v10170 = vpop.f32.mrb[0].mxu0
      %v10171 = vadd.f32 %v9834, %v10170
      %v10172 = vpop.f32.mrb[0].mxu0
      %v10173 = vpop.f32.mrb[0].mxu0
      %v10174 = vadd.f32 %v9837, %v10173
      %v10175 = vpop.f32.mrb[0].mxu0
      %10176 = vmatprep.mubr.bf16.mxu0 0
      %10177 = vmatmul.mubr.bf16.gmra.mrb[0].mxu0 %v7013
      %v10178 = vpop.f32.mrb[0].mxu0
      %v10179 = vadd.f32 %v9842, %v10178
      %v10180 = vpop.f32.mrb[0].mxu0
      %v10181 = vpop.f32.mrb[0].mxu0
      %v10182 = vadd.f32 %v9845, %v10181
      %v10183 = vpop.f32.mrb[0].mxu0
      %10184 = vmatprep.mubr.bf16.mxu0 0
      %10185 = vmatmul.mubr.bf16.gmra.mrb[0].mxu0 %v7014
      %v10186 = vpop.f32.mrb[0].mxu0
      %v10187 = vadd.f32 %v9850, %v10186
      %v10188 = vpop.f32.mrb[0].mxu0
      %v10189 = vpop.f32.mrb[0].mxu0
      %v10190 = vadd.f32 %v9853, %v10189
      %v10191 = vpop.f32.mrb[0].mxu0
      %10192 = vmatprep.mubr.bf16.mxu0 0
      %10193 = vmatmul.mubr.bf16.gmra.mrb[0].mxu0 %v7015
      %v10194 = vpop.f32.mrb[0].mxu0
      %v10195 = vadd.f32 %v9858, %v10194
      %v10196 = vpop.f32.mrb[0].mxu0
      %v10197 = vpop.f32.mrb[0].mxu0
      %v10198 = vadd.f32 %v9861, %v10197
      %v10199 = vpop.f32.mrb[0].mxu0
      %10200 = vdwg.mxu0
      %s10201 = scalar_lea.vmem %s2, 512
      %v10202 = vld [vmem:[%s10201] sm:$0xf]
      %v10203 = vld [vmem:[%s10201 + $0x4] sm:$0xf]
      %v10204 = vld [vmem:[%s10201 + $0x8] sm:$0xf]
      %v10205 = vld [vmem:[%s10201 + $0xc] sm:$0xf]
      %v10206 = vld [vmem:[%s10201 + $0x10] sm:$0xf]
      %v10207 = vld [vmem:[%s10201 + $0x14] sm:$0xf]
      %v10208 = vld [vmem:[%s10201 + $0x18] sm:$0xf]
      %v10209 = vld [vmem:[%s10201 + $0x1c] sm:$0xf]
      %v10210 = vld [vmem:[%s10201 + $0x20] sm:$0xf]
      %v10211 = vld [vmem:[%s10201 + $0x24] sm:$0xf]
      %v10212 = vld [vmem:[%s10201 + $0x28] sm:$0xf]
      %v10213 = vld [vmem:[%s10201 + $0x2c] sm:$0xf]
      %v10214 = vld [vmem:[%s10201 + $0x30] sm:$0xf]
      %v10215 = vld [vmem:[%s10201 + $0x34] sm:$0xf]
      %v10216 = vld [vmem:[%s10201 + $0x38] sm:$0xf]
      %v10217 = vld [vmem:[%s10201 + $0x3c] sm:$0xf]
      %v10234 = vunpack.c.l.b16 %v10202
      %v10235 = vunpack.c.l.b16 %v10203
      %v10236 = vunpack.c.l.b16 %v10204
      %v10237 = vunpack.c.l.b16 %v10205
      %v10238 = vunpack.c.l.b16 %v10206
      %v10239 = vunpack.c.l.b16 %v10207
      %v10240 = vunpack.c.l.b16 %v10208
      %v10241 = vunpack.c.l.b16 %v10209
      %v10242 = vunpack.c.l.b16 %v10210
      %v10243 = vunpack.c.l.b16 %v10211
      %v10244 = vunpack.c.l.b16 %v10212
      %v10245 = vunpack.c.l.b16 %v10213
      %v10246 = vunpack.c.l.b16 %v10214
      %v10247 = vunpack.c.l.b16 %v10215
      %v10248 = vunpack.c.l.b16 %v10216
      %v10249 = vunpack.c.l.b16 %v10217
      %v10250 = vpack.c.b16 %v10235, %v10234
      %v10251 = vpack.c.b16 %v10237, %v10236
      %v10252 = vpack.c.b16 %v10239, %v10238
      %v10253 = vpack.c.b16 %v10241, %v10240
      %v10254 = vpack.c.b16 %v10243, %v10242
      %v10255 = vpack.c.b16 %v10245, %v10244
      %v10256 = vpack.c.b16 %v10247, %v10246
      %v10257 = vpack.c.b16 %v10249, %v10248
      %10266 = vmatprep.subr.bf16.mxu0 0
      %10267 = vmatpush1.bf16.msra.mxu0 %v10250
      %10268 = vmatprep.subr.bf16.mxu0 0
      %10269 = vmatpush1.bf16.msra.mxu0 %v10251
      %10270 = vmatprep.subr.bf16.mxu0 0
      %10271 = vmatpush1.bf16.msra.mxu0 %v10252
      %10272 = vmatprep.subr.bf16.mxu0 0
      %10273 = vmatpush1.bf16.msra.mxu0 %v10253
      %10274 = vmatprep.subr.bf16.mxu0 0
      %10275 = vmatpush1.bf16.msra.mxu0 %v10254
      %10276 = vmatprep.subr.bf16.mxu0 0
      %10277 = vmatpush1.bf16.msra.mxu0 %v10255
      %10278 = vmatprep.subr.bf16.mxu0 0
      %10279 = vmatpush1.bf16.msra.mxu0 %v10256
      %10280 = vmatprep.subr.bf16.mxu0 0
      %10281 = vmatpush1.bf16.msra.mxu0 %v10257
      %10282 = vmatprep.subr.bf16.mxu0 0
      %10283 = vmatpush1.bf16.msra.mxu0 0
      %10284 = vmatprep.subr.bf16.mxu0 0
      %10285 = vmatpush1.bf16.msra.mxu0 0
      %10286 = vmatprep.subr.bf16.mxu0 0
      %10287 = vmatpush1.bf16.msra.mxu0 0
      %10288 = vmatprep.subr.bf16.mxu0 0
      %10289 = vmatpush1.bf16.msra.mxu0 0
      %10290 = vmatprep.subr.bf16.mxu0 0
      %10291 = vmatpush1.bf16.msra.mxu0 0
      %10292 = vmatprep.subr.bf16.mxu0 0
      %10293 = vmatpush1.bf16.msra.mxu0 0
      %10294 = vmatprep.subr.bf16.mxu0 0
      %10295 = vmatpush1.bf16.msra.mxu0 0
      %10296 = vmatprep.subr.bf16.mxu0 0
      %10297 = vmatpush1.bf16.msra.mxu0 0
      %10298 = vmatprep.mubr.bf16.mxu0 0
      %10299 = vmatmul.mubr.bf16.gmra.mrb[0].mxu0 %v7725
      %v10300 = vpop.f32.mrb[0].mxu0
      %v10301 = vadd.f32 0.0, %v10300
      %v10302 = vpop.f32.mrb[0].mxu0
      %v10303 = vpop.f32.mrb[0].mxu0
      %v10304 = vadd.f32 0.0, %v10303
      %v10305 = vpop.f32.mrb[0].mxu0
      %10306 = vmatprep.mubr.bf16.mxu0 0
      %10307 = vmatmul.mubr.bf16.gmra.mrb[0].mxu0 %v7726
      %v10308 = vpop.f32.mrb[0].mxu0
      %v10309 = vadd.f32 0.0, %v10308
      %v10310 = vpop.f32.mrb[0].mxu0
      %v10311 = vpop.f32.mrb[0].mxu0
      %v10312 = vadd.f32 0.0, %v10311
      %v10313 = vpop.f32.mrb[0].mxu0
      %10314 = vmatprep.mubr.bf16.mxu0 0
      %10315 = vmatmul.mubr.bf16.gmra.mrb[0].mxu0 %v7727
      %v10316 = vpop.f32.mrb[0].mxu0
      %v10317 = vadd.f32 0.0, %v10316
      %v10318 = vpop.f32.mrb[0].mxu0
      %v10319 = vpop.f32.mrb[0].mxu0
      %v10320 = vadd.f32 0.0, %v10319
      %v10321 = vpop.f32.mrb[0].mxu0
      %10322 = vmatprep.mubr.bf16.mxu0 0
      %10323 = vmatmul.mubr.bf16.gmra.mrb[0].mxu0 %v7728
      %v10324 = vpop.f32.mrb[0].mxu0
      %v10325 = vadd.f32 0.0, %v10324
      %v10326 = vpop.f32.mrb[0].mxu0
      %v10327 = vpop.f32.mrb[0].mxu0
      %v10328 = vadd.f32 0.0, %v10327
      %v10329 = vpop.f32.mrb[0].mxu0
      %10330 = vmatprep.mubr.bf16.mxu0 0
      %10331 = vmatmul.mubr.bf16.gmra.mrb[0].mxu0 %v7729
      %v10332 = vpop.f32.mrb[0].mxu0
      %v10333 = vadd.f32 0.0, %v10332
      %v10334 = vpop.f32.mrb[0].mxu0
      %v10335 = vpop.f32.mrb[0].mxu0
      %v10336 = vadd.f32 0.0, %v10335
      %v10337 = vpop.f32.mrb[0].mxu0
      %10338 = vmatprep.mubr.bf16.mxu0 0
      %10339 = vmatmul.mubr.bf16.gmra.mrb[0].mxu0 %v7730
      %v10340 = vpop.f32.mrb[0].mxu0
      %v10341 = vadd.f32 0.0, %v10340
      %v10342 = vpop.f32.mrb[0].mxu0
      %v10343 = vpop.f32.mrb[0].mxu0
      %v10344 = vadd.f32 0.0, %v10343
      %v10345 = vpop.f32.mrb[0].mxu0
      %10346 = vmatprep.mubr.bf16.mxu0 0
      %10347 = vmatmul.mubr.bf16.gmra.mrb[0].mxu0 %v7731
      %v10348 = vpop.f32.mrb[0].mxu0
      %v10349 = vadd.f32 0.0, %v10348
      %v10350 = vpop.f32.mrb[0].mxu0
      %v10351 = vpop.f32.mrb[0].mxu0
      %v10352 = vadd.f32 0.0, %v10351
      %v10353 = vpop.f32.mrb[0].mxu0
      %10354 = vmatprep.mubr.bf16.mxu0 0
      %10355 = vmatmul.mubr.bf16.gmra.mrb[0].mxu0 %v7732
      %v10356 = vpop.f32.mrb[0].mxu0
      %v10357 = vadd.f32 0.0, %v10356
      %v10358 = vpop.f32.mrb[0].mxu0
      %v10359 = vpop.f32.mrb[0].mxu0
      %v10360 = vadd.f32 0.0, %v10359
      %v10361 = vpop.f32.mrb[0].mxu0
      %10362 = vmatprep.mubr.bf16.mxu0 0
      %10363 = vmatmul.mubr.bf16.gmra.mrb[0].mxu0 %v7733
      %v10364 = vpop.f32.mrb[0].mxu0
      %v10365 = vadd.f32 0.0, %v10364
      %v10366 = vpop.f32.mrb[0].mxu0
      %v10367 = vpop.f32.mrb[0].mxu0
      %v10368 = vadd.f32 0.0, %v10367
      %v10369 = vpop.f32.mrb[0].mxu0
      %10370 = vmatprep.mubr.bf16.mxu0 0
      %10371 = vmatmul.mubr.bf16.gmra.mrb[0].mxu0 %v7734
      %v10372 = vpop.f32.mrb[0].mxu0
      %v10373 = vadd.f32 0.0, %v10372
      %v10374 = vpop.f32.mrb[0].mxu0
      %v10375 = vpop.f32.mrb[0].mxu0
      %v10376 = vadd.f32 0.0, %v10375
      %v10377 = vpop.f32.mrb[0].mxu0
      %10378 = vmatprep.mubr.bf16.mxu0 0
      %10379 = vmatmul.mubr.bf16.gmra.mrb[0].mxu0 %v7735
      %v10380 = vpop.f32.mrb[0].mxu0
      %v10381 = vadd.f32 0.0, %v10380
      %v10382 = vpop.f32.mrb[0].mxu0
      %v10383 = vpop.f32.mrb[0].mxu0
      %v10384 = vadd.f32 0.0, %v10383
      %v10385 = vpop.f32.mrb[0].mxu0
      %10386 = vmatprep.mubr.bf16.mxu0 0
      %10387 = vmatmul.mubr.bf16.gmra.mrb[0].mxu0 %v7736
      %v10388 = vpop.f32.mrb[0].mxu0
      %v10389 = vadd.f32 0.0, %v10388
      %v10390 = vpop.f32.mrb[0].mxu0
      %v10391 = vpop.f32.mrb[0].mxu0
      %v10392 = vadd.f32 0.0, %v10391
      %v10393 = vpop.f32.mrb[0].mxu0
      %10394 = vmatprep.mubr.bf16.mxu0 0
      %10395 = vmatmul.mubr.bf16.gmra.mrb[0].mxu0 %v7737
      %v10396 = vpop.f32.mrb[0].mxu0
      %v10397 = vadd.f32 0.0, %v10396
      %v10398 = vpop.f32.mrb[0].mxu0
      %v10399 = vpop.f32.mrb[0].mxu0
      %v10400 = vadd.f32 0.0, %v10399
      %v10401 = vpop.f32.mrb[0].mxu0
      %10402 = vmatprep.mubr.bf16.mxu0 0
      %10403 = vmatmul.mubr.bf16.gmra.mrb[0].mxu0 %v7738
      %v10404 = vpop.f32.mrb[0].mxu0
      %v10405 = vadd.f32 0.0, %v10404
      %v10406 = vpop.f32.mrb[0].mxu0
      %v10407 = vpop.f32.mrb[0].mxu0
      %v10408 = vadd.f32 0.0, %v10407
      %v10409 = vpop.f32.mrb[0].mxu0
      %10410 = vmatprep.mubr.bf16.mxu0 0
      %10411 = vmatmul.mubr.bf16.gmra.mrb[0].mxu0 %v7739
      %v10412 = vpop.f32.mrb[0].mxu0
      %v10413 = vadd.f32 0.0, %v10412
      %v10414 = vpop.f32.mrb[0].mxu0
      %v10415 = vpop.f32.mrb[0].mxu0
      %v10416 = vadd.f32 0.0, %v10415
      %v10417 = vpop.f32.mrb[0].mxu0
      %10418 = vmatprep.mubr.bf16.mxu0 0
      %10419 = vmatmul.mubr.bf16.gmra.mrb[0].mxu0 %v7740
      %v10420 = vpop.f32.mrb[0].mxu0
      %v10421 = vadd.f32 0.0, %v10420
      %v10422 = vpop.f32.mrb[0].mxu0
      %v10423 = vpop.f32.mrb[0].mxu0
      %v10424 = vadd.f32 0.0, %v10423
      %v10425 = vpop.f32.mrb[0].mxu0
      %10426 = vmatprep.mubr.bf16.mxu0 0
      %10427 = vmatmul.mubr.bf16.gmra.mrb[0].mxu0 %v7741
      %v10428 = vpop.f32.mrb[0].mxu0
      %v10429 = vadd.f32 0.0, %v10428
      %v10430 = vpop.f32.mrb[0].mxu0
      %v10431 = vpop.f32.mrb[0].mxu0
      %v10432 = vadd.f32 0.0, %v10431
      %v10433 = vpop.f32.mrb[0].mxu0
      %10434 = vmatprep.mubr.bf16.mxu0 0
      %10435 = vmatmul.mubr.bf16.gmra.mrb[0].mxu0 %v7742
      %v10436 = vpop.f32.mrb[0].mxu0
      %v10437 = vadd.f32 0.0, %v10436
      %v10438 = vpop.f32.mrb[0].mxu0
      %v10439 = vpop.f32.mrb[0].mxu0
      %v10440 = vadd.f32 0.0, %v10439
      %v10441 = vpop.f32.mrb[0].mxu0
      %10442 = vmatprep.mubr.bf16.mxu0 0
      %10443 = vmatmul.mubr.bf16.gmra.mrb[0].mxu0 %v7743
      %v10444 = vpop.f32.mrb[0].mxu0
      %v10445 = vadd.f32 0.0, %v10444
      %v10446 = vpop.f32.mrb[0].mxu0
      %v10447 = vpop.f32.mrb[0].mxu0
      %v10448 = vadd.f32 0.0, %v10447
      %v10449 = vpop.f32.mrb[0].mxu0
      %10450 = vmatprep.mubr.bf16.mxu0 0
      %10451 = vmatmul.mubr.bf16.gmra.mrb[0].mxu0 %v7744
      %v10452 = vpop.f32.mrb[0].mxu0
      %v10453 = vadd.f32 0.0, %v10452
      %v10454 = vpop.f32.mrb[0].mxu0
      %v10455 = vpop.f32.mrb[0].mxu0
      %v10456 = vadd.f32 0.0, %v10455
      %v10457 = vpop.f32.mrb[0].mxu0
      %10458 = vmatprep.mubr.bf16.mxu0 0
      %10459 = vmatmul.mubr.bf16.gmra.mrb[0].mxu0 %v7745
      %v10460 = vpop.f32.mrb[0].mxu0
      %v10461 = vadd.f32 0.0, %v10460
      %v10462 = vpop.f32.mrb[0].mxu0
      %v10463 = vpop.f32.mrb[0].mxu0
      %v10464 = vadd.f32 0.0, %v10463
      %v10465 = vpop.f32.mrb[0].mxu0
      %10466 = vmatprep.mubr.bf16.mxu0 0
      %10467 = vmatmul.mubr.bf16.gmra.mrb[0].mxu0 %v7746
      %v10468 = vpop.f32.mrb[0].mxu0
      %v10469 = vadd.f32 0.0, %v10468
      %v10470 = vpop.f32.mrb[0].mxu0
      %v10471 = vpop.f32.mrb[0].mxu0
      %v10472 = vadd.f32 0.0, %v10471
      %v10473 = vpop.f32.mrb[0].mxu0
      %10474 = vmatprep.mubr.bf16.mxu0 0
      %10475 = vmatmul.mubr.bf16.gmra.mrb[0].mxu0 %v7747
      %v10476 = vpop.f32.mrb[0].mxu0
      %v10477 = vadd.f32 0.0, %v10476
      %v10478 = vpop.f32.mrb[0].mxu0
      %v10479 = vpop.f32.mrb[0].mxu0
      %v10480 = vadd.f32 0.0, %v10479
      %v10481 = vpop.f32.mrb[0].mxu0
      %10482 = vmatprep.mubr.bf16.mxu0 0
      %10483 = vmatmul.mubr.bf16.gmra.mrb[0].mxu0 %v7748
      %v10484 = vpop.f32.mrb[0].mxu0
      %v10485 = vadd.f32 0.0, %v10484
      %v10486 = vpop.f32.mrb[0].mxu0
      %v10487 = vpop.f32.mrb[0].mxu0
      %v10488 = vadd.f32 0.0, %v10487
      %v10489 = vpop.f32.mrb[0].mxu0
      %10490 = vmatprep.mubr.bf16.mxu0 0
      %10491 = vmatmul.mubr.bf16.gmra.mrb[0].mxu0 %v7749
      %v10492 = vpop.f32.mrb[0].mxu0
      %v10493 = vadd.f32 0.0, %v10492
      %v10494 = vpop.f32.mrb[0].mxu0
      %v10495 = vpop.f32.mrb[0].mxu0
      %v10496 = vadd.f32 0.0, %v10495
      %v10497 = vpop.f32.mrb[0].mxu0
      %10498 = vmatprep.mubr.bf16.mxu0 0
      %10499 = vmatmul.mubr.bf16.gmra.mrb[0].mxu0 %v7750
      %v10500 = vpop.f32.mrb[0].mxu0
      %v10501 = vadd.f32 0.0, %v10500
      %v10502 = vpop.f32.mrb[0].mxu0
      %v10503 = vpop.f32.mrb[0].mxu0
      %v10504 = vadd.f32 0.0, %v10503
      %v10505 = vpop.f32.mrb[0].mxu0
      %10506 = vmatprep.mubr.bf16.mxu0 0
      %10507 = vmatmul.mubr.bf16.gmra.mrb[0].mxu0 %v7751
      %v10508 = vpop.f32.mrb[0].mxu0
      %v10509 = vadd.f32 0.0, %v10508
      %v10510 = vpop.f32.mrb[0].mxu0
      %v10511 = vpop.f32.mrb[0].mxu0
      %v10512 = vadd.f32 0.0, %v10511
      %v10513 = vpop.f32.mrb[0].mxu0
      %10514 = vmatprep.mubr.bf16.mxu0 0
      %10515 = vmatmul.mubr.bf16.gmra.mrb[0].mxu0 %v7752
      %v10516 = vpop.f32.mrb[0].mxu0
      %v10517 = vadd.f32 0.0, %v10516
      %v10518 = vpop.f32.mrb[0].mxu0
      %v10519 = vpop.f32.mrb[0].mxu0
      %v10520 = vadd.f32 0.0, %v10519
      %v10521 = vpop.f32.mrb[0].mxu0
      %10522 = vmatprep.mubr.bf16.mxu0 0
      %10523 = vmatmul.mubr.bf16.gmra.mrb[0].mxu0 %v7753
      %v10524 = vpop.f32.mrb[0].mxu0
      %v10525 = vadd.f32 0.0, %v10524
      %v10526 = vpop.f32.mrb[0].mxu0
      %v10527 = vpop.f32.mrb[0].mxu0
      %v10528 = vadd.f32 0.0, %v10527
      %v10529 = vpop.f32.mrb[0].mxu0
      %10530 = vmatprep.mubr.bf16.mxu0 0
      %10531 = vmatmul.mubr.bf16.gmra.mrb[0].mxu0 %v7754
      %v10532 = vpop.f32.mrb[0].mxu0
      %v10533 = vadd.f32 0.0, %v10532
      %v10534 = vpop.f32.mrb[0].mxu0
      %v10535 = vpop.f32.mrb[0].mxu0
      %v10536 = vadd.f32 0.0, %v10535
      %v10537 = vpop.f32.mrb[0].mxu0
      %10538 = vmatprep.mubr.bf16.mxu0 0
      %10539 = vmatmul.mubr.bf16.gmra.mrb[0].mxu0 %v7755
      %v10540 = vpop.f32.mrb[0].mxu0
      %v10541 = vadd.f32 0.0, %v10540
      %v10542 = vpop.f32.mrb[0].mxu0
      %v10543 = vpop.f32.mrb[0].mxu0
      %v10544 = vadd.f32 0.0, %v10543
      %v10545 = vpop.f32.mrb[0].mxu0
      %10546 = vmatprep.mubr.bf16.mxu0 0
      %10547 = vmatmul.mubr.bf16.gmra.mrb[0].mxu0 %v7756
      %v10548 = vpop.f32.mrb[0].mxu0
      %v10549 = vadd.f32 0.0, %v10548
      %v10550 = vpop.f32.mrb[0].mxu0
      %v10551 = vpop.f32.mrb[0].mxu0
      %v10552 = vadd.f32 0.0, %v10551
      %v10553 = vpop.f32.mrb[0].mxu0
      %10554 = vdwg.mxu0
      %v10555 = vadd.f32 %v9947, %v10301
      %v10556 = vadd.f32 %v9950, %v10304
      %v10557 = vadd.f32 %v9955, %v10309
      %v10558 = vadd.f32 %v9958, %v10312
      %v10559 = vadd.f32 %v9963, %v10317
      %v10560 = vadd.f32 %v9966, %v10320
      %v10561 = vadd.f32 %v9971, %v10325
      %v10562 = vadd.f32 %v9974, %v10328
      %v10563 = vadd.f32 %v9979, %v10333
      %v10564 = vadd.f32 %v9982, %v10336
      %v10565 = vadd.f32 %v9987, %v10341
      %v10566 = vadd.f32 %v9990, %v10344
      %v10567 = vadd.f32 %v9995, %v10349
      %v10568 = vadd.f32 %v9998, %v10352
      %v10569 = vadd.f32 %v10003, %v10357
      %v10570 = vadd.f32 %v10006, %v10360
      %v10571 = vadd.f32 %v10011, %v10365
      %v10572 = vadd.f32 %v10014, %v10368
      %v10573 = vadd.f32 %v10019, %v10373
      %v10574 = vadd.f32 %v10022, %v10376
      %v10575 = vadd.f32 %v10027, %v10381
      %v10576 = vadd.f32 %v10030, %v10384
      %v10577 = vadd.f32 %v10035, %v10389
      %v10578 = vadd.f32 %v10038, %v10392
      %v10579 = vadd.f32 %v10043, %v10397
      %v10580 = vadd.f32 %v10046, %v10400
      %v10581 = vadd.f32 %v10051, %v10405
      %v10582 = vadd.f32 %v10054, %v10408
      %v10583 = vadd.f32 %v10059, %v10413
      %v10584 = vadd.f32 %v10062, %v10416
      %v10585 = vadd.f32 %v10067, %v10421
      %v10586 = vadd.f32 %v10070, %v10424
      %v10587 = vadd.f32 %v10075, %v10429
      %v10588 = vadd.f32 %v10078, %v10432
      %v10589 = vadd.f32 %v10083, %v10437
      %v10590 = vadd.f32 %v10086, %v10440
      %v10591 = vadd.f32 %v10091, %v10445
      %v10592 = vadd.f32 %v10094, %v10448
      %v10593 = vadd.f32 %v10099, %v10453
      %v10594 = vadd.f32 %v10102, %v10456
      %v10595 = vadd.f32 %v10107, %v10461
      %v10596 = vadd.f32 %v10110, %v10464
      %v10597 = vadd.f32 %v10115, %v10469
      %v10598 = vadd.f32 %v10118, %v10472
      %v10599 = vadd.f32 %v10123, %v10477
      %v10600 = vadd.f32 %v10126, %v10480
      %v10601 = vadd.f32 %v10131, %v10485
      %v10602 = vadd.f32 %v10134, %v10488
      %v10603 = vadd.f32 %v10139, %v10493
      %v10604 = vadd.f32 %v10142, %v10496
      %v10605 = vadd.f32 %v10147, %v10501
      %v10606 = vadd.f32 %v10150, %v10504
      %v10607 = vadd.f32 %v10155, %v10509
      %v10608 = vadd.f32 %v10158, %v10512
      %v10609 = vadd.f32 %v10163, %v10517
      %v10610 = vadd.f32 %v10166, %v10520
      %v10611 = vadd.f32 %v10171, %v10525
      %v10612 = vadd.f32 %v10174, %v10528
      %v10613 = vadd.f32 %v10179, %v10533
      %v10614 = vadd.f32 %v10182, %v10536
      %v10615 = vadd.f32 %v10187, %v10541
      %v10616 = vadd.f32 %v10190, %v10544
      %v10617 = vadd.f32 %v10195, %v10549
      %v10618 = vadd.f32 %v10198, %v10552
      %v10619 = vrot.slane %v10555, 1
      %v10620 = vrot.slane %v10556, 1
      %v10621 = vrot.slane %v10557, 1
      %v10622 = vrot.slane %v10558, 1
      %v10623 = vrot.slane %v10559, 1
      %v10624 = vrot.slane %v10560, 1
      %v10625 = vrot.slane %v10561, 1
      %v10626 = vrot.slane %v10562, 1
      %v10627 = vrot.slane %v10563, 1
      %v10628 = vrot.slane %v10564, 1
      %v10629 = vrot.slane %v10565, 1
      %v10630 = vrot.slane %v10566, 1
      %v10631 = vrot.slane %v10567, 1
      %v10632 = vrot.slane %v10568, 1
      %v10633 = vrot.slane %v10569, 1
      %v10634 = vrot.slane %v10570, 1
      %v10635 = vrot.slane %v10571, 1
      %v10636 = vrot.slane %v10572, 1
      %v10637 = vrot.slane %v10573, 1
      %v10638 = vrot.slane %v10574, 1
      %v10639 = vrot.slane %v10575, 1
      %v10640 = vrot.slane %v10576, 1
      %v10641 = vrot.slane %v10577, 1
      %v10642 = vrot.slane %v10578, 1
      %v10643 = vrot.slane %v10579, 1
      %v10644 = vrot.slane %v10580, 1
      %v10645 = vrot.slane %v10581, 1
      %v10646 = vrot.slane %v10582, 1
      %v10647 = vrot.slane %v10583, 1
      %v10648 = vrot.slane %v10584, 1
      %v10649 = vrot.slane %v10585, 1
      %v10650 = vrot.slane %v10586, 1
      %v10651 = vrot.slane %v10587, 1
      %v10652 = vrot.slane %v10588, 1
      %v10653 = vrot.slane %v10589, 1
      %v10654 = vrot.slane %v10590, 1
      %v10655 = vrot.slane %v10591, 1
      %v10656 = vrot.slane %v10592, 1
      %v10657 = vrot.slane %v10593, 1
      %v10658 = vrot.slane %v10594, 1
      %v10659 = vrot.slane %v10595, 1
      %v10660 = vrot.slane %v10596, 1
      %v10661 = vrot.slane %v10597, 1
      %v10662 = vrot.slane %v10598, 1
      %v10663 = vrot.slane %v10599, 1
      %v10664 = vrot.slane %v10600, 1
      %v10665 = vrot.slane %v10601, 1
      %v10666 = vrot.slane %v10602, 1
      %v10667 = vrot.slane %v10603, 1
      %v10668 = vrot.slane %v10604, 1
      %v10669 = vrot.slane %v10605, 1
      %v10670 = vrot.slane %v10606, 1
      %v10671 = vrot.slane %v10607, 1
      %v10672 = vrot.slane %v10608, 1
      %v10673 = vrot.slane %v10609, 1
      %v10674 = vrot.slane %v10610, 1
      %v10675 = vrot.slane %v10611, 1
      %v10676 = vrot.slane %v10612, 1
      %v10677 = vrot.slane %v10613, 1
      %v10678 = vrot.slane %v10614, 1
      %v10679 = vrot.slane %v10615, 1
      %v10680 = vrot.slane %v10616, 1
      %v10681 = vrot.slane %v10617, 1
      %v10682 = vrot.slane %v10618, 1
      %v10683 = vsel %vm5487, %v10681, %v10682
      %v10684 = vsel %vm5487, %v10680, %v10681
      %v10685 = vsel %vm5487, %v10679, %v10680
      %v10686 = vsel %vm5487, %v10678, %v10679
      %v10687 = vsel %vm5487, %v10677, %v10678
      %v10688 = vsel %vm5487, %v10676, %v10677
      %v10689 = vsel %vm5487, %v10675, %v10676
      %v10690 = vsel %vm5487, %v10674, %v10675
      %v10691 = vsel %vm5487, %v10673, %v10674
      %v10692 = vsel %vm5487, %v10672, %v10673
      %v10693 = vsel %vm5487, %v10671, %v10672
      %v10694 = vsel %vm5487, %v10670, %v10671
      %v10695 = vsel %vm5487, %v10669, %v10670
      %v10696 = vsel %vm5487, %v10668, %v10669
      %v10697 = vsel %vm5487, %v10667, %v10668
      %v10698 = vsel %vm5487, %v10666, %v10667
      %v10699 = vsel %vm5487, %v10665, %v10666
      %v10700 = vsel %vm5487, %v10664, %v10665
      %v10701 = vsel %vm5487, %v10663, %v10664
      %v10702 = vsel %vm5487, %v10662, %v10663
      %v10703 = vsel %vm5487, %v10661, %v10662
      %v10704 = vsel %vm5487, %v10660, %v10661
      %v10705 = vsel %vm5487, %v10659, %v10660
      %v10706 = vsel %vm5487, %v10658, %v10659
      %v10707 = vsel %vm5487, %v10657, %v10658
      %v10708 = vsel %vm5487, %v10656, %v10657
      %v10709 = vsel %vm5487, %v10655, %v10656
      %v10710 = vsel %vm5487, %v10654, %v10655
      %v10711 = vsel %vm5487, %v10653, %v10654
      %v10712 = vsel %vm5487, %v10652, %v10653
      %v10713 = vsel %vm5487, %v10651, %v10652
      %v10714 = vsel %vm5487, %v10650, %v10651
      %v10715 = vsel %vm5487, %v10649, %v10650
      %v10716 = vsel %vm5487, %v10648, %v10649
      %v10717 = vsel %vm5487, %v10647, %v10648
      %v10718 = vsel %vm5487, %v10646, %v10647
      %v10719 = vsel %vm5487, %v10645, %v10646
      %v10720 = vsel %vm5487, %v10644, %v10645
      %v10721 = vsel %vm5487, %v10643, %v10644
      %v10722 = vsel %vm5487, %v10642, %v10643
      %v10723 = vsel %vm5487, %v10641, %v10642
      %v10724 = vsel %vm5487, %v10640, %v10641
      %v10725 = vsel %vm5487, %v10639, %v10640
      %v10726 = vsel %vm5487, %v10638, %v10639
      %v10727 = vsel %vm5487, %v10637, %v10638
      %v10728 = vsel %vm5487, %v10636, %v10637
      %v10729 = vsel %vm5487, %v10635, %v10636
      %v10730 = vsel %vm5487, %v10634, %v10635
      %v10731 = vsel %vm5487, %v10633, %v10634
      %v10732 = vsel %vm5487, %v10632, %v10633
      %v10733 = vsel %vm5487, %v10631, %v10632
      %v10734 = vsel %vm5487, %v10630, %v10631
      %v10735 = vsel %vm5487, %v10629, %v10630
      %v10736 = vsel %vm5487, %v10628, %v10629
      %v10737 = vsel %vm5487, %v10627, %v10628
      %v10738 = vsel %vm5487, %v10626, %v10627
      %v10739 = vsel %vm5487, %v10625, %v10626
      %v10740 = vsel %vm5487, %v10624, %v10625
      %v10741 = vsel %vm5487, %v10623, %v10624
      %v10742 = vsel %vm5487, %v10622, %v10623
      %v10743 = vsel %vm5487, %v10621, %v10622
      %v10744 = vsel %vm5487, %v10620, %v10621
      %v10745 = vsel %vm5487, %v10619, %v10620
      %v10746 = vsel %vm5487, %v10682, %v10619
      %v10747 = vadd.f32 %v9429, %v10745
      %v10748 = vadd.f32 %v9430, %v10744
      %v10749 = vadd.f32 %v9431, %v10743
      %v10750 = vadd.f32 %v9432, %v10742
      %v10751 = vadd.f32 %v9433, %v10741
      %v10752 = vadd.f32 %v9434, %v10740
      %v10753 = vadd.f32 %v9435, %v10739
      %v10754 = vadd.f32 %v9436, %v10738
      %v10755 = vadd.f32 %v9437, %v10737
      %v10756 = vadd.f32 %v9438, %v10736
      %v10757 = vadd.f32 %v9439, %v10735
      %v10758 = vadd.f32 %v9440, %v10734
      %v10759 = vadd.f32 %v9441, %v10733
      %v10760 = vadd.f32 %v9442, %v10732
      %v10761 = vadd.f32 %v9443, %v10731
      %v10762 = vadd.f32 %v9444, %v10730
      %v10763 = vadd.f32 %v9445, %v10729
      %v10764 = vadd.f32 %v9446, %v10728
      %v10765 = vadd.f32 %v9447, %v10727
      %v10766 = vadd.f32 %v9448, %v10726
      %v10767 = vadd.f32 %v9449, %v10725
      %v10768 = vadd.f32 %v9450, %v10724
      %v10769 = vadd.f32 %v9451, %v10723
      %v10770 = vadd.f32 %v9452, %v10722
      %v10771 = vadd.f32 %v9453, %v10721
      %v10772 = vadd.f32 %v9454, %v10720
      %v10773 = vadd.f32 %v9455, %v10719
      %v10774 = vadd.f32 %v9456, %v10718
      %v10775 = vadd.f32 %v9457, %v10717
      %v10776 = vadd.f32 %v9458, %v10716
      %v10777 = vadd.f32 %v9459, %v10715
      %v10778 = vadd.f32 %v9460, %v10714
      %v10779 = vadd.f32 %v9461, %v10713
      %v10780 = vadd.f32 %v9462, %v10712
      %v10781 = vadd.f32 %v9463, %v10711
      %v10782 = vadd.f32 %v9464, %v10710
      %v10783 = vadd.f32 %v9465, %v10709
      %v10784 = vadd.f32 %v9466, %v10708
      %v10785 = vadd.f32 %v9467, %v10707
      %v10786 = vadd.f32 %v9468, %v10706
      %v10787 = vadd.f32 %v9469, %v10705
      %v10788 = vadd.f32 %v9470, %v10704
      %v10789 = vadd.f32 %v9471, %v10703
      %v10790 = vadd.f32 %v9472, %v10702
      %v10791 = vadd.f32 %v9473, %v10701
      %v10792 = vadd.f32 %v9474, %v10700
      %v10793 = vadd.f32 %v9475, %v10699
      %v10794 = vadd.f32 %v9476, %v10698
      %v10795 = vadd.f32 %v9477, %v10697
      %v10796 = vadd.f32 %v9478, %v10696
      %v10797 = vadd.f32 %v9479, %v10695
      %v10798 = vadd.f32 %v9480, %v10694
      %v10799 = vadd.f32 %v9481, %v10693
      %v10800 = vadd.f32 %v9482, %v10692
      %v10801 = vadd.f32 %v9483, %v10691
      %v10802 = vadd.f32 %v9484, %v10690
      %v10803 = vadd.f32 %v9485, %v10689
      %v10804 = vadd.f32 %v9486, %v10688
      %v10805 = vadd.f32 %v9487, %v10687
      %v10806 = vadd.f32 %v9488, %v10686
      %v10807 = vadd.f32 %v9489, %v10685
      %v10808 = vadd.f32 %v9490, %v10684
      %v10809 = vadd.f32 %v9491, %v10683
      %v10810 = vadd.f32 %v9492, %v10746
      %v10811 = vmul.f32 %v10747, %v1261
      %v10812 = vmul.f32 %v10748, %v1262
      %v10813 = vmul.f32 %v10749, %v1263
      %v10814 = vmul.f32 %v10750, %v1264
      %v10815 = vmul.f32 %v10751, %v1265
      %v10816 = vmul.f32 %v10752, %v1266
      %v10817 = vmul.f32 %v10753, %v1267
      %v10818 = vmul.f32 %v10754, %v1268
      %v10819 = vmul.f32 %v10755, %v1269
      %v10820 = vmul.f32 %v10756, %v1270
      %v10821 = vmul.f32 %v10757, %v1271
      %v10822 = vmul.f32 %v10758, %v1272
      %v10823 = vmul.f32 %v10759, %v1273
      %v10824 = vmul.f32 %v10760, %v1274
      %v10825 = vmul.f32 %v10761, %v1275
      %v10826 = vmul.f32 %v10762, %v1276
      %v10827 = vmul.f32 %v10763, %v1277
      %v10828 = vmul.f32 %v10764, %v1278
      %v10829 = vmul.f32 %v10765, %v1279
      %v10830 = vmul.f32 %v10766, %v1280
      %v10831 = vmul.f32 %v10767, %v1281
      %v10832 = vmul.f32 %v10768, %v1282
      %v10833 = vmul.f32 %v10769, %v1283
      %v10834 = vmul.f32 %v10770, %v1284
      %v10835 = vmul.f32 %v10771, %v1285
      %v10836 = vmul.f32 %v10772, %v1286
      %v10837 = vmul.f32 %v10773, %v1287
      %v10838 = vmul.f32 %v10774, %v1288
      %v10839 = vmul.f32 %v10775, %v1289
      %v10840 = vmul.f32 %v10776, %v1290
      %v10841 = vmul.f32 %v10777, %v1291
      %v10842 = vmul.f32 %v10778, %v1292
      %v10843 = vmul.f32 %v10779, %v1293
      %v10844 = vmul.f32 %v10780, %v1294
      %v10845 = vmul.f32 %v10781, %v1295
      %v10846 = vmul.f32 %v10782, %v1296
      %v10847 = vmul.f32 %v10783, %v1297
      %v10848 = vmul.f32 %v10784, %v1298
      %v10849 = vmul.f32 %v10785, %v1299
      %v10850 = vmul.f32 %v10786, %v1300
      %v10851 = vmul.f32 %v10787, %v1301
      %v10852 = vmul.f32 %v10788, %v1302
      %v10853 = vmul.f32 %v10789, %v1303
      %v10854 = vmul.f32 %v10790, %v1304
      %v10855 = vmul.f32 %v10791, %v1305
      %v10856 = vmul.f32 %v10792, %v1306
      %v10857 = vmul.f32 %v10793, %v1307
      %v10858 = vmul.f32 %v10794, %v1308
      %v10859 = vmul.f32 %v10795, %v1309
      %v10860 = vmul.f32 %v10796, %v1310
      %v10861 = vmul.f32 %v10797, %v1311
      %v10862 = vmul.f32 %v10798, %v1312
      %v10863 = vmul.f32 %v10799, %v1313
      %v10864 = vmul.f32 %v10800, %v1314
      %v10865 = vmul.f32 %v10801, %v1315
      %v10866 = vmul.f32 %v10802, %v1316
      %v10867 = vmul.f32 %v10803, %v1317
      %v10868 = vmul.f32 %v10804, %v1318
      %v10869 = vmul.f32 %v10805, %v1319
      %v10870 = vmul.f32 %v10806, %v1320
      %v10871 = vmul.f32 %v10807, %v1321
      %v10872 = vmul.f32 %v10808, %v1322
      %v10873 = vmul.f32 %v10809, %v1323
      %v10874 = vmul.f32 %v10810, %v1324
      %v10875 = vadd.f32 %v10811, %v10812
      %v10876 = vadd.f32 %v10875, %v10813
      %v10877 = vadd.f32 %v10876, %v10814
      %v10878 = vadd.f32 %v10877, %v10815
      %v10879 = vadd.f32 %v10878, %v10816
      %v10880 = vadd.f32 %v10879, %v10817
      %v10881 = vadd.f32 %v10880, %v10818
      %v10882 = vadd.f32 %v10881, %v10819
      %v10883 = vadd.f32 %v10882, %v10820
      %v10884 = vadd.f32 %v10883, %v10821
      %v10885 = vadd.f32 %v10884, %v10822
      %v10886 = vadd.f32 %v10885, %v10823
      %v10887 = vadd.f32 %v10886, %v10824
      %v10888 = vadd.f32 %v10887, %v10825
      %v10889 = vadd.f32 %v10888, %v10826
      %v10890 = vadd.f32 %v10889, %v10827
      %v10891 = vadd.f32 %v10890, %v10828
      %v10892 = vadd.f32 %v10891, %v10829
      %v10893 = vadd.f32 %v10892, %v10830
      %v10894 = vadd.f32 %v10893, %v10831
      %v10895 = vadd.f32 %v10894, %v10832
      %v10896 = vadd.f32 %v10895, %v10833
      %v10897 = vadd.f32 %v10896, %v10834
      %v10898 = vadd.f32 %v10897, %v10835
      %v10899 = vadd.f32 %v10898, %v10836
      %v10900 = vadd.f32 %v10899, %v10837
      %v10901 = vadd.f32 %v10900, %v10838
      %v10902 = vadd.f32 %v10901, %v10839
      %v10903 = vadd.f32 %v10902, %v10840
      %v10904 = vadd.f32 %v10903, %v10841
      %v10905 = vadd.f32 %v10904, %v10842
      %v10906 = vadd.f32 %v10905, %v10843
      %v10907 = vadd.f32 %v10906, %v10844
      %v10908 = vadd.f32 %v10907, %v10845
      %v10909 = vadd.f32 %v10908, %v10846
      %v10910 = vadd.f32 %v10909, %v10847
      %v10911 = vadd.f32 %v10910, %v10848
      %v10912 = vadd.f32 %v10911, %v10849
      %v10913 = vadd.f32 %v10912, %v10850
      %v10914 = vadd.f32 %v10913, %v10851
      %v10915 = vadd.f32 %v10914, %v10852
      %v10916 = vadd.f32 %v10915, %v10853
      %v10917 = vadd.f32 %v10916, %v10854
      %v10918 = vadd.f32 %v10917, %v10855
      %v10919 = vadd.f32 %v10918, %v10856
      %v10920 = vadd.f32 %v10919, %v10857
      %v10921 = vadd.f32 %v10920, %v10858
      %v10922 = vadd.f32 %v10921, %v10859
      %v10923 = vadd.f32 %v10922, %v10860
      %v10924 = vadd.f32 %v10923, %v10861
      %v10925 = vadd.f32 %v10924, %v10862
      %v10926 = vadd.f32 %v10925, %v10863
      %v10927 = vadd.f32 %v10926, %v10864
      %v10928 = vadd.f32 %v10927, %v10865
      %v10929 = vadd.f32 %v10928, %v10866
      %v10930 = vadd.f32 %v10929, %v10867
      %v10931 = vadd.f32 %v10930, %v10868
      %v10932 = vadd.f32 %v10931, %v10869
      %v10933 = vadd.f32 %v10932, %v10870
      %v10934 = vadd.f32 %v10933, %v10871
      %v10935 = vadd.f32 %v10934, %v10872
      %v10936 = vadd.f32 %v10935, %v10873
      %v10937 = vadd.f32 %v10936, %v10874
      %v10938 = vrot.slane %v10937, 4
      %v10939 = vadd.f32 %v10937, %v10938
      %v10940 = vrot.slane %v10939, 2
      %v10941 = vadd.f32 %v10939, %v10940
      %v10942 = vrot.slane %v10941, 1
      %v10943 = vadd.f32 %v10941, %v10942
      %v10944 = vmul.f32 %v10943, 0.00390625
      %v10945 = vsub.f32 %v10747, %v10944
      %v10946 = vsub.f32 %v10748, %v10944
      %v10947 = vsub.f32 %v10749, %v10944
      %v10948 = vsub.f32 %v10750, %v10944
      %v10949 = vsub.f32 %v10751, %v10944
      %v10950 = vsub.f32 %v10752, %v10944
      %v10951 = vsub.f32 %v10753, %v10944
      %v10952 = vsub.f32 %v10754, %v10944
      %v10953 = vsub.f32 %v10755, %v10944
      %v10954 = vsub.f32 %v10756, %v10944
      %v10955 = vsub.f32 %v10757, %v10944
      %v10956 = vsub.f32 %v10758, %v10944
      %v10957 = vsub.f32 %v10759, %v10944
      %v10958 = vsub.f32 %v10760, %v10944
      %v10959 = vsub.f32 %v10761, %v10944
      %v10960 = vsub.f32 %v10762, %v10944
      %v10961 = vsub.f32 %v10763, %v10944
      %v10962 = vsub.f32 %v10764, %v10944
      %v10963 = vsub.f32 %v10765, %v10944
      %v10964 = vsub.f32 %v10766, %v10944
      %v10965 = vsub.f32 %v10767, %v10944
      %v10966 = vsub.f32 %v10768, %v10944
      %v10967 = vsub.f32 %v10769, %v10944
      %v10968 = vsub.f32 %v10770, %v10944
      %v10969 = vsub.f32 %v10771, %v10944
      %v10970 = vsub.f32 %v10772, %v10944
      %v10971 = vsub.f32 %v10773, %v10944
      %v10972 = vsub.f32 %v10774, %v10944
      %v10973 = vsub.f32 %v10775, %v10944
      %v10974 = vsub.f32 %v10776, %v10944
      %v10975 = vsub.f32 %v10777, %v10944
      %v10976 = vsub.f32 %v10778, %v10944
      %v10977 = vsub.f32 %v10779, %v10944
      %v10978 = vsub.f32 %v10780, %v10944
      %v10979 = vsub.f32 %v10781, %v10944
      %v10980 = vsub.f32 %v10782, %v10944
      %v10981 = vsub.f32 %v10783, %v10944
      %v10982 = vsub.f32 %v10784, %v10944
      %v10983 = vsub.f32 %v10785, %v10944
      %v10984 = vsub.f32 %v10786, %v10944
      %v10985 = vsub.f32 %v10787, %v10944
      %v10986 = vsub.f32 %v10788, %v10944
      %v10987 = vsub.f32 %v10789, %v10944
      %v10988 = vsub.f32 %v10790, %v10944
      %v10989 = vsub.f32 %v10791, %v10944
      %v10990 = vsub.f32 %v10792, %v10944
      %v10991 = vsub.f32 %v10793, %v10944
      %v10992 = vsub.f32 %v10794, %v10944
      %v10993 = vsub.f32 %v10795, %v10944
      %v10994 = vsub.f32 %v10796, %v10944
      %v10995 = vsub.f32 %v10797, %v10944
      %v10996 = vsub.f32 %v10798, %v10944
      %v10997 = vsub.f32 %v10799, %v10944
      %v10998 = vsub.f32 %v10800, %v10944
      %v10999 = vsub.f32 %v10801, %v10944
      %v11000 = vsub.f32 %v10802, %v10944
      %v11001 = vsub.f32 %v10803, %v10944
      %v11002 = vsub.f32 %v10804, %v10944
      %v11003 = vsub.f32 %v10805, %v10944
      %v11004 = vsub.f32 %v10806, %v10944
      %v11005 = vsub.f32 %v10807, %v10944
      %v11006 = vsub.f32 %v10808, %v10944
      %v11007 = vsub.f32 %v10809, %v10944
      %v11008 = vsub.f32 %v10810, %v10944
      %v11009 = vmul.f32 %v10945, %v1261
      %v11010 = vmul.f32 %v10946, %v1262
      %v11011 = vmul.f32 %v10947, %v1263
      %v11012 = vmul.f32 %v10948, %v1264
      %v11013 = vmul.f32 %v10949, %v1265
      %v11014 = vmul.f32 %v10950, %v1266
      %v11015 = vmul.f32 %v10951, %v1267
      %v11016 = vmul.f32 %v10952, %v1268
      %v11017 = vmul.f32 %v10953, %v1269
      %v11018 = vmul.f32 %v10954, %v1270
      %v11019 = vmul.f32 %v10955, %v1271
      %v11020 = vmul.f32 %v10956, %v1272
      %v11021 = vmul.f32 %v10957, %v1273
      %v11022 = vmul.f32 %v10958, %v1274
      %v11023 = vmul.f32 %v10959, %v1275
      %v11024 = vmul.f32 %v10960, %v1276
      %v11025 = vmul.f32 %v10961, %v1277
      %v11026 = vmul.f32 %v10962, %v1278
      %v11027 = vmul.f32 %v10963, %v1279
      %v11028 = vmul.f32 %v10964, %v1280
      %v11029 = vmul.f32 %v10965, %v1281
      %v11030 = vmul.f32 %v10966, %v1282
      %v11031 = vmul.f32 %v10967, %v1283
      %v11032 = vmul.f32 %v10968, %v1284
      %v11033 = vmul.f32 %v10969, %v1285
      %v11034 = vmul.f32 %v10970, %v1286
      %v11035 = vmul.f32 %v10971, %v1287
      %v11036 = vmul.f32 %v10972, %v1288
      %v11037 = vmul.f32 %v10973, %v1289
      %v11038 = vmul.f32 %v10974, %v1290
      %v11039 = vmul.f32 %v10975, %v1291
      %v11040 = vmul.f32 %v10976, %v1292
      %v11041 = vmul.f32 %v10977, %v1293
      %v11042 = vmul.f32 %v10978, %v1294
      %v11043 = vmul.f32 %v10979, %v1295
      %v11044 = vmul.f32 %v10980, %v1296
      %v11045 = vmul.f32 %v10981, %v1297
      %v11046 = vmul.f32 %v10982, %v1298
      %v11047 = vmul.f32 %v10983, %v1299
      %v11048 = vmul.f32 %v10984, %v1300
      %v11049 = vmul.f32 %v10985, %v1301
      %v11050 = vmul.f32 %v10986, %v1302
      %v11051 = vmul.f32 %v10987, %v1303
      %v11052 = vmul.f32 %v10988, %v1304
      %v11053 = vmul.f32 %v10989, %v1305
      %v11054 = vmul.f32 %v10990, %v1306
      %v11055 = vmul.f32 %v10991, %v1307
      %v11056 = vmul.f32 %v10992, %v1308
      %v11057 = vmul.f32 %v10993, %v1309
      %v11058 = vmul.f32 %v10994, %v1310
      %v11059 = vmul.f32 %v10995, %v1311
      %v11060 = vmul.f32 %v10996, %v1312
      %v11061 = vmul.f32 %v10997, %v1313
      %v11062 = vmul.f32 %v10998, %v1314
      %v11063 = vmul.f32 %v10999, %v1315
      %v11064 = vmul.f32 %v11000, %v1316
      %v11065 = vmul.f32 %v11001, %v1317
      %v11066 = vmul.f32 %v11002, %v1318
      %v11067 = vmul.f32 %v11003, %v1319
      %v11068 = vmul.f32 %v11004, %v1320
      %v11069 = vmul.f32 %v11005, %v1321
      %v11070 = vmul.f32 %v11006, %v1322
      %v11071 = vmul.f32 %v11007, %v1323
      %v11072 = vmul.f32 %v11008, %v1324
      %v11073 = vmul.f32 %v11009, %v11009
      %v11074 = vmul.f32 %v11010, %v11010
      %v11075 = vmul.f32 %v11011, %v11011
      %v11076 = vmul.f32 %v11012, %v11012
      %v11077 = vmul.f32 %v11013, %v11013
      %v11078 = vmul.f32 %v11014, %v11014
      %v11079 = vmul.f32 %v11015, %v11015
      %v11080 = vmul.f32 %v11016, %v11016
      %v11081 = vmul.f32 %v11017, %v11017
      %v11082 = vmul.f32 %v11018, %v11018
      %v11083 = vmul.f32 %v11019, %v11019
      %v11084 = vmul.f32 %v11020, %v11020
      %v11085 = vmul.f32 %v11021, %v11021
      %v11086 = vmul.f32 %v11022, %v11022
      %v11087 = vmul.f32 %v11023, %v11023
      %v11088 = vmul.f32 %v11024, %v11024
      %v11089 = vmul.f32 %v11025, %v11025
      %v11090 = vmul.f32 %v11026, %v11026
      %v11091 = vmul.f32 %v11027, %v11027
      %v11092 = vmul.f32 %v11028, %v11028
      %v11093 = vmul.f32 %v11029, %v11029
      %v11094 = vmul.f32 %v11030, %v11030
      %v11095 = vmul.f32 %v11031, %v11031
      %v11096 = vmul.f32 %v11032, %v11032
      %v11097 = vmul.f32 %v11033, %v11033
      %v11098 = vmul.f32 %v11034, %v11034
      %v11099 = vmul.f32 %v11035, %v11035
      %v11100 = vmul.f32 %v11036, %v11036
      %v11101 = vmul.f32 %v11037, %v11037
      %v11102 = vmul.f32 %v11038, %v11038
      %v11103 = vmul.f32 %v11039, %v11039
      %v11104 = vmul.f32 %v11040, %v11040
      %v11105 = vmul.f32 %v11041, %v11041
      %v11106 = vmul.f32 %v11042, %v11042
      %v11107 = vmul.f32 %v11043, %v11043
      %v11108 = vmul.f32 %v11044, %v11044
      %v11109 = vmul.f32 %v11045, %v11045
      %v11110 = vmul.f32 %v11046, %v11046
      %v11111 = vmul.f32 %v11047, %v11047
      %v11112 = vmul.f32 %v11048, %v11048
      %v11113 = vmul.f32 %v11049, %v11049
      %v11114 = vmul.f32 %v11050, %v11050
      %v11115 = vmul.f32 %v11051, %v11051
      %v11116 = vmul.f32 %v11052, %v11052
      %v11117 = vmul.f32 %v11053, %v11053
      %v11118 = vmul.f32 %v11054, %v11054
      %v11119 = vmul.f32 %v11055, %v11055
      %v11120 = vmul.f32 %v11056, %v11056
      %v11121 = vmul.f32 %v11057, %v11057
      %v11122 = vmul.f32 %v11058, %v11058
      %v11123 = vmul.f32 %v11059, %v11059
      %v11124 = vmul.f32 %v11060, %v11060
      %v11125 = vmul.f32 %v11061, %v11061
      %v11126 = vmul.f32 %v11062, %v11062
      %v11127 = vmul.f32 %v11063, %v11063
      %v11128 = vmul.f32 %v11064, %v11064
      %v11129 = vmul.f32 %v11065, %v11065
      %v11130 = vmul.f32 %v11066, %v11066
      %v11131 = vmul.f32 %v11067, %v11067
      %v11132 = vmul.f32 %v11068, %v11068
      %v11133 = vmul.f32 %v11069, %v11069
      %v11134 = vmul.f32 %v11070, %v11070
      %v11135 = vmul.f32 %v11071, %v11071
      %v11136 = vmul.f32 %v11072, %v11072
      %v11137 = vadd.f32 %v11073, %v11074
      %v11138 = vadd.f32 %v11137, %v11075
      %v11139 = vadd.f32 %v11138, %v11076
      %v11140 = vadd.f32 %v11139, %v11077
      %v11141 = vadd.f32 %v11140, %v11078
      %v11142 = vadd.f32 %v11141, %v11079
      %v11143 = vadd.f32 %v11142, %v11080
      %v11144 = vadd.f32 %v11143, %v11081
      %v11145 = vadd.f32 %v11144, %v11082
      %v11146 = vadd.f32 %v11145, %v11083
      %v11147 = vadd.f32 %v11146, %v11084
      %v11148 = vadd.f32 %v11147, %v11085
      %v11149 = vadd.f32 %v11148, %v11086
      %v11150 = vadd.f32 %v11149, %v11087
      %v11151 = vadd.f32 %v11150, %v11088
      %v11152 = vadd.f32 %v11151, %v11089
      %v11153 = vadd.f32 %v11152, %v11090
      %v11154 = vadd.f32 %v11153, %v11091
      %v11155 = vadd.f32 %v11154, %v11092
      %v11156 = vadd.f32 %v11155, %v11093
      %v11157 = vadd.f32 %v11156, %v11094
      %v11158 = vadd.f32 %v11157, %v11095
      %v11159 = vadd.f32 %v11158, %v11096
      %v11160 = vadd.f32 %v11159, %v11097
      %v11161 = vadd.f32 %v11160, %v11098
      %v11162 = vadd.f32 %v11161, %v11099
      %v11163 = vadd.f32 %v11162, %v11100
      %v11164 = vadd.f32 %v11163, %v11101
      %v11165 = vadd.f32 %v11164, %v11102
      %v11166 = vadd.f32 %v11165, %v11103
      %v11167 = vadd.f32 %v11166, %v11104
      %v11168 = vadd.f32 %v11167, %v11105
      %v11169 = vadd.f32 %v11168, %v11106
      %v11170 = vadd.f32 %v11169, %v11107
      %v11171 = vadd.f32 %v11170, %v11108
      %v11172 = vadd.f32 %v11171, %v11109
      %v11173 = vadd.f32 %v11172, %v11110
      %v11174 = vadd.f32 %v11173, %v11111
      %v11175 = vadd.f32 %v11174, %v11112
      %v11176 = vadd.f32 %v11175, %v11113
      %v11177 = vadd.f32 %v11176, %v11114
      %v11178 = vadd.f32 %v11177, %v11115
      %v11179 = vadd.f32 %v11178, %v11116
      %v11180 = vadd.f32 %v11179, %v11117
      %v11181 = vadd.f32 %v11180, %v11118
      %v11182 = vadd.f32 %v11181, %v11119
      %v11183 = vadd.f32 %v11182, %v11120
      %v11184 = vadd.f32 %v11183, %v11121
      %v11185 = vadd.f32 %v11184, %v11122
      %v11186 = vadd.f32 %v11185, %v11123
      %v11187 = vadd.f32 %v11186, %v11124
      %v11188 = vadd.f32 %v11187, %v11125
      %v11189 = vadd.f32 %v11188, %v11126
      %v11190 = vadd.f32 %v11189, %v11127
      %v11191 = vadd.f32 %v11190, %v11128
      %v11192 = vadd.f32 %v11191, %v11129
      %v11193 = vadd.f32 %v11192, %v11130
      %v11194 = vadd.f32 %v11193, %v11131
      %v11195 = vadd.f32 %v11194, %v11132
      %v11196 = vadd.f32 %v11195, %v11133
      %v11197 = vadd.f32 %v11196, %v11134
      %v11198 = vadd.f32 %v11197, %v11135
      %v11199 = vadd.f32 %v11198, %v11136
      %v11200 = vrot.slane %v11199, 4
      %v11201 = vadd.f32 %v11199, %v11200
      %v11202 = vrot.slane %v11201, 2
      %v11203 = vadd.f32 %v11201, %v11202
      %v11204 = vrot.slane %v11203, 1
      %v11205 = vadd.f32 %v11203, %v11204
      %v11206 = vmul.f32 %v11205, 0.00390625
      %v11207 = vadd.f32 %v11206, 1e-05
      %v11208 = vrsqrt.pop %v11207
      %v11209 = vmul.f32 %v11009, %v11208
      %v11210 = vmul.f32 %v11010, %v11208
      %v11211 = vmul.f32 %v11011, %v11208
      %v11212 = vmul.f32 %v11012, %v11208
      %v11213 = vmul.f32 %v11013, %v11208
      %v11214 = vmul.f32 %v11014, %v11208
      %v11215 = vmul.f32 %v11015, %v11208
      %v11216 = vmul.f32 %v11016, %v11208
      %v11217 = vmul.f32 %v11017, %v11208
      %v11218 = vmul.f32 %v11018, %v11208
      %v11219 = vmul.f32 %v11019, %v11208
      %v11220 = vmul.f32 %v11020, %v11208
      %v11221 = vmul.f32 %v11021, %v11208
      %v11222 = vmul.f32 %v11022, %v11208
      %v11223 = vmul.f32 %v11023, %v11208
      %v11224 = vmul.f32 %v11024, %v11208
      %v11225 = vmul.f32 %v11025, %v11208
      %v11226 = vmul.f32 %v11026, %v11208
      %v11227 = vmul.f32 %v11027, %v11208
      %v11228 = vmul.f32 %v11028, %v11208
      %v11229 = vmul.f32 %v11029, %v11208
      %v11230 = vmul.f32 %v11030, %v11208
      %v11231 = vmul.f32 %v11031, %v11208
      %v11232 = vmul.f32 %v11032, %v11208
      %v11233 = vmul.f32 %v11033, %v11208
      %v11234 = vmul.f32 %v11034, %v11208
      %v11235 = vmul.f32 %v11035, %v11208
      %v11236 = vmul.f32 %v11036, %v11208
      %v11237 = vmul.f32 %v11037, %v11208
      %v11238 = vmul.f32 %v11038, %v11208
      %v11239 = vmul.f32 %v11039, %v11208
      %v11240 = vmul.f32 %v11040, %v11208
      %v11241 = vmul.f32 %v11041, %v11208
      %v11242 = vmul.f32 %v11042, %v11208
      %v11243 = vmul.f32 %v11043, %v11208
      %v11244 = vmul.f32 %v11044, %v11208
      %v11245 = vmul.f32 %v11045, %v11208
      %v11246 = vmul.f32 %v11046, %v11208
      %v11247 = vmul.f32 %v11047, %v11208
      %v11248 = vmul.f32 %v11048, %v11208
      %v11249 = vmul.f32 %v11049, %v11208
      %v11250 = vmul.f32 %v11050, %v11208
      %v11251 = vmul.f32 %v11051, %v11208
      %v11252 = vmul.f32 %v11052, %v11208
      %v11253 = vmul.f32 %v11053, %v11208
      %v11254 = vmul.f32 %v11054, %v11208
      %v11255 = vmul.f32 %v11055, %v11208
      %v11256 = vmul.f32 %v11056, %v11208
      %v11257 = vmul.f32 %v11057, %v11208
      %v11258 = vmul.f32 %v11058, %v11208
      %v11259 = vmul.f32 %v11059, %v11208
      %v11260 = vmul.f32 %v11060, %v11208
      %v11261 = vmul.f32 %v11061, %v11208
      %v11262 = vmul.f32 %v11062, %v11208
      %v11263 = vmul.f32 %v11063, %v11208
      %v11264 = vmul.f32 %v11064, %v11208
      %v11265 = vmul.f32 %v11065, %v11208
      %v11266 = vmul.f32 %v11066, %v11208
      %v11267 = vmul.f32 %v11067, %v11208
      %v11268 = vmul.f32 %v11068, %v11208
      %v11269 = vmul.f32 %v11069, %v11208
      %v11270 = vmul.f32 %v11070, %v11208
      %v11271 = vmul.f32 %v11071, %v11208
      %v11272 = vmul.f32 %v11072, %v11208
      %v11273 = vld [vmem:[%s165 + $0x10] sm:$0xf]
      %v11274 = vld [vmem:[%s165 + $0x14] sm:$0xf]
      %v11275 = vld [vmem:[%s165 + $0x18] sm:$0xf]
      %v11276 = vld [vmem:[%s165 + $0x1c] sm:$0xf]
      %v11277 = vld [vmem:[%s165 + $0x20] sm:$0xf]
      %v11278 = vld [vmem:[%s165 + $0x24] sm:$0xf]
      %v11279 = vld [vmem:[%s165 + $0x28] sm:$0xf]
      %v11280 = vld [vmem:[%s165 + $0x2c] sm:$0xf]
      %v11281 = vld [vmem:[%s165 + $0x30] sm:$0xf]
      %v11282 = vld [vmem:[%s165 + $0x34] sm:$0xf]
      %v11283 = vld [vmem:[%s165 + $0x38] sm:$0xf]
      %v11284 = vld [vmem:[%s165 + $0x3c] sm:$0xf]
      %v11285 = vld [vmem:[%s165 + $0x40] sm:$0xf]
      %v11286 = vld [vmem:[%s165 + $0x44] sm:$0xf]
      %v11287 = vld [vmem:[%s165 + $0x48] sm:$0xf]
      %v11288 = vld [vmem:[%s165 + $0x4c] sm:$0xf]
      %v11289 = vld [vmem:[%s165 + $0x50] sm:$0xf]
      %v11290 = vld [vmem:[%s165 + $0x54] sm:$0xf]
      %v11291 = vld [vmem:[%s165 + $0x58] sm:$0xf]
      %v11292 = vld [vmem:[%s165 + $0x5c] sm:$0xf]
      %v11293 = vld [vmem:[%s165 + $0x60] sm:$0xf]
      %v11294 = vld [vmem:[%s165 + $0x64] sm:$0xf]
      %v11295 = vld [vmem:[%s165 + $0x68] sm:$0xf]
      %v11296 = vld [vmem:[%s165 + $0x6c] sm:$0xf]
      %v11297 = vld [vmem:[%s165 + $0x70] sm:$0xf]
      %v11298 = vld [vmem:[%s165 + $0x74] sm:$0xf]
      %v11299 = vld [vmem:[%s165 + $0x78] sm:$0xf]
      %v11300 = vld [vmem:[%s165 + $0x7c] sm:$0xf]
      %v11301 = vld [vmem:[%s165 + $0x80] sm:$0xf]
      %v11302 = vld [vmem:[%s165 + $0x84] sm:$0xf]
      %v11303 = vld [vmem:[%s165 + $0x88] sm:$0xf]
      %v11304 = vld [vmem:[%s165 + $0x8c] sm:$0xf]
      %v11305 = vld [vmem:[%s165 + $0x90] sm:$0xf]
      %v11306 = vld [vmem:[%s165 + $0x94] sm:$0xf]
      %v11307 = vld [vmem:[%s165 + $0x98] sm:$0xf]
      %v11308 = vld [vmem:[%s165 + $0x9c] sm:$0xf]
      %v11309 = vld [vmem:[%s165 + $0xa0] sm:$0xf]
      %v11310 = vld [vmem:[%s165 + $0xa4] sm:$0xf]
      %v11311 = vld [vmem:[%s165 + $0xa8] sm:$0xf]
      %v11312 = vld [vmem:[%s165 + $0xac] sm:$0xf]
      %v11313 = vld [vmem:[%s165 + $0xb0] sm:$0xf]
      %v11314 = vld [vmem:[%s165 + $0xb4] sm:$0xf]
      %v11315 = vld [vmem:[%s165 + $0xb8] sm:$0xf]
      %v11316 = vld [vmem:[%s165 + $0xbc] sm:$0xf]
      %v11317 = vld [vmem:[%s165 + $0xc0] sm:$0xf]
      %v11318 = vld [vmem:[%s165 + $0xc4] sm:$0xf]
      %v11319 = vld [vmem:[%s165 + $0xc8] sm:$0xf]
      %v11320 = vld [vmem:[%s165 + $0xcc] sm:$0xf]
      %v11321 = vld [vmem:[%s165 + $0xd0] sm:$0xf]
      %v11322 = vld [vmem:[%s165 + $0xd4] sm:$0xf]
      %v11323 = vld [vmem:[%s165 + $0xd8] sm:$0xf]
      %v11324 = vld [vmem:[%s165 + $0xdc] sm:$0xf]
      %v11325 = vld [vmem:[%s165 + $0xe0] sm:$0xf]
      %v11326 = vld [vmem:[%s165 + $0xe4] sm:$0xf]
      %v11327 = vld [vmem:[%s165 + $0xe8] sm:$0xf]
      %v11328 = vld [vmem:[%s165 + $0xec] sm:$0xf]
      %v11329 = vld [vmem:[%s165 + $0xf0] sm:$0xf]
      %v11330 = vld [vmem:[%s165 + $0xf4] sm:$0xf]
      %v11331 = vld [vmem:[%s165 + $0xf8] sm:$0xf]
      %v11332 = vld [vmem:[%s165 + $0xfc] sm:$0xf]
      %v11333 = vld [vmem:[%s165 + $0x100] sm:$0xf]
      %v11334 = vld [vmem:[%s165 + $0x104] sm:$0xf]
      %v11335 = vld [vmem:[%s165 + $0x108] sm:$0xf]
      %v11336 = vld [vmem:[%s165 + $0x10c] sm:$0xf]
      %v11337 = vunpack.c.l.bf16 %v11273
      %v11338 = vunpack.c.l.bf16 %v11274
      %v11339 = vunpack.c.l.bf16 %v11275
      %v11340 = vunpack.c.l.bf16 %v11276
      %v11341 = vunpack.c.l.bf16 %v11277
      %v11342 = vunpack.c.l.bf16 %v11278
      %v11343 = vunpack.c.l.bf16 %v11279
      %v11344 = vunpack.c.l.bf16 %v11280
      %v11345 = vunpack.c.l.bf16 %v11281
      %v11346 = vunpack.c.l.bf16 %v11282
      %v11347 = vunpack.c.l.bf16 %v11283
      %v11348 = vunpack.c.l.bf16 %v11284
      %v11349 = vunpack.c.l.bf16 %v11285
      %v11350 = vunpack.c.l.bf16 %v11286
      %v11351 = vunpack.c.l.bf16 %v11287
      %v11352 = vunpack.c.l.bf16 %v11288
      %v11353 = vunpack.c.l.bf16 %v11289
      %v11354 = vunpack.c.l.bf16 %v11290
      %v11355 = vunpack.c.l.bf16 %v11291
      %v11356 = vunpack.c.l.bf16 %v11292
      %v11357 = vunpack.c.l.bf16 %v11293
      %v11358 = vunpack.c.l.bf16 %v11294
      %v11359 = vunpack.c.l.bf16 %v11295
      %v11360 = vunpack.c.l.bf16 %v11296
      %v11361 = vunpack.c.l.bf16 %v11297
      %v11362 = vunpack.c.l.bf16 %v11298
      %v11363 = vunpack.c.l.bf16 %v11299
      %v11364 = vunpack.c.l.bf16 %v11300
      %v11365 = vunpack.c.l.bf16 %v11301
      %v11366 = vunpack.c.l.bf16 %v11302
      %v11367 = vunpack.c.l.bf16 %v11303
      %v11368 = vunpack.c.l.bf16 %v11304
      %v11369 = vunpack.c.l.bf16 %v11305
      %v11370 = vunpack.c.l.bf16 %v11306
      %v11371 = vunpack.c.l.bf16 %v11307
      %v11372 = vunpack.c.l.bf16 %v11308
      %v11373 = vunpack.c.l.bf16 %v11309
      %v11374 = vunpack.c.l.bf16 %v11310
      %v11375 = vunpack.c.l.bf16 %v11311
      %v11376 = vunpack.c.l.bf16 %v11312
      %v11377 = vunpack.c.l.bf16 %v11313
      %v11378 = vunpack.c.l.bf16 %v11314
      %v11379 = vunpack.c.l.bf16 %v11315
      %v11380 = vunpack.c.l.bf16 %v11316
      %v11381 = vunpack.c.l.bf16 %v11317
      %v11382 = vunpack.c.l.bf16 %v11318
      %v11383 = vunpack.c.l.bf16 %v11319
      %v11384 = vunpack.c.l.bf16 %v11320
      %v11385 = vunpack.c.l.bf16 %v11321
      %v11386 = vunpack.c.l.bf16 %v11322
      %v11387 = vunpack.c.l.bf16 %v11323
      %v11388 = vunpack.c.l.bf16 %v11324
      %v11389 = vunpack.c.l.bf16 %v11325
      %v11390 = vunpack.c.l.bf16 %v11326
      %v11391 = vunpack.c.l.bf16 %v11327
      %v11392 = vunpack.c.l.bf16 %v11328
      %v11393 = vunpack.c.l.bf16 %v11329
      %v11394 = vunpack.c.l.bf16 %v11330
      %v11395 = vunpack.c.l.bf16 %v11331
      %v11396 = vunpack.c.l.bf16 %v11332
      %v11397 = vunpack.c.l.bf16 %v11333
      %v11398 = vunpack.c.l.bf16 %v11334
      %v11399 = vunpack.c.l.bf16 %v11335
      %v11400 = vunpack.c.l.bf16 %v11336
      %v11401 = vadd.f32 %v11337, %v11209
      %v11402 = vadd.f32 %v11338, %v11210
      %v11403 = vadd.f32 %v11339, %v11211
      %v11404 = vadd.f32 %v11340, %v11212
      %v11405 = vadd.f32 %v11341, %v11213
      %v11406 = vadd.f32 %v11342, %v11214
      %v11407 = vadd.f32 %v11343, %v11215
      %v11408 = vadd.f32 %v11344, %v11216
      %v11409 = vadd.f32 %v11345, %v11217
      %v11410 = vadd.f32 %v11346, %v11218
      %v11411 = vadd.f32 %v11347, %v11219
      %v11412 = vadd.f32 %v11348, %v11220
      %v11413 = vadd.f32 %v11349, %v11221
      %v11414 = vadd.f32 %v11350, %v11222
      %v11415 = vadd.f32 %v11351, %v11223
      %v11416 = vadd.f32 %v11352, %v11224
      %v11417 = vadd.f32 %v11353, %v11225
      %v11418 = vadd.f32 %v11354, %v11226
      %v11419 = vadd.f32 %v11355, %v11227
      %v11420 = vadd.f32 %v11356, %v11228
      %v11421 = vadd.f32 %v11357, %v11229
      %v11422 = vadd.f32 %v11358, %v11230
      %v11423 = vadd.f32 %v11359, %v11231
      %v11424 = vadd.f32 %v11360, %v11232
      %v11425 = vadd.f32 %v11361, %v11233
      %v11426 = vadd.f32 %v11362, %v11234
      %v11427 = vadd.f32 %v11363, %v11235
      %v11428 = vadd.f32 %v11364, %v11236
      %v11429 = vadd.f32 %v11365, %v11237
      %v11430 = vadd.f32 %v11366, %v11238
      %v11431 = vadd.f32 %v11367, %v11239
      %v11432 = vadd.f32 %v11368, %v11240
      %v11433 = vadd.f32 %v11369, %v11241
      %v11434 = vadd.f32 %v11370, %v11242
      %v11435 = vadd.f32 %v11371, %v11243
      %v11436 = vadd.f32 %v11372, %v11244
      %v11437 = vadd.f32 %v11373, %v11245
      %v11438 = vadd.f32 %v11374, %v11246
      %v11439 = vadd.f32 %v11375, %v11247
      %v11440 = vadd.f32 %v11376, %v11248
      %v11441 = vadd.f32 %v11377, %v11249
      %v11442 = vadd.f32 %v11378, %v11250
      %v11443 = vadd.f32 %v11379, %v11251
      %v11444 = vadd.f32 %v11380, %v11252
      %v11445 = vadd.f32 %v11381, %v11253
      %v11446 = vadd.f32 %v11382, %v11254
      %v11447 = vadd.f32 %v11383, %v11255
      %v11448 = vadd.f32 %v11384, %v11256
      %v11449 = vadd.f32 %v11385, %v11257
      %v11450 = vadd.f32 %v11386, %v11258
      %v11451 = vadd.f32 %v11387, %v11259
      %v11452 = vadd.f32 %v11388, %v11260
      %v11453 = vadd.f32 %v11389, %v11261
      %v11454 = vadd.f32 %v11390, %v11262
      %v11455 = vadd.f32 %v11391, %v11263
      %v11456 = vadd.f32 %v11392, %v11264
      %v11457 = vadd.f32 %v11393, %v11265
      %v11458 = vadd.f32 %v11394, %v11266
      %v11459 = vadd.f32 %v11395, %v11267
      %v11460 = vadd.f32 %v11396, %v11268
      %v11461 = vadd.f32 %v11397, %v11269
      %v11462 = vadd.f32 %v11398, %v11270
      %v11463 = vadd.f32 %v11399, %v11271
      %v11464 = vadd.f32 %v11400, %v11272
      %11465 = vst [vmem:[%s170] sm:$0xff] %v11401
      %11466 = vst [vmem:[%s170 + $0x8] sm:$0xff] %v11402
      %11467 = vst [vmem:[%s170 + $0x10] sm:$0xff] %v11403
      %11468 = vst [vmem:[%s170 + $0x18] sm:$0xff] %v11404
      %11469 = vst [vmem:[%s170 + $0x20] sm:$0xff] %v11405
      %11470 = vst [vmem:[%s170 + $0x28] sm:$0xff] %v11406
      %11471 = vst [vmem:[%s170 + $0x30] sm:$0xff] %v11407
      %11472 = vst [vmem:[%s170 + $0x38] sm:$0xff] %v11408
      %11473 = vst [vmem:[%s170 + $0x40] sm:$0xff] %v11409
      %11474 = vst [vmem:[%s170 + $0x48] sm:$0xff] %v11410
      %11475 = vst [vmem:[%s170 + $0x50] sm:$0xff] %v11411
      %11476 = vst [vmem:[%s170 + $0x58] sm:$0xff] %v11412
      %11477 = vst [vmem:[%s170 + $0x60] sm:$0xff] %v11413
      %11478 = vst [vmem:[%s170 + $0x68] sm:$0xff] %v11414
      %11479 = vst [vmem:[%s170 + $0x70] sm:$0xff] %v11415
      %11480 = vst [vmem:[%s170 + $0x78] sm:$0xff] %v11416
      %11481 = vst [vmem:[%s170 + $0x80] sm:$0xff] %v11417
      %11482 = vst [vmem:[%s170 + $0x88] sm:$0xff] %v11418
      %11483 = vst [vmem:[%s170 + $0x90] sm:$0xff] %v11419
      %11484 = vst [vmem:[%s170 + $0x98] sm:$0xff] %v11420
      %11485 = vst [vmem:[%s170 + $0xa0] sm:$0xff] %v11421
      %11486 = vst [vmem:[%s170 + $0xa8] sm:$0xff] %v11422
      %11487 = vst [vmem:[%s170 + $0xb0] sm:$0xff] %v11423
      %11488 = vst [vmem:[%s170 + $0xb8] sm:$0xff] %v11424
      %11489 = vst [vmem:[%s170 + $0xc0] sm:$0xff] %v11425
      %11490 = vst [vmem:[%s170 + $0xc8] sm:$0xff] %v11426
      %11491 = vst [vmem:[%s170 + $0xd0] sm:$0xff] %v11427
      %11492 = vst [vmem:[%s170 + $0xd8] sm:$0xff] %v11428
      %11493 = vst [vmem:[%s170 + $0xe0] sm:$0xff] %v11429
      %11494 = vst [vmem:[%s170 + $0xe8] sm:$0xff] %v11430
      %11495 = vst [vmem:[%s170 + $0xf0] sm:$0xff] %v11431
      %11496 = vst [vmem:[%s170 + $0xf8] sm:$0xff] %v11432
      %11497 = vst [vmem:[%s170 + $0x100] sm:$0xff] %v11433
      %11498 = vst [vmem:[%s170 + $0x108] sm:$0xff] %v11434
      %11499 = vst [vmem:[%s170 + $0x110] sm:$0xff] %v11435
      %11500 = vst [vmem:[%s170 + $0x118] sm:$0xff] %v11436
      %11501 = vst [vmem:[%s170 + $0x120] sm:$0xff] %v11437
      %11502 = vst [vmem:[%s170 + $0x128] sm:$0xff] %v11438
      %11503 = vst [vmem:[%s170 + $0x130] sm:$0xff] %v11439
      %11504 = vst [vmem:[%s170 + $0x138] sm:$0xff] %v11440
      %11505 = vst [vmem:[%s170 + $0x140] sm:$0xff] %v11441
      %11506 = vst [vmem:[%s170 + $0x148] sm:$0xff] %v11442
      %11507 = vst [vmem:[%s170 + $0x150] sm:$0xff] %v11443
      %11508 = vst [vmem:[%s170 + $0x158] sm:$0xff] %v11444
      %11509 = vst [vmem:[%s170 + $0x160] sm:$0xff] %v11445
      %11510 = vst [vmem:[%s170 + $0x168] sm:$0xff] %v11446
      %11511 = vst [vmem:[%s170 + $0x170] sm:$0xff] %v11447
      %11512 = vst [vmem:[%s170 + $0x178] sm:$0xff] %v11448
      %11513 = vst [vmem:[%s170 + $0x180] sm:$0xff] %v11449
      %11514 = vst [vmem:[%s170 + $0x188] sm:$0xff] %v11450
      %11515 = vst [vmem:[%s170 + $0x190] sm:$0xff] %v11451
      %11516 = vst [vmem:[%s170 + $0x198] sm:$0xff] %v11452
      %11517 = vst [vmem:[%s170 + $0x1a0] sm:$0xff] %v11453
      %11518 = vst [vmem:[%s170 + $0x1a8] sm:$0xff] %v11454
      %11519 = vst [vmem:[%s170 + $0x1b0] sm:$0xff] %v11455
      %11520 = vst [vmem:[%s170 + $0x1b8] sm:$0xff] %v11456
      %11521 = vst [vmem:[%s170 + $0x1c0] sm:$0xff] %v11457
      %11522 = vst [vmem:[%s170 + $0x1c8] sm:$0xff] %v11458
      %11523 = vst [vmem:[%s170 + $0x1d0] sm:$0xff] %v11459
      %11524 = vst [vmem:[%s170 + $0x1d8] sm:$0xff] %v11460
      %11525 = vst [vmem:[%s170 + $0x1e0] sm:$0xff] %v11461
      %11526 = vst [vmem:[%s170 + $0x1e8] sm:$0xff] %v11462
      %11527 = vst [vmem:[%s170 + $0x1f0] sm:$0xff] %v11463
      %11528 = vst [vmem:[%s170 + $0x1f8] sm:$0xff] %v11464
      %p11529 = scmp.lt.s32.totalorder %s14, 1
      %s11530 = scalar_select %p11529, %s14, 1
      %s11531 = smul.addr %s11530, 64
      %s11532 = smul.addr %s11531, 8
      %s11533 = scalar_lea.vmem %s3, %s11532
      // Predicated region
      $region33: #{residual_block_pallas.1} parent=31 // pred_check
        %p11534 = pneg %p100
      $region34: #{residual_block_pallas.1} parent=31 // pred_check_branch
        %11536 = sbr.rel (%p11534) target = $region36
      $region35: #{residual_block_pallas.1} parent=31 // pred_region
        _
      $region36: #{residual_block_pallas.1} parent=31 // pred_fallthru
        _
    $region32: #{residual_block_pallas.1} parent=5 // pred_fallthru
      _
    %p11537 = scmp.le.s32.totalorder 2, %s9
    // Predicated region
    $region37: #{residual_block_pallas.1} parent=5 // pred_check
      %p11538 = pneg %p11537
    $region38: #{residual_block_pallas.1} parent=5 // pred_check_branch
      %11540 = sbr.rel (%p11538) target = $region40
    $region39: #{residual_block_pallas.1} parent=5 // pred_region
      %s11541 = ssub.s32 %s9, 2
      // Predicated region
      $region41: #{residual_block_pallas.1} parent=39 // pred_check
        %p11542 = pneg %p106
      $region42: #{residual_block_pallas.1} parent=39 // pred_check_branch
        %11544 = sbr.rel (%p11542) target = $region44
      $region43: #{residual_block_pallas.1} parent=39 // pred_region
        %p11545 = scmp.lt.s32.totalorder %s15, 1
        %s11546 = scalar_select %p11545, %s15, 1
        %s11547 = smul.addr %s11546, 64
        %s11548 = smul.addr %s11547, 8
        %s11549 = scalar_lea.vmem %s3, %s11548
      $region44: #{residual_block_pallas.1} parent=39 // pred_fallthru
        _
    $region40: #{residual_block_pallas.1} parent=5 // pred_fallthru
      _
  $region6: #{residual_block_pallas.1} parent=0 // loop_footer
    %s13 = sadd.s32 1, %s9
  $region7: #{residual_block_pallas.1} parent=0 // loop_footer_branch
    %8 = sbr.rel target = $region3
  $region8: #{residual_block_pallas.1} parent=0 // loop_exit
    _

</llo_original>
